<compile_context>
chip_gen: v6e
topology: v6e:2x2x1
jax: 0.10.0
libtpu: 0.0.40
codegen_flags: <defaults>
</compile_context>

<pallas_src>
import jax
import jax.numpy as jnp
from jax import lax
from jax.experimental import pallas as pl
from jax.experimental.pallas import tpu as pltpu

# Full-precision f32 matmuls everywhere (kernel and pure-JAX reference) so the
# parity check below is meaningful.
jax.config.update("jax_default_matmul_precision", "float32")

H = 128  # LSTM hidden size (fixed by the module definition).


# ---------------------------------------------------------------------------
# Fused kernel: ConvNet -> LSTM -> Linear -> sigmoid, one batch tile per step.
# ---------------------------------------------------------------------------
def _cnn_lstm_kernel(x_ref, w1_ref, b1_ref, w2_ref, b2_ref, w3_ref, b3_ref,
                     wih_ref, whh_ref, bl_ref, wfc_ref, bfc_ref,
                     o_ref, gx_ref, hseq_ref):
    # x_ref   : (Bt, T, 6)     channels-last input tile
    # w*_ref  : (K, Cin, Cout) conv weights;  b*_ref: (1, Cout)
    # wih_ref : (H, 4H), whh_ref: (H, 4H)  -- gate order [i, f, o, g]
    # bl_ref  : (1, 4H)  combined b_ih + b_hh, gate order [i, f, o, g]
    # wfc_ref : (1, H),  bfc_ref: (1, 1)
    # o_ref   : (Bt, T)  lane-dense sigmoid output
    # gx_ref  : scratch (Bt, T, 4H) -- hoisted input projection
    # hseq_ref: scratch (Bt, T, H)  -- LSTM hidden-state sequence
    Bt, T = o_ref.shape

    def conv1d_relu(x, w_ref, b_ref):
        # "same"-padded conv = K shifted (Bt*T, Cin) x (Cin, Cout) MXU matmuls.
        K, Cin, Cout = w_ref.shape
        pad = (K - 1) // 2
        z = jnp.zeros((Bt, pad, Cin), jnp.float32)
        xp = jnp.concatenate([z, x, z], axis=1)            # in-kernel padding
        acc = jnp.zeros((Bt * T, Cout), jnp.float32)
        for k in range(K):                                 # K is static (5 or 3)
            xk = xp[:, k:k + T, :].reshape(Bt * T, Cin)
            acc = acc + jnp.dot(xk, w_ref[k],
                                preferred_element_type=jnp.float32)
        acc = acc + b_ref[...]
        return jnp.maximum(acc, 0.0).reshape(Bt, T, Cout)

    # ---- ConvNet: all intermediates stay on-chip --------------------------
    h = conv1d_relu(x_ref[...], w1_ref, b1_ref)            # (Bt, T, 32)
    h = conv1d_relu(h, w2_ref, b2_ref)                     # (Bt, T, 64)
    h = conv1d_relu(h, w3_ref, b3_ref)                     # (Bt, T, 128)

    # ---- LSTM: hoist x @ W_ih out of the serial loop (one big MXU matmul) -
    gx = jnp.dot(h.reshape(Bt * T, H), wih_ref[...],
                 preferred_element_type=jnp.float32) + bl_ref[...]
    gx_ref[...] = gx.reshape(Bt, T, 4 * H)

    whh = whh_ref[...]                                     # hoisted load

    def step(t, carry):
        hh, cc = carry
        g_x = gx_ref[:, pl.ds(t, 1), :].reshape(Bt, 4 * H)
        gates = g_x + jnp.dot(hh, whh, preferred_element_type=jnp.float32)
        sig = jax.nn.sigmoid(gates[:, :3 * H])             # one slab: i, f, o
        g_g = jnp.tanh(gates[:, 3 * H:])
        i_g = sig[:, 0 * H:1 * H]
        f_g = sig[:, 1 * H:2 * H]
        o_g = sig[:, 2 * H:3 * H]
        c_new = f_g * cc + i_g * g_g
        h_new = o_g * jnp.tanh(c_new)
        hseq_ref[:, pl.ds(t, 1), :] = h_new.reshape(Bt, 1, H)
        return (h_new, c_new)

    h0 = jnp.zeros((Bt, H), jnp.float32)
    c0 = jnp.zeros((Bt, H), jnp.float32)
    lax.fori_loop(0, T, step, (h0, c0))

    # ---- FC(128->1) + sigmoid: VPU multiply + lane reduce, lane-dense store.
    hs = hseq_ref[...]                                     # (Bt, T, H)
    y = jnp.sum(hs * wfc_ref[...], axis=-1) + bfc_ref[...]
    o_ref[...] = jax.nn.sigmoid(y).astype(o_ref.dtype)


# ---------------------------------------------------------------------------
# Wrapper.
# ---------------------------------------------------------------------------
def _reorder_gates(w):
    # PyTorch gate order [i, f, g, o] -> kernel order [i, f, o, g] (last axis).
    i, f, g, o = jnp.split(w, 4, axis=-1)
    return jnp.concatenate([i, f, o, g], axis=-1)


def _const_spec(arr):
    zeros = (0,) * arr.ndim
    return pl.BlockSpec(arr.shape, lambda b: zeros)


@jax.jit
def cnn_lstm_forward(x_ncl, params):
    """x_ncl: (B, 6, L) in PyTorch NCL layout. Returns (B, L, 1)."""
    x = jnp.transpose(x_ncl, (0, 2, 1)).astype(jnp.float32)   # (B, L, 6)
    B, L, Cin = x.shape

    # One-time weight massaging (cheap XLA ops, outside the kernel).
    wih = _reorder_gates(params["wih"])
    whh = _reorder_gates(params["whh"])
    bl = _reorder_gates(params["b_lstm"])
    wfc = params["wfc"].reshape(1, H)
    weights = (params["w1"], params["b1"], params["w2"], params["b2"],
               params["w3"], params["b3"], wih, whh, bl, wfc, params["bfc"])

    # Batch tiling: grid over B, "parallel" so it can shard across TensorCores.
    bt = 8 if (B % 8 == 0 and B >= 8) else B
    grid = (B // bt,)

    # VMEM budget sized from the buffers actually resident per grid step.
    act_bytes = bt * L * (Cin + 32 + 64 + 128 + 4 * H) * 4   # conv/LSTM temps
    scratch_bytes = bt * L * (4 * H + H) * 4                 # gx + hseq
    w_bytes = sum(int(w.size) * 4 for w in weights)
    est = (2 * bt * L * Cin * 4 + 2 * bt * L * 4 + 2 * w_bytes
           + scratch_bytes + act_bytes + (4 << 20))
    vmem_limit = int(min(64 << 20, max(16 << 20, est)))

    out = pl.pallas_call(
        _cnn_lstm_kernel,
        out_shape=jax.ShapeDtypeStruct((B, L), jnp.float32),
        grid=grid,
        in_specs=[pl.BlockSpec((bt, L, Cin), lambda b: (b, 0, 0))]
                 + [_const_spec(w) for w in weights],
        out_specs=pl.BlockSpec((bt, L), lambda b: (b, 0)),
        scratch_shapes=[pltpu.VMEM((bt, L, 4 * H), jnp.float32),
                        pltpu.VMEM((bt, L, H), jnp.float32)],
        compiler_params=pltpu.CompilerParams(
            dimension_semantics=("parallel",),
            vmem_limit_bytes=vmem_limit),
    )(x, *weights)
    return out[..., None]                                    # (B, L, 1)


# ---------------------------------------------------------------------------
# Deterministic parameter init (shapes from the nn.Module __init__).
# ---------------------------------------------------------------------------
def init_params(key):
    ks = jax.random.split(key, 12)

    def unif(k, shape, fan_in):
        bound = 1.0 / jnp.sqrt(jnp.float32(fan_in))
        return jax.random.uniform(k, shape, jnp.float32, -bound, bound)

    params = {
        # Conv1d(6, 32, k=5): stored as (K, Cin, Cout)
        "w1": unif(ks[0], (5, 6, 32), 6 * 5),
        "b1": unif(ks[1], (1, 32), 6 * 5),
        # Conv1d(32, 64, k=3)
        "w2": unif(ks[2], (3, 32, 64), 32 * 3),
        "b2": unif(ks[3], (1, 64), 32 * 3),
        # Conv1d(64, 128, k=3)
        "w3": unif(ks[4], (3, 64, 128), 64 * 3),
        "b3": unif(ks[5], (1, 128), 64 * 3),
        # LSTM(128, 128): W_ih^T (H,4H), W_hh^T (H,4H), bias (1,4H) -- torch
        # gate order [i, f, g, o]; kernel reorders to [i, f, o, g] itself.
        "wih": unif(ks[6], (H, 4 * H), H),
        "whh": unif(ks[7], (H, 4 * H), H),
        "b_lstm": unif(ks[8], (1, 4 * H), H) + unif(ks[9], (1, 4 * H), H),
        # Linear(128, 1)
        "wfc": unif(ks[10], (H, 1), H),
        "bfc": unif(ks[11], (1, 1), H),
    }
    return params


# ---------------------------------------------------------------------------
# Pure-JAX reference (mirrors the PyTorch forward) for a correctness check.
# ---------------------------------------------------------------------------
def ref_forward(x_ncl, p):
    x = jnp.transpose(x_ncl, (0, 2, 1)).astype(jnp.float32)

    def conv(x_blc, w, b, pad):
        K = w.shape[0]
        L = x_blc.shape[1]
        xp = jnp.pad(x_blc, ((0, 0), (pad, pad), (0, 0)))
        acc = sum(jnp.einsum("blc,co->blo", xp[:, k:k + L, :], w[k])
                  for k in range(K))
        return jax.nn.relu(acc + b)

    x = conv(x, p["w1"], p["b1"], 2)
    x = conv(x, p["w2"], p["b2"], 1)
    x = conv(x, p["w3"], p["b3"], 1)

    B = x.shape[0]

    def step(carry, x_t):
        h, c = carry
        gates = x_t @ p["wih"] + h @ p["whh"] + p["b_lstm"][0]
        i_g = jax.nn.sigmoid(gates[:, 0 * H:1 * H])
        f_g = jax.nn.sigmoid(gates[:, 1 * H:2 * H])
        g_g = jnp.tanh(gates[:, 2 * H:3 * H])
        o_g = jax.nn.sigmoid(gates[:, 3 * H:4 * H])
        c_new = f_g * c + i_g * g_g
        h_new = o_g * jnp.tanh(c_new)
        return (h_new, c_new), h_new

    xs = jnp.transpose(x, (1, 0, 2))                            # (T, B, H)
    (_, _), hs = lax.scan(step, (jnp.zeros((B, H)), jnp.zeros((B, H))), xs)
    hs = jnp.transpose(hs, (1, 0, 2))                           # (B, T, H)
    return jax.nn.sigmoid(hs @ p["wfc"] + p["bfc"])


if __name__ == "__main__":
    key = jax.random.PRNGKey(0)
    k_x, k_p = jax.random.split(key)

    B, C_IN, L = 2, 6, 16
    x = jax.random.normal(k_x, (B, C_IN, L), jnp.float32)       # NCL, like torch
    params = init_params(k_p)

    out = cnn_lstm_forward(x, params)
    out = jax.block_until_ready(out)
    assert out.shape == (B, L, 1), out.shape

    ref = ref_forward(x, params)
    max_err = float(jnp.max(jnp.abs(out - ref)))
    assert jnp.allclose(out, ref, rtol=5e-3, atol=5e-3), max_err

    print("KERNEL_OK")
</pallas_src>

<mosaic_0001>
module attributes {stable_mosaic.version = 11 : i64} {
  func.func @_cnn_lstm_kernel(%arg0: i32, %arg1: memref<2x16x6xf32, #tpu.memory_space<vmem>>, %arg2: memref<5x6x32xf32, #tpu.memory_space<vmem>>, %arg3: memref<1x32xf32, #tpu.memory_space<vmem>>, %arg4: memref<3x32x64xf32, #tpu.memory_space<vmem>>, %arg5: memref<1x64xf32, #tpu.memory_space<vmem>>, %arg6: memref<3x64x128xf32, #tpu.memory_space<vmem>>, %arg7: memref<1x128xf32, #tpu.memory_space<vmem>>, %arg8: memref<128x512xf32, #tpu.memory_space<vmem>>, %arg9: memref<128x512xf32, #tpu.memory_space<vmem>>, %arg10: memref<1x512xf32, #tpu.memory_space<vmem>>, %arg11: memref<1x128xf32, #tpu.memory_space<vmem>>, %arg12: memref<1x1xf32, #tpu.memory_space<vmem>>, %arg13: memref<2x16xf32, #tpu.memory_space<vmem>>, %arg14: memref<2x16x512xf32, #tpu.memory_space<vmem>>, %arg15: memref<2x16x128xf32, #tpu.memory_space<vmem>>) attributes {dimension_semantics = [#tpu.dimension_semantics<parallel>], iteration_bounds = array<i64: 1>, scalar_prefetch = 0 : i64, scratch_operands = 2 : i64, tpu.core_type = #tpu.core_type<tc>, window_params = [{transform_indices = @transform_0, window_bounds = array<i64: 2, 16, 6>}, {pipeline_mode = #tpu.pipeline_mode<synchronous>, transform_indices = @transform_1, window_bounds = array<i64: 5, 6, 32>}, {pipeline_mode = #tpu.pipeline_mode<synchronous>, transform_indices = @transform_2, window_bounds = array<i64: 1, 32>}, {pipeline_mode = #tpu.pipeline_mode<synchronous>, transform_indices = @transform_3, window_bounds = array<i64: 3, 32, 64>}, {pipeline_mode = #tpu.pipeline_mode<synchronous>, transform_indices = @transform_4, window_bounds = array<i64: 1, 64>}, {pipeline_mode = #tpu.pipeline_mode<synchronous>, transform_indices = @transform_5, window_bounds = array<i64: 3, 64, 128>}, {pipeline_mode = #tpu.pipeline_mode<synchronous>, transform_indices = @transform_6, window_bounds = array<i64: 1, 128>}, {pipeline_mode = #tpu.pipeline_mode<synchronous>, transform_indices = @transform_7, window_bounds = array<i64: 128, 512>}, {pipeline_mode = #tpu.pipeline_mode<synchronous>, transform_indices = @transform_8, window_bounds = array<i64: 128, 512>}, {pipeline_mode = #tpu.pipeline_mode<synchronous>, transform_indices = @transform_9, window_bounds = array<i64: 1, 512>}, {pipeline_mode = #tpu.pipeline_mode<synchronous>, transform_indices = @transform_10, window_bounds = array<i64: 1, 128>}, {pipeline_mode = #tpu.pipeline_mode<synchronous>, transform_indices = @transform_11, window_bounds = array<i64: 1, 1>}, {transform_indices = @transform_12, window_bounds = array<i64: 2, 16>}]} {
    %c0 = arith.constant 0 : index
    %c0_0 = arith.constant 0 : index
    %c0_1 = arith.constant 0 : index
    %0 = vector.load %arg1[%c0, %c0_0, %c0_1] : memref<2x16x6xf32, #tpu.memory_space<vmem>>, vector<2x16x6xf32>
    %cst = arith.constant 0.000000e+00 : f32
    %1 = vector.broadcast %cst : f32 to vector<2x2x6xf32>
    %2 = tpu.concatenate %1, %0, %1 in 1 : vector<2x2x6xf32>, vector<2x16x6xf32>, vector<2x2x6xf32> -> vector<2x20x6xf32>
    %cst_2 = arith.constant 0.000000e+00 : f32
    %3 = vector.broadcast %cst_2 : f32 to vector<32x32xf32>
    %4 = vector.extract_strided_slice %2 {offsets = [0, 0, 0], sizes = [2, 16, 6], strides = [1, 1, 1]} : vector<2x20x6xf32> to vector<2x16x6xf32>
    %5 = vector.shape_cast %4 : vector<2x16x6xf32> to vector<32x6xf32>
    %c0_3 = arith.constant 0 : index
    %c0_4 = arith.constant 0 : index
    %c0_5 = arith.constant 0 : index
    %6 = vector.load %arg2[%c0_3, %c0_4, %c0_5] : memref<5x6x32xf32, #tpu.memory_space<vmem>>, vector<1x6x32xf32>
    %7 = vector.shape_cast %6 : vector<1x6x32xf32> to vector<6x32xf32>
    %cst_6 = arith.constant dense<0.000000e+00> : vector<32x32xf32>
    %8 = tpu.matmul %5, %7, %cst_6 {dimension_numbers = #tpu.dot_dimension_numbers<[1], [0], [0], [1], [0, 0, 1, 1], [], []>, precision = #tpu.contract_precision<fp32>} : vector<32x6xf32>, vector<6x32xf32>, vector<32x32xf32> -> vector<32x32xf32>
    %9 = arith.addf %3, %8 : vector<32x32xf32>
    %10 = vector.extract_strided_slice %2 {offsets = [0, 1, 0], sizes = [2, 16, 6], strides = [1, 1, 1]} : vector<2x20x6xf32> to vector<2x16x6xf32>
    %11 = vector.shape_cast %10 : vector<2x16x6xf32> to vector<32x6xf32>
    %c1 = arith.constant 1 : index
    %c0_7 = arith.constant 0 : index
    %c0_8 = arith.constant 0 : index
    %12 = vector.load %arg2[%c1, %c0_7, %c0_8] : memref<5x6x32xf32, #tpu.memory_space<vmem>>, vector<1x6x32xf32>
    %13 = vector.shape_cast %12 : vector<1x6x32xf32> to vector<6x32xf32>
    %cst_9 = arith.constant dense<0.000000e+00> : vector<32x32xf32>
    %14 = tpu.matmul %11, %13, %cst_9 {dimension_numbers = #tpu.dot_dimension_numbers<[1], [0], [0], [1], [0, 0, 1, 1], [], []>, precision = #tpu.contract_precision<fp32>} : vector<32x6xf32>, vector<6x32xf32>, vector<32x32xf32> -> vector<32x32xf32>
    %15 = arith.addf %9, %14 : vector<32x32xf32>
    %16 = vector.extract_strided_slice %2 {offsets = [0, 2, 0], sizes = [2, 16, 6], strides = [1, 1, 1]} : vector<2x20x6xf32> to vector<2x16x6xf32>
    %17 = vector.shape_cast %16 : vector<2x16x6xf32> to vector<32x6xf32>
    %c2 = arith.constant 2 : index
    %c0_10 = arith.constant 0 : index
    %c0_11 = arith.constant 0 : index
    %18 = vector.load %arg2[%c2, %c0_10, %c0_11] : memref<5x6x32xf32, #tpu.memory_space<vmem>>, vector<1x6x32xf32>
    %19 = vector.shape_cast %18 : vector<1x6x32xf32> to vector<6x32xf32>
    %cst_12 = arith.constant dense<0.000000e+00> : vector<32x32xf32>
    %20 = tpu.matmul %17, %19, %cst_12 {dimension_numbers = #tpu.dot_dimension_numbers<[1], [0], [0], [1], [0, 0, 1, 1], [], []>, precision = #tpu.contract_precision<fp32>} : vector<32x6xf32>, vector<6x32xf32>, vector<32x32xf32> -> vector<32x32xf32>
    %21 = arith.addf %15, %20 : vector<32x32xf32>
    %22 = vector.extract_strided_slice %2 {offsets = [0, 3, 0], sizes = [2, 16, 6], strides = [1, 1, 1]} : vector<2x20x6xf32> to vector<2x16x6xf32>
    %23 = vector.shape_cast %22 : vector<2x16x6xf32> to vector<32x6xf32>
    %c3 = arith.constant 3 : index
    %c0_13 = arith.constant 0 : index
    %c0_14 = arith.constant 0 : index
    %24 = vector.load %arg2[%c3, %c0_13, %c0_14] : memref<5x6x32xf32, #tpu.memory_space<vmem>>, vector<1x6x32xf32>
    %25 = vector.shape_cast %24 : vector<1x6x32xf32> to vector<6x32xf32>
    %cst_15 = arith.constant dense<0.000000e+00> : vector<32x32xf32>
    %26 = tpu.matmul %23, %25, %cst_15 {dimension_numbers = #tpu.dot_dimension_numbers<[1], [0], [0], [1], [0, 0, 1, 1], [], []>, precision = #tpu.contract_precision<fp32>} : vector<32x6xf32>, vector<6x32xf32>, vector<32x32xf32> -> vector<32x32xf32>
    %27 = arith.addf %21, %26 : vector<32x32xf32>
    %28 = vector.extract_strided_slice %2 {offsets = [0, 4, 0], sizes = [2, 16, 6], strides = [1, 1, 1]} : vector<2x20x6xf32> to vector<2x16x6xf32>
    %29 = vector.shape_cast %28 : vector<2x16x6xf32> to vector<32x6xf32>
    %c4 = arith.constant 4 : index
    %c0_16 = arith.constant 0 : index
    %c0_17 = arith.constant 0 : index
    %30 = vector.load %arg2[%c4, %c0_16, %c0_17] : memref<5x6x32xf32, #tpu.memory_space<vmem>>, vector<1x6x32xf32>
    %31 = vector.shape_cast %30 : vector<1x6x32xf32> to vector<6x32xf32>
    %cst_18 = arith.constant dense<0.000000e+00> : vector<32x32xf32>
    %32 = tpu.matmul %29, %31, %cst_18 {dimension_numbers = #tpu.dot_dimension_numbers<[1], [0], [0], [1], [0, 0, 1, 1], [], []>, precision = #tpu.contract_precision<fp32>} : vector<32x6xf32>, vector<6x32xf32>, vector<32x32xf32> -> vector<32x32xf32>
    %33 = arith.addf %27, %32 : vector<32x32xf32>
    %c0_19 = arith.constant 0 : index
    %c0_20 = arith.constant 0 : index
    %34 = vector.load %arg3[%c0_19, %c0_20] : memref<1x32xf32, #tpu.memory_space<vmem>>, vector<1x32xf32>
    %35 = vector.broadcast %34 : vector<1x32xf32> to vector<32x32xf32>
    %36 = arith.addf %33, %35 : vector<32x32xf32>
    %cst_21 = arith.constant 0.000000e+00 : f32
    %37 = vector.broadcast %cst_21 : f32 to vector<32x32xf32>
    %38 = arith.maximumf %36, %37 : vector<32x32xf32>
    %39 = vector.shape_cast %38 : vector<32x32xf32> to vector<2x16x32xf32>
    %cst_22 = arith.constant 0.000000e+00 : f32
    %40 = vector.broadcast %cst_22 : f32 to vector<2x1x32xf32>
    %41 = tpu.concatenate %40, %39, %40 in 1 : vector<2x1x32xf32>, vector<2x16x32xf32>, vector<2x1x32xf32> -> vector<2x18x32xf32>
    %cst_23 = arith.constant 0.000000e+00 : f32
    %42 = vector.broadcast %cst_23 : f32 to vector<32x64xf32>
    %43 = vector.extract_strided_slice %41 {offsets = [0, 0, 0], sizes = [2, 16, 32], strides = [1, 1, 1]} : vector<2x18x32xf32> to vector<2x16x32xf32>
    %44 = vector.shape_cast %43 : vector<2x16x32xf32> to vector<32x32xf32>
    %c0_24 = arith.constant 0 : index
    %c0_25 = arith.constant 0 : index
    %c0_26 = arith.constant 0 : index
    %45 = vector.load %arg4[%c0_24, %c0_25, %c0_26] : memref<3x32x64xf32, #tpu.memory_space<vmem>>, vector<1x32x64xf32>
    %46 = vector.shape_cast %45 : vector<1x32x64xf32> to vector<32x64xf32>
    %cst_27 = arith.constant dense<0.000000e+00> : vector<32x64xf32>
    %47 = tpu.matmul %44, %46, %cst_27 {dimension_numbers = #tpu.dot_dimension_numbers<[1], [0], [0], [1], [0, 0, 1, 1], [], []>, precision = #tpu.contract_precision<fp32>} : vector<32x32xf32>, vector<32x64xf32>, vector<32x64xf32> -> vector<32x64xf32>
    %48 = arith.addf %42, %47 : vector<32x64xf32>
    %49 = vector.extract_strided_slice %41 {offsets = [0, 1, 0], sizes = [2, 16, 32], strides = [1, 1, 1]} : vector<2x18x32xf32> to vector<2x16x32xf32>
    %50 = vector.shape_cast %49 : vector<2x16x32xf32> to vector<32x32xf32>
    %c1_28 = arith.constant 1 : index
    %c0_29 = arith.constant 0 : index
    %c0_30 = arith.constant 0 : index
    %51 = vector.load %arg4[%c1_28, %c0_29, %c0_30] : memref<3x32x64xf32, #tpu.memory_space<vmem>>, vector<1x32x64xf32>
    %52 = vector.shape_cast %51 : vector<1x32x64xf32> to vector<32x64xf32>
    %cst_31 = arith.constant dense<0.000000e+00> : vector<32x64xf32>
    %53 = tpu.matmul %50, %52, %cst_31 {dimension_numbers = #tpu.dot_dimension_numbers<[1], [0], [0], [1], [0, 0, 1, 1], [], []>, precision = #tpu.contract_precision<fp32>} : vector<32x32xf32>, vector<32x64xf32>, vector<32x64xf32> -> vector<32x64xf32>
    %54 = arith.addf %48, %53 : vector<32x64xf32>
    %55 = vector.extract_strided_slice %41 {offsets = [0, 2, 0], sizes = [2, 16, 32], strides = [1, 1, 1]} : vector<2x18x32xf32> to vector<2x16x32xf32>
    %56 = vector.shape_cast %55 : vector<2x16x32xf32> to vector<32x32xf32>
    %c2_32 = arith.constant 2 : index
    %c0_33 = arith.constant 0 : index
    %c0_34 = arith.constant 0 : index
    %57 = vector.load %arg4[%c2_32, %c0_33, %c0_34] : memref<3x32x64xf32, #tpu.memory_space<vmem>>, vector<1x32x64xf32>
    %58 = vector.shape_cast %57 : vector<1x32x64xf32> to vector<32x64xf32>
    %cst_35 = arith.constant dense<0.000000e+00> : vector<32x64xf32>
    %59 = tpu.matmul %56, %58, %cst_35 {dimension_numbers = #tpu.dot_dimension_numbers<[1], [0], [0], [1], [0, 0, 1, 1], [], []>, precision = #tpu.contract_precision<fp32>} : vector<32x32xf32>, vector<32x64xf32>, vector<32x64xf32> -> vector<32x64xf32>
    %60 = arith.addf %54, %59 : vector<32x64xf32>
    %c0_36 = arith.constant 0 : index
    %c0_37 = arith.constant 0 : index
    %61 = vector.load %arg5[%c0_36, %c0_37] : memref<1x64xf32, #tpu.memory_space<vmem>>, vector<1x64xf32>
    %62 = vector.broadcast %61 : vector<1x64xf32> to vector<32x64xf32>
    %63 = arith.addf %60, %62 : vector<32x64xf32>
    %cst_38 = arith.constant 0.000000e+00 : f32
    %64 = vector.broadcast %cst_38 : f32 to vector<32x64xf32>
    %65 = arith.maximumf %63, %64 : vector<32x64xf32>
    %66 = vector.shape_cast %65 : vector<32x64xf32> to vector<2x16x64xf32>
    %cst_39 = arith.constant 0.000000e+00 : f32
    %67 = vector.broadcast %cst_39 : f32 to vector<2x1x64xf32>
    %68 = tpu.concatenate %67, %66, %67 in 1 : vector<2x1x64xf32>, vector<2x16x64xf32>, vector<2x1x64xf32> -> vector<2x18x64xf32>
    %cst_40 = arith.constant 0.000000e+00 : f32
    %69 = vector.broadcast %cst_40 : f32 to vector<32x128xf32>
    %70 = vector.extract_strided_slice %68 {offsets = [0, 0, 0], sizes = [2, 16, 64], strides = [1, 1, 1]} : vector<2x18x64xf32> to vector<2x16x64xf32>
    %71 = vector.shape_cast %70 : vector<2x16x64xf32> to vector<32x64xf32>
    %c0_41 = arith.constant 0 : index
    %c0_42 = arith.constant 0 : index
    %c0_43 = arith.constant 0 : index
    %72 = vector.load %arg6[%c0_41, %c0_42, %c0_43] : memref<3x64x128xf32, #tpu.memory_space<vmem>>, vector<1x64x128xf32>
    %73 = vector.shape_cast %72 : vector<1x64x128xf32> to vector<64x128xf32>
    %cst_44 = arith.constant dense<0.000000e+00> : vector<32x128xf32>
    %74 = tpu.matmul %71, %73, %cst_44 {dimension_numbers = #tpu.dot_dimension_numbers<[1], [0], [0], [1], [0, 0, 1, 1], [], []>, precision = #tpu.contract_precision<fp32>} : vector<32x64xf32>, vector<64x128xf32>, vector<32x128xf32> -> vector<32x128xf32>
    %75 = arith.addf %69, %74 : vector<32x128xf32>
    %76 = vector.extract_strided_slice %68 {offsets = [0, 1, 0], sizes = [2, 16, 64], strides = [1, 1, 1]} : vector<2x18x64xf32> to vector<2x16x64xf32>
    %77 = vector.shape_cast %76 : vector<2x16x64xf32> to vector<32x64xf32>
    %c1_45 = arith.constant 1 : index
    %c0_46 = arith.constant 0 : index
    %c0_47 = arith.constant 0 : index
    %78 = vector.load %arg6[%c1_45, %c0_46, %c0_47] : memref<3x64x128xf32, #tpu.memory_space<vmem>>, vector<1x64x128xf32>
    %79 = vector.shape_cast %78 : vector<1x64x128xf32> to vector<64x128xf32>
    %cst_48 = arith.constant dense<0.000000e+00> : vector<32x128xf32>
    %80 = tpu.matmul %77, %79, %cst_48 {dimension_numbers = #tpu.dot_dimension_numbers<[1], [0], [0], [1], [0, 0, 1, 1], [], []>, precision = #tpu.contract_precision<fp32>} : vector<32x64xf32>, vector<64x128xf32>, vector<32x128xf32> -> vector<32x128xf32>
    %81 = arith.addf %75, %80 : vector<32x128xf32>
    %82 = vector.extract_strided_slice %68 {offsets = [0, 2, 0], sizes = [2, 16, 64], strides = [1, 1, 1]} : vector<2x18x64xf32> to vector<2x16x64xf32>
    %83 = vector.shape_cast %82 : vector<2x16x64xf32> to vector<32x64xf32>
    %c2_49 = arith.constant 2 : index
    %c0_50 = arith.constant 0 : index
    %c0_51 = arith.constant 0 : index
    %84 = vector.load %arg6[%c2_49, %c0_50, %c0_51] : memref<3x64x128xf32, #tpu.memory_space<vmem>>, vector<1x64x128xf32>
    %85 = vector.shape_cast %84 : vector<1x64x128xf32> to vector<64x128xf32>
    %cst_52 = arith.constant dense<0.000000e+00> : vector<32x128xf32>
    %86 = tpu.matmul %83, %85, %cst_52 {dimension_numbers = #tpu.dot_dimension_numbers<[1], [0], [0], [1], [0, 0, 1, 1], [], []>, precision = #tpu.contract_precision<fp32>} : vector<32x64xf32>, vector<64x128xf32>, vector<32x128xf32> -> vector<32x128xf32>
    %87 = arith.addf %81, %86 : vector<32x128xf32>
    %c0_53 = arith.constant 0 : index
    %c0_54 = arith.constant 0 : index
    %88 = vector.load %arg7[%c0_53, %c0_54] : memref<1x128xf32, #tpu.memory_space<vmem>>, vector<1x128xf32>
    %89 = vector.broadcast %88 : vector<1x128xf32> to vector<32x128xf32>
    %90 = arith.addf %87, %89 : vector<32x128xf32>
    %cst_55 = arith.constant 0.000000e+00 : f32
    %91 = vector.broadcast %cst_55 : f32 to vector<32x128xf32>
    %92 = arith.maximumf %90, %91 : vector<32x128xf32>
    %93 = vector.shape_cast %92 : vector<32x128xf32> to vector<2x16x128xf32>
    %94 = vector.shape_cast %93 : vector<2x16x128xf32> to vector<32x128xf32>
    %c0_56 = arith.constant 0 : index
    %c0_57 = arith.constant 0 : index
    %95 = vector.load %arg8[%c0_56, %c0_57] : memref<128x512xf32, #tpu.memory_space<vmem>>, vector<128x512xf32>
    %cst_58 = arith.constant dense<0.000000e+00> : vector<32x512xf32>
    %96 = tpu.matmul %94, %95, %cst_58 {dimension_numbers = #tpu.dot_dimension_numbers<[1], [0], [0], [1], [0, 0, 1, 1], [], []>, precision = #tpu.contract_precision<fp32>} : vector<32x128xf32>, vector<128x512xf32>, vector<32x512xf32> -> vector<32x512xf32>
    %c0_59 = arith.constant 0 : index
    %c0_60 = arith.constant 0 : index
    %97 = vector.load %arg10[%c0_59, %c0_60] : memref<1x512xf32, #tpu.memory_space<vmem>>, vector<1x512xf32>
    %98 = vector.broadcast %97 : vector<1x512xf32> to vector<32x512xf32>
    %99 = arith.addf %96, %98 : vector<32x512xf32>
    %100 = vector.shape_cast %99 : vector<32x512xf32> to vector<2x16x512xf32>
    %c0_61 = arith.constant 0 : index
    %c0_62 = arith.constant 0 : index
    %c0_63 = arith.constant 0 : index
    %101 = vector.load %arg14[%c0_61, %c0_62, %c0_63] : memref<2x16x512xf32, #tpu.memory_space<vmem>>, vector<2x16x512xf32>
    tpu.vector_store %arg14[%c0_61, %c0_62, %c0_63], %100 {strides = array<i32>} : memref<2x16x512xf32, #tpu.memory_space<vmem>>, vector<2x16x512xf32>,
    %c0_64 = arith.constant 0 : index
    %c0_65 = arith.constant 0 : index
    %102 = vector.load %arg9[%c0_64, %c0_65] : memref<128x512xf32, #tpu.memory_space<vmem>>, vector<128x512xf32>
    %cst_66 = arith.constant 0.000000e+00 : f32
    %103 = vector.broadcast %cst_66 : f32 to vector<2x128xf32>
    %cst_67 = arith.constant 0.000000e+00 : f32
    %104 = vector.broadcast %cst_67 : f32 to vector<2x128xf32>
    %c0_i32 = arith.constant 0 : i32
    %c16_i32 = arith.constant 16 : i32
    %105 = arith.addi %c0_i32, %c16_i32 : i32
    %c1_i32 = arith.constant 1 : i32
    %106:2 = scf.for %arg16 = %c0_i32 to %105 step %c1_i32 iter_args(%arg17 = %103, %arg18 = %104) -> (vector<2x128xf32>, vector<2x128xf32>)  : i32 {
      %c0_80 = arith.constant 0 : index
      %122 = arith.index_cast %arg16 : i32 to index
      %c0_81 = arith.constant 0 : index
      %123 = vector.load %arg14[%c0_80, %122, %c0_81] : memref<2x16x512xf32, #tpu.memory_space<vmem>>, vector<2x1x512xf32>
      %124 = vector.shape_cast %123 : vector<2x1x512xf32> to vector<2x512xf32>
      %cst_82 = arith.constant dense<0.000000e+00> : vector<2x512xf32>
      %125 = tpu.matmul %arg17, %102, %cst_82 {dimension_numbers = #tpu.dot_dimension_numbers<[1], [0], [0], [1], [0, 0, 1, 1], [], []>, precision = #tpu.contract_precision<fp32>} : vector<2x128xf32>, vector<128x512xf32>, vector<2x512xf32> -> vector<2x512xf32>
      %126 = arith.addf %124, %125 : vector<2x512xf32>
      %127 = vector.extract_strided_slice %126 {offsets = [0, 0], sizes = [2, 384], strides = [1, 1]} : vector<2x512xf32> to vector<2x384xf32>
      %128 = arith.negf %127 : vector<2x384xf32>
      %129 = math.exp %128 : vector<2x384xf32>
      %cst_83 = arith.constant 1.000000e+00 : f32
      %130 = vector.broadcast %cst_83 : f32 to vector<2x384xf32>
      %131 = arith.addf %130, %129 : vector<2x384xf32>
      %132 = arith.divf %130, %131 : vector<2x384xf32>
      %133 = vector.extract_strided_slice %126 {offsets = [0, 384], sizes = [2, 128], strides = [1, 1]} : vector<2x512xf32> to vector<2x128xf32>
      %134 = math.tanh %133 : vector<2x128xf32>
      %135 = vector.extract_strided_slice %132 {offsets = [0, 0], sizes = [2, 128], strides = [1, 1]} : vector<2x384xf32> to vector<2x128xf32>
      %136 = vector.extract_strided_slice %132 {offsets = [0, 128], sizes = [2, 128], strides = [1, 1]} : vector<2x384xf32> to vector<2x128xf32>
      %137 = vector.extract_strided_slice %132 {offsets = [0, 256], sizes = [2, 128], strides = [1, 1]} : vector<2x384xf32> to vector<2x128xf32>
      %138 = arith.mulf %136, %arg18 : vector<2x128xf32>
      %139 = arith.mulf %135, %134 : vector<2x128xf32>
      %140 = arith.addf %138, %139 : vector<2x128xf32>
      %141 = math.tanh %140 : vector<2x128xf32>
      %142 = arith.mulf %137, %141 : vector<2x128xf32>
      %143 = vector.shape_cast %142 : vector<2x128xf32> to vector<2x1x128xf32>
      %c0_84 = arith.constant 0 : index
      %144 = arith.index_cast %arg16 : i32 to index
      %c0_85 = arith.constant 0 : index
      %145 = vector.load %arg15[%c0_84, %144, %c0_85] : memref<2x16x128xf32, #tpu.memory_space<vmem>>, vector<2x1x128xf32>
      tpu.vector_store %arg15[%c0_84, %144, %c0_85], %143 {strides = array<i32>} : memref<2x16x128xf32, #tpu.memory_space<vmem>>, vector<2x1x128xf32>,
      scf.yield %142, %140 : vector<2x128xf32>, vector<2x128xf32>
    }
    %c16_i32_68 = arith.constant 16 : i32
    %c0_69 = arith.constant 0 : index
    %c0_70 = arith.constant 0 : index
    %c0_71 = arith.constant 0 : index
    %107 = vector.load %arg15[%c0_69, %c0_70, %c0_71] : memref<2x16x128xf32, #tpu.memory_space<vmem>>, vector<2x16x128xf32>
    %c0_72 = arith.constant 0 : index
    %c0_73 = arith.constant 0 : index
    %108 = vector.load %arg11[%c0_72, %c0_73] : memref<1x128xf32, #tpu.memory_space<vmem>>, vector<1x128xf32>
    %109 = vector.shape_cast %108 : vector<1x128xf32> to vector<1x1x128xf32>
    %110 = vector.broadcast %109 : vector<1x1x128xf32> to vector<2x16x128xf32>
    %111 = arith.mulf %107, %110 : vector<2x16x128xf32>
    %cst_74 = arith.constant dense<0.000000e+00> : vector<2x16xf32>
    %112 = vector.multi_reduction <add>, %111, %cst_74 [2] : vector<2x16x128xf32> to vector<2x16xf32>
    %c0_75 = arith.constant 0 : index
    %c0_76 = arith.constant 0 : index
    %113 = vector.load %arg12[%c0_75, %c0_76] : memref<1x1xf32, #tpu.memory_space<vmem>>, vector<1x1xf32>
    %114 = vector.broadcast %113 : vector<1x1xf32> to vector<2x16xf32>
    %115 = arith.addf %112, %114 : vector<2x16xf32>
    %116 = arith.negf %115 : vector<2x16xf32>
    %117 = math.exp %116 : vector<2x16xf32>
    %cst_77 = arith.constant 1.000000e+00 : f32
    %118 = vector.broadcast %cst_77 : f32 to vector<2x16xf32>
    %119 = arith.addf %118, %117 : vector<2x16xf32>
    %120 = arith.divf %118, %119 : vector<2x16xf32>
    %c0_78 = arith.constant 0 : index
    %c0_79 = arith.constant 0 : index
    %121 = vector.load %arg13[%c0_78, %c0_79] : memref<2x16xf32, #tpu.memory_space<vmem>>, vector<2x16xf32>
    tpu.vector_store %arg13[%c0_78, %c0_79], %120 {strides = array<i32>} : memref<2x16xf32, #tpu.memory_space<vmem>>, vector<2x16xf32>,
    return
  }
  func.func @transform_0(%arg0: i32) -> (i32, i32, i32) {
    %c0_i32 = arith.constant 0 : i32
    %c0_i32_0 = arith.constant 0 : i32
    %c0_i32_1 = arith.constant 0 : i32
    return %arg0, %c0_i32, %c0_i32_0 : i32, i32, i32
  }
  func.func @transform_1(%arg0: i32) -> (i32, i32, i32) {
    %c0_i32 = arith.constant 0 : i32
    %c0_i32_0 = arith.constant 0 : i32
    %c0_i32_1 = arith.constant 0 : i32
    %c0_i32_2 = arith.constant 0 : i32
    return %c0_i32, %c0_i32_0, %c0_i32_1 : i32, i32, i32
  }
  func.func @transform_2(%arg0: i32) -> (i32, i32) {
    %c0_i32 = arith.constant 0 : i32
    %c0_i32_0 = arith.constant 0 : i32
    %c0_i32_1 = arith.constant 0 : i32
    return %c0_i32, %c0_i32_0 : i32, i32
  }
  func.func @transform_3(%arg0: i32) -> (i32, i32, i32) {
    %c0_i32 = arith.constant 0 : i32
    %c0_i32_0 = arith.constant 0 : i32
    %c0_i32_1 = arith.constant 0 : i32
    %c0_i32_2 = arith.constant 0 : i32
    return %c0_i32, %c0_i32_0, %c0_i32_1 : i32, i32, i32
  }
  func.func @transform_4(%arg0: i32) -> (i32, i32) {
    %c0_i32 = arith.constant 0 : i32
    %c0_i32_0 = arith.constant 0 : i32
    %c0_i32_1 = arith.constant 0 : i32
    return %c0_i32, %c0_i32_0 : i32, i32
  }
  func.func @transform_5(%arg0: i32) -> (i32, i32, i32) {
    %c0_i32 = arith.constant 0 : i32
    %c0_i32_0 = arith.constant 0 : i32
    %c0_i32_1 = arith.constant 0 : i32
    %c0_i32_2 = arith.constant 0 : i32
    return %c0_i32, %c0_i32_0, %c0_i32_1 : i32, i32, i32
  }
  func.func @transform_6(%arg0: i32) -> (i32, i32) {
    %c0_i32 = arith.constant 0 : i32
    %c0_i32_0 = arith.constant 0 : i32
    %c0_i32_1 = arith.constant 0 : i32
    return %c0_i32, %c0_i32_0 : i32, i32
  }
  func.func @transform_7(%arg0: i32) -> (i32, i32) {
    %c0_i32 = arith.constant 0 : i32
    %c0_i32_0 = arith.constant 0 : i32
    %c0_i32_1 = arith.constant 0 : i32
    return %c0_i32, %c0_i32_0 : i32, i32
  }
  func.func @transform_8(%arg0: i32) -> (i32, i32) {
    %c0_i32 = arith.constant 0 : i32
    %c0_i32_0 = arith.constant 0 : i32
    %c0_i32_1 = arith.constant 0 : i32
    return %c0_i32, %c0_i32_0 : i32, i32
  }
  func.func @transform_9(%arg0: i32) -> (i32, i32) {
    %c0_i32 = arith.constant 0 : i32
    %c0_i32_0 = arith.constant 0 : i32
    %c0_i32_1 = arith.constant 0 : i32
    return %c0_i32, %c0_i32_0 : i32, i32
  }
  func.func @transform_10(%arg0: i32) -> (i32, i32) {
    %c0_i32 = arith.constant 0 : i32
    %c0_i32_0 = arith.constant 0 : i32
    %c0_i32_1 = arith.constant 0 : i32
    return %c0_i32, %c0_i32_0 : i32, i32
  }
  func.func @transform_11(%arg0: i32) -> (i32, i32) {
    %c0_i32 = arith.constant 0 : i32
    %c0_i32_0 = arith.constant 0 : i32
    %c0_i32_1 = arith.constant 0 : i32
    return %c0_i32, %c0_i32_0 : i32, i32
  }
  func.func @transform_12(%arg0: i32) -> (i32, i32) {
    %c0_i32 = arith.constant 0 : i32
    %c0_i32_0 = arith.constant 0 : i32
    return %arg0, %c0_i32 : i32, i32
  }
}

</mosaic_0001>

<llo_original>
// kernel: cnn_lstm_forward.1
$region0: #{cnn_lstm_forward.1}
  #allocation0 [shape = 'u32[]', space=smem, size = 0x4, offset = 0x4, fixed_abs, tag = 'smem constant byte address 0x4 - core index']
  #allocation1 [shape = 'u32[144,128]{1,0:T(1,128)}', space=vmem, size = 0x12000, scoped, tag = 'internal scratch']
  #allocation2 [shape = 'f32[2,16,512]{2,1,0:T(8,128)}', space=vmem, size = 0x10000, scoped, tag = 'scratch operand']
  #allocation3 [shape = 'f32[2,16,128]{2,1,0:T(8,128)}', space=vmem, size = 0x4000, scoped, tag = 'scratch operand']
  #allocation4 [shape = 'f32[1,1]{1,0:T(1,128)S(1)}', space=vmem, size = 0x200, scoped, tag = 'scoped memory for cnn_lstm_forward.1']
  %s0 = inlined_call_operand.vmem [shape: f32[2,16,6], index: 0, kind: input, shape index: {}]
  %s1 = inlined_call_operand.vmem [shape: f32[5,6,32], index: 1, kind: input, shape index: {}]
  %s2 = inlined_call_operand.vmem [shape: f32[1,32], index: 2, kind: input, shape index: {}]
  %s3 = inlined_call_operand.vmem [shape: f32[3,32,64], index: 3, kind: input, shape index: {}]
  %s4 = inlined_call_operand.vmem [shape: f32[1,64], index: 4, kind: input, shape index: {}]
  %s5 = inlined_call_operand.vmem [shape: f32[3,64,128], index: 5, kind: input, shape index: {}]
  %s6 = inlined_call_operand.vmem [shape: f32[1,128], index: 6, kind: input, shape index: {}]
  %s7 = inlined_call_operand.vmem [shape: f32[128,512], index: 7, kind: input, shape index: {}]
  %s8 = inlined_call_operand.vmem [shape: f32[128,512], index: 8, kind: input, shape index: {}]
  %s9 = inlined_call_operand.vmem [shape: f32[1,512], index: 9, kind: input, shape index: {}]
  %s10 = inlined_call_operand.vmem [shape: f32[1,128], index: 10, kind: input, shape index: {}]
  %s11 = inlined_call_operand.<no memory space> [shape: f32[1,1], index: 11, kind: input, shape index: {}]
  %s12 = inlined_call_operand.hbm [shape: f32[2,16], index: 12, kind: output, shape index: {}]
  %s13 = sld [smem:[#allocation0]]
  $region65: #{cnn_lstm_forward.1} parent=0
    _
  %s15 = ssub.s32 1, %s13
  %s16 = scalar_select 0, %s15, %s13
  %v17 = vstv %s11
  %18 = vst [vmem:[#allocation4] sm:$0x1] %v17
  $region1: #{cnn_lstm_forward.1} parent=0
    #allocation5 [shape = 'u8[1024]{0}', space=vmem, size = 0x400, scoped, tag = 'output window, operand 0, single buffered']
    #allocation6 [shape = 's32[1]{0}', space=sflag, size = 0x4, scoped, tag = 'scoped memory for cnn_lstm_forward.1']
    %19 = vsyncpa [#allocation6], 0
    // Predicated region
    $region2: #{cnn_lstm_forward.1} parent=1 // pred_check
      _
    $region3: #{cnn_lstm_forward.1} parent=1 // pred_check_branch
      %21 = sbr.rel (0) target = $region5
    $region4: #{cnn_lstm_forward.1} parent=1 // pred_region
      _
    $region5: #{cnn_lstm_forward.1} parent=1 // pred_fallthru
      _
    // Predicated region
    $region6: #{cnn_lstm_forward.1} parent=1 // pred_check
      _
    $region7: #{cnn_lstm_forward.1} parent=1 // pred_check_branch
      %23 = sbr.rel (0) target = $region9
    $region8: #{cnn_lstm_forward.1} parent=1 // pred_region
      _
    $region9: #{cnn_lstm_forward.1} parent=1 // pred_fallthru
      _
    // Predicated region
    $region10: #{cnn_lstm_forward.1} parent=1 // pred_check
      _
    $region11: #{cnn_lstm_forward.1} parent=1 // pred_check_branch
      %25 = sbr.rel (0) target = $region13
    $region12: #{cnn_lstm_forward.1} parent=1 // pred_region
      _
    $region13: #{cnn_lstm_forward.1} parent=1 // pred_fallthru
      _
    // Predicated region
    $region14: #{cnn_lstm_forward.1} parent=1 // pred_check
      _
    $region15: #{cnn_lstm_forward.1} parent=1 // pred_check_branch
      %27 = sbr.rel (0) target = $region17
    $region16: #{cnn_lstm_forward.1} parent=1 // pred_region
      _
    $region17: #{cnn_lstm_forward.1} parent=1 // pred_fallthru
      _
    // Predicated region
    $region18: #{cnn_lstm_forward.1} parent=1 // pred_check
      _
    $region19: #{cnn_lstm_forward.1} parent=1 // pred_check_branch
      %29 = sbr.rel (0) target = $region21
    $region20: #{cnn_lstm_forward.1} parent=1 // pred_region
      _
    $region21: #{cnn_lstm_forward.1} parent=1 // pred_fallthru
      _
    // Predicated region
    $region22: #{cnn_lstm_forward.1} parent=1 // pred_check
      _
    $region23: #{cnn_lstm_forward.1} parent=1 // pred_check_branch
      %31 = sbr.rel (0) target = $region25
    $region24: #{cnn_lstm_forward.1} parent=1 // pred_region
      _
    $region25: #{cnn_lstm_forward.1} parent=1 // pred_fallthru
      _
    // Predicated region
    $region26: #{cnn_lstm_forward.1} parent=1 // pred_check
      _
    $region27: #{cnn_lstm_forward.1} parent=1 // pred_check_branch
      %33 = sbr.rel (0) target = $region29
    $region28: #{cnn_lstm_forward.1} parent=1 // pred_region
      _
    $region29: #{cnn_lstm_forward.1} parent=1 // pred_fallthru
      _
    // Predicated region
    $region30: #{cnn_lstm_forward.1} parent=1 // pred_check
      _
    $region31: #{cnn_lstm_forward.1} parent=1 // pred_check_branch
      %35 = sbr.rel (0) target = $region33
    $region32: #{cnn_lstm_forward.1} parent=1 // pred_region
      _
    $region33: #{cnn_lstm_forward.1} parent=1 // pred_fallthru
      _
    // Predicated region
    $region34: #{cnn_lstm_forward.1} parent=1 // pred_check
      _
    $region35: #{cnn_lstm_forward.1} parent=1 // pred_check_branch
      %37 = sbr.rel (0) target = $region37
    $region36: #{cnn_lstm_forward.1} parent=1 // pred_region
      _
    $region37: #{cnn_lstm_forward.1} parent=1 // pred_fallthru
      _
    // Predicated region
    $region38: #{cnn_lstm_forward.1} parent=1 // pred_check
      _
    $region39: #{cnn_lstm_forward.1} parent=1 // pred_check_branch
      %39 = sbr.rel (0) target = $region41
    $region40: #{cnn_lstm_forward.1} parent=1 // pred_region
      _
    $region41: #{cnn_lstm_forward.1} parent=1 // pred_fallthru
      _
    // Predicated region
    $region42: #{cnn_lstm_forward.1} parent=1 // pred_check
      _
    $region43: #{cnn_lstm_forward.1} parent=1 // pred_check_branch
      %41 = sbr.rel (0) target = $region45
    $region44: #{cnn_lstm_forward.1} parent=1 // pred_region
      _
    $region45: #{cnn_lstm_forward.1} parent=1 // pred_fallthru
      _
    // Predicated region
    $region46: #{cnn_lstm_forward.1} parent=1 // pred_check
      _
    $region47: #{cnn_lstm_forward.1} parent=1 // pred_check_branch
      %43 = sbr.rel (0) target = $region49
    $region48: #{cnn_lstm_forward.1} parent=1 // pred_region
      _
    $region49: #{cnn_lstm_forward.1} parent=1 // pred_fallthru
      _
    %v44 = vld [vmem:[%s0] sm:$0xff]
    %v45 = vld [vmem:[%s0 + $0x8] sm:$0xff]
    %v46 = vld [vmem:[%s0 + $0x10] sm:$0xff]
    %v47 = vld [vmem:[%s0 + $0x18] sm:$0xff]
    %vm52 = vcmask 1041408
    %v53 = vrot.slane %v44, 6
    %v54 = vrot.slane %v45, 6
    %v55 = vsel %vm52, %v53, %v54
    %v56 = vrot.slane %v46, 6
    %v57 = vrot.slane %v47, 6
    %v58 = vsel %vm52, %v56, %v57
    %v63 = vsel %vm52, 0.0, %v53
    %v64 = vsel %vm52, 0.0, %v56
    %v65 = vsel %vm52, %v54, 0.0
    %v66 = vsel %vm52, %v57, 0.0
    %v67 = vld [vmem:[%s1] sm:$0x3f]
    %vm72 = vcmask 1046528
    %v73 = vrot.slane %v63, 1
    %v74 = vrot.slane %v55, 1
    %v75 = vsel %vm72, %v73, %v74
    %v76 = vrot.slane %v65, 1
    %v77 = vsel %vm72, %v74, %v76
    %v78 = vrot.slane %v64, 1
    %v79 = vrot.slane %v58, 1
    %v80 = vsel %vm72, %v78, %v79
    %v81 = vrot.slane %v66, 1
    %v82 = vsel %vm72, %v79, %v81
    %s83 = scalar_lea.vmem %s1, 8
    %v84 = vld [vmem:[%s83] sm:$0x3f]
    %vm85 = vcmask 48128
    %v86 = vsel %vm85, %v75, 0
    %v88 = vsel %vm85, %v77, 0
    %v90 = vsel %vm85, %v80, 0
    %v92 = vsel %vm85, %v82, 0
    %vm94 = vcmask 1045504
    %v96 = vsel %vm94, %v84, 0
    %98 = vmatprep.subr.mxu0 0.0
    %99 = vmatpush1.msra.mxu0 0.0
    %100 = vmatprep.subr.mxu0 0.0
    %101 = vmatpush1.msra.mxu0 0.0
    %102 = vmatprep.subr.mxu0 0.0
    %103 = vmatpush1.msra.mxu0 0.0
    %104 = vmatprep.subr.mxu0 0.0
    %105 = vmatpush1.msra.mxu0 0.0
    %106 = vmatprep.subr.mxu0 0.0
    %107 = vmatpush1.msra.mxu0 0.0
    %108 = vmatprep.subr.mxu0 0.0
    %109 = vmatpush1.msra.mxu0 0.0
    %110 = vmatprep.subr.mxu0 0.0
    %111 = vmatpush1.msra.mxu0 0.0
    %112 = vmatprep.subr.mxu0 0.0
    %113 = vmatpush1.msra.mxu0 0.0
    %114 = vmatprep.subr.mxu0 0.0
    %115 = vmatpush1.msra.mxu0 0.0
    %116 = vmatprep.subr.mxu0 0.0
    %117 = vmatpush1.msra.mxu0 0.0
    %118 = vmatprep.subr.mxu0 0.0
    %119 = vmatpush1.msra.mxu0 0.0
    %120 = vmatprep.subr.mxu0 0.0
    %121 = vmatpush1.msra.mxu0 0.0
    %122 = vmatprep.subr.mxu0 0.0
    %123 = vmatpush1.msra.mxu0 0.0
    %124 = vmatprep.subr.mxu0 0.0
    %125 = vmatpush1.msra.mxu0 0.0
    %126 = vmatprep.subr.mxu0 0.0
    %127 = vmatpush1.msra.mxu0 0.0
    %128 = vmatprep.subr.mxu0 0.0
    %v129 = vand.u32 %v96, 4294901760
    %130 = vmatpush1.msra.mxu0 %v129
    %131 = vmatprep.subr.mxu0 0.0
    %132 = vmatpush2.msra.mxu0 0.0
    %133 = vmatprep.subr.mxu0 0.0
    %134 = vmatpush2.msra.mxu0 0.0
    %135 = vmatprep.subr.mxu0 0.0
    %136 = vmatpush2.msra.mxu0 0.0
    %137 = vmatprep.subr.mxu0 0.0
    %138 = vmatpush2.msra.mxu0 0.0
    %139 = vmatprep.subr.mxu0 0.0
    %140 = vmatpush2.msra.mxu0 0.0
    %141 = vmatprep.subr.mxu0 0.0
    %142 = vmatpush2.msra.mxu0 0.0
    %143 = vmatprep.subr.mxu0 0.0
    %144 = vmatpush2.msra.mxu0 0.0
    %145 = vmatprep.subr.mxu0 0.0
    %146 = vmatpush2.msra.mxu0 0.0
    %147 = vmatprep.subr.mxu0 0.0
    %148 = vmatpush2.msra.mxu0 0.0
    %149 = vmatprep.subr.mxu0 0.0
    %150 = vmatpush2.msra.mxu0 0.0
    %151 = vmatprep.subr.mxu0 0.0
    %152 = vmatpush2.msra.mxu0 0.0
    %153 = vmatprep.subr.mxu0 0.0
    %154 = vmatpush2.msra.mxu0 0.0
    %155 = vmatprep.subr.mxu0 0.0
    %156 = vmatpush2.msra.mxu0 0.0
    %157 = vmatprep.subr.mxu0 0.0
    %158 = vmatpush2.msra.mxu0 0.0
    %159 = vmatprep.subr.mxu0 0.0
    %160 = vmatpush2.msra.mxu0 0.0
    %161 = vmatprep.subr.mxu0 0.0
    %162 = vmatpush2.msra.mxu0 0.0
    %163 = vmatprep.mubr.f32.mxu0 0.0
    %v164 = vand.u32 %v86, 4294901760
    %v165 = vsub.f32 %v86, %v164
    %v166 = vand.u32 %v165, 4294901760
    %v167 = vsub.f32 %v165, %v166
    %v168 = vand.u32 %v167, 4294901760
    %169 = vmatmul.mubr.f32.gmra.mxu0 %v168
    %v170 = vpop.f32.mrf.mxu0
    %v171 = vadd.f32 0.0, %v170
    %v172 = vpop.f32.mrf.mxu0
    %173 = vmatprep.mubr.f32.mxu0 0.0
    %v174 = vand.u32 %v88, 4294901760
    %v175 = vsub.f32 %v88, %v174
    %v176 = vand.u32 %v175, 4294901760
    %v177 = vsub.f32 %v175, %v176
    %v178 = vand.u32 %v177, 4294901760
    %179 = vmatmul.mubr.f32.gmra.mxu0 %v178
    %v180 = vpop.f32.mrf.mxu0
    %v181 = vadd.f32 0.0, %v180
    %v182 = vpop.f32.mrf.mxu0
    %183 = vmatprep.mubr.f32.mxu0 0.0
    %v184 = vand.u32 %v90, 4294901760
    %v185 = vsub.f32 %v90, %v184
    %v186 = vand.u32 %v185, 4294901760
    %v187 = vsub.f32 %v185, %v186
    %v188 = vand.u32 %v187, 4294901760
    %189 = vmatmul.mubr.f32.gmra.mxu0 %v188
    %v190 = vpop.f32.mrf.mxu0
    %v191 = vadd.f32 0.0, %v190
    %v192 = vpop.f32.mrf.mxu0
    %193 = vmatprep.mubr.f32.mxu0 0.0
    %v194 = vand.u32 %v92, 4294901760
    %v195 = vsub.f32 %v92, %v194
    %v196 = vand.u32 %v195, 4294901760
    %v197 = vsub.f32 %v195, %v196
    %v198 = vand.u32 %v197, 4294901760
    %199 = vmatmul.mubr.f32.gmra.mxu0 %v198
    %v200 = vpop.f32.mrf.mxu0
    %v201 = vadd.f32 0.0, %v200
    %v202 = vpop.f32.mrf.mxu0
    %203 = vdwg.mxu0
    %204 = vmatprep.subr.mxu0 0.0
    %205 = vmatpush1.msra.mxu0 0.0
    %206 = vmatprep.subr.mxu0 0.0
    %207 = vmatpush1.msra.mxu0 0.0
    %208 = vmatprep.subr.mxu0 0.0
    %209 = vmatpush1.msra.mxu0 0.0
    %210 = vmatprep.subr.mxu0 0.0
    %211 = vmatpush1.msra.mxu0 0.0
    %212 = vmatprep.subr.mxu0 0.0
    %213 = vmatpush1.msra.mxu0 0.0
    %214 = vmatprep.subr.mxu0 0.0
    %215 = vmatpush1.msra.mxu0 0.0
    %216 = vmatprep.subr.mxu0 0.0
    %217 = vmatpush1.msra.mxu0 0.0
    %218 = vmatprep.subr.mxu0 0.0
    %219 = vmatpush1.msra.mxu0 0.0
    %220 = vmatprep.subr.mxu0 0.0
    %221 = vmatpush1.msra.mxu0 0.0
    %222 = vmatprep.subr.mxu0 0.0
    %223 = vmatpush1.msra.mxu0 0.0
    %224 = vmatprep.subr.mxu0 0.0
    %225 = vmatpush1.msra.mxu0 0.0
    %226 = vmatprep.subr.mxu0 0.0
    %227 = vmatpush1.msra.mxu0 0.0
    %228 = vmatprep.subr.mxu0 0.0
    %229 = vmatpush1.msra.mxu0 0.0
    %230 = vmatprep.subr.mxu0 0.0
    %231 = vmatpush1.msra.mxu0 0.0
    %232 = vmatprep.subr.mxu0 0.0
    %233 = vmatpush1.msra.mxu0 0.0
    %234 = vmatprep.subr.mxu0 0.0
    %v235 = vand.u32 %v96, 4294901760
    %v236 = vsub.f32 %v96, %v235
    %v237 = vand.u32 %v236, 4294901760
    %v238 = vsub.f32 %v236, %v237
    %v239 = vand.u32 %v238, 4294901760
    %240 = vmatpush1.msra.mxu0 %v239
    %241 = vmatprep.subr.mxu0 0.0
    %242 = vmatpush2.msra.mxu0 0.0
    %243 = vmatprep.subr.mxu0 0.0
    %244 = vmatpush2.msra.mxu0 0.0
    %245 = vmatprep.subr.mxu0 0.0
    %246 = vmatpush2.msra.mxu0 0.0
    %247 = vmatprep.subr.mxu0 0.0
    %248 = vmatpush2.msra.mxu0 0.0
    %249 = vmatprep.subr.mxu0 0.0
    %250 = vmatpush2.msra.mxu0 0.0
    %251 = vmatprep.subr.mxu0 0.0
    %252 = vmatpush2.msra.mxu0 0.0
    %253 = vmatprep.subr.mxu0 0.0
    %254 = vmatpush2.msra.mxu0 0.0
    %255 = vmatprep.subr.mxu0 0.0
    %256 = vmatpush2.msra.mxu0 0.0
    %257 = vmatprep.subr.mxu0 0.0
    %258 = vmatpush2.msra.mxu0 0.0
    %259 = vmatprep.subr.mxu0 0.0
    %260 = vmatpush2.msra.mxu0 0.0
    %261 = vmatprep.subr.mxu0 0.0
    %262 = vmatpush2.msra.mxu0 0.0
    %263 = vmatprep.subr.mxu0 0.0
    %264 = vmatpush2.msra.mxu0 0.0
    %265 = vmatprep.subr.mxu0 0.0
    %266 = vmatpush2.msra.mxu0 0.0
    %267 = vmatprep.subr.mxu0 0.0
    %268 = vmatpush2.msra.mxu0 0.0
    %269 = vmatprep.subr.mxu0 0.0
    %270 = vmatpush2.msra.mxu0 0.0
    %271 = vmatprep.subr.mxu0 0.0
    %272 = vmatpush2.msra.mxu0 0.0
    %273 = vmatprep.mubr.f32.mxu0 0.0
    %v274 = vand.u32 %v86, 4294901760
    %275 = vmatmul.mubr.f32.gmra.mxu0 %v274
    %v276 = vpop.f32.mrf.mxu0
    %v277 = vadd.f32 %v171, %v276
    %v278 = vpop.f32.mrf.mxu0
    %279 = vmatprep.mubr.f32.mxu0 0.0
    %v280 = vand.u32 %v88, 4294901760
    %281 = vmatmul.mubr.f32.gmra.mxu0 %v280
    %v282 = vpop.f32.mrf.mxu0
    %v283 = vadd.f32 %v181, %v282
    %v284 = vpop.f32.mrf.mxu0
    %285 = vmatprep.mubr.f32.mxu0 0.0
    %v286 = vand.u32 %v90, 4294901760
    %287 = vmatmul.mubr.f32.gmra.mxu0 %v286
    %v288 = vpop.f32.mrf.mxu0
    %v289 = vadd.f32 %v191, %v288
    %v290 = vpop.f32.mrf.mxu0
    %291 = vmatprep.mubr.f32.mxu0 0.0
    %v292 = vand.u32 %v92, 4294901760
    %293 = vmatmul.mubr.f32.gmra.mxu0 %v292
    %v294 = vpop.f32.mrf.mxu0
    %v295 = vadd.f32 %v201, %v294
    %v296 = vpop.f32.mrf.mxu0
    %297 = vdwg.mxu0
    %298 = vmatprep.subr.mxu0 0.0
    %299 = vmatpush1.msra.mxu0 0.0
    %300 = vmatprep.subr.mxu0 0.0
    %301 = vmatpush1.msra.mxu0 0.0
    %302 = vmatprep.subr.mxu0 0.0
    %303 = vmatpush1.msra.mxu0 0.0
    %304 = vmatprep.subr.mxu0 0.0
    %305 = vmatpush1.msra.mxu0 0.0
    %306 = vmatprep.subr.mxu0 0.0
    %307 = vmatpush1.msra.mxu0 0.0
    %308 = vmatprep.subr.mxu0 0.0
    %309 = vmatpush1.msra.mxu0 0.0
    %310 = vmatprep.subr.mxu0 0.0
    %311 = vmatpush1.msra.mxu0 0.0
    %312 = vmatprep.subr.mxu0 0.0
    %313 = vmatpush1.msra.mxu0 0.0
    %314 = vmatprep.subr.mxu0 0.0
    %315 = vmatpush1.msra.mxu0 0.0
    %316 = vmatprep.subr.mxu0 0.0
    %317 = vmatpush1.msra.mxu0 0.0
    %318 = vmatprep.subr.mxu0 0.0
    %319 = vmatpush1.msra.mxu0 0.0
    %320 = vmatprep.subr.mxu0 0.0
    %321 = vmatpush1.msra.mxu0 0.0
    %322 = vmatprep.subr.mxu0 0.0
    %323 = vmatpush1.msra.mxu0 0.0
    %324 = vmatprep.subr.mxu0 0.0
    %325 = vmatpush1.msra.mxu0 0.0
    %326 = vmatprep.subr.mxu0 0.0
    %327 = vmatpush1.msra.mxu0 0.0
    %328 = vmatprep.subr.mxu0 0.0
    %v329 = vand.u32 %v96, 4294901760
    %v330 = vsub.f32 %v96, %v329
    %331 = vmatpush1.msra.mxu0 %v330
    %332 = vmatprep.subr.mxu0 0.0
    %333 = vmatpush2.msra.mxu0 0.0
    %334 = vmatprep.subr.mxu0 0.0
    %335 = vmatpush2.msra.mxu0 0.0
    %336 = vmatprep.subr.mxu0 0.0
    %337 = vmatpush2.msra.mxu0 0.0
    %338 = vmatprep.subr.mxu0 0.0
    %339 = vmatpush2.msra.mxu0 0.0
    %340 = vmatprep.subr.mxu0 0.0
    %341 = vmatpush2.msra.mxu0 0.0
    %342 = vmatprep.subr.mxu0 0.0
    %343 = vmatpush2.msra.mxu0 0.0
    %344 = vmatprep.subr.mxu0 0.0
    %345 = vmatpush2.msra.mxu0 0.0
    %346 = vmatprep.subr.mxu0 0.0
    %347 = vmatpush2.msra.mxu0 0.0
    %348 = vmatprep.subr.mxu0 0.0
    %349 = vmatpush2.msra.mxu0 0.0
    %350 = vmatprep.subr.mxu0 0.0
    %351 = vmatpush2.msra.mxu0 0.0
    %352 = vmatprep.subr.mxu0 0.0
    %353 = vmatpush2.msra.mxu0 0.0
    %354 = vmatprep.subr.mxu0 0.0
    %355 = vmatpush2.msra.mxu0 0.0
    %356 = vmatprep.subr.mxu0 0.0
    %357 = vmatpush2.msra.mxu0 0.0
    %358 = vmatprep.subr.mxu0 0.0
    %359 = vmatpush2.msra.mxu0 0.0
    %360 = vmatprep.subr.mxu0 0.0
    %361 = vmatpush2.msra.mxu0 0.0
    %362 = vmatprep.subr.mxu0 0.0
    %363 = vmatpush2.msra.mxu0 0.0
    %364 = vmatprep.mubr.f32.mxu0 0.0
    %v365 = vand.u32 %v86, 4294901760
    %v366 = vsub.f32 %v86, %v365
    %367 = vmatmul.mubr.f32.gmra.mxu0 %v366
    %v368 = vpop.f32.mrf.mxu0
    %v369 = vadd.f32 %v277, %v368
    %v370 = vpop.f32.mrf.mxu0
    %371 = vmatprep.mubr.f32.mxu0 0.0
    %v372 = vand.u32 %v88, 4294901760
    %v373 = vsub.f32 %v88, %v372
    %374 = vmatmul.mubr.f32.gmra.mxu0 %v373
    %v375 = vpop.f32.mrf.mxu0
    %v376 = vadd.f32 %v283, %v375
    %v377 = vpop.f32.mrf.mxu0
    %378 = vmatprep.mubr.f32.mxu0 0.0
    %v379 = vand.u32 %v90, 4294901760
    %v380 = vsub.f32 %v90, %v379
    %381 = vmatmul.mubr.f32.gmra.mxu0 %v380
    %v382 = vpop.f32.mrf.mxu0
    %v383 = vadd.f32 %v289, %v382
    %v384 = vpop.f32.mrf.mxu0
    %385 = vmatprep.mubr.f32.mxu0 0.0
    %v386 = vand.u32 %v92, 4294901760
    %v387 = vsub.f32 %v92, %v386
    %388 = vmatmul.mubr.f32.gmra.mxu0 %v387
    %v389 = vpop.f32.mrf.mxu0
    %v390 = vadd.f32 %v295, %v389
    %v391 = vpop.f32.mrf.mxu0
    %392 = vdwg.mxu0
    %393 = vmatprep.subr.mxu0 0.0
    %394 = vmatpush1.msra.mxu0 0.0
    %395 = vmatprep.subr.mxu0 0.0
    %396 = vmatpush1.msra.mxu0 0.0
    %397 = vmatprep.subr.mxu0 0.0
    %398 = vmatpush1.msra.mxu0 0.0
    %399 = vmatprep.subr.mxu0 0.0
    %400 = vmatpush1.msra.mxu0 0.0
    %401 = vmatprep.subr.mxu0 0.0
    %402 = vmatpush1.msra.mxu0 0.0
    %403 = vmatprep.subr.mxu0 0.0
    %404 = vmatpush1.msra.mxu0 0.0
    %405 = vmatprep.subr.mxu0 0.0
    %406 = vmatpush1.msra.mxu0 0.0
    %407 = vmatprep.subr.mxu0 0.0
    %408 = vmatpush1.msra.mxu0 0.0
    %409 = vmatprep.subr.mxu0 0.0
    %410 = vmatpush1.msra.mxu0 0.0
    %411 = vmatprep.subr.mxu0 0.0
    %412 = vmatpush1.msra.mxu0 0.0
    %413 = vmatprep.subr.mxu0 0.0
    %414 = vmatpush1.msra.mxu0 0.0
    %415 = vmatprep.subr.mxu0 0.0
    %416 = vmatpush1.msra.mxu0 0.0
    %417 = vmatprep.subr.mxu0 0.0
    %418 = vmatpush1.msra.mxu0 0.0
    %419 = vmatprep.subr.mxu0 0.0
    %420 = vmatpush1.msra.mxu0 0.0
    %421 = vmatprep.subr.mxu0 0.0
    %422 = vmatpush1.msra.mxu0 0.0
    %423 = vmatprep.subr.mxu0 0.0
    %v424 = vand.u32 %v96, 4294901760
    %425 = vmatpush1.msra.mxu0 %v424
    %426 = vmatprep.subr.mxu0 0.0
    %427 = vmatpush2.msra.mxu0 0.0
    %428 = vmatprep.subr.mxu0 0.0
    %429 = vmatpush2.msra.mxu0 0.0
    %430 = vmatprep.subr.mxu0 0.0
    %431 = vmatpush2.msra.mxu0 0.0
    %432 = vmatprep.subr.mxu0 0.0
    %433 = vmatpush2.msra.mxu0 0.0
    %434 = vmatprep.subr.mxu0 0.0
    %435 = vmatpush2.msra.mxu0 0.0
    %436 = vmatprep.subr.mxu0 0.0
    %437 = vmatpush2.msra.mxu0 0.0
    %438 = vmatprep.subr.mxu0 0.0
    %439 = vmatpush2.msra.mxu0 0.0
    %440 = vmatprep.subr.mxu0 0.0
    %441 = vmatpush2.msra.mxu0 0.0
    %442 = vmatprep.subr.mxu0 0.0
    %443 = vmatpush2.msra.mxu0 0.0
    %444 = vmatprep.subr.mxu0 0.0
    %445 = vmatpush2.msra.mxu0 0.0
    %446 = vmatprep.subr.mxu0 0.0
    %447 = vmatpush2.msra.mxu0 0.0
    %448 = vmatprep.subr.mxu0 0.0
    %449 = vmatpush2.msra.mxu0 0.0
    %450 = vmatprep.subr.mxu0 0.0
    %451 = vmatpush2.msra.mxu0 0.0
    %452 = vmatprep.subr.mxu0 0.0
    %453 = vmatpush2.msra.mxu0 0.0
    %454 = vmatprep.subr.mxu0 0.0
    %455 = vmatpush2.msra.mxu0 0.0
    %456 = vmatprep.subr.mxu0 0.0
    %457 = vmatpush2.msra.mxu0 0.0
    %458 = vmatprep.mubr.f32.mxu0 0.0
    %v459 = vand.u32 %v86, 4294901760
    %v460 = vsub.f32 %v86, %v459
    %v461 = vand.u32 %v460, 4294901760
    %462 = vmatmul.mubr.f32.gmra.mxu0 %v461
    %v463 = vpop.f32.mrf.mxu0
    %v464 = vadd.f32 %v369, %v463
    %v465 = vpop.f32.mrf.mxu0
    %466 = vmatprep.mubr.f32.mxu0 0.0
    %v467 = vand.u32 %v88, 4294901760
    %v468 = vsub.f32 %v88, %v467
    %v469 = vand.u32 %v468, 4294901760
    %470 = vmatmul.mubr.f32.gmra.mxu0 %v469
    %v471 = vpop.f32.mrf.mxu0
    %v472 = vadd.f32 %v376, %v471
    %v473 = vpop.f32.mrf.mxu0
    %474 = vmatprep.mubr.f32.mxu0 0.0
    %v475 = vand.u32 %v90, 4294901760
    %v476 = vsub.f32 %v90, %v475
    %v477 = vand.u32 %v476, 4294901760
    %478 = vmatmul.mubr.f32.gmra.mxu0 %v477
    %v479 = vpop.f32.mrf.mxu0
    %v480 = vadd.f32 %v383, %v479
    %v481 = vpop.f32.mrf.mxu0
    %482 = vmatprep.mubr.f32.mxu0 0.0
    %v483 = vand.u32 %v92, 4294901760
    %v484 = vsub.f32 %v92, %v483
    %v485 = vand.u32 %v484, 4294901760
    %486 = vmatmul.mubr.f32.gmra.mxu0 %v485
    %v487 = vpop.f32.mrf.mxu0
    %v488 = vadd.f32 %v390, %v487
    %v489 = vpop.f32.mrf.mxu0
    %490 = vdwg.mxu0
    %491 = vmatprep.subr.mxu0 0.0
    %492 = vmatpush1.msra.mxu0 0.0
    %493 = vmatprep.subr.mxu0 0.0
    %494 = vmatpush1.msra.mxu0 0.0
    %495 = vmatprep.subr.mxu0 0.0
    %496 = vmatpush1.msra.mxu0 0.0
    %497 = vmatprep.subr.mxu0 0.0
    %498 = vmatpush1.msra.mxu0 0.0
    %499 = vmatprep.subr.mxu0 0.0
    %500 = vmatpush1.msra.mxu0 0.0
    %501 = vmatprep.subr.mxu0 0.0
    %502 = vmatpush1.msra.mxu0 0.0
    %503 = vmatprep.subr.mxu0 0.0
    %504 = vmatpush1.msra.mxu0 0.0
    %505 = vmatprep.subr.mxu0 0.0
    %506 = vmatpush1.msra.mxu0 0.0
    %507 = vmatprep.subr.mxu0 0.0
    %508 = vmatpush1.msra.mxu0 0.0
    %509 = vmatprep.subr.mxu0 0.0
    %510 = vmatpush1.msra.mxu0 0.0
    %511 = vmatprep.subr.mxu0 0.0
    %512 = vmatpush1.msra.mxu0 0.0
    %513 = vmatprep.subr.mxu0 0.0
    %514 = vmatpush1.msra.mxu0 0.0
    %515 = vmatprep.subr.mxu0 0.0
    %516 = vmatpush1.msra.mxu0 0.0
    %517 = vmatprep.subr.mxu0 0.0
    %518 = vmatpush1.msra.mxu0 0.0
    %519 = vmatprep.subr.mxu0 0.0
    %520 = vmatpush1.msra.mxu0 0.0
    %521 = vmatprep.subr.mxu0 0.0
    %v522 = vand.u32 %v96, 4294901760
    %v523 = vsub.f32 %v96, %v522
    %v524 = vand.u32 %v523, 4294901760
    %525 = vmatpush1.msra.mxu0 %v524
    %526 = vmatprep.subr.mxu0 0.0
    %527 = vmatpush2.msra.mxu0 0.0
    %528 = vmatprep.subr.mxu0 0.0
    %529 = vmatpush2.msra.mxu0 0.0
    %530 = vmatprep.subr.mxu0 0.0
    %531 = vmatpush2.msra.mxu0 0.0
    %532 = vmatprep.subr.mxu0 0.0
    %533 = vmatpush2.msra.mxu0 0.0
    %534 = vmatprep.subr.mxu0 0.0
    %535 = vmatpush2.msra.mxu0 0.0
    %536 = vmatprep.subr.mxu0 0.0
    %537 = vmatpush2.msra.mxu0 0.0
    %538 = vmatprep.subr.mxu0 0.0
    %539 = vmatpush2.msra.mxu0 0.0
    %540 = vmatprep.subr.mxu0 0.0
    %541 = vmatpush2.msra.mxu0 0.0
    %542 = vmatprep.subr.mxu0 0.0
    %543 = vmatpush2.msra.mxu0 0.0
    %544 = vmatprep.subr.mxu0 0.0
    %545 = vmatpush2.msra.mxu0 0.0
    %546 = vmatprep.subr.mxu0 0.0
    %547 = vmatpush2.msra.mxu0 0.0
    %548 = vmatprep.subr.mxu0 0.0
    %549 = vmatpush2.msra.mxu0 0.0
    %550 = vmatprep.subr.mxu0 0.0
    %551 = vmatpush2.msra.mxu0 0.0
    %552 = vmatprep.subr.mxu0 0.0
    %553 = vmatpush2.msra.mxu0 0.0
    %554 = vmatprep.subr.mxu0 0.0
    %555 = vmatpush2.msra.mxu0 0.0
    %556 = vmatprep.subr.mxu0 0.0
    %557 = vmatpush2.msra.mxu0 0.0
    %558 = vmatprep.mubr.f32.mxu0 0.0
    %v559 = vand.u32 %v86, 4294901760
    %560 = vmatmul.mubr.f32.gmra.mxu0 %v559
    %v561 = vpop.f32.mrf.mxu0
    %v562 = vadd.f32 %v464, %v561
    %v563 = vpop.f32.mrf.mxu0
    %564 = vmatprep.mubr.f32.mxu0 0.0
    %v565 = vand.u32 %v88, 4294901760
    %566 = vmatmul.mubr.f32.gmra.mxu0 %v565
    %v567 = vpop.f32.mrf.mxu0
    %v568 = vadd.f32 %v472, %v567
    %v569 = vpop.f32.mrf.mxu0
    %570 = vmatprep.mubr.f32.mxu0 0.0
    %v571 = vand.u32 %v90, 4294901760
    %572 = vmatmul.mubr.f32.gmra.mxu0 %v571
    %v573 = vpop.f32.mrf.mxu0
    %v574 = vadd.f32 %v480, %v573
    %v575 = vpop.f32.mrf.mxu0
    %576 = vmatprep.mubr.f32.mxu0 0.0
    %v577 = vand.u32 %v92, 4294901760
    %578 = vmatmul.mubr.f32.gmra.mxu0 %v577
    %v579 = vpop.f32.mrf.mxu0
    %v580 = vadd.f32 %v488, %v579
    %v581 = vpop.f32.mrf.mxu0
    %582 = vdwg.mxu0
    %583 = vmatprep.subr.mxu0 0.0
    %584 = vmatpush1.msra.mxu0 0.0
    %585 = vmatprep.subr.mxu0 0.0
    %586 = vmatpush1.msra.mxu0 0.0
    %587 = vmatprep.subr.mxu0 0.0
    %588 = vmatpush1.msra.mxu0 0.0
    %589 = vmatprep.subr.mxu0 0.0
    %590 = vmatpush1.msra.mxu0 0.0
    %591 = vmatprep.subr.mxu0 0.0
    %592 = vmatpush1.msra.mxu0 0.0
    %593 = vmatprep.subr.mxu0 0.0
    %594 = vmatpush1.msra.mxu0 0.0
    %595 = vmatprep.subr.mxu0 0.0
    %596 = vmatpush1.msra.mxu0 0.0
    %597 = vmatprep.subr.mxu0 0.0
    %598 = vmatpush1.msra.mxu0 0.0
    %599 = vmatprep.subr.mxu0 0.0
    %600 = vmatpush1.msra.mxu0 0.0
    %601 = vmatprep.subr.mxu0 0.0
    %602 = vmatpush1.msra.mxu0 0.0
    %603 = vmatprep.subr.mxu0 0.0
    %604 = vmatpush1.msra.mxu0 0.0
    %605 = vmatprep.subr.mxu0 0.0
    %606 = vmatpush1.msra.mxu0 0.0
    %607 = vmatprep.subr.mxu0 0.0
    %608 = vmatpush1.msra.mxu0 0.0
    %609 = vmatprep.subr.mxu0 0.0
    %610 = vmatpush1.msra.mxu0 0.0
    %611 = vmatprep.subr.mxu0 0.0
    %612 = vmatpush1.msra.mxu0 0.0
    %613 = vmatprep.subr.mxu0 0.0
    %v614 = vand.u32 %v96, 4294901760
    %615 = vmatpush1.msra.mxu0 %v614
    %616 = vmatprep.subr.mxu0 0.0
    %617 = vmatpush2.msra.mxu0 0.0
    %618 = vmatprep.subr.mxu0 0.0
    %619 = vmatpush2.msra.mxu0 0.0
    %620 = vmatprep.subr.mxu0 0.0
    %621 = vmatpush2.msra.mxu0 0.0
    %622 = vmatprep.subr.mxu0 0.0
    %623 = vmatpush2.msra.mxu0 0.0
    %624 = vmatprep.subr.mxu0 0.0
    %625 = vmatpush2.msra.mxu0 0.0
    %626 = vmatprep.subr.mxu0 0.0
    %627 = vmatpush2.msra.mxu0 0.0
    %628 = vmatprep.subr.mxu0 0.0
    %629 = vmatpush2.msra.mxu0 0.0
    %630 = vmatprep.subr.mxu0 0.0
    %631 = vmatpush2.msra.mxu0 0.0
    %632 = vmatprep.subr.mxu0 0.0
    %633 = vmatpush2.msra.mxu0 0.0
    %634 = vmatprep.subr.mxu0 0.0
    %635 = vmatpush2.msra.mxu0 0.0
    %636 = vmatprep.subr.mxu0 0.0
    %637 = vmatpush2.msra.mxu0 0.0
    %638 = vmatprep.subr.mxu0 0.0
    %639 = vmatpush2.msra.mxu0 0.0
    %640 = vmatprep.subr.mxu0 0.0
    %641 = vmatpush2.msra.mxu0 0.0
    %642 = vmatprep.subr.mxu0 0.0
    %643 = vmatpush2.msra.mxu0 0.0
    %644 = vmatprep.subr.mxu0 0.0
    %645 = vmatpush2.msra.mxu0 0.0
    %646 = vmatprep.subr.mxu0 0.0
    %647 = vmatpush2.msra.mxu0 0.0
    %648 = vmatprep.mubr.f32.mxu0 0.0
    %v649 = vand.u32 %v86, 4294901760
    %650 = vmatmul.mubr.f32.gmra.mxu0 %v649
    %v651 = vpop.f32.mrf.mxu0
    %v652 = vadd.f32 %v562, %v651
    %v653 = vpop.f32.mrf.mxu0
    %654 = vmatprep.mubr.f32.mxu0 0.0
    %v655 = vand.u32 %v88, 4294901760
    %656 = vmatmul.mubr.f32.gmra.mxu0 %v655
    %v657 = vpop.f32.mrf.mxu0
    %v658 = vadd.f32 %v568, %v657
    %v659 = vpop.f32.mrf.mxu0
    %660 = vmatprep.mubr.f32.mxu0 0.0
    %v661 = vand.u32 %v90, 4294901760
    %662 = vmatmul.mubr.f32.gmra.mxu0 %v661
    %v663 = vpop.f32.mrf.mxu0
    %v664 = vadd.f32 %v574, %v663
    %v665 = vpop.f32.mrf.mxu0
    %666 = vmatprep.mubr.f32.mxu0 0.0
    %v667 = vand.u32 %v92, 4294901760
    %668 = vmatmul.mubr.f32.gmra.mxu0 %v667
    %v669 = vpop.f32.mrf.mxu0
    %v670 = vadd.f32 %v580, %v669
    %v671 = vpop.f32.mrf.mxu0
    %672 = vdwg.mxu0
    %v673 = vsel %vm85, %v63, 0
    %v675 = vsel %vm85, %v55, 0
    %v677 = vsel %vm85, %v64, 0
    %v679 = vsel %vm85, %v58, 0
    %v682 = vsel %vm94, %v67, 0
    %684 = vmatprep.subr.mxu0 0.0
    %685 = vmatpush1.msra.mxu0 0.0
    %686 = vmatprep.subr.mxu0 0.0
    %687 = vmatpush1.msra.mxu0 0.0
    %688 = vmatprep.subr.mxu0 0.0
    %689 = vmatpush1.msra.mxu0 0.0
    %690 = vmatprep.subr.mxu0 0.0
    %691 = vmatpush1.msra.mxu0 0.0
    %692 = vmatprep.subr.mxu0 0.0
    %693 = vmatpush1.msra.mxu0 0.0
    %694 = vmatprep.subr.mxu0 0.0
    %695 = vmatpush1.msra.mxu0 0.0
    %696 = vmatprep.subr.mxu0 0.0
    %697 = vmatpush1.msra.mxu0 0.0
    %698 = vmatprep.subr.mxu0 0.0
    %699 = vmatpush1.msra.mxu0 0.0
    %700 = vmatprep.subr.mxu0 0.0
    %701 = vmatpush1.msra.mxu0 0.0
    %702 = vmatprep.subr.mxu0 0.0
    %703 = vmatpush1.msra.mxu0 0.0
    %704 = vmatprep.subr.mxu0 0.0
    %705 = vmatpush1.msra.mxu0 0.0
    %706 = vmatprep.subr.mxu0 0.0
    %707 = vmatpush1.msra.mxu0 0.0
    %708 = vmatprep.subr.mxu0 0.0
    %709 = vmatpush1.msra.mxu0 0.0
    %710 = vmatprep.subr.mxu0 0.0
    %711 = vmatpush1.msra.mxu0 0.0
    %712 = vmatprep.subr.mxu0 0.0
    %713 = vmatpush1.msra.mxu0 0.0
    %714 = vmatprep.subr.mxu0 0.0
    %v715 = vand.u32 %v682, 4294901760
    %716 = vmatpush1.msra.mxu0 %v715
    %717 = vmatprep.subr.mxu0 0.0
    %718 = vmatpush2.msra.mxu0 0.0
    %719 = vmatprep.subr.mxu0 0.0
    %720 = vmatpush2.msra.mxu0 0.0
    %721 = vmatprep.subr.mxu0 0.0
    %722 = vmatpush2.msra.mxu0 0.0
    %723 = vmatprep.subr.mxu0 0.0
    %724 = vmatpush2.msra.mxu0 0.0
    %725 = vmatprep.subr.mxu0 0.0
    %726 = vmatpush2.msra.mxu0 0.0
    %727 = vmatprep.subr.mxu0 0.0
    %728 = vmatpush2.msra.mxu0 0.0
    %729 = vmatprep.subr.mxu0 0.0
    %730 = vmatpush2.msra.mxu0 0.0
    %731 = vmatprep.subr.mxu0 0.0
    %732 = vmatpush2.msra.mxu0 0.0
    %733 = vmatprep.subr.mxu0 0.0
    %734 = vmatpush2.msra.mxu0 0.0
    %735 = vmatprep.subr.mxu0 0.0
    %736 = vmatpush2.msra.mxu0 0.0
    %737 = vmatprep.subr.mxu0 0.0
    %738 = vmatpush2.msra.mxu0 0.0
    %739 = vmatprep.subr.mxu0 0.0
    %740 = vmatpush2.msra.mxu0 0.0
    %741 = vmatprep.subr.mxu0 0.0
    %742 = vmatpush2.msra.mxu0 0.0
    %743 = vmatprep.subr.mxu0 0.0
    %744 = vmatpush2.msra.mxu0 0.0
    %745 = vmatprep.subr.mxu0 0.0
    %746 = vmatpush2.msra.mxu0 0.0
    %747 = vmatprep.subr.mxu0 0.0
    %748 = vmatpush2.msra.mxu0 0.0
    %749 = vmatprep.mubr.f32.mxu0 0.0
    %v750 = vand.u32 %v673, 4294901760
    %v751 = vsub.f32 %v673, %v750
    %v752 = vand.u32 %v751, 4294901760
    %v753 = vsub.f32 %v751, %v752
    %v754 = vand.u32 %v753, 4294901760
    %755 = vmatmul.mubr.f32.gmra.mxu0 %v754
    %v756 = vpop.f32.mrf.mxu0
    %v757 = vadd.f32 %v652, %v756
    %v758 = vpop.f32.mrf.mxu0
    %759 = vmatprep.mubr.f32.mxu0 0.0
    %v760 = vand.u32 %v675, 4294901760
    %v761 = vsub.f32 %v675, %v760
    %v762 = vand.u32 %v761, 4294901760
    %v763 = vsub.f32 %v761, %v762
    %v764 = vand.u32 %v763, 4294901760
    %765 = vmatmul.mubr.f32.gmra.mxu0 %v764
    %v766 = vpop.f32.mrf.mxu0
    %v767 = vadd.f32 %v658, %v766
    %v768 = vpop.f32.mrf.mxu0
    %769 = vmatprep.mubr.f32.mxu0 0.0
    %v770 = vand.u32 %v677, 4294901760
    %v771 = vsub.f32 %v677, %v770
    %v772 = vand.u32 %v771, 4294901760
    %v773 = vsub.f32 %v771, %v772
    %v774 = vand.u32 %v773, 4294901760
    %775 = vmatmul.mubr.f32.gmra.mxu0 %v774
    %v776 = vpop.f32.mrf.mxu0
    %v777 = vadd.f32 %v664, %v776
    %v778 = vpop.f32.mrf.mxu0
    %779 = vmatprep.mubr.f32.mxu0 0.0
    %v780 = vand.u32 %v679, 4294901760
    %v781 = vsub.f32 %v679, %v780
    %v782 = vand.u32 %v781, 4294901760
    %v783 = vsub.f32 %v781, %v782
    %v784 = vand.u32 %v783, 4294901760
    %785 = vmatmul.mubr.f32.gmra.mxu0 %v784
    %v786 = vpop.f32.mrf.mxu0
    %v787 = vadd.f32 %v670, %v786
    %v788 = vpop.f32.mrf.mxu0
    %789 = vdwg.mxu0
    %790 = vmatprep.subr.mxu0 0.0
    %791 = vmatpush1.msra.mxu0 0.0
    %792 = vmatprep.subr.mxu0 0.0
    %793 = vmatpush1.msra.mxu0 0.0
    %794 = vmatprep.subr.mxu0 0.0
    %795 = vmatpush1.msra.mxu0 0.0
    %796 = vmatprep.subr.mxu0 0.0
    %797 = vmatpush1.msra.mxu0 0.0
    %798 = vmatprep.subr.mxu0 0.0
    %799 = vmatpush1.msra.mxu0 0.0
    %800 = vmatprep.subr.mxu0 0.0
    %801 = vmatpush1.msra.mxu0 0.0
    %802 = vmatprep.subr.mxu0 0.0
    %803 = vmatpush1.msra.mxu0 0.0
    %804 = vmatprep.subr.mxu0 0.0
    %805 = vmatpush1.msra.mxu0 0.0
    %806 = vmatprep.subr.mxu0 0.0
    %807 = vmatpush1.msra.mxu0 0.0
    %808 = vmatprep.subr.mxu0 0.0
    %809 = vmatpush1.msra.mxu0 0.0
    %810 = vmatprep.subr.mxu0 0.0
    %811 = vmatpush1.msra.mxu0 0.0
    %812 = vmatprep.subr.mxu0 0.0
    %813 = vmatpush1.msra.mxu0 0.0
    %814 = vmatprep.subr.mxu0 0.0
    %815 = vmatpush1.msra.mxu0 0.0
    %816 = vmatprep.subr.mxu0 0.0
    %817 = vmatpush1.msra.mxu0 0.0
    %818 = vmatprep.subr.mxu0 0.0
    %819 = vmatpush1.msra.mxu0 0.0
    %820 = vmatprep.subr.mxu0 0.0
    %v821 = vand.u32 %v682, 4294901760
    %v822 = vsub.f32 %v682, %v821
    %v823 = vand.u32 %v822, 4294901760
    %v824 = vsub.f32 %v822, %v823
    %v825 = vand.u32 %v824, 4294901760
    %826 = vmatpush1.msra.mxu0 %v825
    %827 = vmatprep.subr.mxu0 0.0
    %828 = vmatpush2.msra.mxu0 0.0
    %829 = vmatprep.subr.mxu0 0.0
    %830 = vmatpush2.msra.mxu0 0.0
    %831 = vmatprep.subr.mxu0 0.0
    %832 = vmatpush2.msra.mxu0 0.0
    %833 = vmatprep.subr.mxu0 0.0
    %834 = vmatpush2.msra.mxu0 0.0
    %835 = vmatprep.subr.mxu0 0.0
    %836 = vmatpush2.msra.mxu0 0.0
    %837 = vmatprep.subr.mxu0 0.0
    %838 = vmatpush2.msra.mxu0 0.0
    %839 = vmatprep.subr.mxu0 0.0
    %840 = vmatpush2.msra.mxu0 0.0
    %841 = vmatprep.subr.mxu0 0.0
    %842 = vmatpush2.msra.mxu0 0.0
    %843 = vmatprep.subr.mxu0 0.0
    %844 = vmatpush2.msra.mxu0 0.0
    %845 = vmatprep.subr.mxu0 0.0
    %846 = vmatpush2.msra.mxu0 0.0
    %847 = vmatprep.subr.mxu0 0.0
    %848 = vmatpush2.msra.mxu0 0.0
    %849 = vmatprep.subr.mxu0 0.0
    %850 = vmatpush2.msra.mxu0 0.0
    %851 = vmatprep.subr.mxu0 0.0
    %852 = vmatpush2.msra.mxu0 0.0
    %853 = vmatprep.subr.mxu0 0.0
    %854 = vmatpush2.msra.mxu0 0.0
    %855 = vmatprep.subr.mxu0 0.0
    %856 = vmatpush2.msra.mxu0 0.0
    %857 = vmatprep.subr.mxu0 0.0
    %858 = vmatpush2.msra.mxu0 0.0
    %859 = vmatprep.mubr.f32.mxu0 0.0
    %v860 = vand.u32 %v673, 4294901760
    %861 = vmatmul.mubr.f32.gmra.mxu0 %v860
    %v862 = vpop.f32.mrf.mxu0
    %v863 = vadd.f32 %v757, %v862
    %v864 = vpop.f32.mrf.mxu0
    %865 = vmatprep.mubr.f32.mxu0 0.0
    %v866 = vand.u32 %v675, 4294901760
    %867 = vmatmul.mubr.f32.gmra.mxu0 %v866
    %v868 = vpop.f32.mrf.mxu0
    %v869 = vadd.f32 %v767, %v868
    %v870 = vpop.f32.mrf.mxu0
    %871 = vmatprep.mubr.f32.mxu0 0.0
    %v872 = vand.u32 %v677, 4294901760
    %873 = vmatmul.mubr.f32.gmra.mxu0 %v872
    %v874 = vpop.f32.mrf.mxu0
    %v875 = vadd.f32 %v777, %v874
    %v876 = vpop.f32.mrf.mxu0
    %877 = vmatprep.mubr.f32.mxu0 0.0
    %v878 = vand.u32 %v679, 4294901760
    %879 = vmatmul.mubr.f32.gmra.mxu0 %v878
    %v880 = vpop.f32.mrf.mxu0
    %v881 = vadd.f32 %v787, %v880
    %v882 = vpop.f32.mrf.mxu0
    %883 = vdwg.mxu0
    %884 = vmatprep.subr.mxu0 0.0
    %885 = vmatpush1.msra.mxu0 0.0
    %886 = vmatprep.subr.mxu0 0.0
    %887 = vmatpush1.msra.mxu0 0.0
    %888 = vmatprep.subr.mxu0 0.0
    %889 = vmatpush1.msra.mxu0 0.0
    %890 = vmatprep.subr.mxu0 0.0
    %891 = vmatpush1.msra.mxu0 0.0
    %892 = vmatprep.subr.mxu0 0.0
    %893 = vmatpush1.msra.mxu0 0.0
    %894 = vmatprep.subr.mxu0 0.0
    %895 = vmatpush1.msra.mxu0 0.0
    %896 = vmatprep.subr.mxu0 0.0
    %897 = vmatpush1.msra.mxu0 0.0
    %898 = vmatprep.subr.mxu0 0.0
    %899 = vmatpush1.msra.mxu0 0.0
    %900 = vmatprep.subr.mxu0 0.0
    %901 = vmatpush1.msra.mxu0 0.0
    %902 = vmatprep.subr.mxu0 0.0
    %903 = vmatpush1.msra.mxu0 0.0
    %904 = vmatprep.subr.mxu0 0.0
    %905 = vmatpush1.msra.mxu0 0.0
    %906 = vmatprep.subr.mxu0 0.0
    %907 = vmatpush1.msra.mxu0 0.0
    %908 = vmatprep.subr.mxu0 0.0
    %909 = vmatpush1.msra.mxu0 0.0
    %910 = vmatprep.subr.mxu0 0.0
    %911 = vmatpush1.msra.mxu0 0.0
    %912 = vmatprep.subr.mxu0 0.0
    %913 = vmatpush1.msra.mxu0 0.0
    %914 = vmatprep.subr.mxu0 0.0
    %v915 = vand.u32 %v682, 4294901760
    %v916 = vsub.f32 %v682, %v915
    %917 = vmatpush1.msra.mxu0 %v916
    %918 = vmatprep.subr.mxu0 0.0
    %919 = vmatpush2.msra.mxu0 0.0
    %920 = vmatprep.subr.mxu0 0.0
    %921 = vmatpush2.msra.mxu0 0.0
    %922 = vmatprep.subr.mxu0 0.0
    %923 = vmatpush2.msra.mxu0 0.0
    %924 = vmatprep.subr.mxu0 0.0
    %925 = vmatpush2.msra.mxu0 0.0
    %926 = vmatprep.subr.mxu0 0.0
    %927 = vmatpush2.msra.mxu0 0.0
    %928 = vmatprep.subr.mxu0 0.0
    %929 = vmatpush2.msra.mxu0 0.0
    %930 = vmatprep.subr.mxu0 0.0
    %931 = vmatpush2.msra.mxu0 0.0
    %932 = vmatprep.subr.mxu0 0.0
    %933 = vmatpush2.msra.mxu0 0.0
    %934 = vmatprep.subr.mxu0 0.0
    %935 = vmatpush2.msra.mxu0 0.0
    %936 = vmatprep.subr.mxu0 0.0
    %937 = vmatpush2.msra.mxu0 0.0
    %938 = vmatprep.subr.mxu0 0.0
    %939 = vmatpush2.msra.mxu0 0.0
    %940 = vmatprep.subr.mxu0 0.0
    %941 = vmatpush2.msra.mxu0 0.0
    %942 = vmatprep.subr.mxu0 0.0
    %943 = vmatpush2.msra.mxu0 0.0
    %944 = vmatprep.subr.mxu0 0.0
    %945 = vmatpush2.msra.mxu0 0.0
    %946 = vmatprep.subr.mxu0 0.0
    %947 = vmatpush2.msra.mxu0 0.0
    %948 = vmatprep.subr.mxu0 0.0
    %949 = vmatpush2.msra.mxu0 0.0
    %950 = vmatprep.mubr.f32.mxu0 0.0
    %v951 = vand.u32 %v673, 4294901760
    %v952 = vsub.f32 %v673, %v951
    %953 = vmatmul.mubr.f32.gmra.mxu0 %v952
    %v954 = vpop.f32.mrf.mxu0
    %v955 = vadd.f32 %v863, %v954
    %v956 = vpop.f32.mrf.mxu0
    %957 = vmatprep.mubr.f32.mxu0 0.0
    %v958 = vand.u32 %v675, 4294901760
    %v959 = vsub.f32 %v675, %v958
    %960 = vmatmul.mubr.f32.gmra.mxu0 %v959
    %v961 = vpop.f32.mrf.mxu0
    %v962 = vadd.f32 %v869, %v961
    %v963 = vpop.f32.mrf.mxu0
    %964 = vmatprep.mubr.f32.mxu0 0.0
    %v965 = vand.u32 %v677, 4294901760
    %v966 = vsub.f32 %v677, %v965
    %967 = vmatmul.mubr.f32.gmra.mxu0 %v966
    %v968 = vpop.f32.mrf.mxu0
    %v969 = vadd.f32 %v875, %v968
    %v970 = vpop.f32.mrf.mxu0
    %971 = vmatprep.mubr.f32.mxu0 0.0
    %v972 = vand.u32 %v679, 4294901760
    %v973 = vsub.f32 %v679, %v972
    %974 = vmatmul.mubr.f32.gmra.mxu0 %v973
    %v975 = vpop.f32.mrf.mxu0
    %v976 = vadd.f32 %v881, %v975
    %v977 = vpop.f32.mrf.mxu0
    %978 = vdwg.mxu0
    %979 = vmatprep.subr.mxu0 0.0
    %980 = vmatpush1.msra.mxu0 0.0
    %981 = vmatprep.subr.mxu0 0.0
    %982 = vmatpush1.msra.mxu0 0.0
    %983 = vmatprep.subr.mxu0 0.0
    %984 = vmatpush1.msra.mxu0 0.0
    %985 = vmatprep.subr.mxu0 0.0
    %986 = vmatpush1.msra.mxu0 0.0
    %987 = vmatprep.subr.mxu0 0.0
    %988 = vmatpush1.msra.mxu0 0.0
    %989 = vmatprep.subr.mxu0 0.0
    %990 = vmatpush1.msra.mxu0 0.0
    %991 = vmatprep.subr.mxu0 0.0
    %992 = vmatpush1.msra.mxu0 0.0
    %993 = vmatprep.subr.mxu0 0.0
    %994 = vmatpush1.msra.mxu0 0.0
    %995 = vmatprep.subr.mxu0 0.0
    %996 = vmatpush1.msra.mxu0 0.0
    %997 = vmatprep.subr.mxu0 0.0
    %998 = vmatpush1.msra.mxu0 0.0
    %999 = vmatprep.subr.mxu0 0.0
    %1000 = vmatpush1.msra.mxu0 0.0
    %1001 = vmatprep.subr.mxu0 0.0
    %1002 = vmatpush1.msra.mxu0 0.0
    %1003 = vmatprep.subr.mxu0 0.0
    %1004 = vmatpush1.msra.mxu0 0.0
    %1005 = vmatprep.subr.mxu0 0.0
    %1006 = vmatpush1.msra.mxu0 0.0
    %1007 = vmatprep.subr.mxu0 0.0
    %1008 = vmatpush1.msra.mxu0 0.0
    %1009 = vmatprep.subr.mxu0 0.0
    %v1010 = vand.u32 %v682, 4294901760
    %1011 = vmatpush1.msra.mxu0 %v1010
    %1012 = vmatprep.subr.mxu0 0.0
    %1013 = vmatpush2.msra.mxu0 0.0
    %1014 = vmatprep.subr.mxu0 0.0
    %1015 = vmatpush2.msra.mxu0 0.0
    %1016 = vmatprep.subr.mxu0 0.0
    %1017 = vmatpush2.msra.mxu0 0.0
    %1018 = vmatprep.subr.mxu0 0.0
    %1019 = vmatpush2.msra.mxu0 0.0
    %1020 = vmatprep.subr.mxu0 0.0
    %1021 = vmatpush2.msra.mxu0 0.0
    %1022 = vmatprep.subr.mxu0 0.0
    %1023 = vmatpush2.msra.mxu0 0.0
    %1024 = vmatprep.subr.mxu0 0.0
    %1025 = vmatpush2.msra.mxu0 0.0
    %1026 = vmatprep.subr.mxu0 0.0
    %1027 = vmatpush2.msra.mxu0 0.0
    %1028 = vmatprep.subr.mxu0 0.0
    %1029 = vmatpush2.msra.mxu0 0.0
    %1030 = vmatprep.subr.mxu0 0.0
    %1031 = vmatpush2.msra.mxu0 0.0
    %1032 = vmatprep.subr.mxu0 0.0
    %1033 = vmatpush2.msra.mxu0 0.0
    %1034 = vmatprep.subr.mxu0 0.0
    %1035 = vmatpush2.msra.mxu0 0.0
    %1036 = vmatprep.subr.mxu0 0.0
    %1037 = vmatpush2.msra.mxu0 0.0
    %1038 = vmatprep.subr.mxu0 0.0
    %1039 = vmatpush2.msra.mxu0 0.0
    %1040 = vmatprep.subr.mxu0 0.0
    %1041 = vmatpush2.msra.mxu0 0.0
    %1042 = vmatprep.subr.mxu0 0.0
    %1043 = vmatpush2.msra.mxu0 0.0
    %1044 = vmatprep.mubr.f32.mxu0 0.0
    %v1045 = vand.u32 %v673, 4294901760
    %v1046 = vsub.f32 %v673, %v1045
    %v1047 = vand.u32 %v1046, 4294901760
    %1048 = vmatmul.mubr.f32.gmra.mxu0 %v1047
    %v1049 = vpop.f32.mrf.mxu0
    %v1050 = vadd.f32 %v955, %v1049
    %v1051 = vpop.f32.mrf.mxu0
    %1052 = vmatprep.mubr.f32.mxu0 0.0
    %v1053 = vand.u32 %v675, 4294901760
    %v1054 = vsub.f32 %v675, %v1053
    %v1055 = vand.u32 %v1054, 4294901760
    %1056 = vmatmul.mubr.f32.gmra.mxu0 %v1055
    %v1057 = vpop.f32.mrf.mxu0
    %v1058 = vadd.f32 %v962, %v1057
    %v1059 = vpop.f32.mrf.mxu0
    %1060 = vmatprep.mubr.f32.mxu0 0.0
    %v1061 = vand.u32 %v677, 4294901760
    %v1062 = vsub.f32 %v677, %v1061
    %v1063 = vand.u32 %v1062, 4294901760
    %1064 = vmatmul.mubr.f32.gmra.mxu0 %v1063
    %v1065 = vpop.f32.mrf.mxu0
    %v1066 = vadd.f32 %v969, %v1065
    %v1067 = vpop.f32.mrf.mxu0
    %1068 = vmatprep.mubr.f32.mxu0 0.0
    %v1069 = vand.u32 %v679, 4294901760
    %v1070 = vsub.f32 %v679, %v1069
    %v1071 = vand.u32 %v1070, 4294901760
    %1072 = vmatmul.mubr.f32.gmra.mxu0 %v1071
    %v1073 = vpop.f32.mrf.mxu0
    %v1074 = vadd.f32 %v976, %v1073
    %v1075 = vpop.f32.mrf.mxu0
    %1076 = vdwg.mxu0
    %1077 = vmatprep.subr.mxu0 0.0
    %1078 = vmatpush1.msra.mxu0 0.0
    %1079 = vmatprep.subr.mxu0 0.0
    %1080 = vmatpush1.msra.mxu0 0.0
    %1081 = vmatprep.subr.mxu0 0.0
    %1082 = vmatpush1.msra.mxu0 0.0
    %1083 = vmatprep.subr.mxu0 0.0
    %1084 = vmatpush1.msra.mxu0 0.0
    %1085 = vmatprep.subr.mxu0 0.0
    %1086 = vmatpush1.msra.mxu0 0.0
    %1087 = vmatprep.subr.mxu0 0.0
    %1088 = vmatpush1.msra.mxu0 0.0
    %1089 = vmatprep.subr.mxu0 0.0
    %1090 = vmatpush1.msra.mxu0 0.0
    %1091 = vmatprep.subr.mxu0 0.0
    %1092 = vmatpush1.msra.mxu0 0.0
    %1093 = vmatprep.subr.mxu0 0.0
    %1094 = vmatpush1.msra.mxu0 0.0
    %1095 = vmatprep.subr.mxu0 0.0
    %1096 = vmatpush1.msra.mxu0 0.0
    %1097 = vmatprep.subr.mxu0 0.0
    %1098 = vmatpush1.msra.mxu0 0.0
    %1099 = vmatprep.subr.mxu0 0.0
    %1100 = vmatpush1.msra.mxu0 0.0
    %1101 = vmatprep.subr.mxu0 0.0
    %1102 = vmatpush1.msra.mxu0 0.0
    %1103 = vmatprep.subr.mxu0 0.0
    %1104 = vmatpush1.msra.mxu0 0.0
    %1105 = vmatprep.subr.mxu0 0.0
    %1106 = vmatpush1.msra.mxu0 0.0
    %1107 = vmatprep.subr.mxu0 0.0
    %v1108 = vand.u32 %v682, 4294901760
    %v1109 = vsub.f32 %v682, %v1108
    %v1110 = vand.u32 %v1109, 4294901760
    %1111 = vmatpush1.msra.mxu0 %v1110
    %1112 = vmatprep.subr.mxu0 0.0
    %1113 = vmatpush2.msra.mxu0 0.0
    %1114 = vmatprep.subr.mxu0 0.0
    %1115 = vmatpush2.msra.mxu0 0.0
    %1116 = vmatprep.subr.mxu0 0.0
    %1117 = vmatpush2.msra.mxu0 0.0
    %1118 = vmatprep.subr.mxu0 0.0
    %1119 = vmatpush2.msra.mxu0 0.0
    %1120 = vmatprep.subr.mxu0 0.0
    %1121 = vmatpush2.msra.mxu0 0.0
    %1122 = vmatprep.subr.mxu0 0.0
    %1123 = vmatpush2.msra.mxu0 0.0
    %1124 = vmatprep.subr.mxu0 0.0
    %1125 = vmatpush2.msra.mxu0 0.0
    %1126 = vmatprep.subr.mxu0 0.0
    %1127 = vmatpush2.msra.mxu0 0.0
    %1128 = vmatprep.subr.mxu0 0.0
    %1129 = vmatpush2.msra.mxu0 0.0
    %1130 = vmatprep.subr.mxu0 0.0
    %1131 = vmatpush2.msra.mxu0 0.0
    %1132 = vmatprep.subr.mxu0 0.0
    %1133 = vmatpush2.msra.mxu0 0.0
    %1134 = vmatprep.subr.mxu0 0.0
    %1135 = vmatpush2.msra.mxu0 0.0
    %1136 = vmatprep.subr.mxu0 0.0
    %1137 = vmatpush2.msra.mxu0 0.0
    %1138 = vmatprep.subr.mxu0 0.0
    %1139 = vmatpush2.msra.mxu0 0.0
    %1140 = vmatprep.subr.mxu0 0.0
    %1141 = vmatpush2.msra.mxu0 0.0
    %1142 = vmatprep.subr.mxu0 0.0
    %1143 = vmatpush2.msra.mxu0 0.0
    %1144 = vmatprep.mubr.f32.mxu0 0.0
    %v1145 = vand.u32 %v673, 4294901760
    %1146 = vmatmul.mubr.f32.gmra.mxu0 %v1145
    %v1147 = vpop.f32.mrf.mxu0
    %v1148 = vadd.f32 %v1050, %v1147
    %v1149 = vpop.f32.mrf.mxu0
    %1150 = vmatprep.mubr.f32.mxu0 0.0
    %v1151 = vand.u32 %v675, 4294901760
    %1152 = vmatmul.mubr.f32.gmra.mxu0 %v1151
    %v1153 = vpop.f32.mrf.mxu0
    %v1154 = vadd.f32 %v1058, %v1153
    %v1155 = vpop.f32.mrf.mxu0
    %1156 = vmatprep.mubr.f32.mxu0 0.0
    %v1157 = vand.u32 %v677, 4294901760
    %1158 = vmatmul.mubr.f32.gmra.mxu0 %v1157
    %v1159 = vpop.f32.mrf.mxu0
    %v1160 = vadd.f32 %v1066, %v1159
    %v1161 = vpop.f32.mrf.mxu0
    %1162 = vmatprep.mubr.f32.mxu0 0.0
    %v1163 = vand.u32 %v679, 4294901760
    %1164 = vmatmul.mubr.f32.gmra.mxu0 %v1163
    %v1165 = vpop.f32.mrf.mxu0
    %v1166 = vadd.f32 %v1074, %v1165
    %v1167 = vpop.f32.mrf.mxu0
    %1168 = vdwg.mxu0
    %1169 = vmatprep.subr.mxu0 0.0
    %1170 = vmatpush1.msra.mxu0 0.0
    %1171 = vmatprep.subr.mxu0 0.0
    %1172 = vmatpush1.msra.mxu0 0.0
    %1173 = vmatprep.subr.mxu0 0.0
    %1174 = vmatpush1.msra.mxu0 0.0
    %1175 = vmatprep.subr.mxu0 0.0
    %1176 = vmatpush1.msra.mxu0 0.0
    %1177 = vmatprep.subr.mxu0 0.0
    %1178 = vmatpush1.msra.mxu0 0.0
    %1179 = vmatprep.subr.mxu0 0.0
    %1180 = vmatpush1.msra.mxu0 0.0
    %1181 = vmatprep.subr.mxu0 0.0
    %1182 = vmatpush1.msra.mxu0 0.0
    %1183 = vmatprep.subr.mxu0 0.0
    %1184 = vmatpush1.msra.mxu0 0.0
    %1185 = vmatprep.subr.mxu0 0.0
    %1186 = vmatpush1.msra.mxu0 0.0
    %1187 = vmatprep.subr.mxu0 0.0
    %1188 = vmatpush1.msra.mxu0 0.0
    %1189 = vmatprep.subr.mxu0 0.0
    %1190 = vmatpush1.msra.mxu0 0.0
    %1191 = vmatprep.subr.mxu0 0.0
    %1192 = vmatpush1.msra.mxu0 0.0
    %1193 = vmatprep.subr.mxu0 0.0
    %1194 = vmatpush1.msra.mxu0 0.0
    %1195 = vmatprep.subr.mxu0 0.0
    %1196 = vmatpush1.msra.mxu0 0.0
    %1197 = vmatprep.subr.mxu0 0.0
    %1198 = vmatpush1.msra.mxu0 0.0
    %1199 = vmatprep.subr.mxu0 0.0
    %v1200 = vand.u32 %v682, 4294901760
    %1201 = vmatpush1.msra.mxu0 %v1200
    %1202 = vmatprep.subr.mxu0 0.0
    %1203 = vmatpush2.msra.mxu0 0.0
    %1204 = vmatprep.subr.mxu0 0.0
    %1205 = vmatpush2.msra.mxu0 0.0
    %1206 = vmatprep.subr.mxu0 0.0
    %1207 = vmatpush2.msra.mxu0 0.0
    %1208 = vmatprep.subr.mxu0 0.0
    %1209 = vmatpush2.msra.mxu0 0.0
    %1210 = vmatprep.subr.mxu0 0.0
    %1211 = vmatpush2.msra.mxu0 0.0
    %1212 = vmatprep.subr.mxu0 0.0
    %1213 = vmatpush2.msra.mxu0 0.0
    %1214 = vmatprep.subr.mxu0 0.0
    %1215 = vmatpush2.msra.mxu0 0.0
    %1216 = vmatprep.subr.mxu0 0.0
    %1217 = vmatpush2.msra.mxu0 0.0
    %1218 = vmatprep.subr.mxu0 0.0
    %1219 = vmatpush2.msra.mxu0 0.0
    %1220 = vmatprep.subr.mxu0 0.0
    %1221 = vmatpush2.msra.mxu0 0.0
    %1222 = vmatprep.subr.mxu0 0.0
    %1223 = vmatpush2.msra.mxu0 0.0
    %1224 = vmatprep.subr.mxu0 0.0
    %1225 = vmatpush2.msra.mxu0 0.0
    %1226 = vmatprep.subr.mxu0 0.0
    %1227 = vmatpush2.msra.mxu0 0.0
    %1228 = vmatprep.subr.mxu0 0.0
    %1229 = vmatpush2.msra.mxu0 0.0
    %1230 = vmatprep.subr.mxu0 0.0
    %1231 = vmatpush2.msra.mxu0 0.0
    %1232 = vmatprep.subr.mxu0 0.0
    %1233 = vmatpush2.msra.mxu0 0.0
    %1234 = vmatprep.mubr.f32.mxu0 0.0
    %v1235 = vand.u32 %v673, 4294901760
    %1236 = vmatmul.mubr.f32.gmra.mxu0 %v1235
    %v1237 = vpop.f32.mrf.mxu0
    %v1238 = vadd.f32 %v1148, %v1237
    %v1239 = vpop.f32.mrf.mxu0
    %1240 = vmatprep.mubr.f32.mxu0 0.0
    %v1241 = vand.u32 %v675, 4294901760
    %1242 = vmatmul.mubr.f32.gmra.mxu0 %v1241
    %v1243 = vpop.f32.mrf.mxu0
    %v1244 = vadd.f32 %v1154, %v1243
    %v1245 = vpop.f32.mrf.mxu0
    %1246 = vmatprep.mubr.f32.mxu0 0.0
    %v1247 = vand.u32 %v677, 4294901760
    %1248 = vmatmul.mubr.f32.gmra.mxu0 %v1247
    %v1249 = vpop.f32.mrf.mxu0
    %v1250 = vadd.f32 %v1160, %v1249
    %v1251 = vpop.f32.mrf.mxu0
    %1252 = vmatprep.mubr.f32.mxu0 0.0
    %v1253 = vand.u32 %v679, 4294901760
    %1254 = vmatmul.mubr.f32.gmra.mxu0 %v1253
    %v1255 = vpop.f32.mrf.mxu0
    %v1256 = vadd.f32 %v1166, %v1255
    %v1257 = vpop.f32.mrf.mxu0
    %1258 = vdwg.mxu0
    %v1259 = vrot.slane %v63, 2
    %v1260 = vrot.slane %v55, 2
    %v1261 = vsel %vm94, %v1259, %v1260
    %v1262 = vrot.slane %v65, 2
    %v1263 = vsel %vm94, %v1260, %v1262
    %v1264 = vrot.slane %v64, 2
    %v1265 = vrot.slane %v58, 2
    %v1266 = vsel %vm94, %v1264, %v1265
    %v1267 = vrot.slane %v66, 2
    %v1268 = vsel %vm94, %v1265, %v1267
    %s1269 = scalar_lea.vmem %s1, 16
    %v1270 = vld [vmem:[%s1269] sm:$0x3f]
    %v1271 = vsel %vm85, %v1261, 0
    %v1273 = vsel %vm85, %v1263, 0
    %v1275 = vsel %vm85, %v1266, 0
    %v1277 = vsel %vm85, %v1268, 0
    %v1280 = vsel %vm94, %v1270, 0
    %1282 = vmatprep.subr.mxu0 0.0
    %1283 = vmatpush1.msra.mxu0 0.0
    %1284 = vmatprep.subr.mxu0 0.0
    %1285 = vmatpush1.msra.mxu0 0.0
    %1286 = vmatprep.subr.mxu0 0.0
    %1287 = vmatpush1.msra.mxu0 0.0
    %1288 = vmatprep.subr.mxu0 0.0
    %1289 = vmatpush1.msra.mxu0 0.0
    %1290 = vmatprep.subr.mxu0 0.0
    %1291 = vmatpush1.msra.mxu0 0.0
    %1292 = vmatprep.subr.mxu0 0.0
    %1293 = vmatpush1.msra.mxu0 0.0
    %1294 = vmatprep.subr.mxu0 0.0
    %1295 = vmatpush1.msra.mxu0 0.0
    %1296 = vmatprep.subr.mxu0 0.0
    %1297 = vmatpush1.msra.mxu0 0.0
    %1298 = vmatprep.subr.mxu0 0.0
    %1299 = vmatpush1.msra.mxu0 0.0
    %1300 = vmatprep.subr.mxu0 0.0
    %1301 = vmatpush1.msra.mxu0 0.0
    %1302 = vmatprep.subr.mxu0 0.0
    %1303 = vmatpush1.msra.mxu0 0.0
    %1304 = vmatprep.subr.mxu0 0.0
    %1305 = vmatpush1.msra.mxu0 0.0
    %1306 = vmatprep.subr.mxu0 0.0
    %1307 = vmatpush1.msra.mxu0 0.0
    %1308 = vmatprep.subr.mxu0 0.0
    %1309 = vmatpush1.msra.mxu0 0.0
    %1310 = vmatprep.subr.mxu0 0.0
    %1311 = vmatpush1.msra.mxu0 0.0
    %1312 = vmatprep.subr.mxu0 0.0
    %v1313 = vand.u32 %v1280, 4294901760
    %1314 = vmatpush1.msra.mxu0 %v1313
    %1315 = vmatprep.subr.mxu0 0.0
    %1316 = vmatpush2.msra.mxu0 0.0
    %1317 = vmatprep.subr.mxu0 0.0
    %1318 = vmatpush2.msra.mxu0 0.0
    %1319 = vmatprep.subr.mxu0 0.0
    %1320 = vmatpush2.msra.mxu0 0.0
    %1321 = vmatprep.subr.mxu0 0.0
    %1322 = vmatpush2.msra.mxu0 0.0
    %1323 = vmatprep.subr.mxu0 0.0
    %1324 = vmatpush2.msra.mxu0 0.0
    %1325 = vmatprep.subr.mxu0 0.0
    %1326 = vmatpush2.msra.mxu0 0.0
    %1327 = vmatprep.subr.mxu0 0.0
    %1328 = vmatpush2.msra.mxu0 0.0
    %1329 = vmatprep.subr.mxu0 0.0
    %1330 = vmatpush2.msra.mxu0 0.0
    %1331 = vmatprep.subr.mxu0 0.0
    %1332 = vmatpush2.msra.mxu0 0.0
    %1333 = vmatprep.subr.mxu0 0.0
    %1334 = vmatpush2.msra.mxu0 0.0
    %1335 = vmatprep.subr.mxu0 0.0
    %1336 = vmatpush2.msra.mxu0 0.0
    %1337 = vmatprep.subr.mxu0 0.0
    %1338 = vmatpush2.msra.mxu0 0.0
    %1339 = vmatprep.subr.mxu0 0.0
    %1340 = vmatpush2.msra.mxu0 0.0
    %1341 = vmatprep.subr.mxu0 0.0
    %1342 = vmatpush2.msra.mxu0 0.0
    %1343 = vmatprep.subr.mxu0 0.0
    %1344 = vmatpush2.msra.mxu0 0.0
    %1345 = vmatprep.subr.mxu0 0.0
    %1346 = vmatpush2.msra.mxu0 0.0
    %1347 = vmatprep.mubr.f32.mxu0 0.0
    %v1348 = vand.u32 %v1271, 4294901760
    %v1349 = vsub.f32 %v1271, %v1348
    %v1350 = vand.u32 %v1349, 4294901760
    %v1351 = vsub.f32 %v1349, %v1350
    %v1352 = vand.u32 %v1351, 4294901760
    %1353 = vmatmul.mubr.f32.gmra.mxu0 %v1352
    %v1354 = vpop.f32.mrf.mxu0
    %v1355 = vadd.f32 0.0, %v1354
    %v1356 = vpop.f32.mrf.mxu0
    %1357 = vmatprep.mubr.f32.mxu0 0.0
    %v1358 = vand.u32 %v1273, 4294901760
    %v1359 = vsub.f32 %v1273, %v1358
    %v1360 = vand.u32 %v1359, 4294901760
    %v1361 = vsub.f32 %v1359, %v1360
    %v1362 = vand.u32 %v1361, 4294901760
    %1363 = vmatmul.mubr.f32.gmra.mxu0 %v1362
    %v1364 = vpop.f32.mrf.mxu0
    %v1365 = vadd.f32 0.0, %v1364
    %v1366 = vpop.f32.mrf.mxu0
    %1367 = vmatprep.mubr.f32.mxu0 0.0
    %v1368 = vand.u32 %v1275, 4294901760
    %v1369 = vsub.f32 %v1275, %v1368
    %v1370 = vand.u32 %v1369, 4294901760
    %v1371 = vsub.f32 %v1369, %v1370
    %v1372 = vand.u32 %v1371, 4294901760
    %1373 = vmatmul.mubr.f32.gmra.mxu0 %v1372
    %v1374 = vpop.f32.mrf.mxu0
    %v1375 = vadd.f32 0.0, %v1374
    %v1376 = vpop.f32.mrf.mxu0
    %1377 = vmatprep.mubr.f32.mxu0 0.0
    %v1378 = vand.u32 %v1277, 4294901760
    %v1379 = vsub.f32 %v1277, %v1378
    %v1380 = vand.u32 %v1379, 4294901760
    %v1381 = vsub.f32 %v1379, %v1380
    %v1382 = vand.u32 %v1381, 4294901760
    %1383 = vmatmul.mubr.f32.gmra.mxu0 %v1382
    %v1384 = vpop.f32.mrf.mxu0
    %v1385 = vadd.f32 0.0, %v1384
    %v1386 = vpop.f32.mrf.mxu0
    %1387 = vdwg.mxu0
    %1388 = vmatprep.subr.mxu0 0.0
    %1389 = vmatpush1.msra.mxu0 0.0
    %1390 = vmatprep.subr.mxu0 0.0
    %1391 = vmatpush1.msra.mxu0 0.0
    %1392 = vmatprep.subr.mxu0 0.0
    %1393 = vmatpush1.msra.mxu0 0.0
    %1394 = vmatprep.subr.mxu0 0.0
    %1395 = vmatpush1.msra.mxu0 0.0
    %1396 = vmatprep.subr.mxu0 0.0
    %1397 = vmatpush1.msra.mxu0 0.0
    %1398 = vmatprep.subr.mxu0 0.0
    %1399 = vmatpush1.msra.mxu0 0.0
    %1400 = vmatprep.subr.mxu0 0.0
    %1401 = vmatpush1.msra.mxu0 0.0
    %1402 = vmatprep.subr.mxu0 0.0
    %1403 = vmatpush1.msra.mxu0 0.0
    %1404 = vmatprep.subr.mxu0 0.0
    %1405 = vmatpush1.msra.mxu0 0.0
    %1406 = vmatprep.subr.mxu0 0.0
    %1407 = vmatpush1.msra.mxu0 0.0
    %1408 = vmatprep.subr.mxu0 0.0
    %1409 = vmatpush1.msra.mxu0 0.0
    %1410 = vmatprep.subr.mxu0 0.0
    %1411 = vmatpush1.msra.mxu0 0.0
    %1412 = vmatprep.subr.mxu0 0.0
    %1413 = vmatpush1.msra.mxu0 0.0
    %1414 = vmatprep.subr.mxu0 0.0
    %1415 = vmatpush1.msra.mxu0 0.0
    %1416 = vmatprep.subr.mxu0 0.0
    %1417 = vmatpush1.msra.mxu0 0.0
    %1418 = vmatprep.subr.mxu0 0.0
    %v1419 = vand.u32 %v1280, 4294901760
    %v1420 = vsub.f32 %v1280, %v1419
    %v1421 = vand.u32 %v1420, 4294901760
    %v1422 = vsub.f32 %v1420, %v1421
    %v1423 = vand.u32 %v1422, 4294901760
    %1424 = vmatpush1.msra.mxu0 %v1423
    %1425 = vmatprep.subr.mxu0 0.0
    %1426 = vmatpush2.msra.mxu0 0.0
    %1427 = vmatprep.subr.mxu0 0.0
    %1428 = vmatpush2.msra.mxu0 0.0
    %1429 = vmatprep.subr.mxu0 0.0
    %1430 = vmatpush2.msra.mxu0 0.0
    %1431 = vmatprep.subr.mxu0 0.0
    %1432 = vmatpush2.msra.mxu0 0.0
    %1433 = vmatprep.subr.mxu0 0.0
    %1434 = vmatpush2.msra.mxu0 0.0
    %1435 = vmatprep.subr.mxu0 0.0
    %1436 = vmatpush2.msra.mxu0 0.0
    %1437 = vmatprep.subr.mxu0 0.0
    %1438 = vmatpush2.msra.mxu0 0.0
    %1439 = vmatprep.subr.mxu0 0.0
    %1440 = vmatpush2.msra.mxu0 0.0
    %1441 = vmatprep.subr.mxu0 0.0
    %1442 = vmatpush2.msra.mxu0 0.0
    %1443 = vmatprep.subr.mxu0 0.0
    %1444 = vmatpush2.msra.mxu0 0.0
    %1445 = vmatprep.subr.mxu0 0.0
    %1446 = vmatpush2.msra.mxu0 0.0
    %1447 = vmatprep.subr.mxu0 0.0
    %1448 = vmatpush2.msra.mxu0 0.0
    %1449 = vmatprep.subr.mxu0 0.0
    %1450 = vmatpush2.msra.mxu0 0.0
    %1451 = vmatprep.subr.mxu0 0.0
    %1452 = vmatpush2.msra.mxu0 0.0
    %1453 = vmatprep.subr.mxu0 0.0
    %1454 = vmatpush2.msra.mxu0 0.0
    %1455 = vmatprep.subr.mxu0 0.0
    %1456 = vmatpush2.msra.mxu0 0.0
    %1457 = vmatprep.mubr.f32.mxu0 0.0
    %v1458 = vand.u32 %v1271, 4294901760
    %1459 = vmatmul.mubr.f32.gmra.mxu0 %v1458
    %v1460 = vpop.f32.mrf.mxu0
    %v1461 = vadd.f32 %v1355, %v1460
    %v1462 = vpop.f32.mrf.mxu0
    %1463 = vmatprep.mubr.f32.mxu0 0.0
    %v1464 = vand.u32 %v1273, 4294901760
    %1465 = vmatmul.mubr.f32.gmra.mxu0 %v1464
    %v1466 = vpop.f32.mrf.mxu0
    %v1467 = vadd.f32 %v1365, %v1466
    %v1468 = vpop.f32.mrf.mxu0
    %1469 = vmatprep.mubr.f32.mxu0 0.0
    %v1470 = vand.u32 %v1275, 4294901760
    %1471 = vmatmul.mubr.f32.gmra.mxu0 %v1470
    %v1472 = vpop.f32.mrf.mxu0
    %v1473 = vadd.f32 %v1375, %v1472
    %v1474 = vpop.f32.mrf.mxu0
    %1475 = vmatprep.mubr.f32.mxu0 0.0
    %v1476 = vand.u32 %v1277, 4294901760
    %1477 = vmatmul.mubr.f32.gmra.mxu0 %v1476
    %v1478 = vpop.f32.mrf.mxu0
    %v1479 = vadd.f32 %v1385, %v1478
    %v1480 = vpop.f32.mrf.mxu0
    %1481 = vdwg.mxu0
    %1482 = vmatprep.subr.mxu0 0.0
    %1483 = vmatpush1.msra.mxu0 0.0
    %1484 = vmatprep.subr.mxu0 0.0
    %1485 = vmatpush1.msra.mxu0 0.0
    %1486 = vmatprep.subr.mxu0 0.0
    %1487 = vmatpush1.msra.mxu0 0.0
    %1488 = vmatprep.subr.mxu0 0.0
    %1489 = vmatpush1.msra.mxu0 0.0
    %1490 = vmatprep.subr.mxu0 0.0
    %1491 = vmatpush1.msra.mxu0 0.0
    %1492 = vmatprep.subr.mxu0 0.0
    %1493 = vmatpush1.msra.mxu0 0.0
    %1494 = vmatprep.subr.mxu0 0.0
    %1495 = vmatpush1.msra.mxu0 0.0
    %1496 = vmatprep.subr.mxu0 0.0
    %1497 = vmatpush1.msra.mxu0 0.0
    %1498 = vmatprep.subr.mxu0 0.0
    %1499 = vmatpush1.msra.mxu0 0.0
    %1500 = vmatprep.subr.mxu0 0.0
    %1501 = vmatpush1.msra.mxu0 0.0
    %1502 = vmatprep.subr.mxu0 0.0
    %1503 = vmatpush1.msra.mxu0 0.0
    %1504 = vmatprep.subr.mxu0 0.0
    %1505 = vmatpush1.msra.mxu0 0.0
    %1506 = vmatprep.subr.mxu0 0.0
    %1507 = vmatpush1.msra.mxu0 0.0
    %1508 = vmatprep.subr.mxu0 0.0
    %1509 = vmatpush1.msra.mxu0 0.0
    %1510 = vmatprep.subr.mxu0 0.0
    %1511 = vmatpush1.msra.mxu0 0.0
    %1512 = vmatprep.subr.mxu0 0.0
    %v1513 = vand.u32 %v1280, 4294901760
    %v1514 = vsub.f32 %v1280, %v1513
    %1515 = vmatpush1.msra.mxu0 %v1514
    %1516 = vmatprep.subr.mxu0 0.0
    %1517 = vmatpush2.msra.mxu0 0.0
    %1518 = vmatprep.subr.mxu0 0.0
    %1519 = vmatpush2.msra.mxu0 0.0
    %1520 = vmatprep.subr.mxu0 0.0
    %1521 = vmatpush2.msra.mxu0 0.0
    %1522 = vmatprep.subr.mxu0 0.0
    %1523 = vmatpush2.msra.mxu0 0.0
    %1524 = vmatprep.subr.mxu0 0.0
    %1525 = vmatpush2.msra.mxu0 0.0
    %1526 = vmatprep.subr.mxu0 0.0
    %1527 = vmatpush2.msra.mxu0 0.0
    %1528 = vmatprep.subr.mxu0 0.0
    %1529 = vmatpush2.msra.mxu0 0.0
    %1530 = vmatprep.subr.mxu0 0.0
    %1531 = vmatpush2.msra.mxu0 0.0
    %1532 = vmatprep.subr.mxu0 0.0
    %1533 = vmatpush2.msra.mxu0 0.0
    %1534 = vmatprep.subr.mxu0 0.0
    %1535 = vmatpush2.msra.mxu0 0.0
    %1536 = vmatprep.subr.mxu0 0.0
    %1537 = vmatpush2.msra.mxu0 0.0
    %1538 = vmatprep.subr.mxu0 0.0
    %1539 = vmatpush2.msra.mxu0 0.0
    %1540 = vmatprep.subr.mxu0 0.0
    %1541 = vmatpush2.msra.mxu0 0.0
    %1542 = vmatprep.subr.mxu0 0.0
    %1543 = vmatpush2.msra.mxu0 0.0
    %1544 = vmatprep.subr.mxu0 0.0
    %1545 = vmatpush2.msra.mxu0 0.0
    %1546 = vmatprep.subr.mxu0 0.0
    %1547 = vmatpush2.msra.mxu0 0.0
    %1548 = vmatprep.mubr.f32.mxu0 0.0
    %v1549 = vand.u32 %v1271, 4294901760
    %v1550 = vsub.f32 %v1271, %v1549
    %1551 = vmatmul.mubr.f32.gmra.mxu0 %v1550
    %v1552 = vpop.f32.mrf.mxu0
    %v1553 = vadd.f32 %v1461, %v1552
    %v1554 = vpop.f32.mrf.mxu0
    %1555 = vmatprep.mubr.f32.mxu0 0.0
    %v1556 = vand.u32 %v1273, 4294901760
    %v1557 = vsub.f32 %v1273, %v1556
    %1558 = vmatmul.mubr.f32.gmra.mxu0 %v1557
    %v1559 = vpop.f32.mrf.mxu0
    %v1560 = vadd.f32 %v1467, %v1559
    %v1561 = vpop.f32.mrf.mxu0
    %1562 = vmatprep.mubr.f32.mxu0 0.0
    %v1563 = vand.u32 %v1275, 4294901760
    %v1564 = vsub.f32 %v1275, %v1563
    %1565 = vmatmul.mubr.f32.gmra.mxu0 %v1564
    %v1566 = vpop.f32.mrf.mxu0
    %v1567 = vadd.f32 %v1473, %v1566
    %v1568 = vpop.f32.mrf.mxu0
    %1569 = vmatprep.mubr.f32.mxu0 0.0
    %v1570 = vand.u32 %v1277, 4294901760
    %v1571 = vsub.f32 %v1277, %v1570
    %1572 = vmatmul.mubr.f32.gmra.mxu0 %v1571
    %v1573 = vpop.f32.mrf.mxu0
    %v1574 = vadd.f32 %v1479, %v1573
    %v1575 = vpop.f32.mrf.mxu0
    %1576 = vdwg.mxu0
    %1577 = vmatprep.subr.mxu0 0.0
    %1578 = vmatpush1.msra.mxu0 0.0
    %1579 = vmatprep.subr.mxu0 0.0
    %1580 = vmatpush1.msra.mxu0 0.0
    %1581 = vmatprep.subr.mxu0 0.0
    %1582 = vmatpush1.msra.mxu0 0.0
    %1583 = vmatprep.subr.mxu0 0.0
    %1584 = vmatpush1.msra.mxu0 0.0
    %1585 = vmatprep.subr.mxu0 0.0
    %1586 = vmatpush1.msra.mxu0 0.0
    %1587 = vmatprep.subr.mxu0 0.0
    %1588 = vmatpush1.msra.mxu0 0.0
    %1589 = vmatprep.subr.mxu0 0.0
    %1590 = vmatpush1.msra.mxu0 0.0
    %1591 = vmatprep.subr.mxu0 0.0
    %1592 = vmatpush1.msra.mxu0 0.0
    %1593 = vmatprep.subr.mxu0 0.0
    %1594 = vmatpush1.msra.mxu0 0.0
    %1595 = vmatprep.subr.mxu0 0.0
    %1596 = vmatpush1.msra.mxu0 0.0
    %1597 = vmatprep.subr.mxu0 0.0
    %1598 = vmatpush1.msra.mxu0 0.0
    %1599 = vmatprep.subr.mxu0 0.0
    %1600 = vmatpush1.msra.mxu0 0.0
    %1601 = vmatprep.subr.mxu0 0.0
    %1602 = vmatpush1.msra.mxu0 0.0
    %1603 = vmatprep.subr.mxu0 0.0
    %1604 = vmatpush1.msra.mxu0 0.0
    %1605 = vmatprep.subr.mxu0 0.0
    %1606 = vmatpush1.msra.mxu0 0.0
    %1607 = vmatprep.subr.mxu0 0.0
    %v1608 = vand.u32 %v1280, 4294901760
    %1609 = vmatpush1.msra.mxu0 %v1608
    %1610 = vmatprep.subr.mxu0 0.0
    %1611 = vmatpush2.msra.mxu0 0.0
    %1612 = vmatprep.subr.mxu0 0.0
    %1613 = vmatpush2.msra.mxu0 0.0
    %1614 = vmatprep.subr.mxu0 0.0
    %1615 = vmatpush2.msra.mxu0 0.0
    %1616 = vmatprep.subr.mxu0 0.0
    %1617 = vmatpush2.msra.mxu0 0.0
    %1618 = vmatprep.subr.mxu0 0.0
    %1619 = vmatpush2.msra.mxu0 0.0
    %1620 = vmatprep.subr.mxu0 0.0
    %1621 = vmatpush2.msra.mxu0 0.0
    %1622 = vmatprep.subr.mxu0 0.0
    %1623 = vmatpush2.msra.mxu0 0.0
    %1624 = vmatprep.subr.mxu0 0.0
    %1625 = vmatpush2.msra.mxu0 0.0
    %1626 = vmatprep.subr.mxu0 0.0
    %1627 = vmatpush2.msra.mxu0 0.0
    %1628 = vmatprep.subr.mxu0 0.0
    %1629 = vmatpush2.msra.mxu0 0.0
    %1630 = vmatprep.subr.mxu0 0.0
    %1631 = vmatpush2.msra.mxu0 0.0
    %1632 = vmatprep.subr.mxu0 0.0
    %1633 = vmatpush2.msra.mxu0 0.0
    %1634 = vmatprep.subr.mxu0 0.0
    %1635 = vmatpush2.msra.mxu0 0.0
    %1636 = vmatprep.subr.mxu0 0.0
    %1637 = vmatpush2.msra.mxu0 0.0
    %1638 = vmatprep.subr.mxu0 0.0
    %1639 = vmatpush2.msra.mxu0 0.0
    %1640 = vmatprep.subr.mxu0 0.0
    %1641 = vmatpush2.msra.mxu0 0.0
    %1642 = vmatprep.mubr.f32.mxu0 0.0
    %v1643 = vand.u32 %v1271, 4294901760
    %v1644 = vsub.f32 %v1271, %v1643
    %v1645 = vand.u32 %v1644, 4294901760
    %1646 = vmatmul.mubr.f32.gmra.mxu0 %v1645
    %v1647 = vpop.f32.mrf.mxu0
    %v1648 = vadd.f32 %v1553, %v1647
    %v1649 = vpop.f32.mrf.mxu0
    %1650 = vmatprep.mubr.f32.mxu0 0.0
    %v1651 = vand.u32 %v1273, 4294901760
    %v1652 = vsub.f32 %v1273, %v1651
    %v1653 = vand.u32 %v1652, 4294901760
    %1654 = vmatmul.mubr.f32.gmra.mxu0 %v1653
    %v1655 = vpop.f32.mrf.mxu0
    %v1656 = vadd.f32 %v1560, %v1655
    %v1657 = vpop.f32.mrf.mxu0
    %1658 = vmatprep.mubr.f32.mxu0 0.0
    %v1659 = vand.u32 %v1275, 4294901760
    %v1660 = vsub.f32 %v1275, %v1659
    %v1661 = vand.u32 %v1660, 4294901760
    %1662 = vmatmul.mubr.f32.gmra.mxu0 %v1661
    %v1663 = vpop.f32.mrf.mxu0
    %v1664 = vadd.f32 %v1567, %v1663
    %v1665 = vpop.f32.mrf.mxu0
    %1666 = vmatprep.mubr.f32.mxu0 0.0
    %v1667 = vand.u32 %v1277, 4294901760
    %v1668 = vsub.f32 %v1277, %v1667
    %v1669 = vand.u32 %v1668, 4294901760
    %1670 = vmatmul.mubr.f32.gmra.mxu0 %v1669
    %v1671 = vpop.f32.mrf.mxu0
    %v1672 = vadd.f32 %v1574, %v1671
    %v1673 = vpop.f32.mrf.mxu0
    %1674 = vdwg.mxu0
    %1675 = vmatprep.subr.mxu0 0.0
    %1676 = vmatpush1.msra.mxu0 0.0
    %1677 = vmatprep.subr.mxu0 0.0
    %1678 = vmatpush1.msra.mxu0 0.0
    %1679 = vmatprep.subr.mxu0 0.0
    %1680 = vmatpush1.msra.mxu0 0.0
    %1681 = vmatprep.subr.mxu0 0.0
    %1682 = vmatpush1.msra.mxu0 0.0
    %1683 = vmatprep.subr.mxu0 0.0
    %1684 = vmatpush1.msra.mxu0 0.0
    %1685 = vmatprep.subr.mxu0 0.0
    %1686 = vmatpush1.msra.mxu0 0.0
    %1687 = vmatprep.subr.mxu0 0.0
    %1688 = vmatpush1.msra.mxu0 0.0
    %1689 = vmatprep.subr.mxu0 0.0
    %1690 = vmatpush1.msra.mxu0 0.0
    %1691 = vmatprep.subr.mxu0 0.0
    %1692 = vmatpush1.msra.mxu0 0.0
    %1693 = vmatprep.subr.mxu0 0.0
    %1694 = vmatpush1.msra.mxu0 0.0
    %1695 = vmatprep.subr.mxu0 0.0
    %1696 = vmatpush1.msra.mxu0 0.0
    %1697 = vmatprep.subr.mxu0 0.0
    %1698 = vmatpush1.msra.mxu0 0.0
    %1699 = vmatprep.subr.mxu0 0.0
    %1700 = vmatpush1.msra.mxu0 0.0
    %1701 = vmatprep.subr.mxu0 0.0
    %1702 = vmatpush1.msra.mxu0 0.0
    %1703 = vmatprep.subr.mxu0 0.0
    %1704 = vmatpush1.msra.mxu0 0.0
    %1705 = vmatprep.subr.mxu0 0.0
    %v1706 = vand.u32 %v1280, 4294901760
    %v1707 = vsub.f32 %v1280, %v1706
    %v1708 = vand.u32 %v1707, 4294901760
    %1709 = vmatpush1.msra.mxu0 %v1708
    %1710 = vmatprep.subr.mxu0 0.0
    %1711 = vmatpush2.msra.mxu0 0.0
    %1712 = vmatprep.subr.mxu0 0.0
    %1713 = vmatpush2.msra.mxu0 0.0
    %1714 = vmatprep.subr.mxu0 0.0
    %1715 = vmatpush2.msra.mxu0 0.0
    %1716 = vmatprep.subr.mxu0 0.0
    %1717 = vmatpush2.msra.mxu0 0.0
    %1718 = vmatprep.subr.mxu0 0.0
    %1719 = vmatpush2.msra.mxu0 0.0
    %1720 = vmatprep.subr.mxu0 0.0
    %1721 = vmatpush2.msra.mxu0 0.0
    %1722 = vmatprep.subr.mxu0 0.0
    %1723 = vmatpush2.msra.mxu0 0.0
    %1724 = vmatprep.subr.mxu0 0.0
    %1725 = vmatpush2.msra.mxu0 0.0
    %1726 = vmatprep.subr.mxu0 0.0
    %1727 = vmatpush2.msra.mxu0 0.0
    %1728 = vmatprep.subr.mxu0 0.0
    %1729 = vmatpush2.msra.mxu0 0.0
    %1730 = vmatprep.subr.mxu0 0.0
    %1731 = vmatpush2.msra.mxu0 0.0
    %1732 = vmatprep.subr.mxu0 0.0
    %1733 = vmatpush2.msra.mxu0 0.0
    %1734 = vmatprep.subr.mxu0 0.0
    %1735 = vmatpush2.msra.mxu0 0.0
    %1736 = vmatprep.subr.mxu0 0.0
    %1737 = vmatpush2.msra.mxu0 0.0
    %1738 = vmatprep.subr.mxu0 0.0
    %1739 = vmatpush2.msra.mxu0 0.0
    %1740 = vmatprep.subr.mxu0 0.0
    %1741 = vmatpush2.msra.mxu0 0.0
    %1742 = vmatprep.mubr.f32.mxu0 0.0
    %v1743 = vand.u32 %v1271, 4294901760
    %1744 = vmatmul.mubr.f32.gmra.mxu0 %v1743
    %v1745 = vpop.f32.mrf.mxu0
    %v1746 = vadd.f32 %v1648, %v1745
    %v1747 = vpop.f32.mrf.mxu0
    %1748 = vmatprep.mubr.f32.mxu0 0.0
    %v1749 = vand.u32 %v1273, 4294901760
    %1750 = vmatmul.mubr.f32.gmra.mxu0 %v1749
    %v1751 = vpop.f32.mrf.mxu0
    %v1752 = vadd.f32 %v1656, %v1751
    %v1753 = vpop.f32.mrf.mxu0
    %1754 = vmatprep.mubr.f32.mxu0 0.0
    %v1755 = vand.u32 %v1275, 4294901760
    %1756 = vmatmul.mubr.f32.gmra.mxu0 %v1755
    %v1757 = vpop.f32.mrf.mxu0
    %v1758 = vadd.f32 %v1664, %v1757
    %v1759 = vpop.f32.mrf.mxu0
    %1760 = vmatprep.mubr.f32.mxu0 0.0
    %v1761 = vand.u32 %v1277, 4294901760
    %1762 = vmatmul.mubr.f32.gmra.mxu0 %v1761
    %v1763 = vpop.f32.mrf.mxu0
    %v1764 = vadd.f32 %v1672, %v1763
    %v1765 = vpop.f32.mrf.mxu0
    %1766 = vdwg.mxu0
    %1767 = vmatprep.subr.mxu0 0.0
    %1768 = vmatpush1.msra.mxu0 0.0
    %1769 = vmatprep.subr.mxu0 0.0
    %1770 = vmatpush1.msra.mxu0 0.0
    %1771 = vmatprep.subr.mxu0 0.0
    %1772 = vmatpush1.msra.mxu0 0.0
    %1773 = vmatprep.subr.mxu0 0.0
    %1774 = vmatpush1.msra.mxu0 0.0
    %1775 = vmatprep.subr.mxu0 0.0
    %1776 = vmatpush1.msra.mxu0 0.0
    %1777 = vmatprep.subr.mxu0 0.0
    %1778 = vmatpush1.msra.mxu0 0.0
    %1779 = vmatprep.subr.mxu0 0.0
    %1780 = vmatpush1.msra.mxu0 0.0
    %1781 = vmatprep.subr.mxu0 0.0
    %1782 = vmatpush1.msra.mxu0 0.0
    %1783 = vmatprep.subr.mxu0 0.0
    %1784 = vmatpush1.msra.mxu0 0.0
    %1785 = vmatprep.subr.mxu0 0.0
    %1786 = vmatpush1.msra.mxu0 0.0
    %1787 = vmatprep.subr.mxu0 0.0
    %1788 = vmatpush1.msra.mxu0 0.0
    %1789 = vmatprep.subr.mxu0 0.0
    %1790 = vmatpush1.msra.mxu0 0.0
    %1791 = vmatprep.subr.mxu0 0.0
    %1792 = vmatpush1.msra.mxu0 0.0
    %1793 = vmatprep.subr.mxu0 0.0
    %1794 = vmatpush1.msra.mxu0 0.0
    %1795 = vmatprep.subr.mxu0 0.0
    %1796 = vmatpush1.msra.mxu0 0.0
    %1797 = vmatprep.subr.mxu0 0.0
    %v1798 = vand.u32 %v1280, 4294901760
    %1799 = vmatpush1.msra.mxu0 %v1798
    %1800 = vmatprep.subr.mxu0 0.0
    %1801 = vmatpush2.msra.mxu0 0.0
    %1802 = vmatprep.subr.mxu0 0.0
    %1803 = vmatpush2.msra.mxu0 0.0
    %1804 = vmatprep.subr.mxu0 0.0
    %1805 = vmatpush2.msra.mxu0 0.0
    %1806 = vmatprep.subr.mxu0 0.0
    %1807 = vmatpush2.msra.mxu0 0.0
    %1808 = vmatprep.subr.mxu0 0.0
    %1809 = vmatpush2.msra.mxu0 0.0
    %1810 = vmatprep.subr.mxu0 0.0
    %1811 = vmatpush2.msra.mxu0 0.0
    %1812 = vmatprep.subr.mxu0 0.0
    %1813 = vmatpush2.msra.mxu0 0.0
    %1814 = vmatprep.subr.mxu0 0.0
    %1815 = vmatpush2.msra.mxu0 0.0
    %1816 = vmatprep.subr.mxu0 0.0
    %1817 = vmatpush2.msra.mxu0 0.0
    %1818 = vmatprep.subr.mxu0 0.0
    %1819 = vmatpush2.msra.mxu0 0.0
    %1820 = vmatprep.subr.mxu0 0.0
    %1821 = vmatpush2.msra.mxu0 0.0
    %1822 = vmatprep.subr.mxu0 0.0
    %1823 = vmatpush2.msra.mxu0 0.0
    %1824 = vmatprep.subr.mxu0 0.0
    %1825 = vmatpush2.msra.mxu0 0.0
    %1826 = vmatprep.subr.mxu0 0.0
    %1827 = vmatpush2.msra.mxu0 0.0
    %1828 = vmatprep.subr.mxu0 0.0
    %1829 = vmatpush2.msra.mxu0 0.0
    %1830 = vmatprep.subr.mxu0 0.0
    %1831 = vmatpush2.msra.mxu0 0.0
    %1832 = vmatprep.mubr.f32.mxu0 0.0
    %v1833 = vand.u32 %v1271, 4294901760
    %1834 = vmatmul.mubr.f32.gmra.mxu0 %v1833
    %v1835 = vpop.f32.mrf.mxu0
    %v1836 = vadd.f32 %v1746, %v1835
    %v1837 = vpop.f32.mrf.mxu0
    %1838 = vmatprep.mubr.f32.mxu0 0.0
    %v1839 = vand.u32 %v1273, 4294901760
    %1840 = vmatmul.mubr.f32.gmra.mxu0 %v1839
    %v1841 = vpop.f32.mrf.mxu0
    %v1842 = vadd.f32 %v1752, %v1841
    %v1843 = vpop.f32.mrf.mxu0
    %1844 = vmatprep.mubr.f32.mxu0 0.0
    %v1845 = vand.u32 %v1275, 4294901760
    %1846 = vmatmul.mubr.f32.gmra.mxu0 %v1845
    %v1847 = vpop.f32.mrf.mxu0
    %v1848 = vadd.f32 %v1758, %v1847
    %v1849 = vpop.f32.mrf.mxu0
    %1850 = vmatprep.mubr.f32.mxu0 0.0
    %v1851 = vand.u32 %v1277, 4294901760
    %1852 = vmatmul.mubr.f32.gmra.mxu0 %v1851
    %v1853 = vpop.f32.mrf.mxu0
    %v1854 = vadd.f32 %v1764, %v1853
    %v1855 = vpop.f32.mrf.mxu0
    %1856 = vdwg.mxu0
    %v1857 = vadd.f32 %v1238, %v1836
    %v1858 = vadd.f32 %v1244, %v1842
    %v1859 = vadd.f32 %v1250, %v1848
    %v1860 = vadd.f32 %v1256, %v1854
    %vm1861 = vcmask 1044480
    %v1862 = vrot.slane %v63, 3
    %v1863 = vrot.slane %v55, 3
    %v1864 = vsel %vm1861, %v1862, %v1863
    %v1865 = vrot.slane %v65, 3
    %v1866 = vsel %vm1861, %v1863, %v1865
    %v1867 = vrot.slane %v64, 3
    %v1868 = vrot.slane %v58, 3
    %v1869 = vsel %vm1861, %v1867, %v1868
    %v1870 = vrot.slane %v66, 3
    %v1871 = vsel %vm1861, %v1868, %v1870
    %s1872 = scalar_lea.vmem %s1, 24
    %v1873 = vld [vmem:[%s1872] sm:$0x3f]
    %v1874 = vsel %vm85, %v1864, 0
    %v1876 = vsel %vm85, %v1866, 0
    %v1878 = vsel %vm85, %v1869, 0
    %v1880 = vsel %vm85, %v1871, 0
    %v1883 = vsel %vm94, %v1873, 0
    %1885 = vmatprep.subr.mxu0 0.0
    %1886 = vmatpush1.msra.mxu0 0.0
    %1887 = vmatprep.subr.mxu0 0.0
    %1888 = vmatpush1.msra.mxu0 0.0
    %1889 = vmatprep.subr.mxu0 0.0
    %1890 = vmatpush1.msra.mxu0 0.0
    %1891 = vmatprep.subr.mxu0 0.0
    %1892 = vmatpush1.msra.mxu0 0.0
    %1893 = vmatprep.subr.mxu0 0.0
    %1894 = vmatpush1.msra.mxu0 0.0
    %1895 = vmatprep.subr.mxu0 0.0
    %1896 = vmatpush1.msra.mxu0 0.0
    %1897 = vmatprep.subr.mxu0 0.0
    %1898 = vmatpush1.msra.mxu0 0.0
    %1899 = vmatprep.subr.mxu0 0.0
    %1900 = vmatpush1.msra.mxu0 0.0
    %1901 = vmatprep.subr.mxu0 0.0
    %1902 = vmatpush1.msra.mxu0 0.0
    %1903 = vmatprep.subr.mxu0 0.0
    %1904 = vmatpush1.msra.mxu0 0.0
    %1905 = vmatprep.subr.mxu0 0.0
    %1906 = vmatpush1.msra.mxu0 0.0
    %1907 = vmatprep.subr.mxu0 0.0
    %1908 = vmatpush1.msra.mxu0 0.0
    %1909 = vmatprep.subr.mxu0 0.0
    %1910 = vmatpush1.msra.mxu0 0.0
    %1911 = vmatprep.subr.mxu0 0.0
    %1912 = vmatpush1.msra.mxu0 0.0
    %1913 = vmatprep.subr.mxu0 0.0
    %1914 = vmatpush1.msra.mxu0 0.0
    %1915 = vmatprep.subr.mxu0 0.0
    %v1916 = vand.u32 %v1883, 4294901760
    %1917 = vmatpush1.msra.mxu0 %v1916
    %1918 = vmatprep.subr.mxu0 0.0
    %1919 = vmatpush2.msra.mxu0 0.0
    %1920 = vmatprep.subr.mxu0 0.0
    %1921 = vmatpush2.msra.mxu0 0.0
    %1922 = vmatprep.subr.mxu0 0.0
    %1923 = vmatpush2.msra.mxu0 0.0
    %1924 = vmatprep.subr.mxu0 0.0
    %1925 = vmatpush2.msra.mxu0 0.0
    %1926 = vmatprep.subr.mxu0 0.0
    %1927 = vmatpush2.msra.mxu0 0.0
    %1928 = vmatprep.subr.mxu0 0.0
    %1929 = vmatpush2.msra.mxu0 0.0
    %1930 = vmatprep.subr.mxu0 0.0
    %1931 = vmatpush2.msra.mxu0 0.0
    %1932 = vmatprep.subr.mxu0 0.0
    %1933 = vmatpush2.msra.mxu0 0.0
    %1934 = vmatprep.subr.mxu0 0.0
    %1935 = vmatpush2.msra.mxu0 0.0
    %1936 = vmatprep.subr.mxu0 0.0
    %1937 = vmatpush2.msra.mxu0 0.0
    %1938 = vmatprep.subr.mxu0 0.0
    %1939 = vmatpush2.msra.mxu0 0.0
    %1940 = vmatprep.subr.mxu0 0.0
    %1941 = vmatpush2.msra.mxu0 0.0
    %1942 = vmatprep.subr.mxu0 0.0
    %1943 = vmatpush2.msra.mxu0 0.0
    %1944 = vmatprep.subr.mxu0 0.0
    %1945 = vmatpush2.msra.mxu0 0.0
    %1946 = vmatprep.subr.mxu0 0.0
    %1947 = vmatpush2.msra.mxu0 0.0
    %1948 = vmatprep.subr.mxu0 0.0
    %1949 = vmatpush2.msra.mxu0 0.0
    %1950 = vmatprep.mubr.f32.mxu0 0.0
    %v1951 = vand.u32 %v1874, 4294901760
    %v1952 = vsub.f32 %v1874, %v1951
    %v1953 = vand.u32 %v1952, 4294901760
    %v1954 = vsub.f32 %v1952, %v1953
    %v1955 = vand.u32 %v1954, 4294901760
    %1956 = vmatmul.mubr.f32.gmra.mxu0 %v1955
    %v1957 = vpop.f32.mrf.mxu0
    %v1958 = vadd.f32 0.0, %v1957
    %v1959 = vpop.f32.mrf.mxu0
    %1960 = vmatprep.mubr.f32.mxu0 0.0
    %v1961 = vand.u32 %v1876, 4294901760
    %v1962 = vsub.f32 %v1876, %v1961
    %v1963 = vand.u32 %v1962, 4294901760
    %v1964 = vsub.f32 %v1962, %v1963
    %v1965 = vand.u32 %v1964, 4294901760
    %1966 = vmatmul.mubr.f32.gmra.mxu0 %v1965
    %v1967 = vpop.f32.mrf.mxu0
    %v1968 = vadd.f32 0.0, %v1967
    %v1969 = vpop.f32.mrf.mxu0
    %1970 = vmatprep.mubr.f32.mxu0 0.0
    %v1971 = vand.u32 %v1878, 4294901760
    %v1972 = vsub.f32 %v1878, %v1971
    %v1973 = vand.u32 %v1972, 4294901760
    %v1974 = vsub.f32 %v1972, %v1973
    %v1975 = vand.u32 %v1974, 4294901760
    %1976 = vmatmul.mubr.f32.gmra.mxu0 %v1975
    %v1977 = vpop.f32.mrf.mxu0
    %v1978 = vadd.f32 0.0, %v1977
    %v1979 = vpop.f32.mrf.mxu0
    %1980 = vmatprep.mubr.f32.mxu0 0.0
    %v1981 = vand.u32 %v1880, 4294901760
    %v1982 = vsub.f32 %v1880, %v1981
    %v1983 = vand.u32 %v1982, 4294901760
    %v1984 = vsub.f32 %v1982, %v1983
    %v1985 = vand.u32 %v1984, 4294901760
    %1986 = vmatmul.mubr.f32.gmra.mxu0 %v1985
    %v1987 = vpop.f32.mrf.mxu0
    %v1988 = vadd.f32 0.0, %v1987
    %v1989 = vpop.f32.mrf.mxu0
    %1990 = vdwg.mxu0
    %1991 = vmatprep.subr.mxu0 0.0
    %1992 = vmatpush1.msra.mxu0 0.0
    %1993 = vmatprep.subr.mxu0 0.0
    %1994 = vmatpush1.msra.mxu0 0.0
    %1995 = vmatprep.subr.mxu0 0.0
    %1996 = vmatpush1.msra.mxu0 0.0
    %1997 = vmatprep.subr.mxu0 0.0
    %1998 = vmatpush1.msra.mxu0 0.0
    %1999 = vmatprep.subr.mxu0 0.0
    %2000 = vmatpush1.msra.mxu0 0.0
    %2001 = vmatprep.subr.mxu0 0.0
    %2002 = vmatpush1.msra.mxu0 0.0
    %2003 = vmatprep.subr.mxu0 0.0
    %2004 = vmatpush1.msra.mxu0 0.0
    %2005 = vmatprep.subr.mxu0 0.0
    %2006 = vmatpush1.msra.mxu0 0.0
    %2007 = vmatprep.subr.mxu0 0.0
    %2008 = vmatpush1.msra.mxu0 0.0
    %2009 = vmatprep.subr.mxu0 0.0
    %2010 = vmatpush1.msra.mxu0 0.0
    %2011 = vmatprep.subr.mxu0 0.0
    %2012 = vmatpush1.msra.mxu0 0.0
    %2013 = vmatprep.subr.mxu0 0.0
    %2014 = vmatpush1.msra.mxu0 0.0
    %2015 = vmatprep.subr.mxu0 0.0
    %2016 = vmatpush1.msra.mxu0 0.0
    %2017 = vmatprep.subr.mxu0 0.0
    %2018 = vmatpush1.msra.mxu0 0.0
    %2019 = vmatprep.subr.mxu0 0.0
    %2020 = vmatpush1.msra.mxu0 0.0
    %2021 = vmatprep.subr.mxu0 0.0
    %v2022 = vand.u32 %v1883, 4294901760
    %v2023 = vsub.f32 %v1883, %v2022
    %v2024 = vand.u32 %v2023, 4294901760
    %v2025 = vsub.f32 %v2023, %v2024
    %v2026 = vand.u32 %v2025, 4294901760
    %2027 = vmatpush1.msra.mxu0 %v2026
    %2028 = vmatprep.subr.mxu0 0.0
    %2029 = vmatpush2.msra.mxu0 0.0
    %2030 = vmatprep.subr.mxu0 0.0
    %2031 = vmatpush2.msra.mxu0 0.0
    %2032 = vmatprep.subr.mxu0 0.0
    %2033 = vmatpush2.msra.mxu0 0.0
    %2034 = vmatprep.subr.mxu0 0.0
    %2035 = vmatpush2.msra.mxu0 0.0
    %2036 = vmatprep.subr.mxu0 0.0
    %2037 = vmatpush2.msra.mxu0 0.0
    %2038 = vmatprep.subr.mxu0 0.0
    %2039 = vmatpush2.msra.mxu0 0.0
    %2040 = vmatprep.subr.mxu0 0.0
    %2041 = vmatpush2.msra.mxu0 0.0
    %2042 = vmatprep.subr.mxu0 0.0
    %2043 = vmatpush2.msra.mxu0 0.0
    %2044 = vmatprep.subr.mxu0 0.0
    %2045 = vmatpush2.msra.mxu0 0.0
    %2046 = vmatprep.subr.mxu0 0.0
    %2047 = vmatpush2.msra.mxu0 0.0
    %2048 = vmatprep.subr.mxu0 0.0
    %2049 = vmatpush2.msra.mxu0 0.0
    %2050 = vmatprep.subr.mxu0 0.0
    %2051 = vmatpush2.msra.mxu0 0.0
    %2052 = vmatprep.subr.mxu0 0.0
    %2053 = vmatpush2.msra.mxu0 0.0
    %2054 = vmatprep.subr.mxu0 0.0
    %2055 = vmatpush2.msra.mxu0 0.0
    %2056 = vmatprep.subr.mxu0 0.0
    %2057 = vmatpush2.msra.mxu0 0.0
    %2058 = vmatprep.subr.mxu0 0.0
    %2059 = vmatpush2.msra.mxu0 0.0
    %2060 = vmatprep.mubr.f32.mxu0 0.0
    %v2061 = vand.u32 %v1874, 4294901760
    %2062 = vmatmul.mubr.f32.gmra.mxu0 %v2061
    %v2063 = vpop.f32.mrf.mxu0
    %v2064 = vadd.f32 %v1958, %v2063
    %v2065 = vpop.f32.mrf.mxu0
    %2066 = vmatprep.mubr.f32.mxu0 0.0
    %v2067 = vand.u32 %v1876, 4294901760
    %2068 = vmatmul.mubr.f32.gmra.mxu0 %v2067
    %v2069 = vpop.f32.mrf.mxu0
    %v2070 = vadd.f32 %v1968, %v2069
    %v2071 = vpop.f32.mrf.mxu0
    %2072 = vmatprep.mubr.f32.mxu0 0.0
    %v2073 = vand.u32 %v1878, 4294901760
    %2074 = vmatmul.mubr.f32.gmra.mxu0 %v2073
    %v2075 = vpop.f32.mrf.mxu0
    %v2076 = vadd.f32 %v1978, %v2075
    %v2077 = vpop.f32.mrf.mxu0
    %2078 = vmatprep.mubr.f32.mxu0 0.0
    %v2079 = vand.u32 %v1880, 4294901760
    %2080 = vmatmul.mubr.f32.gmra.mxu0 %v2079
    %v2081 = vpop.f32.mrf.mxu0
    %v2082 = vadd.f32 %v1988, %v2081
    %v2083 = vpop.f32.mrf.mxu0
    %2084 = vdwg.mxu0
    %2085 = vmatprep.subr.mxu0 0.0
    %2086 = vmatpush1.msra.mxu0 0.0
    %2087 = vmatprep.subr.mxu0 0.0
    %2088 = vmatpush1.msra.mxu0 0.0
    %2089 = vmatprep.subr.mxu0 0.0
    %2090 = vmatpush1.msra.mxu0 0.0
    %2091 = vmatprep.subr.mxu0 0.0
    %2092 = vmatpush1.msra.mxu0 0.0
    %2093 = vmatprep.subr.mxu0 0.0
    %2094 = vmatpush1.msra.mxu0 0.0
    %2095 = vmatprep.subr.mxu0 0.0
    %2096 = vmatpush1.msra.mxu0 0.0
    %2097 = vmatprep.subr.mxu0 0.0
    %2098 = vmatpush1.msra.mxu0 0.0
    %2099 = vmatprep.subr.mxu0 0.0
    %2100 = vmatpush1.msra.mxu0 0.0
    %2101 = vmatprep.subr.mxu0 0.0
    %2102 = vmatpush1.msra.mxu0 0.0
    %2103 = vmatprep.subr.mxu0 0.0
    %2104 = vmatpush1.msra.mxu0 0.0
    %2105 = vmatprep.subr.mxu0 0.0
    %2106 = vmatpush1.msra.mxu0 0.0
    %2107 = vmatprep.subr.mxu0 0.0
    %2108 = vmatpush1.msra.mxu0 0.0
    %2109 = vmatprep.subr.mxu0 0.0
    %2110 = vmatpush1.msra.mxu0 0.0
    %2111 = vmatprep.subr.mxu0 0.0
    %2112 = vmatpush1.msra.mxu0 0.0
    %2113 = vmatprep.subr.mxu0 0.0
    %2114 = vmatpush1.msra.mxu0 0.0
    %2115 = vmatprep.subr.mxu0 0.0
    %v2116 = vand.u32 %v1883, 4294901760
    %v2117 = vsub.f32 %v1883, %v2116
    %2118 = vmatpush1.msra.mxu0 %v2117
    %2119 = vmatprep.subr.mxu0 0.0
    %2120 = vmatpush2.msra.mxu0 0.0
    %2121 = vmatprep.subr.mxu0 0.0
    %2122 = vmatpush2.msra.mxu0 0.0
    %2123 = vmatprep.subr.mxu0 0.0
    %2124 = vmatpush2.msra.mxu0 0.0
    %2125 = vmatprep.subr.mxu0 0.0
    %2126 = vmatpush2.msra.mxu0 0.0
    %2127 = vmatprep.subr.mxu0 0.0
    %2128 = vmatpush2.msra.mxu0 0.0
    %2129 = vmatprep.subr.mxu0 0.0
    %2130 = vmatpush2.msra.mxu0 0.0
    %2131 = vmatprep.subr.mxu0 0.0
    %2132 = vmatpush2.msra.mxu0 0.0
    %2133 = vmatprep.subr.mxu0 0.0
    %2134 = vmatpush2.msra.mxu0 0.0
    %2135 = vmatprep.subr.mxu0 0.0
    %2136 = vmatpush2.msra.mxu0 0.0
    %2137 = vmatprep.subr.mxu0 0.0
    %2138 = vmatpush2.msra.mxu0 0.0
    %2139 = vmatprep.subr.mxu0 0.0
    %2140 = vmatpush2.msra.mxu0 0.0
    %2141 = vmatprep.subr.mxu0 0.0
    %2142 = vmatpush2.msra.mxu0 0.0
    %2143 = vmatprep.subr.mxu0 0.0
    %2144 = vmatpush2.msra.mxu0 0.0
    %2145 = vmatprep.subr.mxu0 0.0
    %2146 = vmatpush2.msra.mxu0 0.0
    %2147 = vmatprep.subr.mxu0 0.0
    %2148 = vmatpush2.msra.mxu0 0.0
    %2149 = vmatprep.subr.mxu0 0.0
    %2150 = vmatpush2.msra.mxu0 0.0
    %2151 = vmatprep.mubr.f32.mxu0 0.0
    %v2152 = vand.u32 %v1874, 4294901760
    %v2153 = vsub.f32 %v1874, %v2152
    %2154 = vmatmul.mubr.f32.gmra.mxu0 %v2153
    %v2155 = vpop.f32.mrf.mxu0
    %v2156 = vadd.f32 %v2064, %v2155
    %v2157 = vpop.f32.mrf.mxu0
    %2158 = vmatprep.mubr.f32.mxu0 0.0
    %v2159 = vand.u32 %v1876, 4294901760
    %v2160 = vsub.f32 %v1876, %v2159
    %2161 = vmatmul.mubr.f32.gmra.mxu0 %v2160
    %v2162 = vpop.f32.mrf.mxu0
    %v2163 = vadd.f32 %v2070, %v2162
    %v2164 = vpop.f32.mrf.mxu0
    %2165 = vmatprep.mubr.f32.mxu0 0.0
    %v2166 = vand.u32 %v1878, 4294901760
    %v2167 = vsub.f32 %v1878, %v2166
    %2168 = vmatmul.mubr.f32.gmra.mxu0 %v2167
    %v2169 = vpop.f32.mrf.mxu0
    %v2170 = vadd.f32 %v2076, %v2169
    %v2171 = vpop.f32.mrf.mxu0
    %2172 = vmatprep.mubr.f32.mxu0 0.0
    %v2173 = vand.u32 %v1880, 4294901760
    %v2174 = vsub.f32 %v1880, %v2173
    %2175 = vmatmul.mubr.f32.gmra.mxu0 %v2174
    %v2176 = vpop.f32.mrf.mxu0
    %v2177 = vadd.f32 %v2082, %v2176
    %v2178 = vpop.f32.mrf.mxu0
    %2179 = vdwg.mxu0
    %2180 = vmatprep.subr.mxu0 0.0
    %2181 = vmatpush1.msra.mxu0 0.0
    %2182 = vmatprep.subr.mxu0 0.0
    %2183 = vmatpush1.msra.mxu0 0.0
    %2184 = vmatprep.subr.mxu0 0.0
    %2185 = vmatpush1.msra.mxu0 0.0
    %2186 = vmatprep.subr.mxu0 0.0
    %2187 = vmatpush1.msra.mxu0 0.0
    %2188 = vmatprep.subr.mxu0 0.0
    %2189 = vmatpush1.msra.mxu0 0.0
    %2190 = vmatprep.subr.mxu0 0.0
    %2191 = vmatpush1.msra.mxu0 0.0
    %2192 = vmatprep.subr.mxu0 0.0
    %2193 = vmatpush1.msra.mxu0 0.0
    %2194 = vmatprep.subr.mxu0 0.0
    %2195 = vmatpush1.msra.mxu0 0.0
    %2196 = vmatprep.subr.mxu0 0.0
    %2197 = vmatpush1.msra.mxu0 0.0
    %2198 = vmatprep.subr.mxu0 0.0
    %2199 = vmatpush1.msra.mxu0 0.0
    %2200 = vmatprep.subr.mxu0 0.0
    %2201 = vmatpush1.msra.mxu0 0.0
    %2202 = vmatprep.subr.mxu0 0.0
    %2203 = vmatpush1.msra.mxu0 0.0
    %2204 = vmatprep.subr.mxu0 0.0
    %2205 = vmatpush1.msra.mxu0 0.0
    %2206 = vmatprep.subr.mxu0 0.0
    %2207 = vmatpush1.msra.mxu0 0.0
    %2208 = vmatprep.subr.mxu0 0.0
    %2209 = vmatpush1.msra.mxu0 0.0
    %2210 = vmatprep.subr.mxu0 0.0
    %v2211 = vand.u32 %v1883, 4294901760
    %2212 = vmatpush1.msra.mxu0 %v2211
    %2213 = vmatprep.subr.mxu0 0.0
    %2214 = vmatpush2.msra.mxu0 0.0
    %2215 = vmatprep.subr.mxu0 0.0
    %2216 = vmatpush2.msra.mxu0 0.0
    %2217 = vmatprep.subr.mxu0 0.0
    %2218 = vmatpush2.msra.mxu0 0.0
    %2219 = vmatprep.subr.mxu0 0.0
    %2220 = vmatpush2.msra.mxu0 0.0
    %2221 = vmatprep.subr.mxu0 0.0
    %2222 = vmatpush2.msra.mxu0 0.0
    %2223 = vmatprep.subr.mxu0 0.0
    %2224 = vmatpush2.msra.mxu0 0.0
    %2225 = vmatprep.subr.mxu0 0.0
    %2226 = vmatpush2.msra.mxu0 0.0
    %2227 = vmatprep.subr.mxu0 0.0
    %2228 = vmatpush2.msra.mxu0 0.0
    %2229 = vmatprep.subr.mxu0 0.0
    %2230 = vmatpush2.msra.mxu0 0.0
    %2231 = vmatprep.subr.mxu0 0.0
    %2232 = vmatpush2.msra.mxu0 0.0
    %2233 = vmatprep.subr.mxu0 0.0
    %2234 = vmatpush2.msra.mxu0 0.0
    %2235 = vmatprep.subr.mxu0 0.0
    %2236 = vmatpush2.msra.mxu0 0.0
    %2237 = vmatprep.subr.mxu0 0.0
    %2238 = vmatpush2.msra.mxu0 0.0
    %2239 = vmatprep.subr.mxu0 0.0
    %2240 = vmatpush2.msra.mxu0 0.0
    %2241 = vmatprep.subr.mxu0 0.0
    %2242 = vmatpush2.msra.mxu0 0.0
    %2243 = vmatprep.subr.mxu0 0.0
    %2244 = vmatpush2.msra.mxu0 0.0
    %2245 = vmatprep.mubr.f32.mxu0 0.0
    %v2246 = vand.u32 %v1874, 4294901760
    %v2247 = vsub.f32 %v1874, %v2246
    %v2248 = vand.u32 %v2247, 4294901760
    %2249 = vmatmul.mubr.f32.gmra.mxu0 %v2248
    %v2250 = vpop.f32.mrf.mxu0
    %v2251 = vadd.f32 %v2156, %v2250
    %v2252 = vpop.f32.mrf.mxu0
    %2253 = vmatprep.mubr.f32.mxu0 0.0
    %v2254 = vand.u32 %v1876, 4294901760
    %v2255 = vsub.f32 %v1876, %v2254
    %v2256 = vand.u32 %v2255, 4294901760
    %2257 = vmatmul.mubr.f32.gmra.mxu0 %v2256
    %v2258 = vpop.f32.mrf.mxu0
    %v2259 = vadd.f32 %v2163, %v2258
    %v2260 = vpop.f32.mrf.mxu0
    %2261 = vmatprep.mubr.f32.mxu0 0.0
    %v2262 = vand.u32 %v1878, 4294901760
    %v2263 = vsub.f32 %v1878, %v2262
    %v2264 = vand.u32 %v2263, 4294901760
    %2265 = vmatmul.mubr.f32.gmra.mxu0 %v2264
    %v2266 = vpop.f32.mrf.mxu0
    %v2267 = vadd.f32 %v2170, %v2266
    %v2268 = vpop.f32.mrf.mxu0
    %2269 = vmatprep.mubr.f32.mxu0 0.0
    %v2270 = vand.u32 %v1880, 4294901760
    %v2271 = vsub.f32 %v1880, %v2270
    %v2272 = vand.u32 %v2271, 4294901760
    %2273 = vmatmul.mubr.f32.gmra.mxu0 %v2272
    %v2274 = vpop.f32.mrf.mxu0
    %v2275 = vadd.f32 %v2177, %v2274
    %v2276 = vpop.f32.mrf.mxu0
    %2277 = vdwg.mxu0
    %2278 = vmatprep.subr.mxu0 0.0
    %2279 = vmatpush1.msra.mxu0 0.0
    %2280 = vmatprep.subr.mxu0 0.0
    %2281 = vmatpush1.msra.mxu0 0.0
    %2282 = vmatprep.subr.mxu0 0.0
    %2283 = vmatpush1.msra.mxu0 0.0
    %2284 = vmatprep.subr.mxu0 0.0
    %2285 = vmatpush1.msra.mxu0 0.0
    %2286 = vmatprep.subr.mxu0 0.0
    %2287 = vmatpush1.msra.mxu0 0.0
    %2288 = vmatprep.subr.mxu0 0.0
    %2289 = vmatpush1.msra.mxu0 0.0
    %2290 = vmatprep.subr.mxu0 0.0
    %2291 = vmatpush1.msra.mxu0 0.0
    %2292 = vmatprep.subr.mxu0 0.0
    %2293 = vmatpush1.msra.mxu0 0.0
    %2294 = vmatprep.subr.mxu0 0.0
    %2295 = vmatpush1.msra.mxu0 0.0
    %2296 = vmatprep.subr.mxu0 0.0
    %2297 = vmatpush1.msra.mxu0 0.0
    %2298 = vmatprep.subr.mxu0 0.0
    %2299 = vmatpush1.msra.mxu0 0.0
    %2300 = vmatprep.subr.mxu0 0.0
    %2301 = vmatpush1.msra.mxu0 0.0
    %2302 = vmatprep.subr.mxu0 0.0
    %2303 = vmatpush1.msra.mxu0 0.0
    %2304 = vmatprep.subr.mxu0 0.0
    %2305 = vmatpush1.msra.mxu0 0.0
    %2306 = vmatprep.subr.mxu0 0.0
    %2307 = vmatpush1.msra.mxu0 0.0
    %2308 = vmatprep.subr.mxu0 0.0
    %v2309 = vand.u32 %v1883, 4294901760
    %v2310 = vsub.f32 %v1883, %v2309
    %v2311 = vand.u32 %v2310, 4294901760
    %2312 = vmatpush1.msra.mxu0 %v2311
    %2313 = vmatprep.subr.mxu0 0.0
    %2314 = vmatpush2.msra.mxu0 0.0
    %2315 = vmatprep.subr.mxu0 0.0
    %2316 = vmatpush2.msra.mxu0 0.0
    %2317 = vmatprep.subr.mxu0 0.0
    %2318 = vmatpush2.msra.mxu0 0.0
    %2319 = vmatprep.subr.mxu0 0.0
    %2320 = vmatpush2.msra.mxu0 0.0
    %2321 = vmatprep.subr.mxu0 0.0
    %2322 = vmatpush2.msra.mxu0 0.0
    %2323 = vmatprep.subr.mxu0 0.0
    %2324 = vmatpush2.msra.mxu0 0.0
    %2325 = vmatprep.subr.mxu0 0.0
    %2326 = vmatpush2.msra.mxu0 0.0
    %2327 = vmatprep.subr.mxu0 0.0
    %2328 = vmatpush2.msra.mxu0 0.0
    %2329 = vmatprep.subr.mxu0 0.0
    %2330 = vmatpush2.msra.mxu0 0.0
    %2331 = vmatprep.subr.mxu0 0.0
    %2332 = vmatpush2.msra.mxu0 0.0
    %2333 = vmatprep.subr.mxu0 0.0
    %2334 = vmatpush2.msra.mxu0 0.0
    %2335 = vmatprep.subr.mxu0 0.0
    %2336 = vmatpush2.msra.mxu0 0.0
    %2337 = vmatprep.subr.mxu0 0.0
    %2338 = vmatpush2.msra.mxu0 0.0
    %2339 = vmatprep.subr.mxu0 0.0
    %2340 = vmatpush2.msra.mxu0 0.0
    %2341 = vmatprep.subr.mxu0 0.0
    %2342 = vmatpush2.msra.mxu0 0.0
    %2343 = vmatprep.subr.mxu0 0.0
    %2344 = vmatpush2.msra.mxu0 0.0
    %2345 = vmatprep.mubr.f32.mxu0 0.0
    %v2346 = vand.u32 %v1874, 4294901760
    %2347 = vmatmul.mubr.f32.gmra.mxu0 %v2346
    %v2348 = vpop.f32.mrf.mxu0
    %v2349 = vadd.f32 %v2251, %v2348
    %v2350 = vpop.f32.mrf.mxu0
    %2351 = vmatprep.mubr.f32.mxu0 0.0
    %v2352 = vand.u32 %v1876, 4294901760
    %2353 = vmatmul.mubr.f32.gmra.mxu0 %v2352
    %v2354 = vpop.f32.mrf.mxu0
    %v2355 = vadd.f32 %v2259, %v2354
    %v2356 = vpop.f32.mrf.mxu0
    %2357 = vmatprep.mubr.f32.mxu0 0.0
    %v2358 = vand.u32 %v1878, 4294901760
    %2359 = vmatmul.mubr.f32.gmra.mxu0 %v2358
    %v2360 = vpop.f32.mrf.mxu0
    %v2361 = vadd.f32 %v2267, %v2360
    %v2362 = vpop.f32.mrf.mxu0
    %2363 = vmatprep.mubr.f32.mxu0 0.0
    %v2364 = vand.u32 %v1880, 4294901760
    %2365 = vmatmul.mubr.f32.gmra.mxu0 %v2364
    %v2366 = vpop.f32.mrf.mxu0
    %v2367 = vadd.f32 %v2275, %v2366
    %v2368 = vpop.f32.mrf.mxu0
    %2369 = vdwg.mxu0
    %2370 = vmatprep.subr.mxu0 0.0
    %2371 = vmatpush1.msra.mxu0 0.0
    %2372 = vmatprep.subr.mxu0 0.0
    %2373 = vmatpush1.msra.mxu0 0.0
    %2374 = vmatprep.subr.mxu0 0.0
    %2375 = vmatpush1.msra.mxu0 0.0
    %2376 = vmatprep.subr.mxu0 0.0
    %2377 = vmatpush1.msra.mxu0 0.0
    %2378 = vmatprep.subr.mxu0 0.0
    %2379 = vmatpush1.msra.mxu0 0.0
    %2380 = vmatprep.subr.mxu0 0.0
    %2381 = vmatpush1.msra.mxu0 0.0
    %2382 = vmatprep.subr.mxu0 0.0
    %2383 = vmatpush1.msra.mxu0 0.0
    %2384 = vmatprep.subr.mxu0 0.0
    %2385 = vmatpush1.msra.mxu0 0.0
    %2386 = vmatprep.subr.mxu0 0.0
    %2387 = vmatpush1.msra.mxu0 0.0
    %2388 = vmatprep.subr.mxu0 0.0
    %2389 = vmatpush1.msra.mxu0 0.0
    %2390 = vmatprep.subr.mxu0 0.0
    %2391 = vmatpush1.msra.mxu0 0.0
    %2392 = vmatprep.subr.mxu0 0.0
    %2393 = vmatpush1.msra.mxu0 0.0
    %2394 = vmatprep.subr.mxu0 0.0
    %2395 = vmatpush1.msra.mxu0 0.0
    %2396 = vmatprep.subr.mxu0 0.0
    %2397 = vmatpush1.msra.mxu0 0.0
    %2398 = vmatprep.subr.mxu0 0.0
    %2399 = vmatpush1.msra.mxu0 0.0
    %2400 = vmatprep.subr.mxu0 0.0
    %v2401 = vand.u32 %v1883, 4294901760
    %2402 = vmatpush1.msra.mxu0 %v2401
    %2403 = vmatprep.subr.mxu0 0.0
    %2404 = vmatpush2.msra.mxu0 0.0
    %2405 = vmatprep.subr.mxu0 0.0
    %2406 = vmatpush2.msra.mxu0 0.0
    %2407 = vmatprep.subr.mxu0 0.0
    %2408 = vmatpush2.msra.mxu0 0.0
    %2409 = vmatprep.subr.mxu0 0.0
    %2410 = vmatpush2.msra.mxu0 0.0
    %2411 = vmatprep.subr.mxu0 0.0
    %2412 = vmatpush2.msra.mxu0 0.0
    %2413 = vmatprep.subr.mxu0 0.0
    %2414 = vmatpush2.msra.mxu0 0.0
    %2415 = vmatprep.subr.mxu0 0.0
    %2416 = vmatpush2.msra.mxu0 0.0
    %2417 = vmatprep.subr.mxu0 0.0
    %2418 = vmatpush2.msra.mxu0 0.0
    %2419 = vmatprep.subr.mxu0 0.0
    %2420 = vmatpush2.msra.mxu0 0.0
    %2421 = vmatprep.subr.mxu0 0.0
    %2422 = vmatpush2.msra.mxu0 0.0
    %2423 = vmatprep.subr.mxu0 0.0
    %2424 = vmatpush2.msra.mxu0 0.0
    %2425 = vmatprep.subr.mxu0 0.0
    %2426 = vmatpush2.msra.mxu0 0.0
    %2427 = vmatprep.subr.mxu0 0.0
    %2428 = vmatpush2.msra.mxu0 0.0
    %2429 = vmatprep.subr.mxu0 0.0
    %2430 = vmatpush2.msra.mxu0 0.0
    %2431 = vmatprep.subr.mxu0 0.0
    %2432 = vmatpush2.msra.mxu0 0.0
    %2433 = vmatprep.subr.mxu0 0.0
    %2434 = vmatpush2.msra.mxu0 0.0
    %2435 = vmatprep.mubr.f32.mxu0 0.0
    %v2436 = vand.u32 %v1874, 4294901760
    %2437 = vmatmul.mubr.f32.gmra.mxu0 %v2436
    %v2438 = vpop.f32.mrf.mxu0
    %v2439 = vadd.f32 %v2349, %v2438
    %v2440 = vpop.f32.mrf.mxu0
    %2441 = vmatprep.mubr.f32.mxu0 0.0
    %v2442 = vand.u32 %v1876, 4294901760
    %2443 = vmatmul.mubr.f32.gmra.mxu0 %v2442
    %v2444 = vpop.f32.mrf.mxu0
    %v2445 = vadd.f32 %v2355, %v2444
    %v2446 = vpop.f32.mrf.mxu0
    %2447 = vmatprep.mubr.f32.mxu0 0.0
    %v2448 = vand.u32 %v1878, 4294901760
    %2449 = vmatmul.mubr.f32.gmra.mxu0 %v2448
    %v2450 = vpop.f32.mrf.mxu0
    %v2451 = vadd.f32 %v2361, %v2450
    %v2452 = vpop.f32.mrf.mxu0
    %2453 = vmatprep.mubr.f32.mxu0 0.0
    %v2454 = vand.u32 %v1880, 4294901760
    %2455 = vmatmul.mubr.f32.gmra.mxu0 %v2454
    %v2456 = vpop.f32.mrf.mxu0
    %v2457 = vadd.f32 %v2367, %v2456
    %v2458 = vpop.f32.mrf.mxu0
    %2459 = vdwg.mxu0
    %v2460 = vadd.f32 %v1857, %v2439
    %v2461 = vadd.f32 %v1858, %v2445
    %v2462 = vadd.f32 %v1859, %v2451
    %v2463 = vadd.f32 %v1860, %v2457
    %vm2464 = vcmask 1043456
    %v2465 = vrot.slane %v63, 4
    %v2466 = vrot.slane %v55, 4
    %v2467 = vsel %vm2464, %v2465, %v2466
    %v2468 = vrot.slane %v65, 4
    %v2469 = vsel %vm2464, %v2466, %v2468
    %v2470 = vrot.slane %v64, 4
    %v2471 = vrot.slane %v58, 4
    %v2472 = vsel %vm2464, %v2470, %v2471
    %v2473 = vrot.slane %v66, 4
    %v2474 = vsel %vm2464, %v2471, %v2473
    %s2475 = scalar_lea.vmem %s1, 32
    %v2476 = vld [vmem:[%s2475] sm:$0x3f]
    %v2477 = vsel %vm85, %v2467, 0
    %v2479 = vsel %vm85, %v2469, 0
    %v2481 = vsel %vm85, %v2472, 0
    %v2483 = vsel %vm85, %v2474, 0
    %v2486 = vsel %vm94, %v2476, 0
    %2488 = vmatprep.subr.mxu0 0.0
    %2489 = vmatpush1.msra.mxu0 0.0
    %2490 = vmatprep.subr.mxu0 0.0
    %2491 = vmatpush1.msra.mxu0 0.0
    %2492 = vmatprep.subr.mxu0 0.0
    %2493 = vmatpush1.msra.mxu0 0.0
    %2494 = vmatprep.subr.mxu0 0.0
    %2495 = vmatpush1.msra.mxu0 0.0
    %2496 = vmatprep.subr.mxu0 0.0
    %2497 = vmatpush1.msra.mxu0 0.0
    %2498 = vmatprep.subr.mxu0 0.0
    %2499 = vmatpush1.msra.mxu0 0.0
    %2500 = vmatprep.subr.mxu0 0.0
    %2501 = vmatpush1.msra.mxu0 0.0
    %2502 = vmatprep.subr.mxu0 0.0
    %2503 = vmatpush1.msra.mxu0 0.0
    %2504 = vmatprep.subr.mxu0 0.0
    %2505 = vmatpush1.msra.mxu0 0.0
    %2506 = vmatprep.subr.mxu0 0.0
    %2507 = vmatpush1.msra.mxu0 0.0
    %2508 = vmatprep.subr.mxu0 0.0
    %2509 = vmatpush1.msra.mxu0 0.0
    %2510 = vmatprep.subr.mxu0 0.0
    %2511 = vmatpush1.msra.mxu0 0.0
    %2512 = vmatprep.subr.mxu0 0.0
    %2513 = vmatpush1.msra.mxu0 0.0
    %2514 = vmatprep.subr.mxu0 0.0
    %2515 = vmatpush1.msra.mxu0 0.0
    %2516 = vmatprep.subr.mxu0 0.0
    %2517 = vmatpush1.msra.mxu0 0.0
    %2518 = vmatprep.subr.mxu0 0.0
    %v2519 = vand.u32 %v2486, 4294901760
    %2520 = vmatpush1.msra.mxu0 %v2519
    %2521 = vmatprep.subr.mxu0 0.0
    %2522 = vmatpush2.msra.mxu0 0.0
    %2523 = vmatprep.subr.mxu0 0.0
    %2524 = vmatpush2.msra.mxu0 0.0
    %2525 = vmatprep.subr.mxu0 0.0
    %2526 = vmatpush2.msra.mxu0 0.0
    %2527 = vmatprep.subr.mxu0 0.0
    %2528 = vmatpush2.msra.mxu0 0.0
    %2529 = vmatprep.subr.mxu0 0.0
    %2530 = vmatpush2.msra.mxu0 0.0
    %2531 = vmatprep.subr.mxu0 0.0
    %2532 = vmatpush2.msra.mxu0 0.0
    %2533 = vmatprep.subr.mxu0 0.0
    %2534 = vmatpush2.msra.mxu0 0.0
    %2535 = vmatprep.subr.mxu0 0.0
    %2536 = vmatpush2.msra.mxu0 0.0
    %2537 = vmatprep.subr.mxu0 0.0
    %2538 = vmatpush2.msra.mxu0 0.0
    %2539 = vmatprep.subr.mxu0 0.0
    %2540 = vmatpush2.msra.mxu0 0.0
    %2541 = vmatprep.subr.mxu0 0.0
    %2542 = vmatpush2.msra.mxu0 0.0
    %2543 = vmatprep.subr.mxu0 0.0
    %2544 = vmatpush2.msra.mxu0 0.0
    %2545 = vmatprep.subr.mxu0 0.0
    %2546 = vmatpush2.msra.mxu0 0.0
    %2547 = vmatprep.subr.mxu0 0.0
    %2548 = vmatpush2.msra.mxu0 0.0
    %2549 = vmatprep.subr.mxu0 0.0
    %2550 = vmatpush2.msra.mxu0 0.0
    %2551 = vmatprep.subr.mxu0 0.0
    %2552 = vmatpush2.msra.mxu0 0.0
    %2553 = vmatprep.mubr.f32.mxu0 0.0
    %v2554 = vand.u32 %v2477, 4294901760
    %v2555 = vsub.f32 %v2477, %v2554
    %v2556 = vand.u32 %v2555, 4294901760
    %v2557 = vsub.f32 %v2555, %v2556
    %v2558 = vand.u32 %v2557, 4294901760
    %2559 = vmatmul.mubr.f32.gmra.mxu0 %v2558
    %v2560 = vpop.f32.mrf.mxu0
    %v2561 = vadd.f32 0.0, %v2560
    %v2562 = vpop.f32.mrf.mxu0
    %2563 = vmatprep.mubr.f32.mxu0 0.0
    %v2564 = vand.u32 %v2479, 4294901760
    %v2565 = vsub.f32 %v2479, %v2564
    %v2566 = vand.u32 %v2565, 4294901760
    %v2567 = vsub.f32 %v2565, %v2566
    %v2568 = vand.u32 %v2567, 4294901760
    %2569 = vmatmul.mubr.f32.gmra.mxu0 %v2568
    %v2570 = vpop.f32.mrf.mxu0
    %v2571 = vadd.f32 0.0, %v2570
    %v2572 = vpop.f32.mrf.mxu0
    %2573 = vmatprep.mubr.f32.mxu0 0.0
    %v2574 = vand.u32 %v2481, 4294901760
    %v2575 = vsub.f32 %v2481, %v2574
    %v2576 = vand.u32 %v2575, 4294901760
    %v2577 = vsub.f32 %v2575, %v2576
    %v2578 = vand.u32 %v2577, 4294901760
    %2579 = vmatmul.mubr.f32.gmra.mxu0 %v2578
    %v2580 = vpop.f32.mrf.mxu0
    %v2581 = vadd.f32 0.0, %v2580
    %v2582 = vpop.f32.mrf.mxu0
    %2583 = vmatprep.mubr.f32.mxu0 0.0
    %v2584 = vand.u32 %v2483, 4294901760
    %v2585 = vsub.f32 %v2483, %v2584
    %v2586 = vand.u32 %v2585, 4294901760
    %v2587 = vsub.f32 %v2585, %v2586
    %v2588 = vand.u32 %v2587, 4294901760
    %2589 = vmatmul.mubr.f32.gmra.mxu0 %v2588
    %v2590 = vpop.f32.mrf.mxu0
    %v2591 = vadd.f32 0.0, %v2590
    %v2592 = vpop.f32.mrf.mxu0
    %2593 = vdwg.mxu0
    %2594 = vmatprep.subr.mxu0 0.0
    %2595 = vmatpush1.msra.mxu0 0.0
    %2596 = vmatprep.subr.mxu0 0.0
    %2597 = vmatpush1.msra.mxu0 0.0
    %2598 = vmatprep.subr.mxu0 0.0
    %2599 = vmatpush1.msra.mxu0 0.0
    %2600 = vmatprep.subr.mxu0 0.0
    %2601 = vmatpush1.msra.mxu0 0.0
    %2602 = vmatprep.subr.mxu0 0.0
    %2603 = vmatpush1.msra.mxu0 0.0
    %2604 = vmatprep.subr.mxu0 0.0
    %2605 = vmatpush1.msra.mxu0 0.0
    %2606 = vmatprep.subr.mxu0 0.0
    %2607 = vmatpush1.msra.mxu0 0.0
    %2608 = vmatprep.subr.mxu0 0.0
    %2609 = vmatpush1.msra.mxu0 0.0
    %2610 = vmatprep.subr.mxu0 0.0
    %2611 = vmatpush1.msra.mxu0 0.0
    %2612 = vmatprep.subr.mxu0 0.0
    %2613 = vmatpush1.msra.mxu0 0.0
    %2614 = vmatprep.subr.mxu0 0.0
    %2615 = vmatpush1.msra.mxu0 0.0
    %2616 = vmatprep.subr.mxu0 0.0
    %2617 = vmatpush1.msra.mxu0 0.0
    %2618 = vmatprep.subr.mxu0 0.0
    %2619 = vmatpush1.msra.mxu0 0.0
    %2620 = vmatprep.subr.mxu0 0.0
    %2621 = vmatpush1.msra.mxu0 0.0
    %2622 = vmatprep.subr.mxu0 0.0
    %2623 = vmatpush1.msra.mxu0 0.0
    %2624 = vmatprep.subr.mxu0 0.0
    %v2625 = vand.u32 %v2486, 4294901760
    %v2626 = vsub.f32 %v2486, %v2625
    %v2627 = vand.u32 %v2626, 4294901760
    %v2628 = vsub.f32 %v2626, %v2627
    %v2629 = vand.u32 %v2628, 4294901760
    %2630 = vmatpush1.msra.mxu0 %v2629
    %2631 = vmatprep.subr.mxu0 0.0
    %2632 = vmatpush2.msra.mxu0 0.0
    %2633 = vmatprep.subr.mxu0 0.0
    %2634 = vmatpush2.msra.mxu0 0.0
    %2635 = vmatprep.subr.mxu0 0.0
    %2636 = vmatpush2.msra.mxu0 0.0
    %2637 = vmatprep.subr.mxu0 0.0
    %2638 = vmatpush2.msra.mxu0 0.0
    %2639 = vmatprep.subr.mxu0 0.0
    %2640 = vmatpush2.msra.mxu0 0.0
    %2641 = vmatprep.subr.mxu0 0.0
    %2642 = vmatpush2.msra.mxu0 0.0
    %2643 = vmatprep.subr.mxu0 0.0
    %2644 = vmatpush2.msra.mxu0 0.0
    %2645 = vmatprep.subr.mxu0 0.0
    %2646 = vmatpush2.msra.mxu0 0.0
    %2647 = vmatprep.subr.mxu0 0.0
    %2648 = vmatpush2.msra.mxu0 0.0
    %2649 = vmatprep.subr.mxu0 0.0
    %2650 = vmatpush2.msra.mxu0 0.0
    %2651 = vmatprep.subr.mxu0 0.0
    %2652 = vmatpush2.msra.mxu0 0.0
    %2653 = vmatprep.subr.mxu0 0.0
    %2654 = vmatpush2.msra.mxu0 0.0
    %2655 = vmatprep.subr.mxu0 0.0
    %2656 = vmatpush2.msra.mxu0 0.0
    %2657 = vmatprep.subr.mxu0 0.0
    %2658 = vmatpush2.msra.mxu0 0.0
    %2659 = vmatprep.subr.mxu0 0.0
    %2660 = vmatpush2.msra.mxu0 0.0
    %2661 = vmatprep.subr.mxu0 0.0
    %2662 = vmatpush2.msra.mxu0 0.0
    %2663 = vmatprep.mubr.f32.mxu0 0.0
    %v2664 = vand.u32 %v2477, 4294901760
    %2665 = vmatmul.mubr.f32.gmra.mxu0 %v2664
    %v2666 = vpop.f32.mrf.mxu0
    %v2667 = vadd.f32 %v2561, %v2666
    %v2668 = vpop.f32.mrf.mxu0
    %2669 = vmatprep.mubr.f32.mxu0 0.0
    %v2670 = vand.u32 %v2479, 4294901760
    %2671 = vmatmul.mubr.f32.gmra.mxu0 %v2670
    %v2672 = vpop.f32.mrf.mxu0
    %v2673 = vadd.f32 %v2571, %v2672
    %v2674 = vpop.f32.mrf.mxu0
    %2675 = vmatprep.mubr.f32.mxu0 0.0
    %v2676 = vand.u32 %v2481, 4294901760
    %2677 = vmatmul.mubr.f32.gmra.mxu0 %v2676
    %v2678 = vpop.f32.mrf.mxu0
    %v2679 = vadd.f32 %v2581, %v2678
    %v2680 = vpop.f32.mrf.mxu0
    %2681 = vmatprep.mubr.f32.mxu0 0.0
    %v2682 = vand.u32 %v2483, 4294901760
    %2683 = vmatmul.mubr.f32.gmra.mxu0 %v2682
    %v2684 = vpop.f32.mrf.mxu0
    %v2685 = vadd.f32 %v2591, %v2684
    %v2686 = vpop.f32.mrf.mxu0
    %2687 = vdwg.mxu0
    %2688 = vmatprep.subr.mxu0 0.0
    %2689 = vmatpush1.msra.mxu0 0.0
    %2690 = vmatprep.subr.mxu0 0.0
    %2691 = vmatpush1.msra.mxu0 0.0
    %2692 = vmatprep.subr.mxu0 0.0
    %2693 = vmatpush1.msra.mxu0 0.0
    %2694 = vmatprep.subr.mxu0 0.0
    %2695 = vmatpush1.msra.mxu0 0.0
    %2696 = vmatprep.subr.mxu0 0.0
    %2697 = vmatpush1.msra.mxu0 0.0
    %2698 = vmatprep.subr.mxu0 0.0
    %2699 = vmatpush1.msra.mxu0 0.0
    %2700 = vmatprep.subr.mxu0 0.0
    %2701 = vmatpush1.msra.mxu0 0.0
    %2702 = vmatprep.subr.mxu0 0.0
    %2703 = vmatpush1.msra.mxu0 0.0
    %2704 = vmatprep.subr.mxu0 0.0
    %2705 = vmatpush1.msra.mxu0 0.0
    %2706 = vmatprep.subr.mxu0 0.0
    %2707 = vmatpush1.msra.mxu0 0.0
    %2708 = vmatprep.subr.mxu0 0.0
    %2709 = vmatpush1.msra.mxu0 0.0
    %2710 = vmatprep.subr.mxu0 0.0
    %2711 = vmatpush1.msra.mxu0 0.0
    %2712 = vmatprep.subr.mxu0 0.0
    %2713 = vmatpush1.msra.mxu0 0.0
    %2714 = vmatprep.subr.mxu0 0.0
    %2715 = vmatpush1.msra.mxu0 0.0
    %2716 = vmatprep.subr.mxu0 0.0
    %2717 = vmatpush1.msra.mxu0 0.0
    %2718 = vmatprep.subr.mxu0 0.0
    %v2719 = vand.u32 %v2486, 4294901760
    %v2720 = vsub.f32 %v2486, %v2719
    %2721 = vmatpush1.msra.mxu0 %v2720
    %2722 = vmatprep.subr.mxu0 0.0
    %2723 = vmatpush2.msra.mxu0 0.0
    %2724 = vmatprep.subr.mxu0 0.0
    %2725 = vmatpush2.msra.mxu0 0.0
    %2726 = vmatprep.subr.mxu0 0.0
    %2727 = vmatpush2.msra.mxu0 0.0
    %2728 = vmatprep.subr.mxu0 0.0
    %2729 = vmatpush2.msra.mxu0 0.0
    %2730 = vmatprep.subr.mxu0 0.0
    %2731 = vmatpush2.msra.mxu0 0.0
    %2732 = vmatprep.subr.mxu0 0.0
    %2733 = vmatpush2.msra.mxu0 0.0
    %2734 = vmatprep.subr.mxu0 0.0
    %2735 = vmatpush2.msra.mxu0 0.0
    %2736 = vmatprep.subr.mxu0 0.0
    %2737 = vmatpush2.msra.mxu0 0.0
    %2738 = vmatprep.subr.mxu0 0.0
    %2739 = vmatpush2.msra.mxu0 0.0
    %2740 = vmatprep.subr.mxu0 0.0
    %2741 = vmatpush2.msra.mxu0 0.0
    %2742 = vmatprep.subr.mxu0 0.0
    %2743 = vmatpush2.msra.mxu0 0.0
    %2744 = vmatprep.subr.mxu0 0.0
    %2745 = vmatpush2.msra.mxu0 0.0
    %2746 = vmatprep.subr.mxu0 0.0
    %2747 = vmatpush2.msra.mxu0 0.0
    %2748 = vmatprep.subr.mxu0 0.0
    %2749 = vmatpush2.msra.mxu0 0.0
    %2750 = vmatprep.subr.mxu0 0.0
    %2751 = vmatpush2.msra.mxu0 0.0
    %2752 = vmatprep.subr.mxu0 0.0
    %2753 = vmatpush2.msra.mxu0 0.0
    %2754 = vmatprep.mubr.f32.mxu0 0.0
    %v2755 = vand.u32 %v2477, 4294901760
    %v2756 = vsub.f32 %v2477, %v2755
    %2757 = vmatmul.mubr.f32.gmra.mxu0 %v2756
    %v2758 = vpop.f32.mrf.mxu0
    %v2759 = vadd.f32 %v2667, %v2758
    %v2760 = vpop.f32.mrf.mxu0
    %2761 = vmatprep.mubr.f32.mxu0 0.0
    %v2762 = vand.u32 %v2479, 4294901760
    %v2763 = vsub.f32 %v2479, %v2762
    %2764 = vmatmul.mubr.f32.gmra.mxu0 %v2763
    %v2765 = vpop.f32.mrf.mxu0
    %v2766 = vadd.f32 %v2673, %v2765
    %v2767 = vpop.f32.mrf.mxu0
    %2768 = vmatprep.mubr.f32.mxu0 0.0
    %v2769 = vand.u32 %v2481, 4294901760
    %v2770 = vsub.f32 %v2481, %v2769
    %2771 = vmatmul.mubr.f32.gmra.mxu0 %v2770
    %v2772 = vpop.f32.mrf.mxu0
    %v2773 = vadd.f32 %v2679, %v2772
    %v2774 = vpop.f32.mrf.mxu0
    %2775 = vmatprep.mubr.f32.mxu0 0.0
    %v2776 = vand.u32 %v2483, 4294901760
    %v2777 = vsub.f32 %v2483, %v2776
    %2778 = vmatmul.mubr.f32.gmra.mxu0 %v2777
    %v2779 = vpop.f32.mrf.mxu0
    %v2780 = vadd.f32 %v2685, %v2779
    %v2781 = vpop.f32.mrf.mxu0
    %2782 = vdwg.mxu0
    %2783 = vmatprep.subr.mxu0 0.0
    %2784 = vmatpush1.msra.mxu0 0.0
    %2785 = vmatprep.subr.mxu0 0.0
    %2786 = vmatpush1.msra.mxu0 0.0
    %2787 = vmatprep.subr.mxu0 0.0
    %2788 = vmatpush1.msra.mxu0 0.0
    %2789 = vmatprep.subr.mxu0 0.0
    %2790 = vmatpush1.msra.mxu0 0.0
    %2791 = vmatprep.subr.mxu0 0.0
    %2792 = vmatpush1.msra.mxu0 0.0
    %2793 = vmatprep.subr.mxu0 0.0
    %2794 = vmatpush1.msra.mxu0 0.0
    %2795 = vmatprep.subr.mxu0 0.0
    %2796 = vmatpush1.msra.mxu0 0.0
    %2797 = vmatprep.subr.mxu0 0.0
    %2798 = vmatpush1.msra.mxu0 0.0
    %2799 = vmatprep.subr.mxu0 0.0
    %2800 = vmatpush1.msra.mxu0 0.0
    %2801 = vmatprep.subr.mxu0 0.0
    %2802 = vmatpush1.msra.mxu0 0.0
    %2803 = vmatprep.subr.mxu0 0.0
    %2804 = vmatpush1.msra.mxu0 0.0
    %2805 = vmatprep.subr.mxu0 0.0
    %2806 = vmatpush1.msra.mxu0 0.0
    %2807 = vmatprep.subr.mxu0 0.0
    %2808 = vmatpush1.msra.mxu0 0.0
    %2809 = vmatprep.subr.mxu0 0.0
    %2810 = vmatpush1.msra.mxu0 0.0
    %2811 = vmatprep.subr.mxu0 0.0
    %2812 = vmatpush1.msra.mxu0 0.0
    %2813 = vmatprep.subr.mxu0 0.0
    %v2814 = vand.u32 %v2486, 4294901760
    %2815 = vmatpush1.msra.mxu0 %v2814
    %2816 = vmatprep.subr.mxu0 0.0
    %2817 = vmatpush2.msra.mxu0 0.0
    %2818 = vmatprep.subr.mxu0 0.0
    %2819 = vmatpush2.msra.mxu0 0.0
    %2820 = vmatprep.subr.mxu0 0.0
    %2821 = vmatpush2.msra.mxu0 0.0
    %2822 = vmatprep.subr.mxu0 0.0
    %2823 = vmatpush2.msra.mxu0 0.0
    %2824 = vmatprep.subr.mxu0 0.0
    %2825 = vmatpush2.msra.mxu0 0.0
    %2826 = vmatprep.subr.mxu0 0.0
    %2827 = vmatpush2.msra.mxu0 0.0
    %2828 = vmatprep.subr.mxu0 0.0
    %2829 = vmatpush2.msra.mxu0 0.0
    %2830 = vmatprep.subr.mxu0 0.0
    %2831 = vmatpush2.msra.mxu0 0.0
    %2832 = vmatprep.subr.mxu0 0.0
    %2833 = vmatpush2.msra.mxu0 0.0
    %2834 = vmatprep.subr.mxu0 0.0
    %2835 = vmatpush2.msra.mxu0 0.0
    %2836 = vmatprep.subr.mxu0 0.0
    %2837 = vmatpush2.msra.mxu0 0.0
    %2838 = vmatprep.subr.mxu0 0.0
    %2839 = vmatpush2.msra.mxu0 0.0
    %2840 = vmatprep.subr.mxu0 0.0
    %2841 = vmatpush2.msra.mxu0 0.0
    %2842 = vmatprep.subr.mxu0 0.0
    %2843 = vmatpush2.msra.mxu0 0.0
    %2844 = vmatprep.subr.mxu0 0.0
    %2845 = vmatpush2.msra.mxu0 0.0
    %2846 = vmatprep.subr.mxu0 0.0
    %2847 = vmatpush2.msra.mxu0 0.0
    %2848 = vmatprep.mubr.f32.mxu0 0.0
    %v2849 = vand.u32 %v2477, 4294901760
    %v2850 = vsub.f32 %v2477, %v2849
    %v2851 = vand.u32 %v2850, 4294901760
    %2852 = vmatmul.mubr.f32.gmra.mxu0 %v2851
    %v2853 = vpop.f32.mrf.mxu0
    %v2854 = vadd.f32 %v2759, %v2853
    %v2855 = vpop.f32.mrf.mxu0
    %2856 = vmatprep.mubr.f32.mxu0 0.0
    %v2857 = vand.u32 %v2479, 4294901760
    %v2858 = vsub.f32 %v2479, %v2857
    %v2859 = vand.u32 %v2858, 4294901760
    %2860 = vmatmul.mubr.f32.gmra.mxu0 %v2859
    %v2861 = vpop.f32.mrf.mxu0
    %v2862 = vadd.f32 %v2766, %v2861
    %v2863 = vpop.f32.mrf.mxu0
    %2864 = vmatprep.mubr.f32.mxu0 0.0
    %v2865 = vand.u32 %v2481, 4294901760
    %v2866 = vsub.f32 %v2481, %v2865
    %v2867 = vand.u32 %v2866, 4294901760
    %2868 = vmatmul.mubr.f32.gmra.mxu0 %v2867
    %v2869 = vpop.f32.mrf.mxu0
    %v2870 = vadd.f32 %v2773, %v2869
    %v2871 = vpop.f32.mrf.mxu0
    %2872 = vmatprep.mubr.f32.mxu0 0.0
    %v2873 = vand.u32 %v2483, 4294901760
    %v2874 = vsub.f32 %v2483, %v2873
    %v2875 = vand.u32 %v2874, 4294901760
    %2876 = vmatmul.mubr.f32.gmra.mxu0 %v2875
    %v2877 = vpop.f32.mrf.mxu0
    %v2878 = vadd.f32 %v2780, %v2877
    %v2879 = vpop.f32.mrf.mxu0
    %2880 = vdwg.mxu0
    %2881 = vmatprep.subr.mxu0 0.0
    %2882 = vmatpush1.msra.mxu0 0.0
    %2883 = vmatprep.subr.mxu0 0.0
    %2884 = vmatpush1.msra.mxu0 0.0
    %2885 = vmatprep.subr.mxu0 0.0
    %2886 = vmatpush1.msra.mxu0 0.0
    %2887 = vmatprep.subr.mxu0 0.0
    %2888 = vmatpush1.msra.mxu0 0.0
    %2889 = vmatprep.subr.mxu0 0.0
    %2890 = vmatpush1.msra.mxu0 0.0
    %2891 = vmatprep.subr.mxu0 0.0
    %2892 = vmatpush1.msra.mxu0 0.0
    %2893 = vmatprep.subr.mxu0 0.0
    %2894 = vmatpush1.msra.mxu0 0.0
    %2895 = vmatprep.subr.mxu0 0.0
    %2896 = vmatpush1.msra.mxu0 0.0
    %2897 = vmatprep.subr.mxu0 0.0
    %2898 = vmatpush1.msra.mxu0 0.0
    %2899 = vmatprep.subr.mxu0 0.0
    %2900 = vmatpush1.msra.mxu0 0.0
    %2901 = vmatprep.subr.mxu0 0.0
    %2902 = vmatpush1.msra.mxu0 0.0
    %2903 = vmatprep.subr.mxu0 0.0
    %2904 = vmatpush1.msra.mxu0 0.0
    %2905 = vmatprep.subr.mxu0 0.0
    %2906 = vmatpush1.msra.mxu0 0.0
    %2907 = vmatprep.subr.mxu0 0.0
    %2908 = vmatpush1.msra.mxu0 0.0
    %2909 = vmatprep.subr.mxu0 0.0
    %2910 = vmatpush1.msra.mxu0 0.0
    %2911 = vmatprep.subr.mxu0 0.0
    %v2912 = vand.u32 %v2486, 4294901760
    %v2913 = vsub.f32 %v2486, %v2912
    %v2914 = vand.u32 %v2913, 4294901760
    %2915 = vmatpush1.msra.mxu0 %v2914
    %2916 = vmatprep.subr.mxu0 0.0
    %2917 = vmatpush2.msra.mxu0 0.0
    %2918 = vmatprep.subr.mxu0 0.0
    %2919 = vmatpush2.msra.mxu0 0.0
    %2920 = vmatprep.subr.mxu0 0.0
    %2921 = vmatpush2.msra.mxu0 0.0
    %2922 = vmatprep.subr.mxu0 0.0
    %2923 = vmatpush2.msra.mxu0 0.0
    %2924 = vmatprep.subr.mxu0 0.0
    %2925 = vmatpush2.msra.mxu0 0.0
    %2926 = vmatprep.subr.mxu0 0.0
    %2927 = vmatpush2.msra.mxu0 0.0
    %2928 = vmatprep.subr.mxu0 0.0
    %2929 = vmatpush2.msra.mxu0 0.0
    %2930 = vmatprep.subr.mxu0 0.0
    %2931 = vmatpush2.msra.mxu0 0.0
    %2932 = vmatprep.subr.mxu0 0.0
    %2933 = vmatpush2.msra.mxu0 0.0
    %2934 = vmatprep.subr.mxu0 0.0
    %2935 = vmatpush2.msra.mxu0 0.0
    %2936 = vmatprep.subr.mxu0 0.0
    %2937 = vmatpush2.msra.mxu0 0.0
    %2938 = vmatprep.subr.mxu0 0.0
    %2939 = vmatpush2.msra.mxu0 0.0
    %2940 = vmatprep.subr.mxu0 0.0
    %2941 = vmatpush2.msra.mxu0 0.0
    %2942 = vmatprep.subr.mxu0 0.0
    %2943 = vmatpush2.msra.mxu0 0.0
    %2944 = vmatprep.subr.mxu0 0.0
    %2945 = vmatpush2.msra.mxu0 0.0
    %2946 = vmatprep.subr.mxu0 0.0
    %2947 = vmatpush2.msra.mxu0 0.0
    %2948 = vmatprep.mubr.f32.mxu0 0.0
    %v2949 = vand.u32 %v2477, 4294901760
    %2950 = vmatmul.mubr.f32.gmra.mxu0 %v2949
    %v2951 = vpop.f32.mrf.mxu0
    %v2952 = vadd.f32 %v2854, %v2951
    %v2953 = vpop.f32.mrf.mxu0
    %2954 = vmatprep.mubr.f32.mxu0 0.0
    %v2955 = vand.u32 %v2479, 4294901760
    %2956 = vmatmul.mubr.f32.gmra.mxu0 %v2955
    %v2957 = vpop.f32.mrf.mxu0
    %v2958 = vadd.f32 %v2862, %v2957
    %v2959 = vpop.f32.mrf.mxu0
    %2960 = vmatprep.mubr.f32.mxu0 0.0
    %v2961 = vand.u32 %v2481, 4294901760
    %2962 = vmatmul.mubr.f32.gmra.mxu0 %v2961
    %v2963 = vpop.f32.mrf.mxu0
    %v2964 = vadd.f32 %v2870, %v2963
    %v2965 = vpop.f32.mrf.mxu0
    %2966 = vmatprep.mubr.f32.mxu0 0.0
    %v2967 = vand.u32 %v2483, 4294901760
    %2968 = vmatmul.mubr.f32.gmra.mxu0 %v2967
    %v2969 = vpop.f32.mrf.mxu0
    %v2970 = vadd.f32 %v2878, %v2969
    %v2971 = vpop.f32.mrf.mxu0
    %2972 = vdwg.mxu0
    %2973 = vmatprep.subr.mxu0 0.0
    %2974 = vmatpush1.msra.mxu0 0.0
    %2975 = vmatprep.subr.mxu0 0.0
    %2976 = vmatpush1.msra.mxu0 0.0
    %2977 = vmatprep.subr.mxu0 0.0
    %2978 = vmatpush1.msra.mxu0 0.0
    %2979 = vmatprep.subr.mxu0 0.0
    %2980 = vmatpush1.msra.mxu0 0.0
    %2981 = vmatprep.subr.mxu0 0.0
    %2982 = vmatpush1.msra.mxu0 0.0
    %2983 = vmatprep.subr.mxu0 0.0
    %2984 = vmatpush1.msra.mxu0 0.0
    %2985 = vmatprep.subr.mxu0 0.0
    %2986 = vmatpush1.msra.mxu0 0.0
    %2987 = vmatprep.subr.mxu0 0.0
    %2988 = vmatpush1.msra.mxu0 0.0
    %2989 = vmatprep.subr.mxu0 0.0
    %2990 = vmatpush1.msra.mxu0 0.0
    %2991 = vmatprep.subr.mxu0 0.0
    %2992 = vmatpush1.msra.mxu0 0.0
    %2993 = vmatprep.subr.mxu0 0.0
    %2994 = vmatpush1.msra.mxu0 0.0
    %2995 = vmatprep.subr.mxu0 0.0
    %2996 = vmatpush1.msra.mxu0 0.0
    %2997 = vmatprep.subr.mxu0 0.0
    %2998 = vmatpush1.msra.mxu0 0.0
    %2999 = vmatprep.subr.mxu0 0.0
    %3000 = vmatpush1.msra.mxu0 0.0
    %3001 = vmatprep.subr.mxu0 0.0
    %3002 = vmatpush1.msra.mxu0 0.0
    %3003 = vmatprep.subr.mxu0 0.0
    %v3004 = vand.u32 %v2486, 4294901760
    %3005 = vmatpush1.msra.mxu0 %v3004
    %3006 = vmatprep.subr.mxu0 0.0
    %3007 = vmatpush2.msra.mxu0 0.0
    %3008 = vmatprep.subr.mxu0 0.0
    %3009 = vmatpush2.msra.mxu0 0.0
    %3010 = vmatprep.subr.mxu0 0.0
    %3011 = vmatpush2.msra.mxu0 0.0
    %3012 = vmatprep.subr.mxu0 0.0
    %3013 = vmatpush2.msra.mxu0 0.0
    %3014 = vmatprep.subr.mxu0 0.0
    %3015 = vmatpush2.msra.mxu0 0.0
    %3016 = vmatprep.subr.mxu0 0.0
    %3017 = vmatpush2.msra.mxu0 0.0
    %3018 = vmatprep.subr.mxu0 0.0
    %3019 = vmatpush2.msra.mxu0 0.0
    %3020 = vmatprep.subr.mxu0 0.0
    %3021 = vmatpush2.msra.mxu0 0.0
    %3022 = vmatprep.subr.mxu0 0.0
    %3023 = vmatpush2.msra.mxu0 0.0
    %3024 = vmatprep.subr.mxu0 0.0
    %3025 = vmatpush2.msra.mxu0 0.0
    %3026 = vmatprep.subr.mxu0 0.0
    %3027 = vmatpush2.msra.mxu0 0.0
    %3028 = vmatprep.subr.mxu0 0.0
    %3029 = vmatpush2.msra.mxu0 0.0
    %3030 = vmatprep.subr.mxu0 0.0
    %3031 = vmatpush2.msra.mxu0 0.0
    %3032 = vmatprep.subr.mxu0 0.0
    %3033 = vmatpush2.msra.mxu0 0.0
    %3034 = vmatprep.subr.mxu0 0.0
    %3035 = vmatpush2.msra.mxu0 0.0
    %3036 = vmatprep.subr.mxu0 0.0
    %3037 = vmatpush2.msra.mxu0 0.0
    %3038 = vmatprep.mubr.f32.mxu0 0.0
    %v3039 = vand.u32 %v2477, 4294901760
    %3040 = vmatmul.mubr.f32.gmra.mxu0 %v3039
    %v3041 = vpop.f32.mrf.mxu0
    %v3042 = vadd.f32 %v2952, %v3041
    %v3043 = vpop.f32.mrf.mxu0
    %3044 = vmatprep.mubr.f32.mxu0 0.0
    %v3045 = vand.u32 %v2479, 4294901760
    %3046 = vmatmul.mubr.f32.gmra.mxu0 %v3045
    %v3047 = vpop.f32.mrf.mxu0
    %v3048 = vadd.f32 %v2958, %v3047
    %v3049 = vpop.f32.mrf.mxu0
    %3050 = vmatprep.mubr.f32.mxu0 0.0
    %v3051 = vand.u32 %v2481, 4294901760
    %3052 = vmatmul.mubr.f32.gmra.mxu0 %v3051
    %v3053 = vpop.f32.mrf.mxu0
    %v3054 = vadd.f32 %v2964, %v3053
    %v3055 = vpop.f32.mrf.mxu0
    %3056 = vmatprep.mubr.f32.mxu0 0.0
    %v3057 = vand.u32 %v2483, 4294901760
    %3058 = vmatmul.mubr.f32.gmra.mxu0 %v3057
    %v3059 = vpop.f32.mrf.mxu0
    %v3060 = vadd.f32 %v2970, %v3059
    %v3061 = vpop.f32.mrf.mxu0
    %3062 = vdwg.mxu0
    %v3063 = vadd.f32 %v2460, %v3042
    %v3064 = vadd.f32 %v2461, %v3048
    %v3065 = vadd.f32 %v2462, %v3054
    %v3066 = vadd.f32 %v2463, %v3060
    %v3067 = vld [vmem:[%s2] sm:$0x1]
    %v3069 = vlaneseq
    %v3070 = vshrl.u32 %v3069, 7
    %v3071 = vsub.s32 0, %v3070
    %v3072 = vrot.slane %v3067, %v3071
    %v3074 = vadd.f32 %v3063, %v3072
    %v3075 = vadd.f32 %v3064, %v3072
    %v3076 = vadd.f32 %v3065, %v3072
    %v3077 = vadd.f32 %v3066, %v3072
    %v3078 = vmax.f32 %v3074, 0.0
    %v3079 = vmax.f32 %v3075, 0.0
    %v3080 = vmax.f32 %v3076, 0.0
    %v3081 = vmax.f32 %v3077, 0.0
    %vm3086 = vcmask 1040384
    %v3087 = vrot.slane %v3078, 7
    %v3088 = vrot.slane %v3079, 7
    %v3089 = vsel %vm3086, %v3087, %v3088
    %v3090 = vrot.slane %v3080, 7
    %v3091 = vrot.slane %v3081, 7
    %v3092 = vsel %vm3086, %v3090, %v3091
    %v3097 = vsel %vm3086, 0.0, %v3087
    %v3098 = vsel %vm3086, 0.0, %v3090
    %v3099 = vsel %vm3086, %v3088, 0.0
    %v3100 = vsel %vm3086, %v3091, 0.0
    %v3101 = vld [vmem:[%s3] sm:$0xff]
    %v3102 = vld [vmem:[%s3 + $0x8] sm:$0xff]
    %v3103 = vld [vmem:[%s3 + $0x10] sm:$0xff]
    %v3104 = vld [vmem:[%s3 + $0x18] sm:$0xff]
    %v3109 = vrot.slane %v3097, 1
    %v3110 = vrot.slane %v3089, 1
    %v3111 = vsel %vm72, %v3109, %v3110
    %v3112 = vrot.slane %v3099, 1
    %v3113 = vsel %vm72, %v3110, %v3112
    %v3114 = vrot.slane %v3098, 1
    %v3115 = vrot.slane %v3092, 1
    %v3116 = vsel %vm72, %v3114, %v3115
    %v3117 = vrot.slane %v3100, 1
    %v3118 = vsel %vm72, %v3115, %v3117
    %s3119 = scalar_lea.vmem %s3, 32
    %v3120 = vld [vmem:[%s3119] sm:$0xff]
    %v3121 = vld [vmem:[%s3119 + $0x8] sm:$0xff]
    %v3122 = vld [vmem:[%s3119 + $0x10] sm:$0xff]
    %v3123 = vld [vmem:[%s3119 + $0x18] sm:$0xff]
    %vm3124 = vcmask 261120
    %v3125 = vsel %vm3124, %v3111, 0
    %v3127 = vsel %vm3124, %v3113, 0
    %v3129 = vsel %vm3124, %v3116, 0
    %v3131 = vsel %vm3124, %v3118, 0
    %3133 = vmatprep.subr.mxu0 0.0
    %3134 = vmatpush1.msra.mxu0 0.0
    %3135 = vmatprep.subr.mxu0 0.0
    %3136 = vmatpush1.msra.mxu0 0.0
    %3137 = vmatprep.subr.mxu0 0.0
    %3138 = vmatpush1.msra.mxu0 0.0
    %3139 = vmatprep.subr.mxu0 0.0
    %3140 = vmatpush1.msra.mxu0 0.0
    %3141 = vmatprep.subr.mxu0 0.0
    %3142 = vmatpush1.msra.mxu0 0.0
    %3143 = vmatprep.subr.mxu0 0.0
    %3144 = vmatpush1.msra.mxu0 0.0
    %3145 = vmatprep.subr.mxu0 0.0
    %3146 = vmatpush1.msra.mxu0 0.0
    %3147 = vmatprep.subr.mxu0 0.0
    %3148 = vmatpush1.msra.mxu0 0.0
    %3149 = vmatprep.subr.mxu0 0.0
    %3150 = vmatpush1.msra.mxu0 0.0
    %3151 = vmatprep.subr.mxu0 0.0
    %3152 = vmatpush1.msra.mxu0 0.0
    %3153 = vmatprep.subr.mxu0 0.0
    %3154 = vmatpush1.msra.mxu0 0.0
    %3155 = vmatprep.subr.mxu0 0.0
    %3156 = vmatpush1.msra.mxu0 0.0
    %3157 = vmatprep.subr.mxu0 0.0
    %v3158 = vand.u32 %v3123, 4294901760
    %3159 = vmatpush1.msra.mxu0 %v3158
    %3160 = vmatprep.subr.mxu0 0.0
    %v3161 = vand.u32 %v3122, 4294901760
    %3162 = vmatpush1.msra.mxu0 %v3161
    %3163 = vmatprep.subr.mxu0 0.0
    %v3164 = vand.u32 %v3121, 4294901760
    %3165 = vmatpush1.msra.mxu0 %v3164
    %3166 = vmatprep.subr.mxu0 0.0
    %v3167 = vand.u32 %v3120, 4294901760
    %3168 = vmatpush1.msra.mxu0 %v3167
    %3169 = vmatprep.subr.mxu0 0.0
    %3170 = vmatpush2.msra.mxu0 0.0
    %3171 = vmatprep.subr.mxu0 0.0
    %3172 = vmatpush2.msra.mxu0 0.0
    %3173 = vmatprep.subr.mxu0 0.0
    %3174 = vmatpush2.msra.mxu0 0.0
    %3175 = vmatprep.subr.mxu0 0.0
    %3176 = vmatpush2.msra.mxu0 0.0
    %3177 = vmatprep.subr.mxu0 0.0
    %3178 = vmatpush2.msra.mxu0 0.0
    %3179 = vmatprep.subr.mxu0 0.0
    %3180 = vmatpush2.msra.mxu0 0.0
    %3181 = vmatprep.subr.mxu0 0.0
    %3182 = vmatpush2.msra.mxu0 0.0
    %3183 = vmatprep.subr.mxu0 0.0
    %3184 = vmatpush2.msra.mxu0 0.0
    %3185 = vmatprep.subr.mxu0 0.0
    %3186 = vmatpush2.msra.mxu0 0.0
    %3187 = vmatprep.subr.mxu0 0.0
    %3188 = vmatpush2.msra.mxu0 0.0
    %3189 = vmatprep.subr.mxu0 0.0
    %3190 = vmatpush2.msra.mxu0 0.0
    %3191 = vmatprep.subr.mxu0 0.0
    %3192 = vmatpush2.msra.mxu0 0.0
    %3193 = vmatprep.subr.mxu0 0.0
    %3194 = vmatpush2.msra.mxu0 0.0
    %3195 = vmatprep.subr.mxu0 0.0
    %3196 = vmatpush2.msra.mxu0 0.0
    %3197 = vmatprep.subr.mxu0 0.0
    %3198 = vmatpush2.msra.mxu0 0.0
    %3199 = vmatprep.subr.mxu0 0.0
    %3200 = vmatpush2.msra.mxu0 0.0
    %3201 = vmatprep.mubr.f32.mxu0 0.0
    %v3202 = vand.u32 %v3125, 4294901760
    %v3203 = vsub.f32 %v3125, %v3202
    %v3204 = vand.u32 %v3203, 4294901760
    %v3205 = vsub.f32 %v3203, %v3204
    %v3206 = vand.u32 %v3205, 4294901760
    %3207 = vmatmul.mubr.f32.gmra.mxu0 %v3206
    %v3208 = vpop.f32.mrf.mxu0
    %v3209 = vadd.f32 0.0, %v3208
    %v3210 = vpop.f32.mrf.mxu0
    %3211 = vmatprep.mubr.f32.mxu0 0.0
    %v3212 = vand.u32 %v3127, 4294901760
    %v3213 = vsub.f32 %v3127, %v3212
    %v3214 = vand.u32 %v3213, 4294901760
    %v3215 = vsub.f32 %v3213, %v3214
    %v3216 = vand.u32 %v3215, 4294901760
    %3217 = vmatmul.mubr.f32.gmra.mxu0 %v3216
    %v3218 = vpop.f32.mrf.mxu0
    %v3219 = vadd.f32 0.0, %v3218
    %v3220 = vpop.f32.mrf.mxu0
    %3221 = vmatprep.mubr.f32.mxu0 0.0
    %v3222 = vand.u32 %v3129, 4294901760
    %v3223 = vsub.f32 %v3129, %v3222
    %v3224 = vand.u32 %v3223, 4294901760
    %v3225 = vsub.f32 %v3223, %v3224
    %v3226 = vand.u32 %v3225, 4294901760
    %3227 = vmatmul.mubr.f32.gmra.mxu0 %v3226
    %v3228 = vpop.f32.mrf.mxu0
    %v3229 = vadd.f32 0.0, %v3228
    %v3230 = vpop.f32.mrf.mxu0
    %3231 = vmatprep.mubr.f32.mxu0 0.0
    %v3232 = vand.u32 %v3131, 4294901760
    %v3233 = vsub.f32 %v3131, %v3232
    %v3234 = vand.u32 %v3233, 4294901760
    %v3235 = vsub.f32 %v3233, %v3234
    %v3236 = vand.u32 %v3235, 4294901760
    %3237 = vmatmul.mubr.f32.gmra.mxu0 %v3236
    %v3238 = vpop.f32.mrf.mxu0
    %v3239 = vadd.f32 0.0, %v3238
    %v3240 = vpop.f32.mrf.mxu0
    %3241 = vdwg.mxu0
    %3242 = vmatprep.subr.mxu0 0.0
    %3243 = vmatpush1.msra.mxu0 0.0
    %3244 = vmatprep.subr.mxu0 0.0
    %3245 = vmatpush1.msra.mxu0 0.0
    %3246 = vmatprep.subr.mxu0 0.0
    %3247 = vmatpush1.msra.mxu0 0.0
    %3248 = vmatprep.subr.mxu0 0.0
    %3249 = vmatpush1.msra.mxu0 0.0
    %3250 = vmatprep.subr.mxu0 0.0
    %3251 = vmatpush1.msra.mxu0 0.0
    %3252 = vmatprep.subr.mxu0 0.0
    %3253 = vmatpush1.msra.mxu0 0.0
    %3254 = vmatprep.subr.mxu0 0.0
    %3255 = vmatpush1.msra.mxu0 0.0
    %3256 = vmatprep.subr.mxu0 0.0
    %3257 = vmatpush1.msra.mxu0 0.0
    %3258 = vmatprep.subr.mxu0 0.0
    %3259 = vmatpush1.msra.mxu0 0.0
    %3260 = vmatprep.subr.mxu0 0.0
    %3261 = vmatpush1.msra.mxu0 0.0
    %3262 = vmatprep.subr.mxu0 0.0
    %3263 = vmatpush1.msra.mxu0 0.0
    %3264 = vmatprep.subr.mxu0 0.0
    %3265 = vmatpush1.msra.mxu0 0.0
    %3266 = vmatprep.subr.mxu0 0.0
    %v3267 = vand.u32 %v3123, 4294901760
    %v3268 = vsub.f32 %v3123, %v3267
    %v3269 = vand.u32 %v3268, 4294901760
    %v3270 = vsub.f32 %v3268, %v3269
    %v3271 = vand.u32 %v3270, 4294901760
    %3272 = vmatpush1.msra.mxu0 %v3271
    %3273 = vmatprep.subr.mxu0 0.0
    %v3274 = vand.u32 %v3122, 4294901760
    %v3275 = vsub.f32 %v3122, %v3274
    %v3276 = vand.u32 %v3275, 4294901760
    %v3277 = vsub.f32 %v3275, %v3276
    %v3278 = vand.u32 %v3277, 4294901760
    %3279 = vmatpush1.msra.mxu0 %v3278
    %3280 = vmatprep.subr.mxu0 0.0
    %v3281 = vand.u32 %v3121, 4294901760
    %v3282 = vsub.f32 %v3121, %v3281
    %v3283 = vand.u32 %v3282, 4294901760
    %v3284 = vsub.f32 %v3282, %v3283
    %v3285 = vand.u32 %v3284, 4294901760
    %3286 = vmatpush1.msra.mxu0 %v3285
    %3287 = vmatprep.subr.mxu0 0.0
    %v3288 = vand.u32 %v3120, 4294901760
    %v3289 = vsub.f32 %v3120, %v3288
    %v3290 = vand.u32 %v3289, 4294901760
    %v3291 = vsub.f32 %v3289, %v3290
    %v3292 = vand.u32 %v3291, 4294901760
    %3293 = vmatpush1.msra.mxu0 %v3292
    %3294 = vmatprep.subr.mxu0 0.0
    %3295 = vmatpush2.msra.mxu0 0.0
    %3296 = vmatprep.subr.mxu0 0.0
    %3297 = vmatpush2.msra.mxu0 0.0
    %3298 = vmatprep.subr.mxu0 0.0
    %3299 = vmatpush2.msra.mxu0 0.0
    %3300 = vmatprep.subr.mxu0 0.0
    %3301 = vmatpush2.msra.mxu0 0.0
    %3302 = vmatprep.subr.mxu0 0.0
    %3303 = vmatpush2.msra.mxu0 0.0
    %3304 = vmatprep.subr.mxu0 0.0
    %3305 = vmatpush2.msra.mxu0 0.0
    %3306 = vmatprep.subr.mxu0 0.0
    %3307 = vmatpush2.msra.mxu0 0.0
    %3308 = vmatprep.subr.mxu0 0.0
    %3309 = vmatpush2.msra.mxu0 0.0
    %3310 = vmatprep.subr.mxu0 0.0
    %3311 = vmatpush2.msra.mxu0 0.0
    %3312 = vmatprep.subr.mxu0 0.0
    %3313 = vmatpush2.msra.mxu0 0.0
    %3314 = vmatprep.subr.mxu0 0.0
    %3315 = vmatpush2.msra.mxu0 0.0
    %3316 = vmatprep.subr.mxu0 0.0
    %3317 = vmatpush2.msra.mxu0 0.0
    %3318 = vmatprep.subr.mxu0 0.0
    %3319 = vmatpush2.msra.mxu0 0.0
    %3320 = vmatprep.subr.mxu0 0.0
    %3321 = vmatpush2.msra.mxu0 0.0
    %3322 = vmatprep.subr.mxu0 0.0
    %3323 = vmatpush2.msra.mxu0 0.0
    %3324 = vmatprep.subr.mxu0 0.0
    %3325 = vmatpush2.msra.mxu0 0.0
    %3326 = vmatprep.mubr.f32.mxu0 0.0
    %v3327 = vand.u32 %v3125, 4294901760
    %3328 = vmatmul.mubr.f32.gmra.mxu0 %v3327
    %v3329 = vpop.f32.mrf.mxu0
    %v3330 = vadd.f32 %v3209, %v3329
    %v3331 = vpop.f32.mrf.mxu0
    %3332 = vmatprep.mubr.f32.mxu0 0.0
    %v3333 = vand.u32 %v3127, 4294901760
    %3334 = vmatmul.mubr.f32.gmra.mxu0 %v3333
    %v3335 = vpop.f32.mrf.mxu0
    %v3336 = vadd.f32 %v3219, %v3335
    %v3337 = vpop.f32.mrf.mxu0
    %3338 = vmatprep.mubr.f32.mxu0 0.0
    %v3339 = vand.u32 %v3129, 4294901760
    %3340 = vmatmul.mubr.f32.gmra.mxu0 %v3339
    %v3341 = vpop.f32.mrf.mxu0
    %v3342 = vadd.f32 %v3229, %v3341
    %v3343 = vpop.f32.mrf.mxu0
    %3344 = vmatprep.mubr.f32.mxu0 0.0
    %v3345 = vand.u32 %v3131, 4294901760
    %3346 = vmatmul.mubr.f32.gmra.mxu0 %v3345
    %v3347 = vpop.f32.mrf.mxu0
    %v3348 = vadd.f32 %v3239, %v3347
    %v3349 = vpop.f32.mrf.mxu0
    %3350 = vdwg.mxu0
    %3351 = vmatprep.subr.mxu0 0.0
    %3352 = vmatpush1.msra.mxu0 0.0
    %3353 = vmatprep.subr.mxu0 0.0
    %3354 = vmatpush1.msra.mxu0 0.0
    %3355 = vmatprep.subr.mxu0 0.0
    %3356 = vmatpush1.msra.mxu0 0.0
    %3357 = vmatprep.subr.mxu0 0.0
    %3358 = vmatpush1.msra.mxu0 0.0
    %3359 = vmatprep.subr.mxu0 0.0
    %3360 = vmatpush1.msra.mxu0 0.0
    %3361 = vmatprep.subr.mxu0 0.0
    %3362 = vmatpush1.msra.mxu0 0.0
    %3363 = vmatprep.subr.mxu0 0.0
    %3364 = vmatpush1.msra.mxu0 0.0
    %3365 = vmatprep.subr.mxu0 0.0
    %3366 = vmatpush1.msra.mxu0 0.0
    %3367 = vmatprep.subr.mxu0 0.0
    %3368 = vmatpush1.msra.mxu0 0.0
    %3369 = vmatprep.subr.mxu0 0.0
    %3370 = vmatpush1.msra.mxu0 0.0
    %3371 = vmatprep.subr.mxu0 0.0
    %3372 = vmatpush1.msra.mxu0 0.0
    %3373 = vmatprep.subr.mxu0 0.0
    %3374 = vmatpush1.msra.mxu0 0.0
    %3375 = vmatprep.subr.mxu0 0.0
    %v3376 = vand.u32 %v3123, 4294901760
    %v3377 = vsub.f32 %v3123, %v3376
    %3378 = vmatpush1.msra.mxu0 %v3377
    %3379 = vmatprep.subr.mxu0 0.0
    %v3380 = vand.u32 %v3122, 4294901760
    %v3381 = vsub.f32 %v3122, %v3380
    %3382 = vmatpush1.msra.mxu0 %v3381
    %3383 = vmatprep.subr.mxu0 0.0
    %v3384 = vand.u32 %v3121, 4294901760
    %v3385 = vsub.f32 %v3121, %v3384
    %3386 = vmatpush1.msra.mxu0 %v3385
    %3387 = vmatprep.subr.mxu0 0.0
    %v3388 = vand.u32 %v3120, 4294901760
    %v3389 = vsub.f32 %v3120, %v3388
    %3390 = vmatpush1.msra.mxu0 %v3389
    %3391 = vmatprep.subr.mxu0 0.0
    %3392 = vmatpush2.msra.mxu0 0.0
    %3393 = vmatprep.subr.mxu0 0.0
    %3394 = vmatpush2.msra.mxu0 0.0
    %3395 = vmatprep.subr.mxu0 0.0
    %3396 = vmatpush2.msra.mxu0 0.0
    %3397 = vmatprep.subr.mxu0 0.0
    %3398 = vmatpush2.msra.mxu0 0.0
    %3399 = vmatprep.subr.mxu0 0.0
    %3400 = vmatpush2.msra.mxu0 0.0
    %3401 = vmatprep.subr.mxu0 0.0
    %3402 = vmatpush2.msra.mxu0 0.0
    %3403 = vmatprep.subr.mxu0 0.0
    %3404 = vmatpush2.msra.mxu0 0.0
    %3405 = vmatprep.subr.mxu0 0.0
    %3406 = vmatpush2.msra.mxu0 0.0
    %3407 = vmatprep.subr.mxu0 0.0
    %3408 = vmatpush2.msra.mxu0 0.0
    %3409 = vmatprep.subr.mxu0 0.0
    %3410 = vmatpush2.msra.mxu0 0.0
    %3411 = vmatprep.subr.mxu0 0.0
    %3412 = vmatpush2.msra.mxu0 0.0
    %3413 = vmatprep.subr.mxu0 0.0
    %3414 = vmatpush2.msra.mxu0 0.0
    %3415 = vmatprep.subr.mxu0 0.0
    %3416 = vmatpush2.msra.mxu0 0.0
    %3417 = vmatprep.subr.mxu0 0.0
    %3418 = vmatpush2.msra.mxu0 0.0
    %3419 = vmatprep.subr.mxu0 0.0
    %3420 = vmatpush2.msra.mxu0 0.0
    %3421 = vmatprep.subr.mxu0 0.0
    %3422 = vmatpush2.msra.mxu0 0.0
    %3423 = vmatprep.mubr.f32.mxu0 0.0
    %v3424 = vand.u32 %v3125, 4294901760
    %v3425 = vsub.f32 %v3125, %v3424
    %3426 = vmatmul.mubr.f32.gmra.mxu0 %v3425
    %v3427 = vpop.f32.mrf.mxu0
    %v3428 = vadd.f32 %v3330, %v3427
    %v3429 = vpop.f32.mrf.mxu0
    %3430 = vmatprep.mubr.f32.mxu0 0.0
    %v3431 = vand.u32 %v3127, 4294901760
    %v3432 = vsub.f32 %v3127, %v3431
    %3433 = vmatmul.mubr.f32.gmra.mxu0 %v3432
    %v3434 = vpop.f32.mrf.mxu0
    %v3435 = vadd.f32 %v3336, %v3434
    %v3436 = vpop.f32.mrf.mxu0
    %3437 = vmatprep.mubr.f32.mxu0 0.0
    %v3438 = vand.u32 %v3129, 4294901760
    %v3439 = vsub.f32 %v3129, %v3438
    %3440 = vmatmul.mubr.f32.gmra.mxu0 %v3439
    %v3441 = vpop.f32.mrf.mxu0
    %v3442 = vadd.f32 %v3342, %v3441
    %v3443 = vpop.f32.mrf.mxu0
    %3444 = vmatprep.mubr.f32.mxu0 0.0
    %v3445 = vand.u32 %v3131, 4294901760
    %v3446 = vsub.f32 %v3131, %v3445
    %3447 = vmatmul.mubr.f32.gmra.mxu0 %v3446
    %v3448 = vpop.f32.mrf.mxu0
    %v3449 = vadd.f32 %v3348, %v3448
    %v3450 = vpop.f32.mrf.mxu0
    %3451 = vdwg.mxu0
    %3452 = vmatprep.subr.mxu0 0.0
    %3453 = vmatpush1.msra.mxu0 0.0
    %3454 = vmatprep.subr.mxu0 0.0
    %3455 = vmatpush1.msra.mxu0 0.0
    %3456 = vmatprep.subr.mxu0 0.0
    %3457 = vmatpush1.msra.mxu0 0.0
    %3458 = vmatprep.subr.mxu0 0.0
    %3459 = vmatpush1.msra.mxu0 0.0
    %3460 = vmatprep.subr.mxu0 0.0
    %3461 = vmatpush1.msra.mxu0 0.0
    %3462 = vmatprep.subr.mxu0 0.0
    %3463 = vmatpush1.msra.mxu0 0.0
    %3464 = vmatprep.subr.mxu0 0.0
    %3465 = vmatpush1.msra.mxu0 0.0
    %3466 = vmatprep.subr.mxu0 0.0
    %3467 = vmatpush1.msra.mxu0 0.0
    %3468 = vmatprep.subr.mxu0 0.0
    %3469 = vmatpush1.msra.mxu0 0.0
    %3470 = vmatprep.subr.mxu0 0.0
    %3471 = vmatpush1.msra.mxu0 0.0
    %3472 = vmatprep.subr.mxu0 0.0
    %3473 = vmatpush1.msra.mxu0 0.0
    %3474 = vmatprep.subr.mxu0 0.0
    %3475 = vmatpush1.msra.mxu0 0.0
    %3476 = vmatprep.subr.mxu0 0.0
    %v3477 = vand.u32 %v3123, 4294901760
    %3478 = vmatpush1.msra.mxu0 %v3477
    %3479 = vmatprep.subr.mxu0 0.0
    %v3480 = vand.u32 %v3122, 4294901760
    %3481 = vmatpush1.msra.mxu0 %v3480
    %3482 = vmatprep.subr.mxu0 0.0
    %v3483 = vand.u32 %v3121, 4294901760
    %3484 = vmatpush1.msra.mxu0 %v3483
    %3485 = vmatprep.subr.mxu0 0.0
    %v3486 = vand.u32 %v3120, 4294901760
    %3487 = vmatpush1.msra.mxu0 %v3486
    %3488 = vmatprep.subr.mxu0 0.0
    %3489 = vmatpush2.msra.mxu0 0.0
    %3490 = vmatprep.subr.mxu0 0.0
    %3491 = vmatpush2.msra.mxu0 0.0
    %3492 = vmatprep.subr.mxu0 0.0
    %3493 = vmatpush2.msra.mxu0 0.0
    %3494 = vmatprep.subr.mxu0 0.0
    %3495 = vmatpush2.msra.mxu0 0.0
    %3496 = vmatprep.subr.mxu0 0.0
    %3497 = vmatpush2.msra.mxu0 0.0
    %3498 = vmatprep.subr.mxu0 0.0
    %3499 = vmatpush2.msra.mxu0 0.0
    %3500 = vmatprep.subr.mxu0 0.0
    %3501 = vmatpush2.msra.mxu0 0.0
    %3502 = vmatprep.subr.mxu0 0.0
    %3503 = vmatpush2.msra.mxu0 0.0
    %3504 = vmatprep.subr.mxu0 0.0
    %3505 = vmatpush2.msra.mxu0 0.0
    %3506 = vmatprep.subr.mxu0 0.0
    %3507 = vmatpush2.msra.mxu0 0.0
    %3508 = vmatprep.subr.mxu0 0.0
    %3509 = vmatpush2.msra.mxu0 0.0
    %3510 = vmatprep.subr.mxu0 0.0
    %3511 = vmatpush2.msra.mxu0 0.0
    %3512 = vmatprep.subr.mxu0 0.0
    %3513 = vmatpush2.msra.mxu0 0.0
    %3514 = vmatprep.subr.mxu0 0.0
    %3515 = vmatpush2.msra.mxu0 0.0
    %3516 = vmatprep.subr.mxu0 0.0
    %3517 = vmatpush2.msra.mxu0 0.0
    %3518 = vmatprep.subr.mxu0 0.0
    %3519 = vmatpush2.msra.mxu0 0.0
    %3520 = vmatprep.mubr.f32.mxu0 0.0
    %v3521 = vand.u32 %v3125, 4294901760
    %v3522 = vsub.f32 %v3125, %v3521
    %v3523 = vand.u32 %v3522, 4294901760
    %3524 = vmatmul.mubr.f32.gmra.mxu0 %v3523
    %v3525 = vpop.f32.mrf.mxu0
    %v3526 = vadd.f32 %v3428, %v3525
    %v3527 = vpop.f32.mrf.mxu0
    %3528 = vmatprep.mubr.f32.mxu0 0.0
    %v3529 = vand.u32 %v3127, 4294901760
    %v3530 = vsub.f32 %v3127, %v3529
    %v3531 = vand.u32 %v3530, 4294901760
    %3532 = vmatmul.mubr.f32.gmra.mxu0 %v3531
    %v3533 = vpop.f32.mrf.mxu0
    %v3534 = vadd.f32 %v3435, %v3533
    %v3535 = vpop.f32.mrf.mxu0
    %3536 = vmatprep.mubr.f32.mxu0 0.0
    %v3537 = vand.u32 %v3129, 4294901760
    %v3538 = vsub.f32 %v3129, %v3537
    %v3539 = vand.u32 %v3538, 4294901760
    %3540 = vmatmul.mubr.f32.gmra.mxu0 %v3539
    %v3541 = vpop.f32.mrf.mxu0
    %v3542 = vadd.f32 %v3442, %v3541
    %v3543 = vpop.f32.mrf.mxu0
    %3544 = vmatprep.mubr.f32.mxu0 0.0
    %v3545 = vand.u32 %v3131, 4294901760
    %v3546 = vsub.f32 %v3131, %v3545
    %v3547 = vand.u32 %v3546, 4294901760
    %3548 = vmatmul.mubr.f32.gmra.mxu0 %v3547
    %v3549 = vpop.f32.mrf.mxu0
    %v3550 = vadd.f32 %v3449, %v3549
    %v3551 = vpop.f32.mrf.mxu0
    %3552 = vdwg.mxu0
    %3553 = vmatprep.subr.mxu0 0.0
    %3554 = vmatpush1.msra.mxu0 0.0
    %3555 = vmatprep.subr.mxu0 0.0
    %3556 = vmatpush1.msra.mxu0 0.0
    %3557 = vmatprep.subr.mxu0 0.0
    %3558 = vmatpush1.msra.mxu0 0.0
    %3559 = vmatprep.subr.mxu0 0.0
    %3560 = vmatpush1.msra.mxu0 0.0
    %3561 = vmatprep.subr.mxu0 0.0
    %3562 = vmatpush1.msra.mxu0 0.0
    %3563 = vmatprep.subr.mxu0 0.0
    %3564 = vmatpush1.msra.mxu0 0.0
    %3565 = vmatprep.subr.mxu0 0.0
    %3566 = vmatpush1.msra.mxu0 0.0
    %3567 = vmatprep.subr.mxu0 0.0
    %3568 = vmatpush1.msra.mxu0 0.0
    %3569 = vmatprep.subr.mxu0 0.0
    %3570 = vmatpush1.msra.mxu0 0.0
    %3571 = vmatprep.subr.mxu0 0.0
    %3572 = vmatpush1.msra.mxu0 0.0
    %3573 = vmatprep.subr.mxu0 0.0
    %3574 = vmatpush1.msra.mxu0 0.0
    %3575 = vmatprep.subr.mxu0 0.0
    %3576 = vmatpush1.msra.mxu0 0.0
    %3577 = vmatprep.subr.mxu0 0.0
    %v3578 = vand.u32 %v3123, 4294901760
    %v3579 = vsub.f32 %v3123, %v3578
    %v3580 = vand.u32 %v3579, 4294901760
    %3581 = vmatpush1.msra.mxu0 %v3580
    %3582 = vmatprep.subr.mxu0 0.0
    %v3583 = vand.u32 %v3122, 4294901760
    %v3584 = vsub.f32 %v3122, %v3583
    %v3585 = vand.u32 %v3584, 4294901760
    %3586 = vmatpush1.msra.mxu0 %v3585
    %3587 = vmatprep.subr.mxu0 0.0
    %v3588 = vand.u32 %v3121, 4294901760
    %v3589 = vsub.f32 %v3121, %v3588
    %v3590 = vand.u32 %v3589, 4294901760
    %3591 = vmatpush1.msra.mxu0 %v3590
    %3592 = vmatprep.subr.mxu0 0.0
    %v3593 = vand.u32 %v3120, 4294901760
    %v3594 = vsub.f32 %v3120, %v3593
    %v3595 = vand.u32 %v3594, 4294901760
    %3596 = vmatpush1.msra.mxu0 %v3595
    %3597 = vmatprep.subr.mxu0 0.0
    %3598 = vmatpush2.msra.mxu0 0.0
    %3599 = vmatprep.subr.mxu0 0.0
    %3600 = vmatpush2.msra.mxu0 0.0
    %3601 = vmatprep.subr.mxu0 0.0
    %3602 = vmatpush2.msra.mxu0 0.0
    %3603 = vmatprep.subr.mxu0 0.0
    %3604 = vmatpush2.msra.mxu0 0.0
    %3605 = vmatprep.subr.mxu0 0.0
    %3606 = vmatpush2.msra.mxu0 0.0
    %3607 = vmatprep.subr.mxu0 0.0
    %3608 = vmatpush2.msra.mxu0 0.0
    %3609 = vmatprep.subr.mxu0 0.0
    %3610 = vmatpush2.msra.mxu0 0.0
    %3611 = vmatprep.subr.mxu0 0.0
    %3612 = vmatpush2.msra.mxu0 0.0
    %3613 = vmatprep.subr.mxu0 0.0
    %3614 = vmatpush2.msra.mxu0 0.0
    %3615 = vmatprep.subr.mxu0 0.0
    %3616 = vmatpush2.msra.mxu0 0.0
    %3617 = vmatprep.subr.mxu0 0.0
    %3618 = vmatpush2.msra.mxu0 0.0
    %3619 = vmatprep.subr.mxu0 0.0
    %3620 = vmatpush2.msra.mxu0 0.0
    %3621 = vmatprep.subr.mxu0 0.0
    %3622 = vmatpush2.msra.mxu0 0.0
    %3623 = vmatprep.subr.mxu0 0.0
    %3624 = vmatpush2.msra.mxu0 0.0
    %3625 = vmatprep.subr.mxu0 0.0
    %3626 = vmatpush2.msra.mxu0 0.0
    %3627 = vmatprep.subr.mxu0 0.0
    %3628 = vmatpush2.msra.mxu0 0.0
    %3629 = vmatprep.mubr.f32.mxu0 0.0
    %v3630 = vand.u32 %v3125, 4294901760
    %3631 = vmatmul.mubr.f32.gmra.mxu0 %v3630
    %v3632 = vpop.f32.mrf.mxu0
    %v3633 = vadd.f32 %v3526, %v3632
    %v3634 = vpop.f32.mrf.mxu0
    %3635 = vmatprep.mubr.f32.mxu0 0.0
    %v3636 = vand.u32 %v3127, 4294901760
    %3637 = vmatmul.mubr.f32.gmra.mxu0 %v3636
    %v3638 = vpop.f32.mrf.mxu0
    %v3639 = vadd.f32 %v3534, %v3638
    %v3640 = vpop.f32.mrf.mxu0
    %3641 = vmatprep.mubr.f32.mxu0 0.0
    %v3642 = vand.u32 %v3129, 4294901760
    %3643 = vmatmul.mubr.f32.gmra.mxu0 %v3642
    %v3644 = vpop.f32.mrf.mxu0
    %v3645 = vadd.f32 %v3542, %v3644
    %v3646 = vpop.f32.mrf.mxu0
    %3647 = vmatprep.mubr.f32.mxu0 0.0
    %v3648 = vand.u32 %v3131, 4294901760
    %3649 = vmatmul.mubr.f32.gmra.mxu0 %v3648
    %v3650 = vpop.f32.mrf.mxu0
    %v3651 = vadd.f32 %v3550, %v3650
    %v3652 = vpop.f32.mrf.mxu0
    %3653 = vdwg.mxu0
    %3654 = vmatprep.subr.mxu0 0.0
    %3655 = vmatpush1.msra.mxu0 0.0
    %3656 = vmatprep.subr.mxu0 0.0
    %3657 = vmatpush1.msra.mxu0 0.0
    %3658 = vmatprep.subr.mxu0 0.0
    %3659 = vmatpush1.msra.mxu0 0.0
    %3660 = vmatprep.subr.mxu0 0.0
    %3661 = vmatpush1.msra.mxu0 0.0
    %3662 = vmatprep.subr.mxu0 0.0
    %3663 = vmatpush1.msra.mxu0 0.0
    %3664 = vmatprep.subr.mxu0 0.0
    %3665 = vmatpush1.msra.mxu0 0.0
    %3666 = vmatprep.subr.mxu0 0.0
    %3667 = vmatpush1.msra.mxu0 0.0
    %3668 = vmatprep.subr.mxu0 0.0
    %3669 = vmatpush1.msra.mxu0 0.0
    %3670 = vmatprep.subr.mxu0 0.0
    %3671 = vmatpush1.msra.mxu0 0.0
    %3672 = vmatprep.subr.mxu0 0.0
    %3673 = vmatpush1.msra.mxu0 0.0
    %3674 = vmatprep.subr.mxu0 0.0
    %3675 = vmatpush1.msra.mxu0 0.0
    %3676 = vmatprep.subr.mxu0 0.0
    %3677 = vmatpush1.msra.mxu0 0.0
    %3678 = vmatprep.subr.mxu0 0.0
    %v3679 = vand.u32 %v3123, 4294901760
    %3680 = vmatpush1.msra.mxu0 %v3679
    %3681 = vmatprep.subr.mxu0 0.0
    %v3682 = vand.u32 %v3122, 4294901760
    %3683 = vmatpush1.msra.mxu0 %v3682
    %3684 = vmatprep.subr.mxu0 0.0
    %v3685 = vand.u32 %v3121, 4294901760
    %3686 = vmatpush1.msra.mxu0 %v3685
    %3687 = vmatprep.subr.mxu0 0.0
    %v3688 = vand.u32 %v3120, 4294901760
    %3689 = vmatpush1.msra.mxu0 %v3688
    %3690 = vmatprep.subr.mxu0 0.0
    %3691 = vmatpush2.msra.mxu0 0.0
    %3692 = vmatprep.subr.mxu0 0.0
    %3693 = vmatpush2.msra.mxu0 0.0
    %3694 = vmatprep.subr.mxu0 0.0
    %3695 = vmatpush2.msra.mxu0 0.0
    %3696 = vmatprep.subr.mxu0 0.0
    %3697 = vmatpush2.msra.mxu0 0.0
    %3698 = vmatprep.subr.mxu0 0.0
    %3699 = vmatpush2.msra.mxu0 0.0
    %3700 = vmatprep.subr.mxu0 0.0
    %3701 = vmatpush2.msra.mxu0 0.0
    %3702 = vmatprep.subr.mxu0 0.0
    %3703 = vmatpush2.msra.mxu0 0.0
    %3704 = vmatprep.subr.mxu0 0.0
    %3705 = vmatpush2.msra.mxu0 0.0
    %3706 = vmatprep.subr.mxu0 0.0
    %3707 = vmatpush2.msra.mxu0 0.0
    %3708 = vmatprep.subr.mxu0 0.0
    %3709 = vmatpush2.msra.mxu0 0.0
    %3710 = vmatprep.subr.mxu0 0.0
    %3711 = vmatpush2.msra.mxu0 0.0
    %3712 = vmatprep.subr.mxu0 0.0
    %3713 = vmatpush2.msra.mxu0 0.0
    %3714 = vmatprep.subr.mxu0 0.0
    %3715 = vmatpush2.msra.mxu0 0.0
    %3716 = vmatprep.subr.mxu0 0.0
    %3717 = vmatpush2.msra.mxu0 0.0
    %3718 = vmatprep.subr.mxu0 0.0
    %3719 = vmatpush2.msra.mxu0 0.0
    %3720 = vmatprep.subr.mxu0 0.0
    %3721 = vmatpush2.msra.mxu0 0.0
    %3722 = vmatprep.mubr.f32.mxu0 0.0
    %v3723 = vand.u32 %v3125, 4294901760
    %3724 = vmatmul.mubr.f32.gmra.mxu0 %v3723
    %v3725 = vpop.f32.mrf.mxu0
    %v3726 = vadd.f32 %v3633, %v3725
    %v3727 = vpop.f32.mrf.mxu0
    %3728 = vmatprep.mubr.f32.mxu0 0.0
    %v3729 = vand.u32 %v3127, 4294901760
    %3730 = vmatmul.mubr.f32.gmra.mxu0 %v3729
    %v3731 = vpop.f32.mrf.mxu0
    %v3732 = vadd.f32 %v3639, %v3731
    %v3733 = vpop.f32.mrf.mxu0
    %3734 = vmatprep.mubr.f32.mxu0 0.0
    %v3735 = vand.u32 %v3129, 4294901760
    %3736 = vmatmul.mubr.f32.gmra.mxu0 %v3735
    %v3737 = vpop.f32.mrf.mxu0
    %v3738 = vadd.f32 %v3645, %v3737
    %v3739 = vpop.f32.mrf.mxu0
    %3740 = vmatprep.mubr.f32.mxu0 0.0
    %v3741 = vand.u32 %v3131, 4294901760
    %3742 = vmatmul.mubr.f32.gmra.mxu0 %v3741
    %v3743 = vpop.f32.mrf.mxu0
    %v3744 = vadd.f32 %v3651, %v3743
    %v3745 = vpop.f32.mrf.mxu0
    %3746 = vdwg.mxu0
    %v3747 = vsel %vm3124, %v3097, 0
    %v3749 = vsel %vm3124, %v3089, 0
    %v3751 = vsel %vm3124, %v3098, 0
    %v3753 = vsel %vm3124, %v3092, 0
    %3755 = vmatprep.subr.mxu0 0.0
    %3756 = vmatpush1.msra.mxu0 0.0
    %3757 = vmatprep.subr.mxu0 0.0
    %3758 = vmatpush1.msra.mxu0 0.0
    %3759 = vmatprep.subr.mxu0 0.0
    %3760 = vmatpush1.msra.mxu0 0.0
    %3761 = vmatprep.subr.mxu0 0.0
    %3762 = vmatpush1.msra.mxu0 0.0
    %3763 = vmatprep.subr.mxu0 0.0
    %3764 = vmatpush1.msra.mxu0 0.0
    %3765 = vmatprep.subr.mxu0 0.0
    %3766 = vmatpush1.msra.mxu0 0.0
    %3767 = vmatprep.subr.mxu0 0.0
    %3768 = vmatpush1.msra.mxu0 0.0
    %3769 = vmatprep.subr.mxu0 0.0
    %3770 = vmatpush1.msra.mxu0 0.0
    %3771 = vmatprep.subr.mxu0 0.0
    %3772 = vmatpush1.msra.mxu0 0.0
    %3773 = vmatprep.subr.mxu0 0.0
    %3774 = vmatpush1.msra.mxu0 0.0
    %3775 = vmatprep.subr.mxu0 0.0
    %3776 = vmatpush1.msra.mxu0 0.0
    %3777 = vmatprep.subr.mxu0 0.0
    %3778 = vmatpush1.msra.mxu0 0.0
    %3779 = vmatprep.subr.mxu0 0.0
    %v3780 = vand.u32 %v3104, 4294901760
    %3781 = vmatpush1.msra.mxu0 %v3780
    %3782 = vmatprep.subr.mxu0 0.0
    %v3783 = vand.u32 %v3103, 4294901760
    %3784 = vmatpush1.msra.mxu0 %v3783
    %3785 = vmatprep.subr.mxu0 0.0
    %v3786 = vand.u32 %v3102, 4294901760
    %3787 = vmatpush1.msra.mxu0 %v3786
    %3788 = vmatprep.subr.mxu0 0.0
    %v3789 = vand.u32 %v3101, 4294901760
    %3790 = vmatpush1.msra.mxu0 %v3789
    %3791 = vmatprep.subr.mxu0 0.0
    %3792 = vmatpush2.msra.mxu0 0.0
    %3793 = vmatprep.subr.mxu0 0.0
    %3794 = vmatpush2.msra.mxu0 0.0
    %3795 = vmatprep.subr.mxu0 0.0
    %3796 = vmatpush2.msra.mxu0 0.0
    %3797 = vmatprep.subr.mxu0 0.0
    %3798 = vmatpush2.msra.mxu0 0.0
    %3799 = vmatprep.subr.mxu0 0.0
    %3800 = vmatpush2.msra.mxu0 0.0
    %3801 = vmatprep.subr.mxu0 0.0
    %3802 = vmatpush2.msra.mxu0 0.0
    %3803 = vmatprep.subr.mxu0 0.0
    %3804 = vmatpush2.msra.mxu0 0.0
    %3805 = vmatprep.subr.mxu0 0.0
    %3806 = vmatpush2.msra.mxu0 0.0
    %3807 = vmatprep.subr.mxu0 0.0
    %3808 = vmatpush2.msra.mxu0 0.0
    %3809 = vmatprep.subr.mxu0 0.0
    %3810 = vmatpush2.msra.mxu0 0.0
    %3811 = vmatprep.subr.mxu0 0.0
    %3812 = vmatpush2.msra.mxu0 0.0
    %3813 = vmatprep.subr.mxu0 0.0
    %3814 = vmatpush2.msra.mxu0 0.0
    %3815 = vmatprep.subr.mxu0 0.0
    %3816 = vmatpush2.msra.mxu0 0.0
    %3817 = vmatprep.subr.mxu0 0.0
    %3818 = vmatpush2.msra.mxu0 0.0
    %3819 = vmatprep.subr.mxu0 0.0
    %3820 = vmatpush2.msra.mxu0 0.0
    %3821 = vmatprep.subr.mxu0 0.0
    %3822 = vmatpush2.msra.mxu0 0.0
    %3823 = vmatprep.mubr.f32.mxu0 0.0
    %v3824 = vand.u32 %v3747, 4294901760
    %v3825 = vsub.f32 %v3747, %v3824
    %v3826 = vand.u32 %v3825, 4294901760
    %v3827 = vsub.f32 %v3825, %v3826
    %v3828 = vand.u32 %v3827, 4294901760
    %3829 = vmatmul.mubr.f32.gmra.mxu0 %v3828
    %v3830 = vpop.f32.mrf.mxu0
    %v3831 = vadd.f32 %v3726, %v3830
    %v3832 = vpop.f32.mrf.mxu0
    %3833 = vmatprep.mubr.f32.mxu0 0.0
    %v3834 = vand.u32 %v3749, 4294901760
    %v3835 = vsub.f32 %v3749, %v3834
    %v3836 = vand.u32 %v3835, 4294901760
    %v3837 = vsub.f32 %v3835, %v3836
    %v3838 = vand.u32 %v3837, 4294901760
    %3839 = vmatmul.mubr.f32.gmra.mxu0 %v3838
    %v3840 = vpop.f32.mrf.mxu0
    %v3841 = vadd.f32 %v3732, %v3840
    %v3842 = vpop.f32.mrf.mxu0
    %3843 = vmatprep.mubr.f32.mxu0 0.0
    %v3844 = vand.u32 %v3751, 4294901760
    %v3845 = vsub.f32 %v3751, %v3844
    %v3846 = vand.u32 %v3845, 4294901760
    %v3847 = vsub.f32 %v3845, %v3846
    %v3848 = vand.u32 %v3847, 4294901760
    %3849 = vmatmul.mubr.f32.gmra.mxu0 %v3848
    %v3850 = vpop.f32.mrf.mxu0
    %v3851 = vadd.f32 %v3738, %v3850
    %v3852 = vpop.f32.mrf.mxu0
    %3853 = vmatprep.mubr.f32.mxu0 0.0
    %v3854 = vand.u32 %v3753, 4294901760
    %v3855 = vsub.f32 %v3753, %v3854
    %v3856 = vand.u32 %v3855, 4294901760
    %v3857 = vsub.f32 %v3855, %v3856
    %v3858 = vand.u32 %v3857, 4294901760
    %3859 = vmatmul.mubr.f32.gmra.mxu0 %v3858
    %v3860 = vpop.f32.mrf.mxu0
    %v3861 = vadd.f32 %v3744, %v3860
    %v3862 = vpop.f32.mrf.mxu0
    %3863 = vdwg.mxu0
    %3864 = vmatprep.subr.mxu0 0.0
    %3865 = vmatpush1.msra.mxu0 0.0
    %3866 = vmatprep.subr.mxu0 0.0
    %3867 = vmatpush1.msra.mxu0 0.0
    %3868 = vmatprep.subr.mxu0 0.0
    %3869 = vmatpush1.msra.mxu0 0.0
    %3870 = vmatprep.subr.mxu0 0.0
    %3871 = vmatpush1.msra.mxu0 0.0
    %3872 = vmatprep.subr.mxu0 0.0
    %3873 = vmatpush1.msra.mxu0 0.0
    %3874 = vmatprep.subr.mxu0 0.0
    %3875 = vmatpush1.msra.mxu0 0.0
    %3876 = vmatprep.subr.mxu0 0.0
    %3877 = vmatpush1.msra.mxu0 0.0
    %3878 = vmatprep.subr.mxu0 0.0
    %3879 = vmatpush1.msra.mxu0 0.0
    %3880 = vmatprep.subr.mxu0 0.0
    %3881 = vmatpush1.msra.mxu0 0.0
    %3882 = vmatprep.subr.mxu0 0.0
    %3883 = vmatpush1.msra.mxu0 0.0
    %3884 = vmatprep.subr.mxu0 0.0
    %3885 = vmatpush1.msra.mxu0 0.0
    %3886 = vmatprep.subr.mxu0 0.0
    %3887 = vmatpush1.msra.mxu0 0.0
    %3888 = vmatprep.subr.mxu0 0.0
    %v3889 = vand.u32 %v3104, 4294901760
    %v3890 = vsub.f32 %v3104, %v3889
    %v3891 = vand.u32 %v3890, 4294901760
    %v3892 = vsub.f32 %v3890, %v3891
    %v3893 = vand.u32 %v3892, 4294901760
    %3894 = vmatpush1.msra.mxu0 %v3893
    %3895 = vmatprep.subr.mxu0 0.0
    %v3896 = vand.u32 %v3103, 4294901760
    %v3897 = vsub.f32 %v3103, %v3896
    %v3898 = vand.u32 %v3897, 4294901760
    %v3899 = vsub.f32 %v3897, %v3898
    %v3900 = vand.u32 %v3899, 4294901760
    %3901 = vmatpush1.msra.mxu0 %v3900
    %3902 = vmatprep.subr.mxu0 0.0
    %v3903 = vand.u32 %v3102, 4294901760
    %v3904 = vsub.f32 %v3102, %v3903
    %v3905 = vand.u32 %v3904, 4294901760
    %v3906 = vsub.f32 %v3904, %v3905
    %v3907 = vand.u32 %v3906, 4294901760
    %3908 = vmatpush1.msra.mxu0 %v3907
    %3909 = vmatprep.subr.mxu0 0.0
    %v3910 = vand.u32 %v3101, 4294901760
    %v3911 = vsub.f32 %v3101, %v3910
    %v3912 = vand.u32 %v3911, 4294901760
    %v3913 = vsub.f32 %v3911, %v3912
    %v3914 = vand.u32 %v3913, 4294901760
    %3915 = vmatpush1.msra.mxu0 %v3914
    %3916 = vmatprep.subr.mxu0 0.0
    %3917 = vmatpush2.msra.mxu0 0.0
    %3918 = vmatprep.subr.mxu0 0.0
    %3919 = vmatpush2.msra.mxu0 0.0
    %3920 = vmatprep.subr.mxu0 0.0
    %3921 = vmatpush2.msra.mxu0 0.0
    %3922 = vmatprep.subr.mxu0 0.0
    %3923 = vmatpush2.msra.mxu0 0.0
    %3924 = vmatprep.subr.mxu0 0.0
    %3925 = vmatpush2.msra.mxu0 0.0
    %3926 = vmatprep.subr.mxu0 0.0
    %3927 = vmatpush2.msra.mxu0 0.0
    %3928 = vmatprep.subr.mxu0 0.0
    %3929 = vmatpush2.msra.mxu0 0.0
    %3930 = vmatprep.subr.mxu0 0.0
    %3931 = vmatpush2.msra.mxu0 0.0
    %3932 = vmatprep.subr.mxu0 0.0
    %3933 = vmatpush2.msra.mxu0 0.0
    %3934 = vmatprep.subr.mxu0 0.0
    %3935 = vmatpush2.msra.mxu0 0.0
    %3936 = vmatprep.subr.mxu0 0.0
    %3937 = vmatpush2.msra.mxu0 0.0
    %3938 = vmatprep.subr.mxu0 0.0
    %3939 = vmatpush2.msra.mxu0 0.0
    %3940 = vmatprep.subr.mxu0 0.0
    %3941 = vmatpush2.msra.mxu0 0.0
    %3942 = vmatprep.subr.mxu0 0.0
    %3943 = vmatpush2.msra.mxu0 0.0
    %3944 = vmatprep.subr.mxu0 0.0
    %3945 = vmatpush2.msra.mxu0 0.0
    %3946 = vmatprep.subr.mxu0 0.0
    %3947 = vmatpush2.msra.mxu0 0.0
    %3948 = vmatprep.mubr.f32.mxu0 0.0
    %v3949 = vand.u32 %v3747, 4294901760
    %3950 = vmatmul.mubr.f32.gmra.mxu0 %v3949
    %v3951 = vpop.f32.mrf.mxu0
    %v3952 = vadd.f32 %v3831, %v3951
    %v3953 = vpop.f32.mrf.mxu0
    %3954 = vmatprep.mubr.f32.mxu0 0.0
    %v3955 = vand.u32 %v3749, 4294901760
    %3956 = vmatmul.mubr.f32.gmra.mxu0 %v3955
    %v3957 = vpop.f32.mrf.mxu0
    %v3958 = vadd.f32 %v3841, %v3957
    %v3959 = vpop.f32.mrf.mxu0
    %3960 = vmatprep.mubr.f32.mxu0 0.0
    %v3961 = vand.u32 %v3751, 4294901760
    %3962 = vmatmul.mubr.f32.gmra.mxu0 %v3961
    %v3963 = vpop.f32.mrf.mxu0
    %v3964 = vadd.f32 %v3851, %v3963
    %v3965 = vpop.f32.mrf.mxu0
    %3966 = vmatprep.mubr.f32.mxu0 0.0
    %v3967 = vand.u32 %v3753, 4294901760
    %3968 = vmatmul.mubr.f32.gmra.mxu0 %v3967
    %v3969 = vpop.f32.mrf.mxu0
    %v3970 = vadd.f32 %v3861, %v3969
    %v3971 = vpop.f32.mrf.mxu0
    %3972 = vdwg.mxu0
    %3973 = vmatprep.subr.mxu0 0.0
    %3974 = vmatpush1.msra.mxu0 0.0
    %3975 = vmatprep.subr.mxu0 0.0
    %3976 = vmatpush1.msra.mxu0 0.0
    %3977 = vmatprep.subr.mxu0 0.0
    %3978 = vmatpush1.msra.mxu0 0.0
    %3979 = vmatprep.subr.mxu0 0.0
    %3980 = vmatpush1.msra.mxu0 0.0
    %3981 = vmatprep.subr.mxu0 0.0
    %3982 = vmatpush1.msra.mxu0 0.0
    %3983 = vmatprep.subr.mxu0 0.0
    %3984 = vmatpush1.msra.mxu0 0.0
    %3985 = vmatprep.subr.mxu0 0.0
    %3986 = vmatpush1.msra.mxu0 0.0
    %3987 = vmatprep.subr.mxu0 0.0
    %3988 = vmatpush1.msra.mxu0 0.0
    %3989 = vmatprep.subr.mxu0 0.0
    %3990 = vmatpush1.msra.mxu0 0.0
    %3991 = vmatprep.subr.mxu0 0.0
    %3992 = vmatpush1.msra.mxu0 0.0
    %3993 = vmatprep.subr.mxu0 0.0
    %3994 = vmatpush1.msra.mxu0 0.0
    %3995 = vmatprep.subr.mxu0 0.0
    %3996 = vmatpush1.msra.mxu0 0.0
    %3997 = vmatprep.subr.mxu0 0.0
    %v3998 = vand.u32 %v3104, 4294901760
    %v3999 = vsub.f32 %v3104, %v3998
    %4000 = vmatpush1.msra.mxu0 %v3999
    %4001 = vmatprep.subr.mxu0 0.0
    %v4002 = vand.u32 %v3103, 4294901760
    %v4003 = vsub.f32 %v3103, %v4002
    %4004 = vmatpush1.msra.mxu0 %v4003
    %4005 = vmatprep.subr.mxu0 0.0
    %v4006 = vand.u32 %v3102, 4294901760
    %v4007 = vsub.f32 %v3102, %v4006
    %4008 = vmatpush1.msra.mxu0 %v4007
    %4009 = vmatprep.subr.mxu0 0.0
    %v4010 = vand.u32 %v3101, 4294901760
    %v4011 = vsub.f32 %v3101, %v4010
    %4012 = vmatpush1.msra.mxu0 %v4011
    %4013 = vmatprep.subr.mxu0 0.0
    %4014 = vmatpush2.msra.mxu0 0.0
    %4015 = vmatprep.subr.mxu0 0.0
    %4016 = vmatpush2.msra.mxu0 0.0
    %4017 = vmatprep.subr.mxu0 0.0
    %4018 = vmatpush2.msra.mxu0 0.0
    %4019 = vmatprep.subr.mxu0 0.0
    %4020 = vmatpush2.msra.mxu0 0.0
    %4021 = vmatprep.subr.mxu0 0.0
    %4022 = vmatpush2.msra.mxu0 0.0
    %4023 = vmatprep.subr.mxu0 0.0
    %4024 = vmatpush2.msra.mxu0 0.0
    %4025 = vmatprep.subr.mxu0 0.0
    %4026 = vmatpush2.msra.mxu0 0.0
    %4027 = vmatprep.subr.mxu0 0.0
    %4028 = vmatpush2.msra.mxu0 0.0
    %4029 = vmatprep.subr.mxu0 0.0
    %4030 = vmatpush2.msra.mxu0 0.0
    %4031 = vmatprep.subr.mxu0 0.0
    %4032 = vmatpush2.msra.mxu0 0.0
    %4033 = vmatprep.subr.mxu0 0.0
    %4034 = vmatpush2.msra.mxu0 0.0
    %4035 = vmatprep.subr.mxu0 0.0
    %4036 = vmatpush2.msra.mxu0 0.0
    %4037 = vmatprep.subr.mxu0 0.0
    %4038 = vmatpush2.msra.mxu0 0.0
    %4039 = vmatprep.subr.mxu0 0.0
    %4040 = vmatpush2.msra.mxu0 0.0
    %4041 = vmatprep.subr.mxu0 0.0
    %4042 = vmatpush2.msra.mxu0 0.0
    %4043 = vmatprep.subr.mxu0 0.0
    %4044 = vmatpush2.msra.mxu0 0.0
    %4045 = vmatprep.mubr.f32.mxu0 0.0
    %v4046 = vand.u32 %v3747, 4294901760
    %v4047 = vsub.f32 %v3747, %v4046
    %4048 = vmatmul.mubr.f32.gmra.mxu0 %v4047
    %v4049 = vpop.f32.mrf.mxu0
    %v4050 = vadd.f32 %v3952, %v4049
    %v4051 = vpop.f32.mrf.mxu0
    %4052 = vmatprep.mubr.f32.mxu0 0.0
    %v4053 = vand.u32 %v3749, 4294901760
    %v4054 = vsub.f32 %v3749, %v4053
    %4055 = vmatmul.mubr.f32.gmra.mxu0 %v4054
    %v4056 = vpop.f32.mrf.mxu0
    %v4057 = vadd.f32 %v3958, %v4056
    %v4058 = vpop.f32.mrf.mxu0
    %4059 = vmatprep.mubr.f32.mxu0 0.0
    %v4060 = vand.u32 %v3751, 4294901760
    %v4061 = vsub.f32 %v3751, %v4060
    %4062 = vmatmul.mubr.f32.gmra.mxu0 %v4061
    %v4063 = vpop.f32.mrf.mxu0
    %v4064 = vadd.f32 %v3964, %v4063
    %v4065 = vpop.f32.mrf.mxu0
    %4066 = vmatprep.mubr.f32.mxu0 0.0
    %v4067 = vand.u32 %v3753, 4294901760
    %v4068 = vsub.f32 %v3753, %v4067
    %4069 = vmatmul.mubr.f32.gmra.mxu0 %v4068
    %v4070 = vpop.f32.mrf.mxu0
    %v4071 = vadd.f32 %v3970, %v4070
    %v4072 = vpop.f32.mrf.mxu0
    %4073 = vdwg.mxu0
    %4074 = vmatprep.subr.mxu0 0.0
    %4075 = vmatpush1.msra.mxu0 0.0
    %4076 = vmatprep.subr.mxu0 0.0
    %4077 = vmatpush1.msra.mxu0 0.0
    %4078 = vmatprep.subr.mxu0 0.0
    %4079 = vmatpush1.msra.mxu0 0.0
    %4080 = vmatprep.subr.mxu0 0.0
    %4081 = vmatpush1.msra.mxu0 0.0
    %4082 = vmatprep.subr.mxu0 0.0
    %4083 = vmatpush1.msra.mxu0 0.0
    %4084 = vmatprep.subr.mxu0 0.0
    %4085 = vmatpush1.msra.mxu0 0.0
    %4086 = vmatprep.subr.mxu0 0.0
    %4087 = vmatpush1.msra.mxu0 0.0
    %4088 = vmatprep.subr.mxu0 0.0
    %4089 = vmatpush1.msra.mxu0 0.0
    %4090 = vmatprep.subr.mxu0 0.0
    %4091 = vmatpush1.msra.mxu0 0.0
    %4092 = vmatprep.subr.mxu0 0.0
    %4093 = vmatpush1.msra.mxu0 0.0
    %4094 = vmatprep.subr.mxu0 0.0
    %4095 = vmatpush1.msra.mxu0 0.0
    %4096 = vmatprep.subr.mxu0 0.0
    %4097 = vmatpush1.msra.mxu0 0.0
    %4098 = vmatprep.subr.mxu0 0.0
    %v4099 = vand.u32 %v3104, 4294901760
    %4100 = vmatpush1.msra.mxu0 %v4099
    %4101 = vmatprep.subr.mxu0 0.0
    %v4102 = vand.u32 %v3103, 4294901760
    %4103 = vmatpush1.msra.mxu0 %v4102
    %4104 = vmatprep.subr.mxu0 0.0
    %v4105 = vand.u32 %v3102, 4294901760
    %4106 = vmatpush1.msra.mxu0 %v4105
    %4107 = vmatprep.subr.mxu0 0.0
    %v4108 = vand.u32 %v3101, 4294901760
    %4109 = vmatpush1.msra.mxu0 %v4108
    %4110 = vmatprep.subr.mxu0 0.0
    %4111 = vmatpush2.msra.mxu0 0.0
    %4112 = vmatprep.subr.mxu0 0.0
    %4113 = vmatpush2.msra.mxu0 0.0
    %4114 = vmatprep.subr.mxu0 0.0
    %4115 = vmatpush2.msra.mxu0 0.0
    %4116 = vmatprep.subr.mxu0 0.0
    %4117 = vmatpush2.msra.mxu0 0.0
    %4118 = vmatprep.subr.mxu0 0.0
    %4119 = vmatpush2.msra.mxu0 0.0
    %4120 = vmatprep.subr.mxu0 0.0
    %4121 = vmatpush2.msra.mxu0 0.0
    %4122 = vmatprep.subr.mxu0 0.0
    %4123 = vmatpush2.msra.mxu0 0.0
    %4124 = vmatprep.subr.mxu0 0.0
    %4125 = vmatpush2.msra.mxu0 0.0
    %4126 = vmatprep.subr.mxu0 0.0
    %4127 = vmatpush2.msra.mxu0 0.0
    %4128 = vmatprep.subr.mxu0 0.0
    %4129 = vmatpush2.msra.mxu0 0.0
    %4130 = vmatprep.subr.mxu0 0.0
    %4131 = vmatpush2.msra.mxu0 0.0
    %4132 = vmatprep.subr.mxu0 0.0
    %4133 = vmatpush2.msra.mxu0 0.0
    %4134 = vmatprep.subr.mxu0 0.0
    %4135 = vmatpush2.msra.mxu0 0.0
    %4136 = vmatprep.subr.mxu0 0.0
    %4137 = vmatpush2.msra.mxu0 0.0
    %4138 = vmatprep.subr.mxu0 0.0
    %4139 = vmatpush2.msra.mxu0 0.0
    %4140 = vmatprep.subr.mxu0 0.0
    %4141 = vmatpush2.msra.mxu0 0.0
    %4142 = vmatprep.mubr.f32.mxu0 0.0
    %v4143 = vand.u32 %v3747, 4294901760
    %v4144 = vsub.f32 %v3747, %v4143
    %v4145 = vand.u32 %v4144, 4294901760
    %4146 = vmatmul.mubr.f32.gmra.mxu0 %v4145
    %v4147 = vpop.f32.mrf.mxu0
    %v4148 = vadd.f32 %v4050, %v4147
    %v4149 = vpop.f32.mrf.mxu0
    %4150 = vmatprep.mubr.f32.mxu0 0.0
    %v4151 = vand.u32 %v3749, 4294901760
    %v4152 = vsub.f32 %v3749, %v4151
    %v4153 = vand.u32 %v4152, 4294901760
    %4154 = vmatmul.mubr.f32.gmra.mxu0 %v4153
    %v4155 = vpop.f32.mrf.mxu0
    %v4156 = vadd.f32 %v4057, %v4155
    %v4157 = vpop.f32.mrf.mxu0
    %4158 = vmatprep.mubr.f32.mxu0 0.0
    %v4159 = vand.u32 %v3751, 4294901760
    %v4160 = vsub.f32 %v3751, %v4159
    %v4161 = vand.u32 %v4160, 4294901760
    %4162 = vmatmul.mubr.f32.gmra.mxu0 %v4161
    %v4163 = vpop.f32.mrf.mxu0
    %v4164 = vadd.f32 %v4064, %v4163
    %v4165 = vpop.f32.mrf.mxu0
    %4166 = vmatprep.mubr.f32.mxu0 0.0
    %v4167 = vand.u32 %v3753, 4294901760
    %v4168 = vsub.f32 %v3753, %v4167
    %v4169 = vand.u32 %v4168, 4294901760
    %4170 = vmatmul.mubr.f32.gmra.mxu0 %v4169
    %v4171 = vpop.f32.mrf.mxu0
    %v4172 = vadd.f32 %v4071, %v4171
    %v4173 = vpop.f32.mrf.mxu0
    %4174 = vdwg.mxu0
    %4175 = vmatprep.subr.mxu0 0.0
    %4176 = vmatpush1.msra.mxu0 0.0
    %4177 = vmatprep.subr.mxu0 0.0
    %4178 = vmatpush1.msra.mxu0 0.0
    %4179 = vmatprep.subr.mxu0 0.0
    %4180 = vmatpush1.msra.mxu0 0.0
    %4181 = vmatprep.subr.mxu0 0.0
    %4182 = vmatpush1.msra.mxu0 0.0
    %4183 = vmatprep.subr.mxu0 0.0
    %4184 = vmatpush1.msra.mxu0 0.0
    %4185 = vmatprep.subr.mxu0 0.0
    %4186 = vmatpush1.msra.mxu0 0.0
    %4187 = vmatprep.subr.mxu0 0.0
    %4188 = vmatpush1.msra.mxu0 0.0
    %4189 = vmatprep.subr.mxu0 0.0
    %4190 = vmatpush1.msra.mxu0 0.0
    %4191 = vmatprep.subr.mxu0 0.0
    %4192 = vmatpush1.msra.mxu0 0.0
    %4193 = vmatprep.subr.mxu0 0.0
    %4194 = vmatpush1.msra.mxu0 0.0
    %4195 = vmatprep.subr.mxu0 0.0
    %4196 = vmatpush1.msra.mxu0 0.0
    %4197 = vmatprep.subr.mxu0 0.0
    %4198 = vmatpush1.msra.mxu0 0.0
    %4199 = vmatprep.subr.mxu0 0.0
    %v4200 = vand.u32 %v3104, 4294901760
    %v4201 = vsub.f32 %v3104, %v4200
    %v4202 = vand.u32 %v4201, 4294901760
    %4203 = vmatpush1.msra.mxu0 %v4202
    %4204 = vmatprep.subr.mxu0 0.0
    %v4205 = vand.u32 %v3103, 4294901760
    %v4206 = vsub.f32 %v3103, %v4205
    %v4207 = vand.u32 %v4206, 4294901760
    %4208 = vmatpush1.msra.mxu0 %v4207
    %4209 = vmatprep.subr.mxu0 0.0
    %v4210 = vand.u32 %v3102, 4294901760
    %v4211 = vsub.f32 %v3102, %v4210
    %v4212 = vand.u32 %v4211, 4294901760
    %4213 = vmatpush1.msra.mxu0 %v4212
    %4214 = vmatprep.subr.mxu0 0.0
    %v4215 = vand.u32 %v3101, 4294901760
    %v4216 = vsub.f32 %v3101, %v4215
    %v4217 = vand.u32 %v4216, 4294901760
    %4218 = vmatpush1.msra.mxu0 %v4217
    %4219 = vmatprep.subr.mxu0 0.0
    %4220 = vmatpush2.msra.mxu0 0.0
    %4221 = vmatprep.subr.mxu0 0.0
    %4222 = vmatpush2.msra.mxu0 0.0
    %4223 = vmatprep.subr.mxu0 0.0
    %4224 = vmatpush2.msra.mxu0 0.0
    %4225 = vmatprep.subr.mxu0 0.0
    %4226 = vmatpush2.msra.mxu0 0.0
    %4227 = vmatprep.subr.mxu0 0.0
    %4228 = vmatpush2.msra.mxu0 0.0
    %4229 = vmatprep.subr.mxu0 0.0
    %4230 = vmatpush2.msra.mxu0 0.0
    %4231 = vmatprep.subr.mxu0 0.0
    %4232 = vmatpush2.msra.mxu0 0.0
    %4233 = vmatprep.subr.mxu0 0.0
    %4234 = vmatpush2.msra.mxu0 0.0
    %4235 = vmatprep.subr.mxu0 0.0
    %4236 = vmatpush2.msra.mxu0 0.0
    %4237 = vmatprep.subr.mxu0 0.0
    %4238 = vmatpush2.msra.mxu0 0.0
    %4239 = vmatprep.subr.mxu0 0.0
    %4240 = vmatpush2.msra.mxu0 0.0
    %4241 = vmatprep.subr.mxu0 0.0
    %4242 = vmatpush2.msra.mxu0 0.0
    %4243 = vmatprep.subr.mxu0 0.0
    %4244 = vmatpush2.msra.mxu0 0.0
    %4245 = vmatprep.subr.mxu0 0.0
    %4246 = vmatpush2.msra.mxu0 0.0
    %4247 = vmatprep.subr.mxu0 0.0
    %4248 = vmatpush2.msra.mxu0 0.0
    %4249 = vmatprep.subr.mxu0 0.0
    %4250 = vmatpush2.msra.mxu0 0.0
    %4251 = vmatprep.mubr.f32.mxu0 0.0
    %v4252 = vand.u32 %v3747, 4294901760
    %4253 = vmatmul.mubr.f32.gmra.mxu0 %v4252
    %v4254 = vpop.f32.mrf.mxu0
    %v4255 = vadd.f32 %v4148, %v4254
    %v4256 = vpop.f32.mrf.mxu0
    %4257 = vmatprep.mubr.f32.mxu0 0.0
    %v4258 = vand.u32 %v3749, 4294901760
    %4259 = vmatmul.mubr.f32.gmra.mxu0 %v4258
    %v4260 = vpop.f32.mrf.mxu0
    %v4261 = vadd.f32 %v4156, %v4260
    %v4262 = vpop.f32.mrf.mxu0
    %4263 = vmatprep.mubr.f32.mxu0 0.0
    %v4264 = vand.u32 %v3751, 4294901760
    %4265 = vmatmul.mubr.f32.gmra.mxu0 %v4264
    %v4266 = vpop.f32.mrf.mxu0
    %v4267 = vadd.f32 %v4164, %v4266
    %v4268 = vpop.f32.mrf.mxu0
    %4269 = vmatprep.mubr.f32.mxu0 0.0
    %v4270 = vand.u32 %v3753, 4294901760
    %4271 = vmatmul.mubr.f32.gmra.mxu0 %v4270
    %v4272 = vpop.f32.mrf.mxu0
    %v4273 = vadd.f32 %v4172, %v4272
    %v4274 = vpop.f32.mrf.mxu0
    %4275 = vdwg.mxu0
    %4276 = vmatprep.subr.mxu0 0.0
    %4277 = vmatpush1.msra.mxu0 0.0
    %4278 = vmatprep.subr.mxu0 0.0
    %4279 = vmatpush1.msra.mxu0 0.0
    %4280 = vmatprep.subr.mxu0 0.0
    %4281 = vmatpush1.msra.mxu0 0.0
    %4282 = vmatprep.subr.mxu0 0.0
    %4283 = vmatpush1.msra.mxu0 0.0
    %4284 = vmatprep.subr.mxu0 0.0
    %4285 = vmatpush1.msra.mxu0 0.0
    %4286 = vmatprep.subr.mxu0 0.0
    %4287 = vmatpush1.msra.mxu0 0.0
    %4288 = vmatprep.subr.mxu0 0.0
    %4289 = vmatpush1.msra.mxu0 0.0
    %4290 = vmatprep.subr.mxu0 0.0
    %4291 = vmatpush1.msra.mxu0 0.0
    %4292 = vmatprep.subr.mxu0 0.0
    %4293 = vmatpush1.msra.mxu0 0.0
    %4294 = vmatprep.subr.mxu0 0.0
    %4295 = vmatpush1.msra.mxu0 0.0
    %4296 = vmatprep.subr.mxu0 0.0
    %4297 = vmatpush1.msra.mxu0 0.0
    %4298 = vmatprep.subr.mxu0 0.0
    %4299 = vmatpush1.msra.mxu0 0.0
    %4300 = vmatprep.subr.mxu0 0.0
    %v4301 = vand.u32 %v3104, 4294901760
    %4302 = vmatpush1.msra.mxu0 %v4301
    %4303 = vmatprep.subr.mxu0 0.0
    %v4304 = vand.u32 %v3103, 4294901760
    %4305 = vmatpush1.msra.mxu0 %v4304
    %4306 = vmatprep.subr.mxu0 0.0
    %v4307 = vand.u32 %v3102, 4294901760
    %4308 = vmatpush1.msra.mxu0 %v4307
    %4309 = vmatprep.subr.mxu0 0.0
    %v4310 = vand.u32 %v3101, 4294901760
    %4311 = vmatpush1.msra.mxu0 %v4310
    %4312 = vmatprep.subr.mxu0 0.0
    %4313 = vmatpush2.msra.mxu0 0.0
    %4314 = vmatprep.subr.mxu0 0.0
    %4315 = vmatpush2.msra.mxu0 0.0
    %4316 = vmatprep.subr.mxu0 0.0
    %4317 = vmatpush2.msra.mxu0 0.0
    %4318 = vmatprep.subr.mxu0 0.0
    %4319 = vmatpush2.msra.mxu0 0.0
    %4320 = vmatprep.subr.mxu0 0.0
    %4321 = vmatpush2.msra.mxu0 0.0
    %4322 = vmatprep.subr.mxu0 0.0
    %4323 = vmatpush2.msra.mxu0 0.0
    %4324 = vmatprep.subr.mxu0 0.0
    %4325 = vmatpush2.msra.mxu0 0.0
    %4326 = vmatprep.subr.mxu0 0.0
    %4327 = vmatpush2.msra.mxu0 0.0
    %4328 = vmatprep.subr.mxu0 0.0
    %4329 = vmatpush2.msra.mxu0 0.0
    %4330 = vmatprep.subr.mxu0 0.0
    %4331 = vmatpush2.msra.mxu0 0.0
    %4332 = vmatprep.subr.mxu0 0.0
    %4333 = vmatpush2.msra.mxu0 0.0
    %4334 = vmatprep.subr.mxu0 0.0
    %4335 = vmatpush2.msra.mxu0 0.0
    %4336 = vmatprep.subr.mxu0 0.0
    %4337 = vmatpush2.msra.mxu0 0.0
    %4338 = vmatprep.subr.mxu0 0.0
    %4339 = vmatpush2.msra.mxu0 0.0
    %4340 = vmatprep.subr.mxu0 0.0
    %4341 = vmatpush2.msra.mxu0 0.0
    %4342 = vmatprep.subr.mxu0 0.0
    %4343 = vmatpush2.msra.mxu0 0.0
    %4344 = vmatprep.mubr.f32.mxu0 0.0
    %v4345 = vand.u32 %v3747, 4294901760
    %4346 = vmatmul.mubr.f32.gmra.mxu0 %v4345
    %v4347 = vpop.f32.mrf.mxu0
    %v4348 = vadd.f32 %v4255, %v4347
    %v4349 = vpop.f32.mrf.mxu0
    %4350 = vmatprep.mubr.f32.mxu0 0.0
    %v4351 = vand.u32 %v3749, 4294901760
    %4352 = vmatmul.mubr.f32.gmra.mxu0 %v4351
    %v4353 = vpop.f32.mrf.mxu0
    %v4354 = vadd.f32 %v4261, %v4353
    %v4355 = vpop.f32.mrf.mxu0
    %4356 = vmatprep.mubr.f32.mxu0 0.0
    %v4357 = vand.u32 %v3751, 4294901760
    %4358 = vmatmul.mubr.f32.gmra.mxu0 %v4357
    %v4359 = vpop.f32.mrf.mxu0
    %v4360 = vadd.f32 %v4267, %v4359
    %v4361 = vpop.f32.mrf.mxu0
    %4362 = vmatprep.mubr.f32.mxu0 0.0
    %v4363 = vand.u32 %v3753, 4294901760
    %4364 = vmatmul.mubr.f32.gmra.mxu0 %v4363
    %v4365 = vpop.f32.mrf.mxu0
    %v4366 = vadd.f32 %v4273, %v4365
    %v4367 = vpop.f32.mrf.mxu0
    %4368 = vdwg.mxu0
    %v4369 = vrot.slane %v3097, 2
    %v4370 = vrot.slane %v3089, 2
    %v4371 = vsel %vm94, %v4369, %v4370
    %v4372 = vrot.slane %v3099, 2
    %v4373 = vsel %vm94, %v4370, %v4372
    %v4374 = vrot.slane %v3098, 2
    %v4375 = vrot.slane %v3092, 2
    %v4376 = vsel %vm94, %v4374, %v4375
    %v4377 = vrot.slane %v3100, 2
    %v4378 = vsel %vm94, %v4375, %v4377
    %s4379 = scalar_lea.vmem %s3, 64
    %v4380 = vld [vmem:[%s4379] sm:$0xff]
    %v4381 = vld [vmem:[%s4379 + $0x8] sm:$0xff]
    %v4382 = vld [vmem:[%s4379 + $0x10] sm:$0xff]
    %v4383 = vld [vmem:[%s4379 + $0x18] sm:$0xff]
    %v4384 = vsel %vm3124, %v4371, 0
    %v4386 = vsel %vm3124, %v4373, 0
    %v4388 = vsel %vm3124, %v4376, 0
    %v4390 = vsel %vm3124, %v4378, 0
    %4392 = vmatprep.subr.mxu0 0.0
    %4393 = vmatpush1.msra.mxu0 0.0
    %4394 = vmatprep.subr.mxu0 0.0
    %4395 = vmatpush1.msra.mxu0 0.0
    %4396 = vmatprep.subr.mxu0 0.0
    %4397 = vmatpush1.msra.mxu0 0.0
    %4398 = vmatprep.subr.mxu0 0.0
    %4399 = vmatpush1.msra.mxu0 0.0
    %4400 = vmatprep.subr.mxu0 0.0
    %4401 = vmatpush1.msra.mxu0 0.0
    %4402 = vmatprep.subr.mxu0 0.0
    %4403 = vmatpush1.msra.mxu0 0.0
    %4404 = vmatprep.subr.mxu0 0.0
    %4405 = vmatpush1.msra.mxu0 0.0
    %4406 = vmatprep.subr.mxu0 0.0
    %4407 = vmatpush1.msra.mxu0 0.0
    %4408 = vmatprep.subr.mxu0 0.0
    %4409 = vmatpush1.msra.mxu0 0.0
    %4410 = vmatprep.subr.mxu0 0.0
    %4411 = vmatpush1.msra.mxu0 0.0
    %4412 = vmatprep.subr.mxu0 0.0
    %4413 = vmatpush1.msra.mxu0 0.0
    %4414 = vmatprep.subr.mxu0 0.0
    %4415 = vmatpush1.msra.mxu0 0.0
    %4416 = vmatprep.subr.mxu0 0.0
    %v4417 = vand.u32 %v4383, 4294901760
    %4418 = vmatpush1.msra.mxu0 %v4417
    %4419 = vmatprep.subr.mxu0 0.0
    %v4420 = vand.u32 %v4382, 4294901760
    %4421 = vmatpush1.msra.mxu0 %v4420
    %4422 = vmatprep.subr.mxu0 0.0
    %v4423 = vand.u32 %v4381, 4294901760
    %4424 = vmatpush1.msra.mxu0 %v4423
    %4425 = vmatprep.subr.mxu0 0.0
    %v4426 = vand.u32 %v4380, 4294901760
    %4427 = vmatpush1.msra.mxu0 %v4426
    %4428 = vmatprep.subr.mxu0 0.0
    %4429 = vmatpush2.msra.mxu0 0.0
    %4430 = vmatprep.subr.mxu0 0.0
    %4431 = vmatpush2.msra.mxu0 0.0
    %4432 = vmatprep.subr.mxu0 0.0
    %4433 = vmatpush2.msra.mxu0 0.0
    %4434 = vmatprep.subr.mxu0 0.0
    %4435 = vmatpush2.msra.mxu0 0.0
    %4436 = vmatprep.subr.mxu0 0.0
    %4437 = vmatpush2.msra.mxu0 0.0
    %4438 = vmatprep.subr.mxu0 0.0
    %4439 = vmatpush2.msra.mxu0 0.0
    %4440 = vmatprep.subr.mxu0 0.0
    %4441 = vmatpush2.msra.mxu0 0.0
    %4442 = vmatprep.subr.mxu0 0.0
    %4443 = vmatpush2.msra.mxu0 0.0
    %4444 = vmatprep.subr.mxu0 0.0
    %4445 = vmatpush2.msra.mxu0 0.0
    %4446 = vmatprep.subr.mxu0 0.0
    %4447 = vmatpush2.msra.mxu0 0.0
    %4448 = vmatprep.subr.mxu0 0.0
    %4449 = vmatpush2.msra.mxu0 0.0
    %4450 = vmatprep.subr.mxu0 0.0
    %4451 = vmatpush2.msra.mxu0 0.0
    %4452 = vmatprep.subr.mxu0 0.0
    %4453 = vmatpush2.msra.mxu0 0.0
    %4454 = vmatprep.subr.mxu0 0.0
    %4455 = vmatpush2.msra.mxu0 0.0
    %4456 = vmatprep.subr.mxu0 0.0
    %4457 = vmatpush2.msra.mxu0 0.0
    %4458 = vmatprep.subr.mxu0 0.0
    %4459 = vmatpush2.msra.mxu0 0.0
    %4460 = vmatprep.mubr.f32.mxu0 0.0
    %v4461 = vand.u32 %v4384, 4294901760
    %v4462 = vsub.f32 %v4384, %v4461
    %v4463 = vand.u32 %v4462, 4294901760
    %v4464 = vsub.f32 %v4462, %v4463
    %v4465 = vand.u32 %v4464, 4294901760
    %4466 = vmatmul.mubr.f32.gmra.mxu0 %v4465
    %v4467 = vpop.f32.mrf.mxu0
    %v4468 = vadd.f32 0.0, %v4467
    %v4469 = vpop.f32.mrf.mxu0
    %4470 = vmatprep.mubr.f32.mxu0 0.0
    %v4471 = vand.u32 %v4386, 4294901760
    %v4472 = vsub.f32 %v4386, %v4471
    %v4473 = vand.u32 %v4472, 4294901760
    %v4474 = vsub.f32 %v4472, %v4473
    %v4475 = vand.u32 %v4474, 4294901760
    %4476 = vmatmul.mubr.f32.gmra.mxu0 %v4475
    %v4477 = vpop.f32.mrf.mxu0
    %v4478 = vadd.f32 0.0, %v4477
    %v4479 = vpop.f32.mrf.mxu0
    %4480 = vmatprep.mubr.f32.mxu0 0.0
    %v4481 = vand.u32 %v4388, 4294901760
    %v4482 = vsub.f32 %v4388, %v4481
    %v4483 = vand.u32 %v4482, 4294901760
    %v4484 = vsub.f32 %v4482, %v4483
    %v4485 = vand.u32 %v4484, 4294901760
    %4486 = vmatmul.mubr.f32.gmra.mxu0 %v4485
    %v4487 = vpop.f32.mrf.mxu0
    %v4488 = vadd.f32 0.0, %v4487
    %v4489 = vpop.f32.mrf.mxu0
    %4490 = vmatprep.mubr.f32.mxu0 0.0
    %v4491 = vand.u32 %v4390, 4294901760
    %v4492 = vsub.f32 %v4390, %v4491
    %v4493 = vand.u32 %v4492, 4294901760
    %v4494 = vsub.f32 %v4492, %v4493
    %v4495 = vand.u32 %v4494, 4294901760
    %4496 = vmatmul.mubr.f32.gmra.mxu0 %v4495
    %v4497 = vpop.f32.mrf.mxu0
    %v4498 = vadd.f32 0.0, %v4497
    %v4499 = vpop.f32.mrf.mxu0
    %4500 = vdwg.mxu0
    %4501 = vmatprep.subr.mxu0 0.0
    %4502 = vmatpush1.msra.mxu0 0.0
    %4503 = vmatprep.subr.mxu0 0.0
    %4504 = vmatpush1.msra.mxu0 0.0
    %4505 = vmatprep.subr.mxu0 0.0
    %4506 = vmatpush1.msra.mxu0 0.0
    %4507 = vmatprep.subr.mxu0 0.0
    %4508 = vmatpush1.msra.mxu0 0.0
    %4509 = vmatprep.subr.mxu0 0.0
    %4510 = vmatpush1.msra.mxu0 0.0
    %4511 = vmatprep.subr.mxu0 0.0
    %4512 = vmatpush1.msra.mxu0 0.0
    %4513 = vmatprep.subr.mxu0 0.0
    %4514 = vmatpush1.msra.mxu0 0.0
    %4515 = vmatprep.subr.mxu0 0.0
    %4516 = vmatpush1.msra.mxu0 0.0
    %4517 = vmatprep.subr.mxu0 0.0
    %4518 = vmatpush1.msra.mxu0 0.0
    %4519 = vmatprep.subr.mxu0 0.0
    %4520 = vmatpush1.msra.mxu0 0.0
    %4521 = vmatprep.subr.mxu0 0.0
    %4522 = vmatpush1.msra.mxu0 0.0
    %4523 = vmatprep.subr.mxu0 0.0
    %4524 = vmatpush1.msra.mxu0 0.0
    %4525 = vmatprep.subr.mxu0 0.0
    %v4526 = vand.u32 %v4383, 4294901760
    %v4527 = vsub.f32 %v4383, %v4526
    %v4528 = vand.u32 %v4527, 4294901760
    %v4529 = vsub.f32 %v4527, %v4528
    %v4530 = vand.u32 %v4529, 4294901760
    %4531 = vmatpush1.msra.mxu0 %v4530
    %4532 = vmatprep.subr.mxu0 0.0
    %v4533 = vand.u32 %v4382, 4294901760
    %v4534 = vsub.f32 %v4382, %v4533
    %v4535 = vand.u32 %v4534, 4294901760
    %v4536 = vsub.f32 %v4534, %v4535
    %v4537 = vand.u32 %v4536, 4294901760
    %4538 = vmatpush1.msra.mxu0 %v4537
    %4539 = vmatprep.subr.mxu0 0.0
    %v4540 = vand.u32 %v4381, 4294901760
    %v4541 = vsub.f32 %v4381, %v4540
    %v4542 = vand.u32 %v4541, 4294901760
    %v4543 = vsub.f32 %v4541, %v4542
    %v4544 = vand.u32 %v4543, 4294901760
    %4545 = vmatpush1.msra.mxu0 %v4544
    %4546 = vmatprep.subr.mxu0 0.0
    %v4547 = vand.u32 %v4380, 4294901760
    %v4548 = vsub.f32 %v4380, %v4547
    %v4549 = vand.u32 %v4548, 4294901760
    %v4550 = vsub.f32 %v4548, %v4549
    %v4551 = vand.u32 %v4550, 4294901760
    %4552 = vmatpush1.msra.mxu0 %v4551
    %4553 = vmatprep.subr.mxu0 0.0
    %4554 = vmatpush2.msra.mxu0 0.0
    %4555 = vmatprep.subr.mxu0 0.0
    %4556 = vmatpush2.msra.mxu0 0.0
    %4557 = vmatprep.subr.mxu0 0.0
    %4558 = vmatpush2.msra.mxu0 0.0
    %4559 = vmatprep.subr.mxu0 0.0
    %4560 = vmatpush2.msra.mxu0 0.0
    %4561 = vmatprep.subr.mxu0 0.0
    %4562 = vmatpush2.msra.mxu0 0.0
    %4563 = vmatprep.subr.mxu0 0.0
    %4564 = vmatpush2.msra.mxu0 0.0
    %4565 = vmatprep.subr.mxu0 0.0
    %4566 = vmatpush2.msra.mxu0 0.0
    %4567 = vmatprep.subr.mxu0 0.0
    %4568 = vmatpush2.msra.mxu0 0.0
    %4569 = vmatprep.subr.mxu0 0.0
    %4570 = vmatpush2.msra.mxu0 0.0
    %4571 = vmatprep.subr.mxu0 0.0
    %4572 = vmatpush2.msra.mxu0 0.0
    %4573 = vmatprep.subr.mxu0 0.0
    %4574 = vmatpush2.msra.mxu0 0.0
    %4575 = vmatprep.subr.mxu0 0.0
    %4576 = vmatpush2.msra.mxu0 0.0
    %4577 = vmatprep.subr.mxu0 0.0
    %4578 = vmatpush2.msra.mxu0 0.0
    %4579 = vmatprep.subr.mxu0 0.0
    %4580 = vmatpush2.msra.mxu0 0.0
    %4581 = vmatprep.subr.mxu0 0.0
    %4582 = vmatpush2.msra.mxu0 0.0
    %4583 = vmatprep.subr.mxu0 0.0
    %4584 = vmatpush2.msra.mxu0 0.0
    %4585 = vmatprep.mubr.f32.mxu0 0.0
    %v4586 = vand.u32 %v4384, 4294901760
    %4587 = vmatmul.mubr.f32.gmra.mxu0 %v4586
    %v4588 = vpop.f32.mrf.mxu0
    %v4589 = vadd.f32 %v4468, %v4588
    %v4590 = vpop.f32.mrf.mxu0
    %4591 = vmatprep.mubr.f32.mxu0 0.0
    %v4592 = vand.u32 %v4386, 4294901760
    %4593 = vmatmul.mubr.f32.gmra.mxu0 %v4592
    %v4594 = vpop.f32.mrf.mxu0
    %v4595 = vadd.f32 %v4478, %v4594
    %v4596 = vpop.f32.mrf.mxu0
    %4597 = vmatprep.mubr.f32.mxu0 0.0
    %v4598 = vand.u32 %v4388, 4294901760
    %4599 = vmatmul.mubr.f32.gmra.mxu0 %v4598
    %v4600 = vpop.f32.mrf.mxu0
    %v4601 = vadd.f32 %v4488, %v4600
    %v4602 = vpop.f32.mrf.mxu0
    %4603 = vmatprep.mubr.f32.mxu0 0.0
    %v4604 = vand.u32 %v4390, 4294901760
    %4605 = vmatmul.mubr.f32.gmra.mxu0 %v4604
    %v4606 = vpop.f32.mrf.mxu0
    %v4607 = vadd.f32 %v4498, %v4606
    %v4608 = vpop.f32.mrf.mxu0
    %4609 = vdwg.mxu0
    %4610 = vmatprep.subr.mxu0 0.0
    %4611 = vmatpush1.msra.mxu0 0.0
    %4612 = vmatprep.subr.mxu0 0.0
    %4613 = vmatpush1.msra.mxu0 0.0
    %4614 = vmatprep.subr.mxu0 0.0
    %4615 = vmatpush1.msra.mxu0 0.0
    %4616 = vmatprep.subr.mxu0 0.0
    %4617 = vmatpush1.msra.mxu0 0.0
    %4618 = vmatprep.subr.mxu0 0.0
    %4619 = vmatpush1.msra.mxu0 0.0
    %4620 = vmatprep.subr.mxu0 0.0
    %4621 = vmatpush1.msra.mxu0 0.0
    %4622 = vmatprep.subr.mxu0 0.0
    %4623 = vmatpush1.msra.mxu0 0.0
    %4624 = vmatprep.subr.mxu0 0.0
    %4625 = vmatpush1.msra.mxu0 0.0
    %4626 = vmatprep.subr.mxu0 0.0
    %4627 = vmatpush1.msra.mxu0 0.0
    %4628 = vmatprep.subr.mxu0 0.0
    %4629 = vmatpush1.msra.mxu0 0.0
    %4630 = vmatprep.subr.mxu0 0.0
    %4631 = vmatpush1.msra.mxu0 0.0
    %4632 = vmatprep.subr.mxu0 0.0
    %4633 = vmatpush1.msra.mxu0 0.0
    %4634 = vmatprep.subr.mxu0 0.0
    %v4635 = vand.u32 %v4383, 4294901760
    %v4636 = vsub.f32 %v4383, %v4635
    %4637 = vmatpush1.msra.mxu0 %v4636
    %4638 = vmatprep.subr.mxu0 0.0
    %v4639 = vand.u32 %v4382, 4294901760
    %v4640 = vsub.f32 %v4382, %v4639
    %4641 = vmatpush1.msra.mxu0 %v4640
    %4642 = vmatprep.subr.mxu0 0.0
    %v4643 = vand.u32 %v4381, 4294901760
    %v4644 = vsub.f32 %v4381, %v4643
    %4645 = vmatpush1.msra.mxu0 %v4644
    %4646 = vmatprep.subr.mxu0 0.0
    %v4647 = vand.u32 %v4380, 4294901760
    %v4648 = vsub.f32 %v4380, %v4647
    %4649 = vmatpush1.msra.mxu0 %v4648
    %4650 = vmatprep.subr.mxu0 0.0
    %4651 = vmatpush2.msra.mxu0 0.0
    %4652 = vmatprep.subr.mxu0 0.0
    %4653 = vmatpush2.msra.mxu0 0.0
    %4654 = vmatprep.subr.mxu0 0.0
    %4655 = vmatpush2.msra.mxu0 0.0
    %4656 = vmatprep.subr.mxu0 0.0
    %4657 = vmatpush2.msra.mxu0 0.0
    %4658 = vmatprep.subr.mxu0 0.0
    %4659 = vmatpush2.msra.mxu0 0.0
    %4660 = vmatprep.subr.mxu0 0.0
    %4661 = vmatpush2.msra.mxu0 0.0
    %4662 = vmatprep.subr.mxu0 0.0
    %4663 = vmatpush2.msra.mxu0 0.0
    %4664 = vmatprep.subr.mxu0 0.0
    %4665 = vmatpush2.msra.mxu0 0.0
    %4666 = vmatprep.subr.mxu0 0.0
    %4667 = vmatpush2.msra.mxu0 0.0
    %4668 = vmatprep.subr.mxu0 0.0
    %4669 = vmatpush2.msra.mxu0 0.0
    %4670 = vmatprep.subr.mxu0 0.0
    %4671 = vmatpush2.msra.mxu0 0.0
    %4672 = vmatprep.subr.mxu0 0.0
    %4673 = vmatpush2.msra.mxu0 0.0
    %4674 = vmatprep.subr.mxu0 0.0
    %4675 = vmatpush2.msra.mxu0 0.0
    %4676 = vmatprep.subr.mxu0 0.0
    %4677 = vmatpush2.msra.mxu0 0.0
    %4678 = vmatprep.subr.mxu0 0.0
    %4679 = vmatpush2.msra.mxu0 0.0
    %4680 = vmatprep.subr.mxu0 0.0
    %4681 = vmatpush2.msra.mxu0 0.0
    %4682 = vmatprep.mubr.f32.mxu0 0.0
    %v4683 = vand.u32 %v4384, 4294901760
    %v4684 = vsub.f32 %v4384, %v4683
    %4685 = vmatmul.mubr.f32.gmra.mxu0 %v4684
    %v4686 = vpop.f32.mrf.mxu0
    %v4687 = vadd.f32 %v4589, %v4686
    %v4688 = vpop.f32.mrf.mxu0
    %4689 = vmatprep.mubr.f32.mxu0 0.0
    %v4690 = vand.u32 %v4386, 4294901760
    %v4691 = vsub.f32 %v4386, %v4690
    %4692 = vmatmul.mubr.f32.gmra.mxu0 %v4691
    %v4693 = vpop.f32.mrf.mxu0
    %v4694 = vadd.f32 %v4595, %v4693
    %v4695 = vpop.f32.mrf.mxu0
    %4696 = vmatprep.mubr.f32.mxu0 0.0
    %v4697 = vand.u32 %v4388, 4294901760
    %v4698 = vsub.f32 %v4388, %v4697
    %4699 = vmatmul.mubr.f32.gmra.mxu0 %v4698
    %v4700 = vpop.f32.mrf.mxu0
    %v4701 = vadd.f32 %v4601, %v4700
    %v4702 = vpop.f32.mrf.mxu0
    %4703 = vmatprep.mubr.f32.mxu0 0.0
    %v4704 = vand.u32 %v4390, 4294901760
    %v4705 = vsub.f32 %v4390, %v4704
    %4706 = vmatmul.mubr.f32.gmra.mxu0 %v4705
    %v4707 = vpop.f32.mrf.mxu0
    %v4708 = vadd.f32 %v4607, %v4707
    %v4709 = vpop.f32.mrf.mxu0
    %4710 = vdwg.mxu0
    %4711 = vmatprep.subr.mxu0 0.0
    %4712 = vmatpush1.msra.mxu0 0.0
    %4713 = vmatprep.subr.mxu0 0.0
    %4714 = vmatpush1.msra.mxu0 0.0
    %4715 = vmatprep.subr.mxu0 0.0
    %4716 = vmatpush1.msra.mxu0 0.0
    %4717 = vmatprep.subr.mxu0 0.0
    %4718 = vmatpush1.msra.mxu0 0.0
    %4719 = vmatprep.subr.mxu0 0.0
    %4720 = vmatpush1.msra.mxu0 0.0
    %4721 = vmatprep.subr.mxu0 0.0
    %4722 = vmatpush1.msra.mxu0 0.0
    %4723 = vmatprep.subr.mxu0 0.0
    %4724 = vmatpush1.msra.mxu0 0.0
    %4725 = vmatprep.subr.mxu0 0.0
    %4726 = vmatpush1.msra.mxu0 0.0
    %4727 = vmatprep.subr.mxu0 0.0
    %4728 = vmatpush1.msra.mxu0 0.0
    %4729 = vmatprep.subr.mxu0 0.0
    %4730 = vmatpush1.msra.mxu0 0.0
    %4731 = vmatprep.subr.mxu0 0.0
    %4732 = vmatpush1.msra.mxu0 0.0
    %4733 = vmatprep.subr.mxu0 0.0
    %4734 = vmatpush1.msra.mxu0 0.0
    %4735 = vmatprep.subr.mxu0 0.0
    %v4736 = vand.u32 %v4383, 4294901760
    %4737 = vmatpush1.msra.mxu0 %v4736
    %4738 = vmatprep.subr.mxu0 0.0
    %v4739 = vand.u32 %v4382, 4294901760
    %4740 = vmatpush1.msra.mxu0 %v4739
    %4741 = vmatprep.subr.mxu0 0.0
    %v4742 = vand.u32 %v4381, 4294901760
    %4743 = vmatpush1.msra.mxu0 %v4742
    %4744 = vmatprep.subr.mxu0 0.0
    %v4745 = vand.u32 %v4380, 4294901760
    %4746 = vmatpush1.msra.mxu0 %v4745
    %4747 = vmatprep.subr.mxu0 0.0
    %4748 = vmatpush2.msra.mxu0 0.0
    %4749 = vmatprep.subr.mxu0 0.0
    %4750 = vmatpush2.msra.mxu0 0.0
    %4751 = vmatprep.subr.mxu0 0.0
    %4752 = vmatpush2.msra.mxu0 0.0
    %4753 = vmatprep.subr.mxu0 0.0
    %4754 = vmatpush2.msra.mxu0 0.0
    %4755 = vmatprep.subr.mxu0 0.0
    %4756 = vmatpush2.msra.mxu0 0.0
    %4757 = vmatprep.subr.mxu0 0.0
    %4758 = vmatpush2.msra.mxu0 0.0
    %4759 = vmatprep.subr.mxu0 0.0
    %4760 = vmatpush2.msra.mxu0 0.0
    %4761 = vmatprep.subr.mxu0 0.0
    %4762 = vmatpush2.msra.mxu0 0.0
    %4763 = vmatprep.subr.mxu0 0.0
    %4764 = vmatpush2.msra.mxu0 0.0
    %4765 = vmatprep.subr.mxu0 0.0
    %4766 = vmatpush2.msra.mxu0 0.0
    %4767 = vmatprep.subr.mxu0 0.0
    %4768 = vmatpush2.msra.mxu0 0.0
    %4769 = vmatprep.subr.mxu0 0.0
    %4770 = vmatpush2.msra.mxu0 0.0
    %4771 = vmatprep.subr.mxu0 0.0
    %4772 = vmatpush2.msra.mxu0 0.0
    %4773 = vmatprep.subr.mxu0 0.0
    %4774 = vmatpush2.msra.mxu0 0.0
    %4775 = vmatprep.subr.mxu0 0.0
    %4776 = vmatpush2.msra.mxu0 0.0
    %4777 = vmatprep.subr.mxu0 0.0
    %4778 = vmatpush2.msra.mxu0 0.0
    %4779 = vmatprep.mubr.f32.mxu0 0.0
    %v4780 = vand.u32 %v4384, 4294901760
    %v4781 = vsub.f32 %v4384, %v4780
    %v4782 = vand.u32 %v4781, 4294901760
    %4783 = vmatmul.mubr.f32.gmra.mxu0 %v4782
    %v4784 = vpop.f32.mrf.mxu0
    %v4785 = vadd.f32 %v4687, %v4784
    %v4786 = vpop.f32.mrf.mxu0
    %4787 = vmatprep.mubr.f32.mxu0 0.0
    %v4788 = vand.u32 %v4386, 4294901760
    %v4789 = vsub.f32 %v4386, %v4788
    %v4790 = vand.u32 %v4789, 4294901760
    %4791 = vmatmul.mubr.f32.gmra.mxu0 %v4790
    %v4792 = vpop.f32.mrf.mxu0
    %v4793 = vadd.f32 %v4694, %v4792
    %v4794 = vpop.f32.mrf.mxu0
    %4795 = vmatprep.mubr.f32.mxu0 0.0
    %v4796 = vand.u32 %v4388, 4294901760
    %v4797 = vsub.f32 %v4388, %v4796
    %v4798 = vand.u32 %v4797, 4294901760
    %4799 = vmatmul.mubr.f32.gmra.mxu0 %v4798
    %v4800 = vpop.f32.mrf.mxu0
    %v4801 = vadd.f32 %v4701, %v4800
    %v4802 = vpop.f32.mrf.mxu0
    %4803 = vmatprep.mubr.f32.mxu0 0.0
    %v4804 = vand.u32 %v4390, 4294901760
    %v4805 = vsub.f32 %v4390, %v4804
    %v4806 = vand.u32 %v4805, 4294901760
    %4807 = vmatmul.mubr.f32.gmra.mxu0 %v4806
    %v4808 = vpop.f32.mrf.mxu0
    %v4809 = vadd.f32 %v4708, %v4808
    %v4810 = vpop.f32.mrf.mxu0
    %4811 = vdwg.mxu0
    %4812 = vmatprep.subr.mxu0 0.0
    %4813 = vmatpush1.msra.mxu0 0.0
    %4814 = vmatprep.subr.mxu0 0.0
    %4815 = vmatpush1.msra.mxu0 0.0
    %4816 = vmatprep.subr.mxu0 0.0
    %4817 = vmatpush1.msra.mxu0 0.0
    %4818 = vmatprep.subr.mxu0 0.0
    %4819 = vmatpush1.msra.mxu0 0.0
    %4820 = vmatprep.subr.mxu0 0.0
    %4821 = vmatpush1.msra.mxu0 0.0
    %4822 = vmatprep.subr.mxu0 0.0
    %4823 = vmatpush1.msra.mxu0 0.0
    %4824 = vmatprep.subr.mxu0 0.0
    %4825 = vmatpush1.msra.mxu0 0.0
    %4826 = vmatprep.subr.mxu0 0.0
    %4827 = vmatpush1.msra.mxu0 0.0
    %4828 = vmatprep.subr.mxu0 0.0
    %4829 = vmatpush1.msra.mxu0 0.0
    %4830 = vmatprep.subr.mxu0 0.0
    %4831 = vmatpush1.msra.mxu0 0.0
    %4832 = vmatprep.subr.mxu0 0.0
    %4833 = vmatpush1.msra.mxu0 0.0
    %4834 = vmatprep.subr.mxu0 0.0
    %4835 = vmatpush1.msra.mxu0 0.0
    %4836 = vmatprep.subr.mxu0 0.0
    %v4837 = vand.u32 %v4383, 4294901760
    %v4838 = vsub.f32 %v4383, %v4837
    %v4839 = vand.u32 %v4838, 4294901760
    %4840 = vmatpush1.msra.mxu0 %v4839
    %4841 = vmatprep.subr.mxu0 0.0
    %v4842 = vand.u32 %v4382, 4294901760
    %v4843 = vsub.f32 %v4382, %v4842
    %v4844 = vand.u32 %v4843, 4294901760
    %4845 = vmatpush1.msra.mxu0 %v4844
    %4846 = vmatprep.subr.mxu0 0.0
    %v4847 = vand.u32 %v4381, 4294901760
    %v4848 = vsub.f32 %v4381, %v4847
    %v4849 = vand.u32 %v4848, 4294901760
    %4850 = vmatpush1.msra.mxu0 %v4849
    %4851 = vmatprep.subr.mxu0 0.0
    %v4852 = vand.u32 %v4380, 4294901760
    %v4853 = vsub.f32 %v4380, %v4852
    %v4854 = vand.u32 %v4853, 4294901760
    %4855 = vmatpush1.msra.mxu0 %v4854
    %4856 = vmatprep.subr.mxu0 0.0
    %4857 = vmatpush2.msra.mxu0 0.0
    %4858 = vmatprep.subr.mxu0 0.0
    %4859 = vmatpush2.msra.mxu0 0.0
    %4860 = vmatprep.subr.mxu0 0.0
    %4861 = vmatpush2.msra.mxu0 0.0
    %4862 = vmatprep.subr.mxu0 0.0
    %4863 = vmatpush2.msra.mxu0 0.0
    %4864 = vmatprep.subr.mxu0 0.0
    %4865 = vmatpush2.msra.mxu0 0.0
    %4866 = vmatprep.subr.mxu0 0.0
    %4867 = vmatpush2.msra.mxu0 0.0
    %4868 = vmatprep.subr.mxu0 0.0
    %4869 = vmatpush2.msra.mxu0 0.0
    %4870 = vmatprep.subr.mxu0 0.0
    %4871 = vmatpush2.msra.mxu0 0.0
    %4872 = vmatprep.subr.mxu0 0.0
    %4873 = vmatpush2.msra.mxu0 0.0
    %4874 = vmatprep.subr.mxu0 0.0
    %4875 = vmatpush2.msra.mxu0 0.0
    %4876 = vmatprep.subr.mxu0 0.0
    %4877 = vmatpush2.msra.mxu0 0.0
    %4878 = vmatprep.subr.mxu0 0.0
    %4879 = vmatpush2.msra.mxu0 0.0
    %4880 = vmatprep.subr.mxu0 0.0
    %4881 = vmatpush2.msra.mxu0 0.0
    %4882 = vmatprep.subr.mxu0 0.0
    %4883 = vmatpush2.msra.mxu0 0.0
    %4884 = vmatprep.subr.mxu0 0.0
    %4885 = vmatpush2.msra.mxu0 0.0
    %4886 = vmatprep.subr.mxu0 0.0
    %4887 = vmatpush2.msra.mxu0 0.0
    %4888 = vmatprep.mubr.f32.mxu0 0.0
    %v4889 = vand.u32 %v4384, 4294901760
    %4890 = vmatmul.mubr.f32.gmra.mxu0 %v4889
    %v4891 = vpop.f32.mrf.mxu0
    %v4892 = vadd.f32 %v4785, %v4891
    %v4893 = vpop.f32.mrf.mxu0
    %4894 = vmatprep.mubr.f32.mxu0 0.0
    %v4895 = vand.u32 %v4386, 4294901760
    %4896 = vmatmul.mubr.f32.gmra.mxu0 %v4895
    %v4897 = vpop.f32.mrf.mxu0
    %v4898 = vadd.f32 %v4793, %v4897
    %v4899 = vpop.f32.mrf.mxu0
    %4900 = vmatprep.mubr.f32.mxu0 0.0
    %v4901 = vand.u32 %v4388, 4294901760
    %4902 = vmatmul.mubr.f32.gmra.mxu0 %v4901
    %v4903 = vpop.f32.mrf.mxu0
    %v4904 = vadd.f32 %v4801, %v4903
    %v4905 = vpop.f32.mrf.mxu0
    %4906 = vmatprep.mubr.f32.mxu0 0.0
    %v4907 = vand.u32 %v4390, 4294901760
    %4908 = vmatmul.mubr.f32.gmra.mxu0 %v4907
    %v4909 = vpop.f32.mrf.mxu0
    %v4910 = vadd.f32 %v4809, %v4909
    %v4911 = vpop.f32.mrf.mxu0
    %4912 = vdwg.mxu0
    %4913 = vmatprep.subr.mxu0 0.0
    %4914 = vmatpush1.msra.mxu0 0.0
    %4915 = vmatprep.subr.mxu0 0.0
    %4916 = vmatpush1.msra.mxu0 0.0
    %4917 = vmatprep.subr.mxu0 0.0
    %4918 = vmatpush1.msra.mxu0 0.0
    %4919 = vmatprep.subr.mxu0 0.0
    %4920 = vmatpush1.msra.mxu0 0.0
    %4921 = vmatprep.subr.mxu0 0.0
    %4922 = vmatpush1.msra.mxu0 0.0
    %4923 = vmatprep.subr.mxu0 0.0
    %4924 = vmatpush1.msra.mxu0 0.0
    %4925 = vmatprep.subr.mxu0 0.0
    %4926 = vmatpush1.msra.mxu0 0.0
    %4927 = vmatprep.subr.mxu0 0.0
    %4928 = vmatpush1.msra.mxu0 0.0
    %4929 = vmatprep.subr.mxu0 0.0
    %4930 = vmatpush1.msra.mxu0 0.0
    %4931 = vmatprep.subr.mxu0 0.0
    %4932 = vmatpush1.msra.mxu0 0.0
    %4933 = vmatprep.subr.mxu0 0.0
    %4934 = vmatpush1.msra.mxu0 0.0
    %4935 = vmatprep.subr.mxu0 0.0
    %4936 = vmatpush1.msra.mxu0 0.0
    %4937 = vmatprep.subr.mxu0 0.0
    %v4938 = vand.u32 %v4383, 4294901760
    %4939 = vmatpush1.msra.mxu0 %v4938
    %4940 = vmatprep.subr.mxu0 0.0
    %v4941 = vand.u32 %v4382, 4294901760
    %4942 = vmatpush1.msra.mxu0 %v4941
    %4943 = vmatprep.subr.mxu0 0.0
    %v4944 = vand.u32 %v4381, 4294901760
    %4945 = vmatpush1.msra.mxu0 %v4944
    %4946 = vmatprep.subr.mxu0 0.0
    %v4947 = vand.u32 %v4380, 4294901760
    %4948 = vmatpush1.msra.mxu0 %v4947
    %4949 = vmatprep.subr.mxu0 0.0
    %4950 = vmatpush2.msra.mxu0 0.0
    %4951 = vmatprep.subr.mxu0 0.0
    %4952 = vmatpush2.msra.mxu0 0.0
    %4953 = vmatprep.subr.mxu0 0.0
    %4954 = vmatpush2.msra.mxu0 0.0
    %4955 = vmatprep.subr.mxu0 0.0
    %4956 = vmatpush2.msra.mxu0 0.0
    %4957 = vmatprep.subr.mxu0 0.0
    %4958 = vmatpush2.msra.mxu0 0.0
    %4959 = vmatprep.subr.mxu0 0.0
    %4960 = vmatpush2.msra.mxu0 0.0
    %4961 = vmatprep.subr.mxu0 0.0
    %4962 = vmatpush2.msra.mxu0 0.0
    %4963 = vmatprep.subr.mxu0 0.0
    %4964 = vmatpush2.msra.mxu0 0.0
    %4965 = vmatprep.subr.mxu0 0.0
    %4966 = vmatpush2.msra.mxu0 0.0
    %4967 = vmatprep.subr.mxu0 0.0
    %4968 = vmatpush2.msra.mxu0 0.0
    %4969 = vmatprep.subr.mxu0 0.0
    %4970 = vmatpush2.msra.mxu0 0.0
    %4971 = vmatprep.subr.mxu0 0.0
    %4972 = vmatpush2.msra.mxu0 0.0
    %4973 = vmatprep.subr.mxu0 0.0
    %4974 = vmatpush2.msra.mxu0 0.0
    %4975 = vmatprep.subr.mxu0 0.0
    %4976 = vmatpush2.msra.mxu0 0.0
    %4977 = vmatprep.subr.mxu0 0.0
    %4978 = vmatpush2.msra.mxu0 0.0
    %4979 = vmatprep.subr.mxu0 0.0
    %4980 = vmatpush2.msra.mxu0 0.0
    %4981 = vmatprep.mubr.f32.mxu0 0.0
    %v4982 = vand.u32 %v4384, 4294901760
    %4983 = vmatmul.mubr.f32.gmra.mxu0 %v4982
    %v4984 = vpop.f32.mrf.mxu0
    %v4985 = vadd.f32 %v4892, %v4984
    %v4986 = vpop.f32.mrf.mxu0
    %4987 = vmatprep.mubr.f32.mxu0 0.0
    %v4988 = vand.u32 %v4386, 4294901760
    %4989 = vmatmul.mubr.f32.gmra.mxu0 %v4988
    %v4990 = vpop.f32.mrf.mxu0
    %v4991 = vadd.f32 %v4898, %v4990
    %v4992 = vpop.f32.mrf.mxu0
    %4993 = vmatprep.mubr.f32.mxu0 0.0
    %v4994 = vand.u32 %v4388, 4294901760
    %4995 = vmatmul.mubr.f32.gmra.mxu0 %v4994
    %v4996 = vpop.f32.mrf.mxu0
    %v4997 = vadd.f32 %v4904, %v4996
    %v4998 = vpop.f32.mrf.mxu0
    %4999 = vmatprep.mubr.f32.mxu0 0.0
    %v5000 = vand.u32 %v4390, 4294901760
    %5001 = vmatmul.mubr.f32.gmra.mxu0 %v5000
    %v5002 = vpop.f32.mrf.mxu0
    %v5003 = vadd.f32 %v4910, %v5002
    %v5004 = vpop.f32.mrf.mxu0
    %5005 = vdwg.mxu0
    %v5006 = vadd.f32 %v4348, %v4985
    %v5007 = vadd.f32 %v4354, %v4991
    %v5008 = vadd.f32 %v4360, %v4997
    %v5009 = vadd.f32 %v4366, %v5003
    %v5010 = vld [vmem:[%s4] sm:$0x1]
    %v5012 = vlaneseq
    %v5013 = vshrl.u32 %v5012, 7
    %v5014 = vsub.s32 0, %v5013
    %v5015 = vrot.slane %v5010, %v5014
    %v5017 = vadd.f32 %v5006, %v5015
    %v5018 = vadd.f32 %v5007, %v5015
    %v5019 = vadd.f32 %v5008, %v5015
    %v5020 = vadd.f32 %v5009, %v5015
    %v5021 = vmax.f32 %v5017, 0.0
    %v5022 = vmax.f32 %v5018, 0.0
    %v5023 = vmax.f32 %v5019, 0.0
    %v5024 = vmax.f32 %v5020, 0.0
    %v5029 = vrot.slane %v5021, 7
    %v5030 = vrot.slane %v5022, 7
    %v5031 = vsel %vm3086, %v5029, %v5030
    %v5032 = vrot.slane %v5023, 7
    %v5033 = vrot.slane %v5024, 7
    %v5034 = vsel %vm3086, %v5032, %v5033
    %v5039 = vsel %vm3086, 0.0, %v5029
    %v5040 = vsel %vm3086, 0.0, %v5032
    %v5041 = vsel %vm3086, %v5030, 0.0
    %v5042 = vsel %vm3086, %v5033, 0.0
    %v5043 = vld [vmem:[%s5] sm:$0xff]
    %v5044 = vld [vmem:[%s5 + $0x8] sm:$0xff]
    %v5045 = vld [vmem:[%s5 + $0x10] sm:$0xff]
    %v5046 = vld [vmem:[%s5 + $0x18] sm:$0xff]
    %v5047 = vld [vmem:[%s5 + $0x20] sm:$0xff]
    %v5048 = vld [vmem:[%s5 + $0x28] sm:$0xff]
    %v5049 = vld [vmem:[%s5 + $0x30] sm:$0xff]
    %v5050 = vld [vmem:[%s5 + $0x38] sm:$0xff]
    %v5055 = vrot.slane %v5039, 1
    %v5056 = vrot.slane %v5031, 1
    %v5057 = vsel %vm72, %v5055, %v5056
    %v5058 = vrot.slane %v5041, 1
    %v5059 = vsel %vm72, %v5056, %v5058
    %v5060 = vrot.slane %v5040, 1
    %v5061 = vrot.slane %v5034, 1
    %v5062 = vsel %vm72, %v5060, %v5061
    %v5063 = vrot.slane %v5042, 1
    %v5064 = vsel %vm72, %v5061, %v5063
    %s5065 = scalar_lea.vmem %s5, 64
    %v5066 = vld [vmem:[%s5065] sm:$0xff]
    %v5067 = vld [vmem:[%s5065 + $0x8] sm:$0xff]
    %v5068 = vld [vmem:[%s5065 + $0x10] sm:$0xff]
    %v5069 = vld [vmem:[%s5065 + $0x18] sm:$0xff]
    %v5070 = vld [vmem:[%s5065 + $0x20] sm:$0xff]
    %v5071 = vld [vmem:[%s5065 + $0x28] sm:$0xff]
    %v5072 = vld [vmem:[%s5065 + $0x30] sm:$0xff]
    %v5073 = vld [vmem:[%s5065 + $0x38] sm:$0xff]
    %vm5074 = vcmask 523264
    %v5075 = vsel %vm5074, %v5057, 0
    %v5077 = vsel %vm5074, %v5059, 0
    %v5079 = vsel %vm5074, %v5062, 0
    %v5081 = vsel %vm5074, %v5064, 0
    %5083 = vmatprep.subr.mxu0 0.0
    %5084 = vmatpush1.msra.mxu0 0.0
    %5085 = vmatprep.subr.mxu0 0.0
    %5086 = vmatpush1.msra.mxu0 0.0
    %5087 = vmatprep.subr.mxu0 0.0
    %5088 = vmatpush1.msra.mxu0 0.0
    %5089 = vmatprep.subr.mxu0 0.0
    %5090 = vmatpush1.msra.mxu0 0.0
    %5091 = vmatprep.subr.mxu0 0.0
    %5092 = vmatpush1.msra.mxu0 0.0
    %5093 = vmatprep.subr.mxu0 0.0
    %5094 = vmatpush1.msra.mxu0 0.0
    %5095 = vmatprep.subr.mxu0 0.0
    %5096 = vmatpush1.msra.mxu0 0.0
    %5097 = vmatprep.subr.mxu0 0.0
    %5098 = vmatpush1.msra.mxu0 0.0
    %5099 = vmatprep.subr.mxu0 0.0
    %v5100 = vand.u32 %v5073, 4294901760
    %5101 = vmatpush1.msra.mxu0 %v5100
    %5102 = vmatprep.subr.mxu0 0.0
    %v5103 = vand.u32 %v5072, 4294901760
    %5104 = vmatpush1.msra.mxu0 %v5103
    %5105 = vmatprep.subr.mxu0 0.0
    %v5106 = vand.u32 %v5071, 4294901760
    %5107 = vmatpush1.msra.mxu0 %v5106
    %5108 = vmatprep.subr.mxu0 0.0
    %v5109 = vand.u32 %v5070, 4294901760
    %5110 = vmatpush1.msra.mxu0 %v5109
    %5111 = vmatprep.subr.mxu0 0.0
    %v5112 = vand.u32 %v5069, 4294901760
    %5113 = vmatpush1.msra.mxu0 %v5112
    %5114 = vmatprep.subr.mxu0 0.0
    %v5115 = vand.u32 %v5068, 4294901760
    %5116 = vmatpush1.msra.mxu0 %v5115
    %5117 = vmatprep.subr.mxu0 0.0
    %v5118 = vand.u32 %v5067, 4294901760
    %5119 = vmatpush1.msra.mxu0 %v5118
    %5120 = vmatprep.subr.mxu0 0.0
    %v5121 = vand.u32 %v5066, 4294901760
    %5122 = vmatpush1.msra.mxu0 %v5121
    %5123 = vmatprep.subr.mxu0 0.0
    %5124 = vmatpush2.msra.mxu0 0.0
    %5125 = vmatprep.subr.mxu0 0.0
    %5126 = vmatpush2.msra.mxu0 0.0
    %5127 = vmatprep.subr.mxu0 0.0
    %5128 = vmatpush2.msra.mxu0 0.0
    %5129 = vmatprep.subr.mxu0 0.0
    %5130 = vmatpush2.msra.mxu0 0.0
    %5131 = vmatprep.subr.mxu0 0.0
    %5132 = vmatpush2.msra.mxu0 0.0
    %5133 = vmatprep.subr.mxu0 0.0
    %5134 = vmatpush2.msra.mxu0 0.0
    %5135 = vmatprep.subr.mxu0 0.0
    %5136 = vmatpush2.msra.mxu0 0.0
    %5137 = vmatprep.subr.mxu0 0.0
    %5138 = vmatpush2.msra.mxu0 0.0
    %5139 = vmatprep.subr.mxu0 0.0
    %5140 = vmatpush2.msra.mxu0 0.0
    %5141 = vmatprep.subr.mxu0 0.0
    %5142 = vmatpush2.msra.mxu0 0.0
    %5143 = vmatprep.subr.mxu0 0.0
    %5144 = vmatpush2.msra.mxu0 0.0
    %5145 = vmatprep.subr.mxu0 0.0
    %5146 = vmatpush2.msra.mxu0 0.0
    %5147 = vmatprep.subr.mxu0 0.0
    %5148 = vmatpush2.msra.mxu0 0.0
    %5149 = vmatprep.subr.mxu0 0.0
    %5150 = vmatpush2.msra.mxu0 0.0
    %5151 = vmatprep.subr.mxu0 0.0
    %5152 = vmatpush2.msra.mxu0 0.0
    %5153 = vmatprep.subr.mxu0 0.0
    %5154 = vmatpush2.msra.mxu0 0.0
    %5155 = vmatprep.mubr.f32.mxu0 0.0
    %v5156 = vand.u32 %v5075, 4294901760
    %v5157 = vsub.f32 %v5075, %v5156
    %v5158 = vand.u32 %v5157, 4294901760
    %v5159 = vsub.f32 %v5157, %v5158
    %v5160 = vand.u32 %v5159, 4294901760
    %5161 = vmatmul.mubr.f32.gmra.mxu0 %v5160
    %v5162 = vpop.f32.mrf.mxu0
    %v5163 = vadd.f32 0.0, %v5162
    %v5164 = vpop.f32.mrf.mxu0
    %5165 = vmatprep.mubr.f32.mxu0 0.0
    %v5166 = vand.u32 %v5077, 4294901760
    %v5167 = vsub.f32 %v5077, %v5166
    %v5168 = vand.u32 %v5167, 4294901760
    %v5169 = vsub.f32 %v5167, %v5168
    %v5170 = vand.u32 %v5169, 4294901760
    %5171 = vmatmul.mubr.f32.gmra.mxu0 %v5170
    %v5172 = vpop.f32.mrf.mxu0
    %v5173 = vadd.f32 0.0, %v5172
    %v5174 = vpop.f32.mrf.mxu0
    %5175 = vmatprep.mubr.f32.mxu0 0.0
    %v5176 = vand.u32 %v5079, 4294901760
    %v5177 = vsub.f32 %v5079, %v5176
    %v5178 = vand.u32 %v5177, 4294901760
    %v5179 = vsub.f32 %v5177, %v5178
    %v5180 = vand.u32 %v5179, 4294901760
    %5181 = vmatmul.mubr.f32.gmra.mxu0 %v5180
    %v5182 = vpop.f32.mrf.mxu0
    %v5183 = vadd.f32 0.0, %v5182
    %v5184 = vpop.f32.mrf.mxu0
    %5185 = vmatprep.mubr.f32.mxu0 0.0
    %v5186 = vand.u32 %v5081, 4294901760
    %v5187 = vsub.f32 %v5081, %v5186
    %v5188 = vand.u32 %v5187, 4294901760
    %v5189 = vsub.f32 %v5187, %v5188
    %v5190 = vand.u32 %v5189, 4294901760
    %5191 = vmatmul.mubr.f32.gmra.mxu0 %v5190
    %v5192 = vpop.f32.mrf.mxu0
    %v5193 = vadd.f32 0.0, %v5192
    %v5194 = vpop.f32.mrf.mxu0
    %5195 = vdwg.mxu0
    %5196 = vmatprep.subr.mxu0 0.0
    %5197 = vmatpush1.msra.mxu0 0.0
    %5198 = vmatprep.subr.mxu0 0.0
    %5199 = vmatpush1.msra.mxu0 0.0
    %5200 = vmatprep.subr.mxu0 0.0
    %5201 = vmatpush1.msra.mxu0 0.0
    %5202 = vmatprep.subr.mxu0 0.0
    %5203 = vmatpush1.msra.mxu0 0.0
    %5204 = vmatprep.subr.mxu0 0.0
    %5205 = vmatpush1.msra.mxu0 0.0
    %5206 = vmatprep.subr.mxu0 0.0
    %5207 = vmatpush1.msra.mxu0 0.0
    %5208 = vmatprep.subr.mxu0 0.0
    %5209 = vmatpush1.msra.mxu0 0.0
    %5210 = vmatprep.subr.mxu0 0.0
    %5211 = vmatpush1.msra.mxu0 0.0
    %5212 = vmatprep.subr.mxu0 0.0
    %v5213 = vand.u32 %v5073, 4294901760
    %v5214 = vsub.f32 %v5073, %v5213
    %v5215 = vand.u32 %v5214, 4294901760
    %v5216 = vsub.f32 %v5214, %v5215
    %v5217 = vand.u32 %v5216, 4294901760
    %5218 = vmatpush1.msra.mxu0 %v5217
    %5219 = vmatprep.subr.mxu0 0.0
    %v5220 = vand.u32 %v5072, 4294901760
    %v5221 = vsub.f32 %v5072, %v5220
    %v5222 = vand.u32 %v5221, 4294901760
    %v5223 = vsub.f32 %v5221, %v5222
    %v5224 = vand.u32 %v5223, 4294901760
    %5225 = vmatpush1.msra.mxu0 %v5224
    %5226 = vmatprep.subr.mxu0 0.0
    %v5227 = vand.u32 %v5071, 4294901760
    %v5228 = vsub.f32 %v5071, %v5227
    %v5229 = vand.u32 %v5228, 4294901760
    %v5230 = vsub.f32 %v5228, %v5229
    %v5231 = vand.u32 %v5230, 4294901760
    %5232 = vmatpush1.msra.mxu0 %v5231
    %5233 = vmatprep.subr.mxu0 0.0
    %v5234 = vand.u32 %v5070, 4294901760
    %v5235 = vsub.f32 %v5070, %v5234
    %v5236 = vand.u32 %v5235, 4294901760
    %v5237 = vsub.f32 %v5235, %v5236
    %v5238 = vand.u32 %v5237, 4294901760
    %5239 = vmatpush1.msra.mxu0 %v5238
    %5240 = vmatprep.subr.mxu0 0.0
    %v5241 = vand.u32 %v5069, 4294901760
    %v5242 = vsub.f32 %v5069, %v5241
    %v5243 = vand.u32 %v5242, 4294901760
    %v5244 = vsub.f32 %v5242, %v5243
    %v5245 = vand.u32 %v5244, 4294901760
    %5246 = vmatpush1.msra.mxu0 %v5245
    %5247 = vmatprep.subr.mxu0 0.0
    %v5248 = vand.u32 %v5068, 4294901760
    %v5249 = vsub.f32 %v5068, %v5248
    %v5250 = vand.u32 %v5249, 4294901760
    %v5251 = vsub.f32 %v5249, %v5250
    %v5252 = vand.u32 %v5251, 4294901760
    %5253 = vmatpush1.msra.mxu0 %v5252
    %5254 = vmatprep.subr.mxu0 0.0
    %v5255 = vand.u32 %v5067, 4294901760
    %v5256 = vsub.f32 %v5067, %v5255
    %v5257 = vand.u32 %v5256, 4294901760
    %v5258 = vsub.f32 %v5256, %v5257
    %v5259 = vand.u32 %v5258, 4294901760
    %5260 = vmatpush1.msra.mxu0 %v5259
    %5261 = vmatprep.subr.mxu0 0.0
    %v5262 = vand.u32 %v5066, 4294901760
    %v5263 = vsub.f32 %v5066, %v5262
    %v5264 = vand.u32 %v5263, 4294901760
    %v5265 = vsub.f32 %v5263, %v5264
    %v5266 = vand.u32 %v5265, 4294901760
    %5267 = vmatpush1.msra.mxu0 %v5266
    %5268 = vmatprep.subr.mxu0 0.0
    %5269 = vmatpush2.msra.mxu0 0.0
    %5270 = vmatprep.subr.mxu0 0.0
    %5271 = vmatpush2.msra.mxu0 0.0
    %5272 = vmatprep.subr.mxu0 0.0
    %5273 = vmatpush2.msra.mxu0 0.0
    %5274 = vmatprep.subr.mxu0 0.0
    %5275 = vmatpush2.msra.mxu0 0.0
    %5276 = vmatprep.subr.mxu0 0.0
    %5277 = vmatpush2.msra.mxu0 0.0
    %5278 = vmatprep.subr.mxu0 0.0
    %5279 = vmatpush2.msra.mxu0 0.0
    %5280 = vmatprep.subr.mxu0 0.0
    %5281 = vmatpush2.msra.mxu0 0.0
    %5282 = vmatprep.subr.mxu0 0.0
    %5283 = vmatpush2.msra.mxu0 0.0
    %5284 = vmatprep.subr.mxu0 0.0
    %5285 = vmatpush2.msra.mxu0 0.0
    %5286 = vmatprep.subr.mxu0 0.0
    %5287 = vmatpush2.msra.mxu0 0.0
    %5288 = vmatprep.subr.mxu0 0.0
    %5289 = vmatpush2.msra.mxu0 0.0
    %5290 = vmatprep.subr.mxu0 0.0
    %5291 = vmatpush2.msra.mxu0 0.0
    %5292 = vmatprep.subr.mxu0 0.0
    %5293 = vmatpush2.msra.mxu0 0.0
    %5294 = vmatprep.subr.mxu0 0.0
    %5295 = vmatpush2.msra.mxu0 0.0
    %5296 = vmatprep.subr.mxu0 0.0
    %5297 = vmatpush2.msra.mxu0 0.0
    %5298 = vmatprep.subr.mxu0 0.0
    %5299 = vmatpush2.msra.mxu0 0.0
    %5300 = vmatprep.mubr.f32.mxu0 0.0
    %v5301 = vand.u32 %v5075, 4294901760
    %5302 = vmatmul.mubr.f32.gmra.mxu0 %v5301
    %v5303 = vpop.f32.mrf.mxu0
    %v5304 = vadd.f32 %v5163, %v5303
    %v5305 = vpop.f32.mrf.mxu0
    %5306 = vmatprep.mubr.f32.mxu0 0.0
    %v5307 = vand.u32 %v5077, 4294901760
    %5308 = vmatmul.mubr.f32.gmra.mxu0 %v5307
    %v5309 = vpop.f32.mrf.mxu0
    %v5310 = vadd.f32 %v5173, %v5309
    %v5311 = vpop.f32.mrf.mxu0
    %5312 = vmatprep.mubr.f32.mxu0 0.0
    %v5313 = vand.u32 %v5079, 4294901760
    %5314 = vmatmul.mubr.f32.gmra.mxu0 %v5313
    %v5315 = vpop.f32.mrf.mxu0
    %v5316 = vadd.f32 %v5183, %v5315
    %v5317 = vpop.f32.mrf.mxu0
    %5318 = vmatprep.mubr.f32.mxu0 0.0
    %v5319 = vand.u32 %v5081, 4294901760
    %5320 = vmatmul.mubr.f32.gmra.mxu0 %v5319
    %v5321 = vpop.f32.mrf.mxu0
    %v5322 = vadd.f32 %v5193, %v5321
    %v5323 = vpop.f32.mrf.mxu0
    %5324 = vdwg.mxu0
    %5325 = vmatprep.subr.mxu0 0.0
    %5326 = vmatpush1.msra.mxu0 0.0
    %5327 = vmatprep.subr.mxu0 0.0
    %5328 = vmatpush1.msra.mxu0 0.0
    %5329 = vmatprep.subr.mxu0 0.0
    %5330 = vmatpush1.msra.mxu0 0.0
    %5331 = vmatprep.subr.mxu0 0.0
    %5332 = vmatpush1.msra.mxu0 0.0
    %5333 = vmatprep.subr.mxu0 0.0
    %5334 = vmatpush1.msra.mxu0 0.0
    %5335 = vmatprep.subr.mxu0 0.0
    %5336 = vmatpush1.msra.mxu0 0.0
    %5337 = vmatprep.subr.mxu0 0.0
    %5338 = vmatpush1.msra.mxu0 0.0
    %5339 = vmatprep.subr.mxu0 0.0
    %5340 = vmatpush1.msra.mxu0 0.0
    %5341 = vmatprep.subr.mxu0 0.0
    %v5342 = vand.u32 %v5073, 4294901760
    %v5343 = vsub.f32 %v5073, %v5342
    %5344 = vmatpush1.msra.mxu0 %v5343
    %5345 = vmatprep.subr.mxu0 0.0
    %v5346 = vand.u32 %v5072, 4294901760
    %v5347 = vsub.f32 %v5072, %v5346
    %5348 = vmatpush1.msra.mxu0 %v5347
    %5349 = vmatprep.subr.mxu0 0.0
    %v5350 = vand.u32 %v5071, 4294901760
    %v5351 = vsub.f32 %v5071, %v5350
    %5352 = vmatpush1.msra.mxu0 %v5351
    %5353 = vmatprep.subr.mxu0 0.0
    %v5354 = vand.u32 %v5070, 4294901760
    %v5355 = vsub.f32 %v5070, %v5354
    %5356 = vmatpush1.msra.mxu0 %v5355
    %5357 = vmatprep.subr.mxu0 0.0
    %v5358 = vand.u32 %v5069, 4294901760
    %v5359 = vsub.f32 %v5069, %v5358
    %5360 = vmatpush1.msra.mxu0 %v5359
    %5361 = vmatprep.subr.mxu0 0.0
    %v5362 = vand.u32 %v5068, 4294901760
    %v5363 = vsub.f32 %v5068, %v5362
    %5364 = vmatpush1.msra.mxu0 %v5363
    %5365 = vmatprep.subr.mxu0 0.0
    %v5366 = vand.u32 %v5067, 4294901760
    %v5367 = vsub.f32 %v5067, %v5366
    %5368 = vmatpush1.msra.mxu0 %v5367
    %5369 = vmatprep.subr.mxu0 0.0
    %v5370 = vand.u32 %v5066, 4294901760
    %v5371 = vsub.f32 %v5066, %v5370
    %5372 = vmatpush1.msra.mxu0 %v5371
    %5373 = vmatprep.subr.mxu0 0.0
    %5374 = vmatpush2.msra.mxu0 0.0
    %5375 = vmatprep.subr.mxu0 0.0
    %5376 = vmatpush2.msra.mxu0 0.0
    %5377 = vmatprep.subr.mxu0 0.0
    %5378 = vmatpush2.msra.mxu0 0.0
    %5379 = vmatprep.subr.mxu0 0.0
    %5380 = vmatpush2.msra.mxu0 0.0
    %5381 = vmatprep.subr.mxu0 0.0
    %5382 = vmatpush2.msra.mxu0 0.0
    %5383 = vmatprep.subr.mxu0 0.0
    %5384 = vmatpush2.msra.mxu0 0.0
    %5385 = vmatprep.subr.mxu0 0.0
    %5386 = vmatpush2.msra.mxu0 0.0
    %5387 = vmatprep.subr.mxu0 0.0
    %5388 = vmatpush2.msra.mxu0 0.0
    %5389 = vmatprep.subr.mxu0 0.0
    %5390 = vmatpush2.msra.mxu0 0.0
    %5391 = vmatprep.subr.mxu0 0.0
    %5392 = vmatpush2.msra.mxu0 0.0
    %5393 = vmatprep.subr.mxu0 0.0
    %5394 = vmatpush2.msra.mxu0 0.0
    %5395 = vmatprep.subr.mxu0 0.0
    %5396 = vmatpush2.msra.mxu0 0.0
    %5397 = vmatprep.subr.mxu0 0.0
    %5398 = vmatpush2.msra.mxu0 0.0
    %5399 = vmatprep.subr.mxu0 0.0
    %5400 = vmatpush2.msra.mxu0 0.0
    %5401 = vmatprep.subr.mxu0 0.0
    %5402 = vmatpush2.msra.mxu0 0.0
    %5403 = vmatprep.subr.mxu0 0.0
    %5404 = vmatpush2.msra.mxu0 0.0
    %5405 = vmatprep.mubr.f32.mxu0 0.0
    %v5406 = vand.u32 %v5075, 4294901760
    %v5407 = vsub.f32 %v5075, %v5406
    %5408 = vmatmul.mubr.f32.gmra.mxu0 %v5407
    %v5409 = vpop.f32.mrf.mxu0
    %v5410 = vadd.f32 %v5304, %v5409
    %v5411 = vpop.f32.mrf.mxu0
    %5412 = vmatprep.mubr.f32.mxu0 0.0
    %v5413 = vand.u32 %v5077, 4294901760
    %v5414 = vsub.f32 %v5077, %v5413
    %5415 = vmatmul.mubr.f32.gmra.mxu0 %v5414
    %v5416 = vpop.f32.mrf.mxu0
    %v5417 = vadd.f32 %v5310, %v5416
    %v5418 = vpop.f32.mrf.mxu0
    %5419 = vmatprep.mubr.f32.mxu0 0.0
    %v5420 = vand.u32 %v5079, 4294901760
    %v5421 = vsub.f32 %v5079, %v5420
    %5422 = vmatmul.mubr.f32.gmra.mxu0 %v5421
    %v5423 = vpop.f32.mrf.mxu0
    %v5424 = vadd.f32 %v5316, %v5423
    %v5425 = vpop.f32.mrf.mxu0
    %5426 = vmatprep.mubr.f32.mxu0 0.0
    %v5427 = vand.u32 %v5081, 4294901760
    %v5428 = vsub.f32 %v5081, %v5427
    %5429 = vmatmul.mubr.f32.gmra.mxu0 %v5428
    %v5430 = vpop.f32.mrf.mxu0
    %v5431 = vadd.f32 %v5322, %v5430
    %v5432 = vpop.f32.mrf.mxu0
    %5433 = vdwg.mxu0
    %5434 = vmatprep.subr.mxu0 0.0
    %5435 = vmatpush1.msra.mxu0 0.0
    %5436 = vmatprep.subr.mxu0 0.0
    %5437 = vmatpush1.msra.mxu0 0.0
    %5438 = vmatprep.subr.mxu0 0.0
    %5439 = vmatpush1.msra.mxu0 0.0
    %5440 = vmatprep.subr.mxu0 0.0
    %5441 = vmatpush1.msra.mxu0 0.0
    %5442 = vmatprep.subr.mxu0 0.0
    %5443 = vmatpush1.msra.mxu0 0.0
    %5444 = vmatprep.subr.mxu0 0.0
    %5445 = vmatpush1.msra.mxu0 0.0
    %5446 = vmatprep.subr.mxu0 0.0
    %5447 = vmatpush1.msra.mxu0 0.0
    %5448 = vmatprep.subr.mxu0 0.0
    %5449 = vmatpush1.msra.mxu0 0.0
    %5450 = vmatprep.subr.mxu0 0.0
    %v5451 = vand.u32 %v5073, 4294901760
    %5452 = vmatpush1.msra.mxu0 %v5451
    %5453 = vmatprep.subr.mxu0 0.0
    %v5454 = vand.u32 %v5072, 4294901760
    %5455 = vmatpush1.msra.mxu0 %v5454
    %5456 = vmatprep.subr.mxu0 0.0
    %v5457 = vand.u32 %v5071, 4294901760
    %5458 = vmatpush1.msra.mxu0 %v5457
    %5459 = vmatprep.subr.mxu0 0.0
    %v5460 = vand.u32 %v5070, 4294901760
    %5461 = vmatpush1.msra.mxu0 %v5460
    %5462 = vmatprep.subr.mxu0 0.0
    %v5463 = vand.u32 %v5069, 4294901760
    %5464 = vmatpush1.msra.mxu0 %v5463
    %5465 = vmatprep.subr.mxu0 0.0
    %v5466 = vand.u32 %v5068, 4294901760
    %5467 = vmatpush1.msra.mxu0 %v5466
    %5468 = vmatprep.subr.mxu0 0.0
    %v5469 = vand.u32 %v5067, 4294901760
    %5470 = vmatpush1.msra.mxu0 %v5469
    %5471 = vmatprep.subr.mxu0 0.0
    %v5472 = vand.u32 %v5066, 4294901760
    %5473 = vmatpush1.msra.mxu0 %v5472
    %5474 = vmatprep.subr.mxu0 0.0
    %5475 = vmatpush2.msra.mxu0 0.0
    %5476 = vmatprep.subr.mxu0 0.0
    %5477 = vmatpush2.msra.mxu0 0.0
    %5478 = vmatprep.subr.mxu0 0.0
    %5479 = vmatpush2.msra.mxu0 0.0
    %5480 = vmatprep.subr.mxu0 0.0
    %5481 = vmatpush2.msra.mxu0 0.0
    %5482 = vmatprep.subr.mxu0 0.0
    %5483 = vmatpush2.msra.mxu0 0.0
    %5484 = vmatprep.subr.mxu0 0.0
    %5485 = vmatpush2.msra.mxu0 0.0
    %5486 = vmatprep.subr.mxu0 0.0
    %5487 = vmatpush2.msra.mxu0 0.0
    %5488 = vmatprep.subr.mxu0 0.0
    %5489 = vmatpush2.msra.mxu0 0.0
    %5490 = vmatprep.subr.mxu0 0.0
    %5491 = vmatpush2.msra.mxu0 0.0
    %5492 = vmatprep.subr.mxu0 0.0
    %5493 = vmatpush2.msra.mxu0 0.0
    %5494 = vmatprep.subr.mxu0 0.0
    %5495 = vmatpush2.msra.mxu0 0.0
    %5496 = vmatprep.subr.mxu0 0.0
    %5497 = vmatpush2.msra.mxu0 0.0
    %5498 = vmatprep.subr.mxu0 0.0
    %5499 = vmatpush2.msra.mxu0 0.0
    %5500 = vmatprep.subr.mxu0 0.0
    %5501 = vmatpush2.msra.mxu0 0.0
    %5502 = vmatprep.subr.mxu0 0.0
    %5503 = vmatpush2.msra.mxu0 0.0
    %5504 = vmatprep.subr.mxu0 0.0
    %5505 = vmatpush2.msra.mxu0 0.0
    %5506 = vmatprep.mubr.f32.mxu0 0.0
    %v5507 = vand.u32 %v5075, 4294901760
    %v5508 = vsub.f32 %v5075, %v5507
    %v5509 = vand.u32 %v5508, 4294901760
    %5510 = vmatmul.mubr.f32.gmra.mxu0 %v5509
    %v5511 = vpop.f32.mrf.mxu0
    %v5512 = vadd.f32 %v5410, %v5511
    %v5513 = vpop.f32.mrf.mxu0
    %5514 = vmatprep.mubr.f32.mxu0 0.0
    %v5515 = vand.u32 %v5077, 4294901760
    %v5516 = vsub.f32 %v5077, %v5515
    %v5517 = vand.u32 %v5516, 4294901760
    %5518 = vmatmul.mubr.f32.gmra.mxu0 %v5517
    %v5519 = vpop.f32.mrf.mxu0
    %v5520 = vadd.f32 %v5417, %v5519
    %v5521 = vpop.f32.mrf.mxu0
    %5522 = vmatprep.mubr.f32.mxu0 0.0
    %v5523 = vand.u32 %v5079, 4294901760
    %v5524 = vsub.f32 %v5079, %v5523
    %v5525 = vand.u32 %v5524, 4294901760
    %5526 = vmatmul.mubr.f32.gmra.mxu0 %v5525
    %v5527 = vpop.f32.mrf.mxu0
    %v5528 = vadd.f32 %v5424, %v5527
    %v5529 = vpop.f32.mrf.mxu0
    %5530 = vmatprep.mubr.f32.mxu0 0.0
    %v5531 = vand.u32 %v5081, 4294901760
    %v5532 = vsub.f32 %v5081, %v5531
    %v5533 = vand.u32 %v5532, 4294901760
    %5534 = vmatmul.mubr.f32.gmra.mxu0 %v5533
    %v5535 = vpop.f32.mrf.mxu0
    %v5536 = vadd.f32 %v5431, %v5535
    %v5537 = vpop.f32.mrf.mxu0
    %5538 = vdwg.mxu0
    %5539 = vmatprep.subr.mxu0 0.0
    %5540 = vmatpush1.msra.mxu0 0.0
    %5541 = vmatprep.subr.mxu0 0.0
    %5542 = vmatpush1.msra.mxu0 0.0
    %5543 = vmatprep.subr.mxu0 0.0
    %5544 = vmatpush1.msra.mxu0 0.0
    %5545 = vmatprep.subr.mxu0 0.0
    %5546 = vmatpush1.msra.mxu0 0.0
    %5547 = vmatprep.subr.mxu0 0.0
    %5548 = vmatpush1.msra.mxu0 0.0
    %5549 = vmatprep.subr.mxu0 0.0
    %5550 = vmatpush1.msra.mxu0 0.0
    %5551 = vmatprep.subr.mxu0 0.0
    %5552 = vmatpush1.msra.mxu0 0.0
    %5553 = vmatprep.subr.mxu0 0.0
    %5554 = vmatpush1.msra.mxu0 0.0
    %5555 = vmatprep.subr.mxu0 0.0
    %v5556 = vand.u32 %v5073, 4294901760
    %v5557 = vsub.f32 %v5073, %v5556
    %v5558 = vand.u32 %v5557, 4294901760
    %5559 = vmatpush1.msra.mxu0 %v5558
    %5560 = vmatprep.subr.mxu0 0.0
    %v5561 = vand.u32 %v5072, 4294901760
    %v5562 = vsub.f32 %v5072, %v5561
    %v5563 = vand.u32 %v5562, 4294901760
    %5564 = vmatpush1.msra.mxu0 %v5563
    %5565 = vmatprep.subr.mxu0 0.0
    %v5566 = vand.u32 %v5071, 4294901760
    %v5567 = vsub.f32 %v5071, %v5566
    %v5568 = vand.u32 %v5567, 4294901760
    %5569 = vmatpush1.msra.mxu0 %v5568
    %5570 = vmatprep.subr.mxu0 0.0
    %v5571 = vand.u32 %v5070, 4294901760
    %v5572 = vsub.f32 %v5070, %v5571
    %v5573 = vand.u32 %v5572, 4294901760
    %5574 = vmatpush1.msra.mxu0 %v5573
    %5575 = vmatprep.subr.mxu0 0.0
    %v5576 = vand.u32 %v5069, 4294901760
    %v5577 = vsub.f32 %v5069, %v5576
    %v5578 = vand.u32 %v5577, 4294901760
    %5579 = vmatpush1.msra.mxu0 %v5578
    %5580 = vmatprep.subr.mxu0 0.0
    %v5581 = vand.u32 %v5068, 4294901760
    %v5582 = vsub.f32 %v5068, %v5581
    %v5583 = vand.u32 %v5582, 4294901760
    %5584 = vmatpush1.msra.mxu0 %v5583
    %5585 = vmatprep.subr.mxu0 0.0
    %v5586 = vand.u32 %v5067, 4294901760
    %v5587 = vsub.f32 %v5067, %v5586
    %v5588 = vand.u32 %v5587, 4294901760
    %5589 = vmatpush1.msra.mxu0 %v5588
    %5590 = vmatprep.subr.mxu0 0.0
    %v5591 = vand.u32 %v5066, 4294901760
    %v5592 = vsub.f32 %v5066, %v5591
    %v5593 = vand.u32 %v5592, 4294901760
    %5594 = vmatpush1.msra.mxu0 %v5593
    %5595 = vmatprep.subr.mxu0 0.0
    %5596 = vmatpush2.msra.mxu0 0.0
    %5597 = vmatprep.subr.mxu0 0.0
    %5598 = vmatpush2.msra.mxu0 0.0
    %5599 = vmatprep.subr.mxu0 0.0
    %5600 = vmatpush2.msra.mxu0 0.0
    %5601 = vmatprep.subr.mxu0 0.0
    %5602 = vmatpush2.msra.mxu0 0.0
    %5603 = vmatprep.subr.mxu0 0.0
    %5604 = vmatpush2.msra.mxu0 0.0
    %5605 = vmatprep.subr.mxu0 0.0
    %5606 = vmatpush2.msra.mxu0 0.0
    %5607 = vmatprep.subr.mxu0 0.0
    %5608 = vmatpush2.msra.mxu0 0.0
    %5609 = vmatprep.subr.mxu0 0.0
    %5610 = vmatpush2.msra.mxu0 0.0
    %5611 = vmatprep.subr.mxu0 0.0
    %5612 = vmatpush2.msra.mxu0 0.0
    %5613 = vmatprep.subr.mxu0 0.0
    %5614 = vmatpush2.msra.mxu0 0.0
    %5615 = vmatprep.subr.mxu0 0.0
    %5616 = vmatpush2.msra.mxu0 0.0
    %5617 = vmatprep.subr.mxu0 0.0
    %5618 = vmatpush2.msra.mxu0 0.0
    %5619 = vmatprep.subr.mxu0 0.0
    %5620 = vmatpush2.msra.mxu0 0.0
    %5621 = vmatprep.subr.mxu0 0.0
    %5622 = vmatpush2.msra.mxu0 0.0
    %5623 = vmatprep.subr.mxu0 0.0
    %5624 = vmatpush2.msra.mxu0 0.0
    %5625 = vmatprep.subr.mxu0 0.0
    %5626 = vmatpush2.msra.mxu0 0.0
    %5627 = vmatprep.mubr.f32.mxu0 0.0
    %v5628 = vand.u32 %v5075, 4294901760
    %5629 = vmatmul.mubr.f32.gmra.mxu0 %v5628
    %v5630 = vpop.f32.mrf.mxu0
    %v5631 = vadd.f32 %v5512, %v5630
    %v5632 = vpop.f32.mrf.mxu0
    %5633 = vmatprep.mubr.f32.mxu0 0.0
    %v5634 = vand.u32 %v5077, 4294901760
    %5635 = vmatmul.mubr.f32.gmra.mxu0 %v5634
    %v5636 = vpop.f32.mrf.mxu0
    %v5637 = vadd.f32 %v5520, %v5636
    %v5638 = vpop.f32.mrf.mxu0
    %5639 = vmatprep.mubr.f32.mxu0 0.0
    %v5640 = vand.u32 %v5079, 4294901760
    %5641 = vmatmul.mubr.f32.gmra.mxu0 %v5640
    %v5642 = vpop.f32.mrf.mxu0
    %v5643 = vadd.f32 %v5528, %v5642
    %v5644 = vpop.f32.mrf.mxu0
    %5645 = vmatprep.mubr.f32.mxu0 0.0
    %v5646 = vand.u32 %v5081, 4294901760
    %5647 = vmatmul.mubr.f32.gmra.mxu0 %v5646
    %v5648 = vpop.f32.mrf.mxu0
    %v5649 = vadd.f32 %v5536, %v5648
    %v5650 = vpop.f32.mrf.mxu0
    %5651 = vdwg.mxu0
    %5652 = vmatprep.subr.mxu0 0.0
    %5653 = vmatpush1.msra.mxu0 0.0
    %5654 = vmatprep.subr.mxu0 0.0
    %5655 = vmatpush1.msra.mxu0 0.0
    %5656 = vmatprep.subr.mxu0 0.0
    %5657 = vmatpush1.msra.mxu0 0.0
    %5658 = vmatprep.subr.mxu0 0.0
    %5659 = vmatpush1.msra.mxu0 0.0
    %5660 = vmatprep.subr.mxu0 0.0
    %5661 = vmatpush1.msra.mxu0 0.0
    %5662 = vmatprep.subr.mxu0 0.0
    %5663 = vmatpush1.msra.mxu0 0.0
    %5664 = vmatprep.subr.mxu0 0.0
    %5665 = vmatpush1.msra.mxu0 0.0
    %5666 = vmatprep.subr.mxu0 0.0
    %5667 = vmatpush1.msra.mxu0 0.0
    %5668 = vmatprep.subr.mxu0 0.0
    %v5669 = vand.u32 %v5073, 4294901760
    %5670 = vmatpush1.msra.mxu0 %v5669
    %5671 = vmatprep.subr.mxu0 0.0
    %v5672 = vand.u32 %v5072, 4294901760
    %5673 = vmatpush1.msra.mxu0 %v5672
    %5674 = vmatprep.subr.mxu0 0.0
    %v5675 = vand.u32 %v5071, 4294901760
    %5676 = vmatpush1.msra.mxu0 %v5675
    %5677 = vmatprep.subr.mxu0 0.0
    %v5678 = vand.u32 %v5070, 4294901760
    %5679 = vmatpush1.msra.mxu0 %v5678
    %5680 = vmatprep.subr.mxu0 0.0
    %v5681 = vand.u32 %v5069, 4294901760
    %5682 = vmatpush1.msra.mxu0 %v5681
    %5683 = vmatprep.subr.mxu0 0.0
    %v5684 = vand.u32 %v5068, 4294901760
    %5685 = vmatpush1.msra.mxu0 %v5684
    %5686 = vmatprep.subr.mxu0 0.0
    %v5687 = vand.u32 %v5067, 4294901760
    %5688 = vmatpush1.msra.mxu0 %v5687
    %5689 = vmatprep.subr.mxu0 0.0
    %v5690 = vand.u32 %v5066, 4294901760
    %5691 = vmatpush1.msra.mxu0 %v5690
    %5692 = vmatprep.subr.mxu0 0.0
    %5693 = vmatpush2.msra.mxu0 0.0
    %5694 = vmatprep.subr.mxu0 0.0
    %5695 = vmatpush2.msra.mxu0 0.0
    %5696 = vmatprep.subr.mxu0 0.0
    %5697 = vmatpush2.msra.mxu0 0.0
    %5698 = vmatprep.subr.mxu0 0.0
    %5699 = vmatpush2.msra.mxu0 0.0
    %5700 = vmatprep.subr.mxu0 0.0
    %5701 = vmatpush2.msra.mxu0 0.0
    %5702 = vmatprep.subr.mxu0 0.0
    %5703 = vmatpush2.msra.mxu0 0.0
    %5704 = vmatprep.subr.mxu0 0.0
    %5705 = vmatpush2.msra.mxu0 0.0
    %5706 = vmatprep.subr.mxu0 0.0
    %5707 = vmatpush2.msra.mxu0 0.0
    %5708 = vmatprep.subr.mxu0 0.0
    %5709 = vmatpush2.msra.mxu0 0.0
    %5710 = vmatprep.subr.mxu0 0.0
    %5711 = vmatpush2.msra.mxu0 0.0
    %5712 = vmatprep.subr.mxu0 0.0
    %5713 = vmatpush2.msra.mxu0 0.0
    %5714 = vmatprep.subr.mxu0 0.0
    %5715 = vmatpush2.msra.mxu0 0.0
    %5716 = vmatprep.subr.mxu0 0.0
    %5717 = vmatpush2.msra.mxu0 0.0
    %5718 = vmatprep.subr.mxu0 0.0
    %5719 = vmatpush2.msra.mxu0 0.0
    %5720 = vmatprep.subr.mxu0 0.0
    %5721 = vmatpush2.msra.mxu0 0.0
    %5722 = vmatprep.subr.mxu0 0.0
    %5723 = vmatpush2.msra.mxu0 0.0
    %5724 = vmatprep.mubr.f32.mxu0 0.0
    %v5725 = vand.u32 %v5075, 4294901760
    %5726 = vmatmul.mubr.f32.gmra.mxu0 %v5725
    %v5727 = vpop.f32.mrf.mxu0
    %v5728 = vadd.f32 %v5631, %v5727
    %v5729 = vpop.f32.mrf.mxu0
    %5730 = vmatprep.mubr.f32.mxu0 0.0
    %v5731 = vand.u32 %v5077, 4294901760
    %5732 = vmatmul.mubr.f32.gmra.mxu0 %v5731
    %v5733 = vpop.f32.mrf.mxu0
    %v5734 = vadd.f32 %v5637, %v5733
    %v5735 = vpop.f32.mrf.mxu0
    %5736 = vmatprep.mubr.f32.mxu0 0.0
    %v5737 = vand.u32 %v5079, 4294901760
    %5738 = vmatmul.mubr.f32.gmra.mxu0 %v5737
    %v5739 = vpop.f32.mrf.mxu0
    %v5740 = vadd.f32 %v5643, %v5739
    %v5741 = vpop.f32.mrf.mxu0
    %5742 = vmatprep.mubr.f32.mxu0 0.0
    %v5743 = vand.u32 %v5081, 4294901760
    %5744 = vmatmul.mubr.f32.gmra.mxu0 %v5743
    %v5745 = vpop.f32.mrf.mxu0
    %v5746 = vadd.f32 %v5649, %v5745
    %v5747 = vpop.f32.mrf.mxu0
    %5748 = vdwg.mxu0
    %v5749 = vsel %vm5074, %v5039, 0
    %v5751 = vsel %vm5074, %v5031, 0
    %v5753 = vsel %vm5074, %v5040, 0
    %v5755 = vsel %vm5074, %v5034, 0
    %5757 = vmatprep.subr.mxu0 0.0
    %5758 = vmatpush1.msra.mxu0 0.0
    %5759 = vmatprep.subr.mxu0 0.0
    %5760 = vmatpush1.msra.mxu0 0.0
    %5761 = vmatprep.subr.mxu0 0.0
    %5762 = vmatpush1.msra.mxu0 0.0
    %5763 = vmatprep.subr.mxu0 0.0
    %5764 = vmatpush1.msra.mxu0 0.0
    %5765 = vmatprep.subr.mxu0 0.0
    %5766 = vmatpush1.msra.mxu0 0.0
    %5767 = vmatprep.subr.mxu0 0.0
    %5768 = vmatpush1.msra.mxu0 0.0
    %5769 = vmatprep.subr.mxu0 0.0
    %5770 = vmatpush1.msra.mxu0 0.0
    %5771 = vmatprep.subr.mxu0 0.0
    %5772 = vmatpush1.msra.mxu0 0.0
    %5773 = vmatprep.subr.mxu0 0.0
    %v5774 = vand.u32 %v5050, 4294901760
    %5775 = vmatpush1.msra.mxu0 %v5774
    %5776 = vmatprep.subr.mxu0 0.0
    %v5777 = vand.u32 %v5049, 4294901760
    %5778 = vmatpush1.msra.mxu0 %v5777
    %5779 = vmatprep.subr.mxu0 0.0
    %v5780 = vand.u32 %v5048, 4294901760
    %5781 = vmatpush1.msra.mxu0 %v5780
    %5782 = vmatprep.subr.mxu0 0.0
    %v5783 = vand.u32 %v5047, 4294901760
    %5784 = vmatpush1.msra.mxu0 %v5783
    %5785 = vmatprep.subr.mxu0 0.0
    %v5786 = vand.u32 %v5046, 4294901760
    %5787 = vmatpush1.msra.mxu0 %v5786
    %5788 = vmatprep.subr.mxu0 0.0
    %v5789 = vand.u32 %v5045, 4294901760
    %5790 = vmatpush1.msra.mxu0 %v5789
    %5791 = vmatprep.subr.mxu0 0.0
    %v5792 = vand.u32 %v5044, 4294901760
    %5793 = vmatpush1.msra.mxu0 %v5792
    %5794 = vmatprep.subr.mxu0 0.0
    %v5795 = vand.u32 %v5043, 4294901760
    %5796 = vmatpush1.msra.mxu0 %v5795
    %5797 = vmatprep.subr.mxu0 0.0
    %5798 = vmatpush2.msra.mxu0 0.0
    %5799 = vmatprep.subr.mxu0 0.0
    %5800 = vmatpush2.msra.mxu0 0.0
    %5801 = vmatprep.subr.mxu0 0.0
    %5802 = vmatpush2.msra.mxu0 0.0
    %5803 = vmatprep.subr.mxu0 0.0
    %5804 = vmatpush2.msra.mxu0 0.0
    %5805 = vmatprep.subr.mxu0 0.0
    %5806 = vmatpush2.msra.mxu0 0.0
    %5807 = vmatprep.subr.mxu0 0.0
    %5808 = vmatpush2.msra.mxu0 0.0
    %5809 = vmatprep.subr.mxu0 0.0
    %5810 = vmatpush2.msra.mxu0 0.0
    %5811 = vmatprep.subr.mxu0 0.0
    %5812 = vmatpush2.msra.mxu0 0.0
    %5813 = vmatprep.subr.mxu0 0.0
    %5814 = vmatpush2.msra.mxu0 0.0
    %5815 = vmatprep.subr.mxu0 0.0
    %5816 = vmatpush2.msra.mxu0 0.0
    %5817 = vmatprep.subr.mxu0 0.0
    %5818 = vmatpush2.msra.mxu0 0.0
    %5819 = vmatprep.subr.mxu0 0.0
    %5820 = vmatpush2.msra.mxu0 0.0
    %5821 = vmatprep.subr.mxu0 0.0
    %5822 = vmatpush2.msra.mxu0 0.0
    %5823 = vmatprep.subr.mxu0 0.0
    %5824 = vmatpush2.msra.mxu0 0.0
    %5825 = vmatprep.subr.mxu0 0.0
    %5826 = vmatpush2.msra.mxu0 0.0
    %5827 = vmatprep.subr.mxu0 0.0
    %5828 = vmatpush2.msra.mxu0 0.0
    %5829 = vmatprep.mubr.f32.mxu0 0.0
    %v5830 = vand.u32 %v5749, 4294901760
    %v5831 = vsub.f32 %v5749, %v5830
    %v5832 = vand.u32 %v5831, 4294901760
    %v5833 = vsub.f32 %v5831, %v5832
    %v5834 = vand.u32 %v5833, 4294901760
    %5835 = vmatmul.mubr.f32.gmra.mxu0 %v5834
    %v5836 = vpop.f32.mrf.mxu0
    %v5837 = vadd.f32 %v5728, %v5836
    %v5838 = vpop.f32.mrf.mxu0
    %5839 = vmatprep.mubr.f32.mxu0 0.0
    %v5840 = vand.u32 %v5751, 4294901760
    %v5841 = vsub.f32 %v5751, %v5840
    %v5842 = vand.u32 %v5841, 4294901760
    %v5843 = vsub.f32 %v5841, %v5842
    %v5844 = vand.u32 %v5843, 4294901760
    %5845 = vmatmul.mubr.f32.gmra.mxu0 %v5844
    %v5846 = vpop.f32.mrf.mxu0
    %v5847 = vadd.f32 %v5734, %v5846
    %v5848 = vpop.f32.mrf.mxu0
    %5849 = vmatprep.mubr.f32.mxu0 0.0
    %v5850 = vand.u32 %v5753, 4294901760
    %v5851 = vsub.f32 %v5753, %v5850
    %v5852 = vand.u32 %v5851, 4294901760
    %v5853 = vsub.f32 %v5851, %v5852
    %v5854 = vand.u32 %v5853, 4294901760
    %5855 = vmatmul.mubr.f32.gmra.mxu0 %v5854
    %v5856 = vpop.f32.mrf.mxu0
    %v5857 = vadd.f32 %v5740, %v5856
    %v5858 = vpop.f32.mrf.mxu0
    %5859 = vmatprep.mubr.f32.mxu0 0.0
    %v5860 = vand.u32 %v5755, 4294901760
    %v5861 = vsub.f32 %v5755, %v5860
    %v5862 = vand.u32 %v5861, 4294901760
    %v5863 = vsub.f32 %v5861, %v5862
    %v5864 = vand.u32 %v5863, 4294901760
    %5865 = vmatmul.mubr.f32.gmra.mxu0 %v5864
    %v5866 = vpop.f32.mrf.mxu0
    %v5867 = vadd.f32 %v5746, %v5866
    %v5868 = vpop.f32.mrf.mxu0
    %5869 = vdwg.mxu0
    %5870 = vmatprep.subr.mxu0 0.0
    %5871 = vmatpush1.msra.mxu0 0.0
    %5872 = vmatprep.subr.mxu0 0.0
    %5873 = vmatpush1.msra.mxu0 0.0
    %5874 = vmatprep.subr.mxu0 0.0
    %5875 = vmatpush1.msra.mxu0 0.0
    %5876 = vmatprep.subr.mxu0 0.0
    %5877 = vmatpush1.msra.mxu0 0.0
    %5878 = vmatprep.subr.mxu0 0.0
    %5879 = vmatpush1.msra.mxu0 0.0
    %5880 = vmatprep.subr.mxu0 0.0
    %5881 = vmatpush1.msra.mxu0 0.0
    %5882 = vmatprep.subr.mxu0 0.0
    %5883 = vmatpush1.msra.mxu0 0.0
    %5884 = vmatprep.subr.mxu0 0.0
    %5885 = vmatpush1.msra.mxu0 0.0
    %5886 = vmatprep.subr.mxu0 0.0
    %v5887 = vand.u32 %v5050, 4294901760
    %v5888 = vsub.f32 %v5050, %v5887
    %v5889 = vand.u32 %v5888, 4294901760
    %v5890 = vsub.f32 %v5888, %v5889
    %v5891 = vand.u32 %v5890, 4294901760
    %5892 = vmatpush1.msra.mxu0 %v5891
    %5893 = vmatprep.subr.mxu0 0.0
    %v5894 = vand.u32 %v5049, 4294901760
    %v5895 = vsub.f32 %v5049, %v5894
    %v5896 = vand.u32 %v5895, 4294901760
    %v5897 = vsub.f32 %v5895, %v5896
    %v5898 = vand.u32 %v5897, 4294901760
    %5899 = vmatpush1.msra.mxu0 %v5898
    %5900 = vmatprep.subr.mxu0 0.0
    %v5901 = vand.u32 %v5048, 4294901760
    %v5902 = vsub.f32 %v5048, %v5901
    %v5903 = vand.u32 %v5902, 4294901760
    %v5904 = vsub.f32 %v5902, %v5903
    %v5905 = vand.u32 %v5904, 4294901760
    %5906 = vmatpush1.msra.mxu0 %v5905
    %5907 = vmatprep.subr.mxu0 0.0
    %v5908 = vand.u32 %v5047, 4294901760
    %v5909 = vsub.f32 %v5047, %v5908
    %v5910 = vand.u32 %v5909, 4294901760
    %v5911 = vsub.f32 %v5909, %v5910
    %v5912 = vand.u32 %v5911, 4294901760
    %5913 = vmatpush1.msra.mxu0 %v5912
    %5914 = vmatprep.subr.mxu0 0.0
    %v5915 = vand.u32 %v5046, 4294901760
    %v5916 = vsub.f32 %v5046, %v5915
    %v5917 = vand.u32 %v5916, 4294901760
    %v5918 = vsub.f32 %v5916, %v5917
    %v5919 = vand.u32 %v5918, 4294901760
    %5920 = vmatpush1.msra.mxu0 %v5919
    %5921 = vmatprep.subr.mxu0 0.0
    %v5922 = vand.u32 %v5045, 4294901760
    %v5923 = vsub.f32 %v5045, %v5922
    %v5924 = vand.u32 %v5923, 4294901760
    %v5925 = vsub.f32 %v5923, %v5924
    %v5926 = vand.u32 %v5925, 4294901760
    %5927 = vmatpush1.msra.mxu0 %v5926
    %5928 = vmatprep.subr.mxu0 0.0
    %v5929 = vand.u32 %v5044, 4294901760
    %v5930 = vsub.f32 %v5044, %v5929
    %v5931 = vand.u32 %v5930, 4294901760
    %v5932 = vsub.f32 %v5930, %v5931
    %v5933 = vand.u32 %v5932, 4294901760
    %5934 = vmatpush1.msra.mxu0 %v5933
    %5935 = vmatprep.subr.mxu0 0.0
    %v5936 = vand.u32 %v5043, 4294901760
    %v5937 = vsub.f32 %v5043, %v5936
    %v5938 = vand.u32 %v5937, 4294901760
    %v5939 = vsub.f32 %v5937, %v5938
    %v5940 = vand.u32 %v5939, 4294901760
    %5941 = vmatpush1.msra.mxu0 %v5940
    %5942 = vmatprep.subr.mxu0 0.0
    %5943 = vmatpush2.msra.mxu0 0.0
    %5944 = vmatprep.subr.mxu0 0.0
    %5945 = vmatpush2.msra.mxu0 0.0
    %5946 = vmatprep.subr.mxu0 0.0
    %5947 = vmatpush2.msra.mxu0 0.0
    %5948 = vmatprep.subr.mxu0 0.0
    %5949 = vmatpush2.msra.mxu0 0.0
    %5950 = vmatprep.subr.mxu0 0.0
    %5951 = vmatpush2.msra.mxu0 0.0
    %5952 = vmatprep.subr.mxu0 0.0
    %5953 = vmatpush2.msra.mxu0 0.0
    %5954 = vmatprep.subr.mxu0 0.0
    %5955 = vmatpush2.msra.mxu0 0.0
    %5956 = vmatprep.subr.mxu0 0.0
    %5957 = vmatpush2.msra.mxu0 0.0
    %5958 = vmatprep.subr.mxu0 0.0
    %5959 = vmatpush2.msra.mxu0 0.0
    %5960 = vmatprep.subr.mxu0 0.0
    %5961 = vmatpush2.msra.mxu0 0.0
    %5962 = vmatprep.subr.mxu0 0.0
    %5963 = vmatpush2.msra.mxu0 0.0
    %5964 = vmatprep.subr.mxu0 0.0
    %5965 = vmatpush2.msra.mxu0 0.0
    %5966 = vmatprep.subr.mxu0 0.0
    %5967 = vmatpush2.msra.mxu0 0.0
    %5968 = vmatprep.subr.mxu0 0.0
    %5969 = vmatpush2.msra.mxu0 0.0
    %5970 = vmatprep.subr.mxu0 0.0
    %5971 = vmatpush2.msra.mxu0 0.0
    %5972 = vmatprep.subr.mxu0 0.0
    %5973 = vmatpush2.msra.mxu0 0.0
    %5974 = vmatprep.mubr.f32.mxu0 0.0
    %v5975 = vand.u32 %v5749, 4294901760
    %5976 = vmatmul.mubr.f32.gmra.mxu0 %v5975
    %v5977 = vpop.f32.mrf.mxu0
    %v5978 = vadd.f32 %v5837, %v5977
    %v5979 = vpop.f32.mrf.mxu0
    %5980 = vmatprep.mubr.f32.mxu0 0.0
    %v5981 = vand.u32 %v5751, 4294901760
    %5982 = vmatmul.mubr.f32.gmra.mxu0 %v5981
    %v5983 = vpop.f32.mrf.mxu0
    %v5984 = vadd.f32 %v5847, %v5983
    %v5985 = vpop.f32.mrf.mxu0
    %5986 = vmatprep.mubr.f32.mxu0 0.0
    %v5987 = vand.u32 %v5753, 4294901760
    %5988 = vmatmul.mubr.f32.gmra.mxu0 %v5987
    %v5989 = vpop.f32.mrf.mxu0
    %v5990 = vadd.f32 %v5857, %v5989
    %v5991 = vpop.f32.mrf.mxu0
    %5992 = vmatprep.mubr.f32.mxu0 0.0
    %v5993 = vand.u32 %v5755, 4294901760
    %5994 = vmatmul.mubr.f32.gmra.mxu0 %v5993
    %v5995 = vpop.f32.mrf.mxu0
    %v5996 = vadd.f32 %v5867, %v5995
    %v5997 = vpop.f32.mrf.mxu0
    %5998 = vdwg.mxu0
    %5999 = vmatprep.subr.mxu0 0.0
    %6000 = vmatpush1.msra.mxu0 0.0
    %6001 = vmatprep.subr.mxu0 0.0
    %6002 = vmatpush1.msra.mxu0 0.0
    %6003 = vmatprep.subr.mxu0 0.0
    %6004 = vmatpush1.msra.mxu0 0.0
    %6005 = vmatprep.subr.mxu0 0.0
    %6006 = vmatpush1.msra.mxu0 0.0
    %6007 = vmatprep.subr.mxu0 0.0
    %6008 = vmatpush1.msra.mxu0 0.0
    %6009 = vmatprep.subr.mxu0 0.0
    %6010 = vmatpush1.msra.mxu0 0.0
    %6011 = vmatprep.subr.mxu0 0.0
    %6012 = vmatpush1.msra.mxu0 0.0
    %6013 = vmatprep.subr.mxu0 0.0
    %6014 = vmatpush1.msra.mxu0 0.0
    %6015 = vmatprep.subr.mxu0 0.0
    %v6016 = vand.u32 %v5050, 4294901760
    %v6017 = vsub.f32 %v5050, %v6016
    %6018 = vmatpush1.msra.mxu0 %v6017
    %6019 = vmatprep.subr.mxu0 0.0
    %v6020 = vand.u32 %v5049, 4294901760
    %v6021 = vsub.f32 %v5049, %v6020
    %6022 = vmatpush1.msra.mxu0 %v6021
    %6023 = vmatprep.subr.mxu0 0.0
    %v6024 = vand.u32 %v5048, 4294901760
    %v6025 = vsub.f32 %v5048, %v6024
    %6026 = vmatpush1.msra.mxu0 %v6025
    %6027 = vmatprep.subr.mxu0 0.0
    %v6028 = vand.u32 %v5047, 4294901760
    %v6029 = vsub.f32 %v5047, %v6028
    %6030 = vmatpush1.msra.mxu0 %v6029
    %6031 = vmatprep.subr.mxu0 0.0
    %v6032 = vand.u32 %v5046, 4294901760
    %v6033 = vsub.f32 %v5046, %v6032
    %6034 = vmatpush1.msra.mxu0 %v6033
    %6035 = vmatprep.subr.mxu0 0.0
    %v6036 = vand.u32 %v5045, 4294901760
    %v6037 = vsub.f32 %v5045, %v6036
    %6038 = vmatpush1.msra.mxu0 %v6037
    %6039 = vmatprep.subr.mxu0 0.0
    %v6040 = vand.u32 %v5044, 4294901760
    %v6041 = vsub.f32 %v5044, %v6040
    %6042 = vmatpush1.msra.mxu0 %v6041
    %6043 = vmatprep.subr.mxu0 0.0
    %v6044 = vand.u32 %v5043, 4294901760
    %v6045 = vsub.f32 %v5043, %v6044
    %6046 = vmatpush1.msra.mxu0 %v6045
    %6047 = vmatprep.subr.mxu0 0.0
    %6048 = vmatpush2.msra.mxu0 0.0
    %6049 = vmatprep.subr.mxu0 0.0
    %6050 = vmatpush2.msra.mxu0 0.0
    %6051 = vmatprep.subr.mxu0 0.0
    %6052 = vmatpush2.msra.mxu0 0.0
    %6053 = vmatprep.subr.mxu0 0.0
    %6054 = vmatpush2.msra.mxu0 0.0
    %6055 = vmatprep.subr.mxu0 0.0
    %6056 = vmatpush2.msra.mxu0 0.0
    %6057 = vmatprep.subr.mxu0 0.0
    %6058 = vmatpush2.msra.mxu0 0.0
    %6059 = vmatprep.subr.mxu0 0.0
    %6060 = vmatpush2.msra.mxu0 0.0
    %6061 = vmatprep.subr.mxu0 0.0
    %6062 = vmatpush2.msra.mxu0 0.0
    %6063 = vmatprep.subr.mxu0 0.0
    %6064 = vmatpush2.msra.mxu0 0.0
    %6065 = vmatprep.subr.mxu0 0.0
    %6066 = vmatpush2.msra.mxu0 0.0
    %6067 = vmatprep.subr.mxu0 0.0
    %6068 = vmatpush2.msra.mxu0 0.0
    %6069 = vmatprep.subr.mxu0 0.0
    %6070 = vmatpush2.msra.mxu0 0.0
    %6071 = vmatprep.subr.mxu0 0.0
    %6072 = vmatpush2.msra.mxu0 0.0
    %6073 = vmatprep.subr.mxu0 0.0
    %6074 = vmatpush2.msra.mxu0 0.0
    %6075 = vmatprep.subr.mxu0 0.0
    %6076 = vmatpush2.msra.mxu0 0.0
    %6077 = vmatprep.subr.mxu0 0.0
    %6078 = vmatpush2.msra.mxu0 0.0
    %6079 = vmatprep.mubr.f32.mxu0 0.0
    %v6080 = vand.u32 %v5749, 4294901760
    %v6081 = vsub.f32 %v5749, %v6080
    %6082 = vmatmul.mubr.f32.gmra.mxu0 %v6081
    %v6083 = vpop.f32.mrf.mxu0
    %v6084 = vadd.f32 %v5978, %v6083
    %v6085 = vpop.f32.mrf.mxu0
    %6086 = vmatprep.mubr.f32.mxu0 0.0
    %v6087 = vand.u32 %v5751, 4294901760
    %v6088 = vsub.f32 %v5751, %v6087
    %6089 = vmatmul.mubr.f32.gmra.mxu0 %v6088
    %v6090 = vpop.f32.mrf.mxu0
    %v6091 = vadd.f32 %v5984, %v6090
    %v6092 = vpop.f32.mrf.mxu0
    %6093 = vmatprep.mubr.f32.mxu0 0.0
    %v6094 = vand.u32 %v5753, 4294901760
    %v6095 = vsub.f32 %v5753, %v6094
    %6096 = vmatmul.mubr.f32.gmra.mxu0 %v6095
    %v6097 = vpop.f32.mrf.mxu0
    %v6098 = vadd.f32 %v5990, %v6097
    %v6099 = vpop.f32.mrf.mxu0
    %6100 = vmatprep.mubr.f32.mxu0 0.0
    %v6101 = vand.u32 %v5755, 4294901760
    %v6102 = vsub.f32 %v5755, %v6101
    %6103 = vmatmul.mubr.f32.gmra.mxu0 %v6102
    %v6104 = vpop.f32.mrf.mxu0
    %v6105 = vadd.f32 %v5996, %v6104
    %v6106 = vpop.f32.mrf.mxu0
    %6107 = vdwg.mxu0
    %6108 = vmatprep.subr.mxu0 0.0
    %6109 = vmatpush1.msra.mxu0 0.0
    %6110 = vmatprep.subr.mxu0 0.0
    %6111 = vmatpush1.msra.mxu0 0.0
    %6112 = vmatprep.subr.mxu0 0.0
    %6113 = vmatpush1.msra.mxu0 0.0
    %6114 = vmatprep.subr.mxu0 0.0
    %6115 = vmatpush1.msra.mxu0 0.0
    %6116 = vmatprep.subr.mxu0 0.0
    %6117 = vmatpush1.msra.mxu0 0.0
    %6118 = vmatprep.subr.mxu0 0.0
    %6119 = vmatpush1.msra.mxu0 0.0
    %6120 = vmatprep.subr.mxu0 0.0
    %6121 = vmatpush1.msra.mxu0 0.0
    %6122 = vmatprep.subr.mxu0 0.0
    %6123 = vmatpush1.msra.mxu0 0.0
    %6124 = vmatprep.subr.mxu0 0.0
    %v6125 = vand.u32 %v5050, 4294901760
    %6126 = vmatpush1.msra.mxu0 %v6125
    %6127 = vmatprep.subr.mxu0 0.0
    %v6128 = vand.u32 %v5049, 4294901760
    %6129 = vmatpush1.msra.mxu0 %v6128
    %6130 = vmatprep.subr.mxu0 0.0
    %v6131 = vand.u32 %v5048, 4294901760
    %6132 = vmatpush1.msra.mxu0 %v6131
    %6133 = vmatprep.subr.mxu0 0.0
    %v6134 = vand.u32 %v5047, 4294901760
    %6135 = vmatpush1.msra.mxu0 %v6134
    %6136 = vmatprep.subr.mxu0 0.0
    %v6137 = vand.u32 %v5046, 4294901760
    %6138 = vmatpush1.msra.mxu0 %v6137
    %6139 = vmatprep.subr.mxu0 0.0
    %v6140 = vand.u32 %v5045, 4294901760
    %6141 = vmatpush1.msra.mxu0 %v6140
    %6142 = vmatprep.subr.mxu0 0.0
    %v6143 = vand.u32 %v5044, 4294901760
    %6144 = vmatpush1.msra.mxu0 %v6143
    %6145 = vmatprep.subr.mxu0 0.0
    %v6146 = vand.u32 %v5043, 4294901760
    %6147 = vmatpush1.msra.mxu0 %v6146
    %6148 = vmatprep.subr.mxu0 0.0
    %6149 = vmatpush2.msra.mxu0 0.0
    %6150 = vmatprep.subr.mxu0 0.0
    %6151 = vmatpush2.msra.mxu0 0.0
    %6152 = vmatprep.subr.mxu0 0.0
    %6153 = vmatpush2.msra.mxu0 0.0
    %6154 = vmatprep.subr.mxu0 0.0
    %6155 = vmatpush2.msra.mxu0 0.0
    %6156 = vmatprep.subr.mxu0 0.0
    %6157 = vmatpush2.msra.mxu0 0.0
    %6158 = vmatprep.subr.mxu0 0.0
    %6159 = vmatpush2.msra.mxu0 0.0
    %6160 = vmatprep.subr.mxu0 0.0
    %6161 = vmatpush2.msra.mxu0 0.0
    %6162 = vmatprep.subr.mxu0 0.0
    %6163 = vmatpush2.msra.mxu0 0.0
    %6164 = vmatprep.subr.mxu0 0.0
    %6165 = vmatpush2.msra.mxu0 0.0
    %6166 = vmatprep.subr.mxu0 0.0
    %6167 = vmatpush2.msra.mxu0 0.0
    %6168 = vmatprep.subr.mxu0 0.0
    %6169 = vmatpush2.msra.mxu0 0.0
    %6170 = vmatprep.subr.mxu0 0.0
    %6171 = vmatpush2.msra.mxu0 0.0
    %6172 = vmatprep.subr.mxu0 0.0
    %6173 = vmatpush2.msra.mxu0 0.0
    %6174 = vmatprep.subr.mxu0 0.0
    %6175 = vmatpush2.msra.mxu0 0.0
    %6176 = vmatprep.subr.mxu0 0.0
    %6177 = vmatpush2.msra.mxu0 0.0
    %6178 = vmatprep.subr.mxu0 0.0
    %6179 = vmatpush2.msra.mxu0 0.0
    %6180 = vmatprep.mubr.f32.mxu0 0.0
    %v6181 = vand.u32 %v5749, 4294901760
    %v6182 = vsub.f32 %v5749, %v6181
    %v6183 = vand.u32 %v6182, 4294901760
    %6184 = vmatmul.mubr.f32.gmra.mxu0 %v6183
    %v6185 = vpop.f32.mrf.mxu0
    %v6186 = vadd.f32 %v6084, %v6185
    %v6187 = vpop.f32.mrf.mxu0
    %6188 = vmatprep.mubr.f32.mxu0 0.0
    %v6189 = vand.u32 %v5751, 4294901760
    %v6190 = vsub.f32 %v5751, %v6189
    %v6191 = vand.u32 %v6190, 4294901760
    %6192 = vmatmul.mubr.f32.gmra.mxu0 %v6191
    %v6193 = vpop.f32.mrf.mxu0
    %v6194 = vadd.f32 %v6091, %v6193
    %v6195 = vpop.f32.mrf.mxu0
    %6196 = vmatprep.mubr.f32.mxu0 0.0
    %v6197 = vand.u32 %v5753, 4294901760
    %v6198 = vsub.f32 %v5753, %v6197
    %v6199 = vand.u32 %v6198, 4294901760
    %6200 = vmatmul.mubr.f32.gmra.mxu0 %v6199
    %v6201 = vpop.f32.mrf.mxu0
    %v6202 = vadd.f32 %v6098, %v6201
    %v6203 = vpop.f32.mrf.mxu0
    %6204 = vmatprep.mubr.f32.mxu0 0.0
    %v6205 = vand.u32 %v5755, 4294901760
    %v6206 = vsub.f32 %v5755, %v6205
    %v6207 = vand.u32 %v6206, 4294901760
    %6208 = vmatmul.mubr.f32.gmra.mxu0 %v6207
    %v6209 = vpop.f32.mrf.mxu0
    %v6210 = vadd.f32 %v6105, %v6209
    %v6211 = vpop.f32.mrf.mxu0
    %6212 = vdwg.mxu0
    %6213 = vmatprep.subr.mxu0 0.0
    %6214 = vmatpush1.msra.mxu0 0.0
    %6215 = vmatprep.subr.mxu0 0.0
    %6216 = vmatpush1.msra.mxu0 0.0
    %6217 = vmatprep.subr.mxu0 0.0
    %6218 = vmatpush1.msra.mxu0 0.0
    %6219 = vmatprep.subr.mxu0 0.0
    %6220 = vmatpush1.msra.mxu0 0.0
    %6221 = vmatprep.subr.mxu0 0.0
    %6222 = vmatpush1.msra.mxu0 0.0
    %6223 = vmatprep.subr.mxu0 0.0
    %6224 = vmatpush1.msra.mxu0 0.0
    %6225 = vmatprep.subr.mxu0 0.0
    %6226 = vmatpush1.msra.mxu0 0.0
    %6227 = vmatprep.subr.mxu0 0.0
    %6228 = vmatpush1.msra.mxu0 0.0
    %6229 = vmatprep.subr.mxu0 0.0
    %v6230 = vand.u32 %v5050, 4294901760
    %v6231 = vsub.f32 %v5050, %v6230
    %v6232 = vand.u32 %v6231, 4294901760
    %6233 = vmatpush1.msra.mxu0 %v6232
    %6234 = vmatprep.subr.mxu0 0.0
    %v6235 = vand.u32 %v5049, 4294901760
    %v6236 = vsub.f32 %v5049, %v6235
    %v6237 = vand.u32 %v6236, 4294901760
    %6238 = vmatpush1.msra.mxu0 %v6237
    %6239 = vmatprep.subr.mxu0 0.0
    %v6240 = vand.u32 %v5048, 4294901760
    %v6241 = vsub.f32 %v5048, %v6240
    %v6242 = vand.u32 %v6241, 4294901760
    %6243 = vmatpush1.msra.mxu0 %v6242
    %6244 = vmatprep.subr.mxu0 0.0
    %v6245 = vand.u32 %v5047, 4294901760
    %v6246 = vsub.f32 %v5047, %v6245
    %v6247 = vand.u32 %v6246, 4294901760
    %6248 = vmatpush1.msra.mxu0 %v6247
    %6249 = vmatprep.subr.mxu0 0.0
    %v6250 = vand.u32 %v5046, 4294901760
    %v6251 = vsub.f32 %v5046, %v6250
    %v6252 = vand.u32 %v6251, 4294901760
    %6253 = vmatpush1.msra.mxu0 %v6252
    %6254 = vmatprep.subr.mxu0 0.0
    %v6255 = vand.u32 %v5045, 4294901760
    %v6256 = vsub.f32 %v5045, %v6255
    %v6257 = vand.u32 %v6256, 4294901760
    %6258 = vmatpush1.msra.mxu0 %v6257
    %6259 = vmatprep.subr.mxu0 0.0
    %v6260 = vand.u32 %v5044, 4294901760
    %v6261 = vsub.f32 %v5044, %v6260
    %v6262 = vand.u32 %v6261, 4294901760
    %6263 = vmatpush1.msra.mxu0 %v6262
    %6264 = vmatprep.subr.mxu0 0.0
    %v6265 = vand.u32 %v5043, 4294901760
    %v6266 = vsub.f32 %v5043, %v6265
    %v6267 = vand.u32 %v6266, 4294901760
    %6268 = vmatpush1.msra.mxu0 %v6267
    %6269 = vmatprep.subr.mxu0 0.0
    %6270 = vmatpush2.msra.mxu0 0.0
    %6271 = vmatprep.subr.mxu0 0.0
    %6272 = vmatpush2.msra.mxu0 0.0
    %6273 = vmatprep.subr.mxu0 0.0
    %6274 = vmatpush2.msra.mxu0 0.0
    %6275 = vmatprep.subr.mxu0 0.0
    %6276 = vmatpush2.msra.mxu0 0.0
    %6277 = vmatprep.subr.mxu0 0.0
    %6278 = vmatpush2.msra.mxu0 0.0
    %6279 = vmatprep.subr.mxu0 0.0
    %6280 = vmatpush2.msra.mxu0 0.0
    %6281 = vmatprep.subr.mxu0 0.0
    %6282 = vmatpush2.msra.mxu0 0.0
    %6283 = vmatprep.subr.mxu0 0.0
    %6284 = vmatpush2.msra.mxu0 0.0
    %6285 = vmatprep.subr.mxu0 0.0
    %6286 = vmatpush2.msra.mxu0 0.0
    %6287 = vmatprep.subr.mxu0 0.0
    %6288 = vmatpush2.msra.mxu0 0.0
    %6289 = vmatprep.subr.mxu0 0.0
    %6290 = vmatpush2.msra.mxu0 0.0
    %6291 = vmatprep.subr.mxu0 0.0
    %6292 = vmatpush2.msra.mxu0 0.0
    %6293 = vmatprep.subr.mxu0 0.0
    %6294 = vmatpush2.msra.mxu0 0.0
    %6295 = vmatprep.subr.mxu0 0.0
    %6296 = vmatpush2.msra.mxu0 0.0
    %6297 = vmatprep.subr.mxu0 0.0
    %6298 = vmatpush2.msra.mxu0 0.0
    %6299 = vmatprep.subr.mxu0 0.0
    %6300 = vmatpush2.msra.mxu0 0.0
    %6301 = vmatprep.mubr.f32.mxu0 0.0
    %v6302 = vand.u32 %v5749, 4294901760
    %6303 = vmatmul.mubr.f32.gmra.mxu0 %v6302
    %v6304 = vpop.f32.mrf.mxu0
    %v6305 = vadd.f32 %v6186, %v6304
    %v6306 = vpop.f32.mrf.mxu0
    %6307 = vmatprep.mubr.f32.mxu0 0.0
    %v6308 = vand.u32 %v5751, 4294901760
    %6309 = vmatmul.mubr.f32.gmra.mxu0 %v6308
    %v6310 = vpop.f32.mrf.mxu0
    %v6311 = vadd.f32 %v6194, %v6310
    %v6312 = vpop.f32.mrf.mxu0
    %6313 = vmatprep.mubr.f32.mxu0 0.0
    %v6314 = vand.u32 %v5753, 4294901760
    %6315 = vmatmul.mubr.f32.gmra.mxu0 %v6314
    %v6316 = vpop.f32.mrf.mxu0
    %v6317 = vadd.f32 %v6202, %v6316
    %v6318 = vpop.f32.mrf.mxu0
    %6319 = vmatprep.mubr.f32.mxu0 0.0
    %v6320 = vand.u32 %v5755, 4294901760
    %6321 = vmatmul.mubr.f32.gmra.mxu0 %v6320
    %v6322 = vpop.f32.mrf.mxu0
    %v6323 = vadd.f32 %v6210, %v6322
    %v6324 = vpop.f32.mrf.mxu0
    %6325 = vdwg.mxu0
    %6326 = vmatprep.subr.mxu0 0.0
    %6327 = vmatpush1.msra.mxu0 0.0
    %6328 = vmatprep.subr.mxu0 0.0
    %6329 = vmatpush1.msra.mxu0 0.0
    %6330 = vmatprep.subr.mxu0 0.0
    %6331 = vmatpush1.msra.mxu0 0.0
    %6332 = vmatprep.subr.mxu0 0.0
    %6333 = vmatpush1.msra.mxu0 0.0
    %6334 = vmatprep.subr.mxu0 0.0
    %6335 = vmatpush1.msra.mxu0 0.0
    %6336 = vmatprep.subr.mxu0 0.0
    %6337 = vmatpush1.msra.mxu0 0.0
    %6338 = vmatprep.subr.mxu0 0.0
    %6339 = vmatpush1.msra.mxu0 0.0
    %6340 = vmatprep.subr.mxu0 0.0
    %6341 = vmatpush1.msra.mxu0 0.0
    %6342 = vmatprep.subr.mxu0 0.0
    %v6343 = vand.u32 %v5050, 4294901760
    %6344 = vmatpush1.msra.mxu0 %v6343
    %6345 = vmatprep.subr.mxu0 0.0
    %v6346 = vand.u32 %v5049, 4294901760
    %6347 = vmatpush1.msra.mxu0 %v6346
    %6348 = vmatprep.subr.mxu0 0.0
    %v6349 = vand.u32 %v5048, 4294901760
    %6350 = vmatpush1.msra.mxu0 %v6349
    %6351 = vmatprep.subr.mxu0 0.0
    %v6352 = vand.u32 %v5047, 4294901760
    %6353 = vmatpush1.msra.mxu0 %v6352
    %6354 = vmatprep.subr.mxu0 0.0
    %v6355 = vand.u32 %v5046, 4294901760
    %6356 = vmatpush1.msra.mxu0 %v6355
    %6357 = vmatprep.subr.mxu0 0.0
    %v6358 = vand.u32 %v5045, 4294901760
    %6359 = vmatpush1.msra.mxu0 %v6358
    %6360 = vmatprep.subr.mxu0 0.0
    %v6361 = vand.u32 %v5044, 4294901760
    %6362 = vmatpush1.msra.mxu0 %v6361
    %6363 = vmatprep.subr.mxu0 0.0
    %v6364 = vand.u32 %v5043, 4294901760
    %6365 = vmatpush1.msra.mxu0 %v6364
    %6366 = vmatprep.subr.mxu0 0.0
    %6367 = vmatpush2.msra.mxu0 0.0
    %6368 = vmatprep.subr.mxu0 0.0
    %6369 = vmatpush2.msra.mxu0 0.0
    %6370 = vmatprep.subr.mxu0 0.0
    %6371 = vmatpush2.msra.mxu0 0.0
    %6372 = vmatprep.subr.mxu0 0.0
    %6373 = vmatpush2.msra.mxu0 0.0
    %6374 = vmatprep.subr.mxu0 0.0
    %6375 = vmatpush2.msra.mxu0 0.0
    %6376 = vmatprep.subr.mxu0 0.0
    %6377 = vmatpush2.msra.mxu0 0.0
    %6378 = vmatprep.subr.mxu0 0.0
    %6379 = vmatpush2.msra.mxu0 0.0
    %6380 = vmatprep.subr.mxu0 0.0
    %6381 = vmatpush2.msra.mxu0 0.0
    %6382 = vmatprep.subr.mxu0 0.0
    %6383 = vmatpush2.msra.mxu0 0.0
    %6384 = vmatprep.subr.mxu0 0.0
    %6385 = vmatpush2.msra.mxu0 0.0
    %6386 = vmatprep.subr.mxu0 0.0
    %6387 = vmatpush2.msra.mxu0 0.0
    %6388 = vmatprep.subr.mxu0 0.0
    %6389 = vmatpush2.msra.mxu0 0.0
    %6390 = vmatprep.subr.mxu0 0.0
    %6391 = vmatpush2.msra.mxu0 0.0
    %6392 = vmatprep.subr.mxu0 0.0
    %6393 = vmatpush2.msra.mxu0 0.0
    %6394 = vmatprep.subr.mxu0 0.0
    %6395 = vmatpush2.msra.mxu0 0.0
    %6396 = vmatprep.subr.mxu0 0.0
    %6397 = vmatpush2.msra.mxu0 0.0
    %6398 = vmatprep.mubr.f32.mxu0 0.0
    %v6399 = vand.u32 %v5749, 4294901760
    %6400 = vmatmul.mubr.f32.gmra.mxu0 %v6399
    %v6401 = vpop.f32.mrf.mxu0
    %v6402 = vadd.f32 %v6305, %v6401
    %v6403 = vpop.f32.mrf.mxu0
    %6404 = vmatprep.mubr.f32.mxu0 0.0
    %v6405 = vand.u32 %v5751, 4294901760
    %6406 = vmatmul.mubr.f32.gmra.mxu0 %v6405
    %v6407 = vpop.f32.mrf.mxu0
    %v6408 = vadd.f32 %v6311, %v6407
    %v6409 = vpop.f32.mrf.mxu0
    %6410 = vmatprep.mubr.f32.mxu0 0.0
    %v6411 = vand.u32 %v5753, 4294901760
    %6412 = vmatmul.mubr.f32.gmra.mxu0 %v6411
    %v6413 = vpop.f32.mrf.mxu0
    %v6414 = vadd.f32 %v6317, %v6413
    %v6415 = vpop.f32.mrf.mxu0
    %6416 = vmatprep.mubr.f32.mxu0 0.0
    %v6417 = vand.u32 %v5755, 4294901760
    %6418 = vmatmul.mubr.f32.gmra.mxu0 %v6417
    %v6419 = vpop.f32.mrf.mxu0
    %v6420 = vadd.f32 %v6323, %v6419
    %v6421 = vpop.f32.mrf.mxu0
    %6422 = vdwg.mxu0
    %v6423 = vrot.slane %v5039, 2
    %v6424 = vrot.slane %v5031, 2
    %v6425 = vsel %vm94, %v6423, %v6424
    %v6426 = vrot.slane %v5041, 2
    %v6427 = vsel %vm94, %v6424, %v6426
    %v6428 = vrot.slane %v5040, 2
    %v6429 = vrot.slane %v5034, 2
    %v6430 = vsel %vm94, %v6428, %v6429
    %v6431 = vrot.slane %v5042, 2
    %v6432 = vsel %vm94, %v6429, %v6431
    %s6433 = scalar_lea.vmem %s5, 128
    %v6434 = vld [vmem:[%s6433] sm:$0xff]
    %v6435 = vld [vmem:[%s6433 + $0x8] sm:$0xff]
    %v6436 = vld [vmem:[%s6433 + $0x10] sm:$0xff]
    %v6437 = vld [vmem:[%s6433 + $0x18] sm:$0xff]
    %v6438 = vld [vmem:[%s6433 + $0x20] sm:$0xff]
    %v6439 = vld [vmem:[%s6433 + $0x28] sm:$0xff]
    %v6440 = vld [vmem:[%s6433 + $0x30] sm:$0xff]
    %v6441 = vld [vmem:[%s6433 + $0x38] sm:$0xff]
    %v6442 = vsel %vm5074, %v6425, 0
    %v6444 = vsel %vm5074, %v6427, 0
    %v6446 = vsel %vm5074, %v6430, 0
    %v6448 = vsel %vm5074, %v6432, 0
    %6450 = vmatprep.subr.mxu0 0.0
    %6451 = vmatpush1.msra.mxu0 0.0
    %6452 = vmatprep.subr.mxu0 0.0
    %6453 = vmatpush1.msra.mxu0 0.0
    %6454 = vmatprep.subr.mxu0 0.0
    %6455 = vmatpush1.msra.mxu0 0.0
    %6456 = vmatprep.subr.mxu0 0.0
    %6457 = vmatpush1.msra.mxu0 0.0
    %6458 = vmatprep.subr.mxu0 0.0
    %6459 = vmatpush1.msra.mxu0 0.0
    %6460 = vmatprep.subr.mxu0 0.0
    %6461 = vmatpush1.msra.mxu0 0.0
    %6462 = vmatprep.subr.mxu0 0.0
    %6463 = vmatpush1.msra.mxu0 0.0
    %6464 = vmatprep.subr.mxu0 0.0
    %6465 = vmatpush1.msra.mxu0 0.0
    %6466 = vmatprep.subr.mxu0 0.0
    %v6467 = vand.u32 %v6441, 4294901760
    %6468 = vmatpush1.msra.mxu0 %v6467
    %6469 = vmatprep.subr.mxu0 0.0
    %v6470 = vand.u32 %v6440, 4294901760
    %6471 = vmatpush1.msra.mxu0 %v6470
    %6472 = vmatprep.subr.mxu0 0.0
    %v6473 = vand.u32 %v6439, 4294901760
    %6474 = vmatpush1.msra.mxu0 %v6473
    %6475 = vmatprep.subr.mxu0 0.0
    %v6476 = vand.u32 %v6438, 4294901760
    %6477 = vmatpush1.msra.mxu0 %v6476
    %6478 = vmatprep.subr.mxu0 0.0
    %v6479 = vand.u32 %v6437, 4294901760
    %6480 = vmatpush1.msra.mxu0 %v6479
    %6481 = vmatprep.subr.mxu0 0.0
    %v6482 = vand.u32 %v6436, 4294901760
    %6483 = vmatpush1.msra.mxu0 %v6482
    %6484 = vmatprep.subr.mxu0 0.0
    %v6485 = vand.u32 %v6435, 4294901760
    %6486 = vmatpush1.msra.mxu0 %v6485
    %6487 = vmatprep.subr.mxu0 0.0
    %v6488 = vand.u32 %v6434, 4294901760
    %6489 = vmatpush1.msra.mxu0 %v6488
    %6490 = vmatprep.subr.mxu0 0.0
    %6491 = vmatpush2.msra.mxu0 0.0
    %6492 = vmatprep.subr.mxu0 0.0
    %6493 = vmatpush2.msra.mxu0 0.0
    %6494 = vmatprep.subr.mxu0 0.0
    %6495 = vmatpush2.msra.mxu0 0.0
    %6496 = vmatprep.subr.mxu0 0.0
    %6497 = vmatpush2.msra.mxu0 0.0
    %6498 = vmatprep.subr.mxu0 0.0
    %6499 = vmatpush2.msra.mxu0 0.0
    %6500 = vmatprep.subr.mxu0 0.0
    %6501 = vmatpush2.msra.mxu0 0.0
    %6502 = vmatprep.subr.mxu0 0.0
    %6503 = vmatpush2.msra.mxu0 0.0
    %6504 = vmatprep.subr.mxu0 0.0
    %6505 = vmatpush2.msra.mxu0 0.0
    %6506 = vmatprep.subr.mxu0 0.0
    %6507 = vmatpush2.msra.mxu0 0.0
    %6508 = vmatprep.subr.mxu0 0.0
    %6509 = vmatpush2.msra.mxu0 0.0
    %6510 = vmatprep.subr.mxu0 0.0
    %6511 = vmatpush2.msra.mxu0 0.0
    %6512 = vmatprep.subr.mxu0 0.0
    %6513 = vmatpush2.msra.mxu0 0.0
    %6514 = vmatprep.subr.mxu0 0.0
    %6515 = vmatpush2.msra.mxu0 0.0
    %6516 = vmatprep.subr.mxu0 0.0
    %6517 = vmatpush2.msra.mxu0 0.0
    %6518 = vmatprep.subr.mxu0 0.0
    %6519 = vmatpush2.msra.mxu0 0.0
    %6520 = vmatprep.subr.mxu0 0.0
    %6521 = vmatpush2.msra.mxu0 0.0
    %6522 = vmatprep.mubr.f32.mxu0 0.0
    %v6523 = vand.u32 %v6442, 4294901760
    %v6524 = vsub.f32 %v6442, %v6523
    %v6525 = vand.u32 %v6524, 4294901760
    %v6526 = vsub.f32 %v6524, %v6525
    %v6527 = vand.u32 %v6526, 4294901760
    %6528 = vmatmul.mubr.f32.gmra.mxu0 %v6527
    %v6529 = vpop.f32.mrf.mxu0
    %v6530 = vadd.f32 0.0, %v6529
    %v6531 = vpop.f32.mrf.mxu0
    %6532 = vmatprep.mubr.f32.mxu0 0.0
    %v6533 = vand.u32 %v6444, 4294901760
    %v6534 = vsub.f32 %v6444, %v6533
    %v6535 = vand.u32 %v6534, 4294901760
    %v6536 = vsub.f32 %v6534, %v6535
    %v6537 = vand.u32 %v6536, 4294901760
    %6538 = vmatmul.mubr.f32.gmra.mxu0 %v6537
    %v6539 = vpop.f32.mrf.mxu0
    %v6540 = vadd.f32 0.0, %v6539
    %v6541 = vpop.f32.mrf.mxu0
    %6542 = vmatprep.mubr.f32.mxu0 0.0
    %v6543 = vand.u32 %v6446, 4294901760
    %v6544 = vsub.f32 %v6446, %v6543
    %v6545 = vand.u32 %v6544, 4294901760
    %v6546 = vsub.f32 %v6544, %v6545
    %v6547 = vand.u32 %v6546, 4294901760
    %6548 = vmatmul.mubr.f32.gmra.mxu0 %v6547
    %v6549 = vpop.f32.mrf.mxu0
    %v6550 = vadd.f32 0.0, %v6549
    %v6551 = vpop.f32.mrf.mxu0
    %6552 = vmatprep.mubr.f32.mxu0 0.0
    %v6553 = vand.u32 %v6448, 4294901760
    %v6554 = vsub.f32 %v6448, %v6553
    %v6555 = vand.u32 %v6554, 4294901760
    %v6556 = vsub.f32 %v6554, %v6555
    %v6557 = vand.u32 %v6556, 4294901760
    %6558 = vmatmul.mubr.f32.gmra.mxu0 %v6557
    %v6559 = vpop.f32.mrf.mxu0
    %v6560 = vadd.f32 0.0, %v6559
    %v6561 = vpop.f32.mrf.mxu0
    %6562 = vdwg.mxu0
    %6563 = vmatprep.subr.mxu0 0.0
    %6564 = vmatpush1.msra.mxu0 0.0
    %6565 = vmatprep.subr.mxu0 0.0
    %6566 = vmatpush1.msra.mxu0 0.0
    %6567 = vmatprep.subr.mxu0 0.0
    %6568 = vmatpush1.msra.mxu0 0.0
    %6569 = vmatprep.subr.mxu0 0.0
    %6570 = vmatpush1.msra.mxu0 0.0
    %6571 = vmatprep.subr.mxu0 0.0
    %6572 = vmatpush1.msra.mxu0 0.0
    %6573 = vmatprep.subr.mxu0 0.0
    %6574 = vmatpush1.msra.mxu0 0.0
    %6575 = vmatprep.subr.mxu0 0.0
    %6576 = vmatpush1.msra.mxu0 0.0
    %6577 = vmatprep.subr.mxu0 0.0
    %6578 = vmatpush1.msra.mxu0 0.0
    %6579 = vmatprep.subr.mxu0 0.0
    %v6580 = vand.u32 %v6441, 4294901760
    %v6581 = vsub.f32 %v6441, %v6580
    %v6582 = vand.u32 %v6581, 4294901760
    %v6583 = vsub.f32 %v6581, %v6582
    %v6584 = vand.u32 %v6583, 4294901760
    %6585 = vmatpush1.msra.mxu0 %v6584
    %6586 = vmatprep.subr.mxu0 0.0
    %v6587 = vand.u32 %v6440, 4294901760
    %v6588 = vsub.f32 %v6440, %v6587
    %v6589 = vand.u32 %v6588, 4294901760
    %v6590 = vsub.f32 %v6588, %v6589
    %v6591 = vand.u32 %v6590, 4294901760
    %6592 = vmatpush1.msra.mxu0 %v6591
    %6593 = vmatprep.subr.mxu0 0.0
    %v6594 = vand.u32 %v6439, 4294901760
    %v6595 = vsub.f32 %v6439, %v6594
    %v6596 = vand.u32 %v6595, 4294901760
    %v6597 = vsub.f32 %v6595, %v6596
    %v6598 = vand.u32 %v6597, 4294901760
    %6599 = vmatpush1.msra.mxu0 %v6598
    %6600 = vmatprep.subr.mxu0 0.0
    %v6601 = vand.u32 %v6438, 4294901760
    %v6602 = vsub.f32 %v6438, %v6601
    %v6603 = vand.u32 %v6602, 4294901760
    %v6604 = vsub.f32 %v6602, %v6603
    %v6605 = vand.u32 %v6604, 4294901760
    %6606 = vmatpush1.msra.mxu0 %v6605
    %6607 = vmatprep.subr.mxu0 0.0
    %v6608 = vand.u32 %v6437, 4294901760
    %v6609 = vsub.f32 %v6437, %v6608
    %v6610 = vand.u32 %v6609, 4294901760
    %v6611 = vsub.f32 %v6609, %v6610
    %v6612 = vand.u32 %v6611, 4294901760
    %6613 = vmatpush1.msra.mxu0 %v6612
    %6614 = vmatprep.subr.mxu0 0.0
    %v6615 = vand.u32 %v6436, 4294901760
    %v6616 = vsub.f32 %v6436, %v6615
    %v6617 = vand.u32 %v6616, 4294901760
    %v6618 = vsub.f32 %v6616, %v6617
    %v6619 = vand.u32 %v6618, 4294901760
    %6620 = vmatpush1.msra.mxu0 %v6619
    %6621 = vmatprep.subr.mxu0 0.0
    %v6622 = vand.u32 %v6435, 4294901760
    %v6623 = vsub.f32 %v6435, %v6622
    %v6624 = vand.u32 %v6623, 4294901760
    %v6625 = vsub.f32 %v6623, %v6624
    %v6626 = vand.u32 %v6625, 4294901760
    %6627 = vmatpush1.msra.mxu0 %v6626
    %6628 = vmatprep.subr.mxu0 0.0
    %v6629 = vand.u32 %v6434, 4294901760
    %v6630 = vsub.f32 %v6434, %v6629
    %v6631 = vand.u32 %v6630, 4294901760
    %v6632 = vsub.f32 %v6630, %v6631
    %v6633 = vand.u32 %v6632, 4294901760
    %6634 = vmatpush1.msra.mxu0 %v6633
    %6635 = vmatprep.subr.mxu0 0.0
    %6636 = vmatpush2.msra.mxu0 0.0
    %6637 = vmatprep.subr.mxu0 0.0
    %6638 = vmatpush2.msra.mxu0 0.0
    %6639 = vmatprep.subr.mxu0 0.0
    %6640 = vmatpush2.msra.mxu0 0.0
    %6641 = vmatprep.subr.mxu0 0.0
    %6642 = vmatpush2.msra.mxu0 0.0
    %6643 = vmatprep.subr.mxu0 0.0
    %6644 = vmatpush2.msra.mxu0 0.0
    %6645 = vmatprep.subr.mxu0 0.0
    %6646 = vmatpush2.msra.mxu0 0.0
    %6647 = vmatprep.subr.mxu0 0.0
    %6648 = vmatpush2.msra.mxu0 0.0
    %6649 = vmatprep.subr.mxu0 0.0
    %6650 = vmatpush2.msra.mxu0 0.0
    %6651 = vmatprep.subr.mxu0 0.0
    %6652 = vmatpush2.msra.mxu0 0.0
    %6653 = vmatprep.subr.mxu0 0.0
    %6654 = vmatpush2.msra.mxu0 0.0
    %6655 = vmatprep.subr.mxu0 0.0
    %6656 = vmatpush2.msra.mxu0 0.0
    %6657 = vmatprep.subr.mxu0 0.0
    %6658 = vmatpush2.msra.mxu0 0.0
    %6659 = vmatprep.subr.mxu0 0.0
    %6660 = vmatpush2.msra.mxu0 0.0
    %6661 = vmatprep.subr.mxu0 0.0
    %6662 = vmatpush2.msra.mxu0 0.0
    %6663 = vmatprep.subr.mxu0 0.0
    %6664 = vmatpush2.msra.mxu0 0.0
    %6665 = vmatprep.subr.mxu0 0.0
    %6666 = vmatpush2.msra.mxu0 0.0
    %6667 = vmatprep.mubr.f32.mxu0 0.0
    %v6668 = vand.u32 %v6442, 4294901760
    %6669 = vmatmul.mubr.f32.gmra.mxu0 %v6668
    %v6670 = vpop.f32.mrf.mxu0
    %v6671 = vadd.f32 %v6530, %v6670
    %v6672 = vpop.f32.mrf.mxu0
    %6673 = vmatprep.mubr.f32.mxu0 0.0
    %v6674 = vand.u32 %v6444, 4294901760
    %6675 = vmatmul.mubr.f32.gmra.mxu0 %v6674
    %v6676 = vpop.f32.mrf.mxu0
    %v6677 = vadd.f32 %v6540, %v6676
    %v6678 = vpop.f32.mrf.mxu0
    %6679 = vmatprep.mubr.f32.mxu0 0.0
    %v6680 = vand.u32 %v6446, 4294901760
    %6681 = vmatmul.mubr.f32.gmra.mxu0 %v6680
    %v6682 = vpop.f32.mrf.mxu0
    %v6683 = vadd.f32 %v6550, %v6682
    %v6684 = vpop.f32.mrf.mxu0
    %6685 = vmatprep.mubr.f32.mxu0 0.0
    %v6686 = vand.u32 %v6448, 4294901760
    %6687 = vmatmul.mubr.f32.gmra.mxu0 %v6686
    %v6688 = vpop.f32.mrf.mxu0
    %v6689 = vadd.f32 %v6560, %v6688
    %v6690 = vpop.f32.mrf.mxu0
    %6691 = vdwg.mxu0
    %6692 = vmatprep.subr.mxu0 0.0
    %6693 = vmatpush1.msra.mxu0 0.0
    %6694 = vmatprep.subr.mxu0 0.0
    %6695 = vmatpush1.msra.mxu0 0.0
    %6696 = vmatprep.subr.mxu0 0.0
    %6697 = vmatpush1.msra.mxu0 0.0
    %6698 = vmatprep.subr.mxu0 0.0
    %6699 = vmatpush1.msra.mxu0 0.0
    %6700 = vmatprep.subr.mxu0 0.0
    %6701 = vmatpush1.msra.mxu0 0.0
    %6702 = vmatprep.subr.mxu0 0.0
    %6703 = vmatpush1.msra.mxu0 0.0
    %6704 = vmatprep.subr.mxu0 0.0
    %6705 = vmatpush1.msra.mxu0 0.0
    %6706 = vmatprep.subr.mxu0 0.0
    %6707 = vmatpush1.msra.mxu0 0.0
    %6708 = vmatprep.subr.mxu0 0.0
    %v6709 = vand.u32 %v6441, 4294901760
    %v6710 = vsub.f32 %v6441, %v6709
    %6711 = vmatpush1.msra.mxu0 %v6710
    %6712 = vmatprep.subr.mxu0 0.0
    %v6713 = vand.u32 %v6440, 4294901760
    %v6714 = vsub.f32 %v6440, %v6713
    %6715 = vmatpush1.msra.mxu0 %v6714
    %6716 = vmatprep.subr.mxu0 0.0
    %v6717 = vand.u32 %v6439, 4294901760
    %v6718 = vsub.f32 %v6439, %v6717
    %6719 = vmatpush1.msra.mxu0 %v6718
    %6720 = vmatprep.subr.mxu0 0.0
    %v6721 = vand.u32 %v6438, 4294901760
    %v6722 = vsub.f32 %v6438, %v6721
    %6723 = vmatpush1.msra.mxu0 %v6722
    %6724 = vmatprep.subr.mxu0 0.0
    %v6725 = vand.u32 %v6437, 4294901760
    %v6726 = vsub.f32 %v6437, %v6725
    %6727 = vmatpush1.msra.mxu0 %v6726
    %6728 = vmatprep.subr.mxu0 0.0
    %v6729 = vand.u32 %v6436, 4294901760
    %v6730 = vsub.f32 %v6436, %v6729
    %6731 = vmatpush1.msra.mxu0 %v6730
    %6732 = vmatprep.subr.mxu0 0.0
    %v6733 = vand.u32 %v6435, 4294901760
    %v6734 = vsub.f32 %v6435, %v6733
    %6735 = vmatpush1.msra.mxu0 %v6734
    %6736 = vmatprep.subr.mxu0 0.0
    %v6737 = vand.u32 %v6434, 4294901760
    %v6738 = vsub.f32 %v6434, %v6737
    %6739 = vmatpush1.msra.mxu0 %v6738
    %6740 = vmatprep.subr.mxu0 0.0
    %6741 = vmatpush2.msra.mxu0 0.0
    %6742 = vmatprep.subr.mxu0 0.0
    %6743 = vmatpush2.msra.mxu0 0.0
    %6744 = vmatprep.subr.mxu0 0.0
    %6745 = vmatpush2.msra.mxu0 0.0
    %6746 = vmatprep.subr.mxu0 0.0
    %6747 = vmatpush2.msra.mxu0 0.0
    %6748 = vmatprep.subr.mxu0 0.0
    %6749 = vmatpush2.msra.mxu0 0.0
    %6750 = vmatprep.subr.mxu0 0.0
    %6751 = vmatpush2.msra.mxu0 0.0
    %6752 = vmatprep.subr.mxu0 0.0
    %6753 = vmatpush2.msra.mxu0 0.0
    %6754 = vmatprep.subr.mxu0 0.0
    %6755 = vmatpush2.msra.mxu0 0.0
    %6756 = vmatprep.subr.mxu0 0.0
    %6757 = vmatpush2.msra.mxu0 0.0
    %6758 = vmatprep.subr.mxu0 0.0
    %6759 = vmatpush2.msra.mxu0 0.0
    %6760 = vmatprep.subr.mxu0 0.0
    %6761 = vmatpush2.msra.mxu0 0.0
    %6762 = vmatprep.subr.mxu0 0.0
    %6763 = vmatpush2.msra.mxu0 0.0
    %6764 = vmatprep.subr.mxu0 0.0
    %6765 = vmatpush2.msra.mxu0 0.0
    %6766 = vmatprep.subr.mxu0 0.0
    %6767 = vmatpush2.msra.mxu0 0.0
    %6768 = vmatprep.subr.mxu0 0.0
    %6769 = vmatpush2.msra.mxu0 0.0
    %6770 = vmatprep.subr.mxu0 0.0
    %6771 = vmatpush2.msra.mxu0 0.0
    %6772 = vmatprep.mubr.f32.mxu0 0.0
    %v6773 = vand.u32 %v6442, 4294901760
    %v6774 = vsub.f32 %v6442, %v6773
    %6775 = vmatmul.mubr.f32.gmra.mxu0 %v6774
    %v6776 = vpop.f32.mrf.mxu0
    %v6777 = vadd.f32 %v6671, %v6776
    %v6778 = vpop.f32.mrf.mxu0
    %6779 = vmatprep.mubr.f32.mxu0 0.0
    %v6780 = vand.u32 %v6444, 4294901760
    %v6781 = vsub.f32 %v6444, %v6780
    %6782 = vmatmul.mubr.f32.gmra.mxu0 %v6781
    %v6783 = vpop.f32.mrf.mxu0
    %v6784 = vadd.f32 %v6677, %v6783
    %v6785 = vpop.f32.mrf.mxu0
    %6786 = vmatprep.mubr.f32.mxu0 0.0
    %v6787 = vand.u32 %v6446, 4294901760
    %v6788 = vsub.f32 %v6446, %v6787
    %6789 = vmatmul.mubr.f32.gmra.mxu0 %v6788
    %v6790 = vpop.f32.mrf.mxu0
    %v6791 = vadd.f32 %v6683, %v6790
    %v6792 = vpop.f32.mrf.mxu0
    %6793 = vmatprep.mubr.f32.mxu0 0.0
    %v6794 = vand.u32 %v6448, 4294901760
    %v6795 = vsub.f32 %v6448, %v6794
    %6796 = vmatmul.mubr.f32.gmra.mxu0 %v6795
    %v6797 = vpop.f32.mrf.mxu0
    %v6798 = vadd.f32 %v6689, %v6797
    %v6799 = vpop.f32.mrf.mxu0
    %6800 = vdwg.mxu0
    %6801 = vmatprep.subr.mxu0 0.0
    %6802 = vmatpush1.msra.mxu0 0.0
    %6803 = vmatprep.subr.mxu0 0.0
    %6804 = vmatpush1.msra.mxu0 0.0
    %6805 = vmatprep.subr.mxu0 0.0
    %6806 = vmatpush1.msra.mxu0 0.0
    %6807 = vmatprep.subr.mxu0 0.0
    %6808 = vmatpush1.msra.mxu0 0.0
    %6809 = vmatprep.subr.mxu0 0.0
    %6810 = vmatpush1.msra.mxu0 0.0
    %6811 = vmatprep.subr.mxu0 0.0
    %6812 = vmatpush1.msra.mxu0 0.0
    %6813 = vmatprep.subr.mxu0 0.0
    %6814 = vmatpush1.msra.mxu0 0.0
    %6815 = vmatprep.subr.mxu0 0.0
    %6816 = vmatpush1.msra.mxu0 0.0
    %6817 = vmatprep.subr.mxu0 0.0
    %v6818 = vand.u32 %v6441, 4294901760
    %6819 = vmatpush1.msra.mxu0 %v6818
    %6820 = vmatprep.subr.mxu0 0.0
    %v6821 = vand.u32 %v6440, 4294901760
    %6822 = vmatpush1.msra.mxu0 %v6821
    %6823 = vmatprep.subr.mxu0 0.0
    %v6824 = vand.u32 %v6439, 4294901760
    %6825 = vmatpush1.msra.mxu0 %v6824
    %6826 = vmatprep.subr.mxu0 0.0
    %v6827 = vand.u32 %v6438, 4294901760
    %6828 = vmatpush1.msra.mxu0 %v6827
    %6829 = vmatprep.subr.mxu0 0.0
    %v6830 = vand.u32 %v6437, 4294901760
    %6831 = vmatpush1.msra.mxu0 %v6830
    %6832 = vmatprep.subr.mxu0 0.0
    %v6833 = vand.u32 %v6436, 4294901760
    %6834 = vmatpush1.msra.mxu0 %v6833
    %6835 = vmatprep.subr.mxu0 0.0
    %v6836 = vand.u32 %v6435, 4294901760
    %6837 = vmatpush1.msra.mxu0 %v6836
    %6838 = vmatprep.subr.mxu0 0.0
    %v6839 = vand.u32 %v6434, 4294901760
    %6840 = vmatpush1.msra.mxu0 %v6839
    %6841 = vmatprep.subr.mxu0 0.0
    %6842 = vmatpush2.msra.mxu0 0.0
    %6843 = vmatprep.subr.mxu0 0.0
    %6844 = vmatpush2.msra.mxu0 0.0
    %6845 = vmatprep.subr.mxu0 0.0
    %6846 = vmatpush2.msra.mxu0 0.0
    %6847 = vmatprep.subr.mxu0 0.0
    %6848 = vmatpush2.msra.mxu0 0.0
    %6849 = vmatprep.subr.mxu0 0.0
    %6850 = vmatpush2.msra.mxu0 0.0
    %6851 = vmatprep.subr.mxu0 0.0
    %6852 = vmatpush2.msra.mxu0 0.0
    %6853 = vmatprep.subr.mxu0 0.0
    %6854 = vmatpush2.msra.mxu0 0.0
    %6855 = vmatprep.subr.mxu0 0.0
    %6856 = vmatpush2.msra.mxu0 0.0
    %6857 = vmatprep.subr.mxu0 0.0
    %6858 = vmatpush2.msra.mxu0 0.0
    %6859 = vmatprep.subr.mxu0 0.0
    %6860 = vmatpush2.msra.mxu0 0.0
    %6861 = vmatprep.subr.mxu0 0.0
    %6862 = vmatpush2.msra.mxu0 0.0
    %6863 = vmatprep.subr.mxu0 0.0
    %6864 = vmatpush2.msra.mxu0 0.0
    %6865 = vmatprep.subr.mxu0 0.0
    %6866 = vmatpush2.msra.mxu0 0.0
    %6867 = vmatprep.subr.mxu0 0.0
    %6868 = vmatpush2.msra.mxu0 0.0
    %6869 = vmatprep.subr.mxu0 0.0
    %6870 = vmatpush2.msra.mxu0 0.0
    %6871 = vmatprep.subr.mxu0 0.0
    %6872 = vmatpush2.msra.mxu0 0.0
    %6873 = vmatprep.mubr.f32.mxu0 0.0
    %v6874 = vand.u32 %v6442, 4294901760
    %v6875 = vsub.f32 %v6442, %v6874
    %v6876 = vand.u32 %v6875, 4294901760
    %6877 = vmatmul.mubr.f32.gmra.mxu0 %v6876
    %v6878 = vpop.f32.mrf.mxu0
    %v6879 = vadd.f32 %v6777, %v6878
    %v6880 = vpop.f32.mrf.mxu0
    %6881 = vmatprep.mubr.f32.mxu0 0.0
    %v6882 = vand.u32 %v6444, 4294901760
    %v6883 = vsub.f32 %v6444, %v6882
    %v6884 = vand.u32 %v6883, 4294901760
    %6885 = vmatmul.mubr.f32.gmra.mxu0 %v6884
    %v6886 = vpop.f32.mrf.mxu0
    %v6887 = vadd.f32 %v6784, %v6886
    %v6888 = vpop.f32.mrf.mxu0
    %6889 = vmatprep.mubr.f32.mxu0 0.0
    %v6890 = vand.u32 %v6446, 4294901760
    %v6891 = vsub.f32 %v6446, %v6890
    %v6892 = vand.u32 %v6891, 4294901760
    %6893 = vmatmul.mubr.f32.gmra.mxu0 %v6892
    %v6894 = vpop.f32.mrf.mxu0
    %v6895 = vadd.f32 %v6791, %v6894
    %v6896 = vpop.f32.mrf.mxu0
    %6897 = vmatprep.mubr.f32.mxu0 0.0
    %v6898 = vand.u32 %v6448, 4294901760
    %v6899 = vsub.f32 %v6448, %v6898
    %v6900 = vand.u32 %v6899, 4294901760
    %6901 = vmatmul.mubr.f32.gmra.mxu0 %v6900
    %v6902 = vpop.f32.mrf.mxu0
    %v6903 = vadd.f32 %v6798, %v6902
    %v6904 = vpop.f32.mrf.mxu0
    %6905 = vdwg.mxu0
    %6906 = vmatprep.subr.mxu0 0.0
    %6907 = vmatpush1.msra.mxu0 0.0
    %6908 = vmatprep.subr.mxu0 0.0
    %6909 = vmatpush1.msra.mxu0 0.0
    %6910 = vmatprep.subr.mxu0 0.0
    %6911 = vmatpush1.msra.mxu0 0.0
    %6912 = vmatprep.subr.mxu0 0.0
    %6913 = vmatpush1.msra.mxu0 0.0
    %6914 = vmatprep.subr.mxu0 0.0
    %6915 = vmatpush1.msra.mxu0 0.0
    %6916 = vmatprep.subr.mxu0 0.0
    %6917 = vmatpush1.msra.mxu0 0.0
    %6918 = vmatprep.subr.mxu0 0.0
    %6919 = vmatpush1.msra.mxu0 0.0
    %6920 = vmatprep.subr.mxu0 0.0
    %6921 = vmatpush1.msra.mxu0 0.0
    %6922 = vmatprep.subr.mxu0 0.0
    %v6923 = vand.u32 %v6441, 4294901760
    %v6924 = vsub.f32 %v6441, %v6923
    %v6925 = vand.u32 %v6924, 4294901760
    %6926 = vmatpush1.msra.mxu0 %v6925
    %6927 = vmatprep.subr.mxu0 0.0
    %v6928 = vand.u32 %v6440, 4294901760
    %v6929 = vsub.f32 %v6440, %v6928
    %v6930 = vand.u32 %v6929, 4294901760
    %6931 = vmatpush1.msra.mxu0 %v6930
    %6932 = vmatprep.subr.mxu0 0.0
    %v6933 = vand.u32 %v6439, 4294901760
    %v6934 = vsub.f32 %v6439, %v6933
    %v6935 = vand.u32 %v6934, 4294901760
    %6936 = vmatpush1.msra.mxu0 %v6935
    %6937 = vmatprep.subr.mxu0 0.0
    %v6938 = vand.u32 %v6438, 4294901760
    %v6939 = vsub.f32 %v6438, %v6938
    %v6940 = vand.u32 %v6939, 4294901760
    %6941 = vmatpush1.msra.mxu0 %v6940
    %6942 = vmatprep.subr.mxu0 0.0
    %v6943 = vand.u32 %v6437, 4294901760
    %v6944 = vsub.f32 %v6437, %v6943
    %v6945 = vand.u32 %v6944, 4294901760
    %6946 = vmatpush1.msra.mxu0 %v6945
    %6947 = vmatprep.subr.mxu0 0.0
    %v6948 = vand.u32 %v6436, 4294901760
    %v6949 = vsub.f32 %v6436, %v6948
    %v6950 = vand.u32 %v6949, 4294901760
    %6951 = vmatpush1.msra.mxu0 %v6950
    %6952 = vmatprep.subr.mxu0 0.0
    %v6953 = vand.u32 %v6435, 4294901760
    %v6954 = vsub.f32 %v6435, %v6953
    %v6955 = vand.u32 %v6954, 4294901760
    %6956 = vmatpush1.msra.mxu0 %v6955
    %6957 = vmatprep.subr.mxu0 0.0
    %v6958 = vand.u32 %v6434, 4294901760
    %v6959 = vsub.f32 %v6434, %v6958
    %v6960 = vand.u32 %v6959, 4294901760
    %6961 = vmatpush1.msra.mxu0 %v6960
    %6962 = vmatprep.subr.mxu0 0.0
    %6963 = vmatpush2.msra.mxu0 0.0
    %6964 = vmatprep.subr.mxu0 0.0
    %6965 = vmatpush2.msra.mxu0 0.0
    %6966 = vmatprep.subr.mxu0 0.0
    %6967 = vmatpush2.msra.mxu0 0.0
    %6968 = vmatprep.subr.mxu0 0.0
    %6969 = vmatpush2.msra.mxu0 0.0
    %6970 = vmatprep.subr.mxu0 0.0
    %6971 = vmatpush2.msra.mxu0 0.0
    %6972 = vmatprep.subr.mxu0 0.0
    %6973 = vmatpush2.msra.mxu0 0.0
    %6974 = vmatprep.subr.mxu0 0.0
    %6975 = vmatpush2.msra.mxu0 0.0
    %6976 = vmatprep.subr.mxu0 0.0
    %6977 = vmatpush2.msra.mxu0 0.0
    %6978 = vmatprep.subr.mxu0 0.0
    %6979 = vmatpush2.msra.mxu0 0.0
    %6980 = vmatprep.subr.mxu0 0.0
    %6981 = vmatpush2.msra.mxu0 0.0
    %6982 = vmatprep.subr.mxu0 0.0
    %6983 = vmatpush2.msra.mxu0 0.0
    %6984 = vmatprep.subr.mxu0 0.0
    %6985 = vmatpush2.msra.mxu0 0.0
    %6986 = vmatprep.subr.mxu0 0.0
    %6987 = vmatpush2.msra.mxu0 0.0
    %6988 = vmatprep.subr.mxu0 0.0
    %6989 = vmatpush2.msra.mxu0 0.0
    %6990 = vmatprep.subr.mxu0 0.0
    %6991 = vmatpush2.msra.mxu0 0.0
    %6992 = vmatprep.subr.mxu0 0.0
    %6993 = vmatpush2.msra.mxu0 0.0
    %6994 = vmatprep.mubr.f32.mxu0 0.0
    %v6995 = vand.u32 %v6442, 4294901760
    %6996 = vmatmul.mubr.f32.gmra.mxu0 %v6995
    %v6997 = vpop.f32.mrf.mxu0
    %v6998 = vadd.f32 %v6879, %v6997
    %v6999 = vpop.f32.mrf.mxu0
    %7000 = vmatprep.mubr.f32.mxu0 0.0
    %v7001 = vand.u32 %v6444, 4294901760
    %7002 = vmatmul.mubr.f32.gmra.mxu0 %v7001
    %v7003 = vpop.f32.mrf.mxu0
    %v7004 = vadd.f32 %v6887, %v7003
    %v7005 = vpop.f32.mrf.mxu0
    %7006 = vmatprep.mubr.f32.mxu0 0.0
    %v7007 = vand.u32 %v6446, 4294901760
    %7008 = vmatmul.mubr.f32.gmra.mxu0 %v7007
    %v7009 = vpop.f32.mrf.mxu0
    %v7010 = vadd.f32 %v6895, %v7009
    %v7011 = vpop.f32.mrf.mxu0
    %7012 = vmatprep.mubr.f32.mxu0 0.0
    %v7013 = vand.u32 %v6448, 4294901760
    %7014 = vmatmul.mubr.f32.gmra.mxu0 %v7013
    %v7015 = vpop.f32.mrf.mxu0
    %v7016 = vadd.f32 %v6903, %v7015
    %v7017 = vpop.f32.mrf.mxu0
    %7018 = vdwg.mxu0
    %7019 = vmatprep.subr.mxu0 0.0
    %7020 = vmatpush1.msra.mxu0 0.0
    %7021 = vmatprep.subr.mxu0 0.0
    %7022 = vmatpush1.msra.mxu0 0.0
    %7023 = vmatprep.subr.mxu0 0.0
    %7024 = vmatpush1.msra.mxu0 0.0
    %7025 = vmatprep.subr.mxu0 0.0
    %7026 = vmatpush1.msra.mxu0 0.0
    %7027 = vmatprep.subr.mxu0 0.0
    %7028 = vmatpush1.msra.mxu0 0.0
    %7029 = vmatprep.subr.mxu0 0.0
    %7030 = vmatpush1.msra.mxu0 0.0
    %7031 = vmatprep.subr.mxu0 0.0
    %7032 = vmatpush1.msra.mxu0 0.0
    %7033 = vmatprep.subr.mxu0 0.0
    %7034 = vmatpush1.msra.mxu0 0.0
    %7035 = vmatprep.subr.mxu0 0.0
    %v7036 = vand.u32 %v6441, 4294901760
    %7037 = vmatpush1.msra.mxu0 %v7036
    %7038 = vmatprep.subr.mxu0 0.0
    %v7039 = vand.u32 %v6440, 4294901760
    %7040 = vmatpush1.msra.mxu0 %v7039
    %7041 = vmatprep.subr.mxu0 0.0
    %v7042 = vand.u32 %v6439, 4294901760
    %7043 = vmatpush1.msra.mxu0 %v7042
    %7044 = vmatprep.subr.mxu0 0.0
    %v7045 = vand.u32 %v6438, 4294901760
    %7046 = vmatpush1.msra.mxu0 %v7045
    %7047 = vmatprep.subr.mxu0 0.0
    %v7048 = vand.u32 %v6437, 4294901760
    %7049 = vmatpush1.msra.mxu0 %v7048
    %7050 = vmatprep.subr.mxu0 0.0
    %v7051 = vand.u32 %v6436, 4294901760
    %7052 = vmatpush1.msra.mxu0 %v7051
    %7053 = vmatprep.subr.mxu0 0.0
    %v7054 = vand.u32 %v6435, 4294901760
    %7055 = vmatpush1.msra.mxu0 %v7054
    %7056 = vmatprep.subr.mxu0 0.0
    %v7057 = vand.u32 %v6434, 4294901760
    %7058 = vmatpush1.msra.mxu0 %v7057
    %7059 = vmatprep.subr.mxu0 0.0
    %7060 = vmatpush2.msra.mxu0 0.0
    %7061 = vmatprep.subr.mxu0 0.0
    %7062 = vmatpush2.msra.mxu0 0.0
    %7063 = vmatprep.subr.mxu0 0.0
    %7064 = vmatpush2.msra.mxu0 0.0
    %7065 = vmatprep.subr.mxu0 0.0
    %7066 = vmatpush2.msra.mxu0 0.0
    %7067 = vmatprep.subr.mxu0 0.0
    %7068 = vmatpush2.msra.mxu0 0.0
    %7069 = vmatprep.subr.mxu0 0.0
    %7070 = vmatpush2.msra.mxu0 0.0
    %7071 = vmatprep.subr.mxu0 0.0
    %7072 = vmatpush2.msra.mxu0 0.0
    %7073 = vmatprep.subr.mxu0 0.0
    %7074 = vmatpush2.msra.mxu0 0.0
    %7075 = vmatprep.subr.mxu0 0.0
    %7076 = vmatpush2.msra.mxu0 0.0
    %7077 = vmatprep.subr.mxu0 0.0
    %7078 = vmatpush2.msra.mxu0 0.0
    %7079 = vmatprep.subr.mxu0 0.0
    %7080 = vmatpush2.msra.mxu0 0.0
    %7081 = vmatprep.subr.mxu0 0.0
    %7082 = vmatpush2.msra.mxu0 0.0
    %7083 = vmatprep.subr.mxu0 0.0
    %7084 = vmatpush2.msra.mxu0 0.0
    %7085 = vmatprep.subr.mxu0 0.0
    %7086 = vmatpush2.msra.mxu0 0.0
    %7087 = vmatprep.subr.mxu0 0.0
    %7088 = vmatpush2.msra.mxu0 0.0
    %7089 = vmatprep.subr.mxu0 0.0
    %7090 = vmatpush2.msra.mxu0 0.0
    %7091 = vmatprep.mubr.f32.mxu0 0.0
    %v7092 = vand.u32 %v6442, 4294901760
    %7093 = vmatmul.mubr.f32.gmra.mxu0 %v7092
    %v7094 = vpop.f32.mrf.mxu0
    %v7095 = vadd.f32 %v6998, %v7094
    %v7096 = vpop.f32.mrf.mxu0
    %7097 = vmatprep.mubr.f32.mxu0 0.0
    %v7098 = vand.u32 %v6444, 4294901760
    %7099 = vmatmul.mubr.f32.gmra.mxu0 %v7098
    %v7100 = vpop.f32.mrf.mxu0
    %v7101 = vadd.f32 %v7004, %v7100
    %v7102 = vpop.f32.mrf.mxu0
    %7103 = vmatprep.mubr.f32.mxu0 0.0
    %v7104 = vand.u32 %v6446, 4294901760
    %7105 = vmatmul.mubr.f32.gmra.mxu0 %v7104
    %v7106 = vpop.f32.mrf.mxu0
    %v7107 = vadd.f32 %v7010, %v7106
    %v7108 = vpop.f32.mrf.mxu0
    %7109 = vmatprep.mubr.f32.mxu0 0.0
    %v7110 = vand.u32 %v6448, 4294901760
    %7111 = vmatmul.mubr.f32.gmra.mxu0 %v7110
    %v7112 = vpop.f32.mrf.mxu0
    %v7113 = vadd.f32 %v7016, %v7112
    %v7114 = vpop.f32.mrf.mxu0
    %7115 = vdwg.mxu0
    %v7116 = vadd.f32 %v6402, %v7095
    %v7117 = vadd.f32 %v6408, %v7101
    %v7118 = vadd.f32 %v6414, %v7107
    %v7119 = vadd.f32 %v6420, %v7113
    %v7120 = vld [vmem:[%s6] sm:$0x1]
    %v7122 = vlaneseq
    %v7123 = vshrl.u32 %v7122, 7
    %v7124 = vsub.s32 0, %v7123
    %v7125 = vrot.slane %v7120, %v7124
    %v7127 = vadd.f32 %v7116, %v7125
    %v7128 = vadd.f32 %v7117, %v7125
    %v7129 = vadd.f32 %v7118, %v7125
    %v7130 = vadd.f32 %v7119, %v7125
    %v7131 = vmax.f32 %v7127, 0.0
    %v7132 = vmax.f32 %v7128, 0.0
    %v7133 = vmax.f32 %v7129, 0.0
    %v7134 = vmax.f32 %v7130, 0.0
    %v7135 = vld [vmem:[%s7] sm:$0xff]
    %v7136 = vld [vmem:[%s7 + $0x8] sm:$0xff]
    %v7137 = vld [vmem:[%s7 + $0x10] sm:$0xff]
    %v7138 = vld [vmem:[%s7 + $0x18] sm:$0xff]
    %v7139 = vld [vmem:[%s7 + $0x20] sm:$0xff]
    %v7140 = vld [vmem:[%s7 + $0x28] sm:$0xff]
    %v7141 = vld [vmem:[%s7 + $0x30] sm:$0xff]
    %v7142 = vld [vmem:[%s7 + $0x38] sm:$0xff]
    %v7143 = vld [vmem:[%s7 + $0x40] sm:$0xff]
    %v7144 = vld [vmem:[%s7 + $0x48] sm:$0xff]
    %v7145 = vld [vmem:[%s7 + $0x50] sm:$0xff]
    %v7146 = vld [vmem:[%s7 + $0x58] sm:$0xff]
    %v7147 = vld [vmem:[%s7 + $0x60] sm:$0xff]
    %v7148 = vld [vmem:[%s7 + $0x68] sm:$0xff]
    %v7149 = vld [vmem:[%s7 + $0x70] sm:$0xff]
    %v7150 = vld [vmem:[%s7 + $0x78] sm:$0xff]
    %v7151 = vld [vmem:[%s7 + $0x80] sm:$0xff]
    %v7152 = vld [vmem:[%s7 + $0x88] sm:$0xff]
    %v7153 = vld [vmem:[%s7 + $0x90] sm:$0xff]
    %v7154 = vld [vmem:[%s7 + $0x98] sm:$0xff]
    %v7155 = vld [vmem:[%s7 + $0xa0] sm:$0xff]
    %v7156 = vld [vmem:[%s7 + $0xa8] sm:$0xff]
    %v7157 = vld [vmem:[%s7 + $0xb0] sm:$0xff]
    %v7158 = vld [vmem:[%s7 + $0xb8] sm:$0xff]
    %v7159 = vld [vmem:[%s7 + $0xc0] sm:$0xff]
    %v7160 = vld [vmem:[%s7 + $0xc8] sm:$0xff]
    %v7161 = vld [vmem:[%s7 + $0xd0] sm:$0xff]
    %v7162 = vld [vmem:[%s7 + $0xd8] sm:$0xff]
    %v7163 = vld [vmem:[%s7 + $0xe0] sm:$0xff]
    %v7164 = vld [vmem:[%s7 + $0xe8] sm:$0xff]
    %v7165 = vld [vmem:[%s7 + $0xf0] sm:$0xff]
    %v7166 = vld [vmem:[%s7 + $0xf8] sm:$0xff]
    %v7167 = vld [vmem:[%s7 + $0x100] sm:$0xff]
    %v7168 = vld [vmem:[%s7 + $0x108] sm:$0xff]
    %v7169 = vld [vmem:[%s7 + $0x110] sm:$0xff]
    %v7170 = vld [vmem:[%s7 + $0x118] sm:$0xff]
    %v7171 = vld [vmem:[%s7 + $0x120] sm:$0xff]
    %v7172 = vld [vmem:[%s7 + $0x128] sm:$0xff]
    %v7173 = vld [vmem:[%s7 + $0x130] sm:$0xff]
    %v7174 = vld [vmem:[%s7 + $0x138] sm:$0xff]
    %v7175 = vld [vmem:[%s7 + $0x140] sm:$0xff]
    %v7176 = vld [vmem:[%s7 + $0x148] sm:$0xff]
    %v7177 = vld [vmem:[%s7 + $0x150] sm:$0xff]
    %v7178 = vld [vmem:[%s7 + $0x158] sm:$0xff]
    %v7179 = vld [vmem:[%s7 + $0x160] sm:$0xff]
    %v7180 = vld [vmem:[%s7 + $0x168] sm:$0xff]
    %v7181 = vld [vmem:[%s7 + $0x170] sm:$0xff]
    %v7182 = vld [vmem:[%s7 + $0x178] sm:$0xff]
    %v7183 = vld [vmem:[%s7 + $0x180] sm:$0xff]
    %v7184 = vld [vmem:[%s7 + $0x188] sm:$0xff]
    %v7185 = vld [vmem:[%s7 + $0x190] sm:$0xff]
    %v7186 = vld [vmem:[%s7 + $0x198] sm:$0xff]
    %v7187 = vld [vmem:[%s7 + $0x1a0] sm:$0xff]
    %v7188 = vld [vmem:[%s7 + $0x1a8] sm:$0xff]
    %v7189 = vld [vmem:[%s7 + $0x1b0] sm:$0xff]
    %v7190 = vld [vmem:[%s7 + $0x1b8] sm:$0xff]
    %v7191 = vld [vmem:[%s7 + $0x1c0] sm:$0xff]
    %v7192 = vld [vmem:[%s7 + $0x1c8] sm:$0xff]
    %v7193 = vld [vmem:[%s7 + $0x1d0] sm:$0xff]
    %v7194 = vld [vmem:[%s7 + $0x1d8] sm:$0xff]
    %v7195 = vld [vmem:[%s7 + $0x1e0] sm:$0xff]
    %v7196 = vld [vmem:[%s7 + $0x1e8] sm:$0xff]
    %v7197 = vld [vmem:[%s7 + $0x1f0] sm:$0xff]
    %v7198 = vld [vmem:[%s7 + $0x1f8] sm:$0xff]
    %v7199 = vld [vmem:[%s9] sm:$0xf]
    %v7201 = vlaneseq
    %v7202 = vshrl.u32 %v7201, 7
    %v7203 = vsub.s32 0, %v7202
    %v7204 = vrot.slane %v7199, %v7203
    %v7205 = vlaneseq
    %v7206 = vshrl.u32 %v7205, 7
    %v7207 = vsub.s32 1, %v7206
    %v7208 = vrot.slane %v7199, %v7207
    %v7209 = vlaneseq
    %v7210 = vshrl.u32 %v7209, 7
    %v7211 = vsub.s32 2, %v7210
    %v7212 = vrot.slane %v7199, %v7211
    %v7213 = vlaneseq
    %v7214 = vshrl.u32 %v7213, 7
    %v7215 = vsub.s32 3, %v7214
    %v7216 = vrot.slane %v7199, %v7215
    %v7221 = vand.u32 %v7196, 4294901760
    %7222 = vmatprep.subr.mxu0 %v7221
    %v7223 = vand.u32 %v7195, 4294901760
    %7224 = vmatpush1.msra.mxu0 %v7223
    %v7225 = vand.u32 %v7192, 4294901760
    %7226 = vmatprep.subr.mxu0 %v7225
    %v7227 = vand.u32 %v7191, 4294901760
    %7228 = vmatpush1.msra.mxu0 %v7227
    %v7229 = vand.u32 %v7188, 4294901760
    %7230 = vmatprep.subr.mxu0 %v7229
    %v7231 = vand.u32 %v7187, 4294901760
    %7232 = vmatpush1.msra.mxu0 %v7231
    %v7233 = vand.u32 %v7184, 4294901760
    %7234 = vmatprep.subr.mxu0 %v7233
    %v7235 = vand.u32 %v7183, 4294901760
    %7236 = vmatpush1.msra.mxu0 %v7235
    %v7237 = vand.u32 %v7180, 4294901760
    %7238 = vmatprep.subr.mxu0 %v7237
    %v7239 = vand.u32 %v7179, 4294901760
    %7240 = vmatpush1.msra.mxu0 %v7239
    %v7241 = vand.u32 %v7176, 4294901760
    %7242 = vmatprep.subr.mxu0 %v7241
    %v7243 = vand.u32 %v7175, 4294901760
    %7244 = vmatpush1.msra.mxu0 %v7243
    %v7245 = vand.u32 %v7172, 4294901760
    %7246 = vmatprep.subr.mxu0 %v7245
    %v7247 = vand.u32 %v7171, 4294901760
    %7248 = vmatpush1.msra.mxu0 %v7247
    %v7249 = vand.u32 %v7168, 4294901760
    %7250 = vmatprep.subr.mxu0 %v7249
    %v7251 = vand.u32 %v7167, 4294901760
    %7252 = vmatpush1.msra.mxu0 %v7251
    %v7253 = vand.u32 %v7164, 4294901760
    %7254 = vmatprep.subr.mxu0 %v7253
    %v7255 = vand.u32 %v7163, 4294901760
    %7256 = vmatpush1.msra.mxu0 %v7255
    %v7257 = vand.u32 %v7160, 4294901760
    %7258 = vmatprep.subr.mxu0 %v7257
    %v7259 = vand.u32 %v7159, 4294901760
    %7260 = vmatpush1.msra.mxu0 %v7259
    %v7261 = vand.u32 %v7156, 4294901760
    %7262 = vmatprep.subr.mxu0 %v7261
    %v7263 = vand.u32 %v7155, 4294901760
    %7264 = vmatpush1.msra.mxu0 %v7263
    %v7265 = vand.u32 %v7152, 4294901760
    %7266 = vmatprep.subr.mxu0 %v7265
    %v7267 = vand.u32 %v7151, 4294901760
    %7268 = vmatpush1.msra.mxu0 %v7267
    %v7269 = vand.u32 %v7148, 4294901760
    %7270 = vmatprep.subr.mxu0 %v7269
    %v7271 = vand.u32 %v7147, 4294901760
    %7272 = vmatpush1.msra.mxu0 %v7271
    %v7273 = vand.u32 %v7144, 4294901760
    %7274 = vmatprep.subr.mxu0 %v7273
    %v7275 = vand.u32 %v7143, 4294901760
    %7276 = vmatpush1.msra.mxu0 %v7275
    %v7277 = vand.u32 %v7140, 4294901760
    %7278 = vmatprep.subr.mxu0 %v7277
    %v7279 = vand.u32 %v7139, 4294901760
    %7280 = vmatpush1.msra.mxu0 %v7279
    %v7281 = vand.u32 %v7136, 4294901760
    %7282 = vmatprep.subr.mxu0 %v7281
    %v7283 = vand.u32 %v7135, 4294901760
    %7284 = vmatpush1.msra.mxu0 %v7283
    %7285 = vmatprep.subr.mxu0 0.0
    %7286 = vmatpush2.msra.mxu0 0.0
    %7287 = vmatprep.subr.mxu0 0.0
    %7288 = vmatpush2.msra.mxu0 0.0
    %7289 = vmatprep.subr.mxu0 0.0
    %7290 = vmatpush2.msra.mxu0 0.0
    %7291 = vmatprep.subr.mxu0 0.0
    %7292 = vmatpush2.msra.mxu0 0.0
    %7293 = vmatprep.subr.mxu0 0.0
    %7294 = vmatpush2.msra.mxu0 0.0
    %7295 = vmatprep.subr.mxu0 0.0
    %7296 = vmatpush2.msra.mxu0 0.0
    %7297 = vmatprep.subr.mxu0 0.0
    %7298 = vmatpush2.msra.mxu0 0.0
    %7299 = vmatprep.subr.mxu0 0.0
    %7300 = vmatpush2.msra.mxu0 0.0
    %7301 = vmatprep.subr.mxu0 0.0
    %7302 = vmatpush2.msra.mxu0 0.0
    %7303 = vmatprep.subr.mxu0 0.0
    %7304 = vmatpush2.msra.mxu0 0.0
    %7305 = vmatprep.subr.mxu0 0.0
    %7306 = vmatpush2.msra.mxu0 0.0
    %7307 = vmatprep.subr.mxu0 0.0
    %7308 = vmatpush2.msra.mxu0 0.0
    %7309 = vmatprep.subr.mxu0 0.0
    %7310 = vmatpush2.msra.mxu0 0.0
    %7311 = vmatprep.subr.mxu0 0.0
    %7312 = vmatpush2.msra.mxu0 0.0
    %7313 = vmatprep.subr.mxu0 0.0
    %7314 = vmatpush2.msra.mxu0 0.0
    %7315 = vmatprep.subr.mxu0 0.0
    %7316 = vmatpush2.msra.mxu0 0.0
    %7317 = vmatprep.mubr.f32.mxu0 0.0
    %v7318 = vand.u32 %v7131, 4294901760
    %v7319 = vsub.f32 %v7131, %v7318
    %v7320 = vand.u32 %v7319, 4294901760
    %v7321 = vsub.f32 %v7319, %v7320
    %v7322 = vand.u32 %v7321, 4294901760
    %7323 = vmatmul.mubr.f32.gmra.mxu0 %v7322
    %v7324 = vpop.f32.mrf.mxu0
    %v7325 = vadd.f32 %v7204, %v7324
    %v7326 = vpop.f32.mrf.mxu0
    %v7327 = vadd.f32 %v7208, %v7326
    %7328 = vmatprep.mubr.f32.mxu0 0.0
    %v7329 = vand.u32 %v7132, 4294901760
    %v7330 = vsub.f32 %v7132, %v7329
    %v7331 = vand.u32 %v7330, 4294901760
    %v7332 = vsub.f32 %v7330, %v7331
    %v7333 = vand.u32 %v7332, 4294901760
    %7334 = vmatmul.mubr.f32.gmra.mxu0 %v7333
    %v7335 = vpop.f32.mrf.mxu0
    %v7336 = vadd.f32 %v7204, %v7335
    %v7337 = vpop.f32.mrf.mxu0
    %v7338 = vadd.f32 %v7208, %v7337
    %7339 = vmatprep.mubr.f32.mxu0 0.0
    %v7340 = vand.u32 %v7133, 4294901760
    %v7341 = vsub.f32 %v7133, %v7340
    %v7342 = vand.u32 %v7341, 4294901760
    %v7343 = vsub.f32 %v7341, %v7342
    %v7344 = vand.u32 %v7343, 4294901760
    %7345 = vmatmul.mubr.f32.gmra.mxu0 %v7344
    %v7346 = vpop.f32.mrf.mxu0
    %v7347 = vadd.f32 %v7204, %v7346
    %v7348 = vpop.f32.mrf.mxu0
    %v7349 = vadd.f32 %v7208, %v7348
    %7350 = vmatprep.mubr.f32.mxu0 0.0
    %v7351 = vand.u32 %v7134, 4294901760
    %v7352 = vsub.f32 %v7134, %v7351
    %v7353 = vand.u32 %v7352, 4294901760
    %v7354 = vsub.f32 %v7352, %v7353
    %v7355 = vand.u32 %v7354, 4294901760
    %7356 = vmatmul.mubr.f32.gmra.mxu0 %v7355
    %v7357 = vpop.f32.mrf.mxu0
    %v7358 = vadd.f32 %v7204, %v7357
    %v7359 = vpop.f32.mrf.mxu0
    %v7360 = vadd.f32 %v7208, %v7359
    %7361 = vdwg.mxu0
    %v7362 = vand.u32 %v7196, 4294901760
    %v7363 = vsub.f32 %v7196, %v7362
    %v7364 = vand.u32 %v7363, 4294901760
    %v7365 = vsub.f32 %v7363, %v7364
    %v7366 = vand.u32 %v7365, 4294901760
    %7367 = vmatprep.subr.mxu0 %v7366
    %v7368 = vand.u32 %v7195, 4294901760
    %v7369 = vsub.f32 %v7195, %v7368
    %v7370 = vand.u32 %v7369, 4294901760
    %v7371 = vsub.f32 %v7369, %v7370
    %v7372 = vand.u32 %v7371, 4294901760
    %7373 = vmatpush1.msra.mxu0 %v7372
    %v7374 = vand.u32 %v7192, 4294901760
    %v7375 = vsub.f32 %v7192, %v7374
    %v7376 = vand.u32 %v7375, 4294901760
    %v7377 = vsub.f32 %v7375, %v7376
    %v7378 = vand.u32 %v7377, 4294901760
    %7379 = vmatprep.subr.mxu0 %v7378
    %v7380 = vand.u32 %v7191, 4294901760
    %v7381 = vsub.f32 %v7191, %v7380
    %v7382 = vand.u32 %v7381, 4294901760
    %v7383 = vsub.f32 %v7381, %v7382
    %v7384 = vand.u32 %v7383, 4294901760
    %7385 = vmatpush1.msra.mxu0 %v7384
    %v7386 = vand.u32 %v7188, 4294901760
    %v7387 = vsub.f32 %v7188, %v7386
    %v7388 = vand.u32 %v7387, 4294901760
    %v7389 = vsub.f32 %v7387, %v7388
    %v7390 = vand.u32 %v7389, 4294901760
    %7391 = vmatprep.subr.mxu0 %v7390
    %v7392 = vand.u32 %v7187, 4294901760
    %v7393 = vsub.f32 %v7187, %v7392
    %v7394 = vand.u32 %v7393, 4294901760
    %v7395 = vsub.f32 %v7393, %v7394
    %v7396 = vand.u32 %v7395, 4294901760
    %7397 = vmatpush1.msra.mxu0 %v7396
    %v7398 = vand.u32 %v7184, 4294901760
    %v7399 = vsub.f32 %v7184, %v7398
    %v7400 = vand.u32 %v7399, 4294901760
    %v7401 = vsub.f32 %v7399, %v7400
    %v7402 = vand.u32 %v7401, 4294901760
    %7403 = vmatprep.subr.mxu0 %v7402
    %v7404 = vand.u32 %v7183, 4294901760
    %v7405 = vsub.f32 %v7183, %v7404
    %v7406 = vand.u32 %v7405, 4294901760
    %v7407 = vsub.f32 %v7405, %v7406
    %v7408 = vand.u32 %v7407, 4294901760
    %7409 = vmatpush1.msra.mxu0 %v7408
    %v7410 = vand.u32 %v7180, 4294901760
    %v7411 = vsub.f32 %v7180, %v7410
    %v7412 = vand.u32 %v7411, 4294901760
    %v7413 = vsub.f32 %v7411, %v7412
    %v7414 = vand.u32 %v7413, 4294901760
    %7415 = vmatprep.subr.mxu0 %v7414
    %v7416 = vand.u32 %v7179, 4294901760
    %v7417 = vsub.f32 %v7179, %v7416
    %v7418 = vand.u32 %v7417, 4294901760
    %v7419 = vsub.f32 %v7417, %v7418
    %v7420 = vand.u32 %v7419, 4294901760
    %7421 = vmatpush1.msra.mxu0 %v7420
    %v7422 = vand.u32 %v7176, 4294901760
    %v7423 = vsub.f32 %v7176, %v7422
    %v7424 = vand.u32 %v7423, 4294901760
    %v7425 = vsub.f32 %v7423, %v7424
    %v7426 = vand.u32 %v7425, 4294901760
    %7427 = vmatprep.subr.mxu0 %v7426
    %v7428 = vand.u32 %v7175, 4294901760
    %v7429 = vsub.f32 %v7175, %v7428
    %v7430 = vand.u32 %v7429, 4294901760
    %v7431 = vsub.f32 %v7429, %v7430
    %v7432 = vand.u32 %v7431, 4294901760
    %7433 = vmatpush1.msra.mxu0 %v7432
    %v7434 = vand.u32 %v7172, 4294901760
    %v7435 = vsub.f32 %v7172, %v7434
    %v7436 = vand.u32 %v7435, 4294901760
    %v7437 = vsub.f32 %v7435, %v7436
    %v7438 = vand.u32 %v7437, 4294901760
    %7439 = vmatprep.subr.mxu0 %v7438
    %v7440 = vand.u32 %v7171, 4294901760
    %v7441 = vsub.f32 %v7171, %v7440
    %v7442 = vand.u32 %v7441, 4294901760
    %v7443 = vsub.f32 %v7441, %v7442
    %v7444 = vand.u32 %v7443, 4294901760
    %7445 = vmatpush1.msra.mxu0 %v7444
    %v7446 = vand.u32 %v7168, 4294901760
    %v7447 = vsub.f32 %v7168, %v7446
    %v7448 = vand.u32 %v7447, 4294901760
    %v7449 = vsub.f32 %v7447, %v7448
    %v7450 = vand.u32 %v7449, 4294901760
    %7451 = vmatprep.subr.mxu0 %v7450
    %v7452 = vand.u32 %v7167, 4294901760
    %v7453 = vsub.f32 %v7167, %v7452
    %v7454 = vand.u32 %v7453, 4294901760
    %v7455 = vsub.f32 %v7453, %v7454
    %v7456 = vand.u32 %v7455, 4294901760
    %7457 = vmatpush1.msra.mxu0 %v7456
    %v7458 = vand.u32 %v7164, 4294901760
    %v7459 = vsub.f32 %v7164, %v7458
    %v7460 = vand.u32 %v7459, 4294901760
    %v7461 = vsub.f32 %v7459, %v7460
    %v7462 = vand.u32 %v7461, 4294901760
    %7463 = vmatprep.subr.mxu0 %v7462
    %v7464 = vand.u32 %v7163, 4294901760
    %v7465 = vsub.f32 %v7163, %v7464
    %v7466 = vand.u32 %v7465, 4294901760
    %v7467 = vsub.f32 %v7465, %v7466
    %v7468 = vand.u32 %v7467, 4294901760
    %7469 = vmatpush1.msra.mxu0 %v7468
    %v7470 = vand.u32 %v7160, 4294901760
    %v7471 = vsub.f32 %v7160, %v7470
    %v7472 = vand.u32 %v7471, 4294901760
    %v7473 = vsub.f32 %v7471, %v7472
    %v7474 = vand.u32 %v7473, 4294901760
    %7475 = vmatprep.subr.mxu0 %v7474
    %v7476 = vand.u32 %v7159, 4294901760
    %v7477 = vsub.f32 %v7159, %v7476
    %v7478 = vand.u32 %v7477, 4294901760
    %v7479 = vsub.f32 %v7477, %v7478
    %v7480 = vand.u32 %v7479, 4294901760
    %7481 = vmatpush1.msra.mxu0 %v7480
    %v7482 = vand.u32 %v7156, 4294901760
    %v7483 = vsub.f32 %v7156, %v7482
    %v7484 = vand.u32 %v7483, 4294901760
    %v7485 = vsub.f32 %v7483, %v7484
    %v7486 = vand.u32 %v7485, 4294901760
    %7487 = vmatprep.subr.mxu0 %v7486
    %v7488 = vand.u32 %v7155, 4294901760
    %v7489 = vsub.f32 %v7155, %v7488
    %v7490 = vand.u32 %v7489, 4294901760
    %v7491 = vsub.f32 %v7489, %v7490
    %v7492 = vand.u32 %v7491, 4294901760
    %7493 = vmatpush1.msra.mxu0 %v7492
    %v7494 = vand.u32 %v7152, 4294901760
    %v7495 = vsub.f32 %v7152, %v7494
    %v7496 = vand.u32 %v7495, 4294901760
    %v7497 = vsub.f32 %v7495, %v7496
    %v7498 = vand.u32 %v7497, 4294901760
    %7499 = vmatprep.subr.mxu0 %v7498
    %v7500 = vand.u32 %v7151, 4294901760
    %v7501 = vsub.f32 %v7151, %v7500
    %v7502 = vand.u32 %v7501, 4294901760
    %v7503 = vsub.f32 %v7501, %v7502
    %v7504 = vand.u32 %v7503, 4294901760
    %7505 = vmatpush1.msra.mxu0 %v7504
    %v7506 = vand.u32 %v7148, 4294901760
    %v7507 = vsub.f32 %v7148, %v7506
    %v7508 = vand.u32 %v7507, 4294901760
    %v7509 = vsub.f32 %v7507, %v7508
    %v7510 = vand.u32 %v7509, 4294901760
    %7511 = vmatprep.subr.mxu0 %v7510
    %v7512 = vand.u32 %v7147, 4294901760
    %v7513 = vsub.f32 %v7147, %v7512
    %v7514 = vand.u32 %v7513, 4294901760
    %v7515 = vsub.f32 %v7513, %v7514
    %v7516 = vand.u32 %v7515, 4294901760
    %7517 = vmatpush1.msra.mxu0 %v7516
    %v7518 = vand.u32 %v7144, 4294901760
    %v7519 = vsub.f32 %v7144, %v7518
    %v7520 = vand.u32 %v7519, 4294901760
    %v7521 = vsub.f32 %v7519, %v7520
    %v7522 = vand.u32 %v7521, 4294901760
    %7523 = vmatprep.subr.mxu0 %v7522
    %v7524 = vand.u32 %v7143, 4294901760
    %v7525 = vsub.f32 %v7143, %v7524
    %v7526 = vand.u32 %v7525, 4294901760
    %v7527 = vsub.f32 %v7525, %v7526
    %v7528 = vand.u32 %v7527, 4294901760
    %7529 = vmatpush1.msra.mxu0 %v7528
    %v7530 = vand.u32 %v7140, 4294901760
    %v7531 = vsub.f32 %v7140, %v7530
    %v7532 = vand.u32 %v7531, 4294901760
    %v7533 = vsub.f32 %v7531, %v7532
    %v7534 = vand.u32 %v7533, 4294901760
    %7535 = vmatprep.subr.mxu0 %v7534
    %v7536 = vand.u32 %v7139, 4294901760
    %v7537 = vsub.f32 %v7139, %v7536
    %v7538 = vand.u32 %v7537, 4294901760
    %v7539 = vsub.f32 %v7537, %v7538
    %v7540 = vand.u32 %v7539, 4294901760
    %7541 = vmatpush1.msra.mxu0 %v7540
    %v7542 = vand.u32 %v7136, 4294901760
    %v7543 = vsub.f32 %v7136, %v7542
    %v7544 = vand.u32 %v7543, 4294901760
    %v7545 = vsub.f32 %v7543, %v7544
    %v7546 = vand.u32 %v7545, 4294901760
    %7547 = vmatprep.subr.mxu0 %v7546
    %v7548 = vand.u32 %v7135, 4294901760
    %v7549 = vsub.f32 %v7135, %v7548
    %v7550 = vand.u32 %v7549, 4294901760
    %v7551 = vsub.f32 %v7549, %v7550
    %v7552 = vand.u32 %v7551, 4294901760
    %7553 = vmatpush1.msra.mxu0 %v7552
    %7554 = vmatprep.subr.mxu0 0.0
    %7555 = vmatpush2.msra.mxu0 0.0
    %7556 = vmatprep.subr.mxu0 0.0
    %7557 = vmatpush2.msra.mxu0 0.0
    %7558 = vmatprep.subr.mxu0 0.0
    %7559 = vmatpush2.msra.mxu0 0.0
    %7560 = vmatprep.subr.mxu0 0.0
    %7561 = vmatpush2.msra.mxu0 0.0
    %7562 = vmatprep.subr.mxu0 0.0
    %7563 = vmatpush2.msra.mxu0 0.0
    %7564 = vmatprep.subr.mxu0 0.0
    %7565 = vmatpush2.msra.mxu0 0.0
    %7566 = vmatprep.subr.mxu0 0.0
    %7567 = vmatpush2.msra.mxu0 0.0
    %7568 = vmatprep.subr.mxu0 0.0
    %7569 = vmatpush2.msra.mxu0 0.0
    %7570 = vmatprep.subr.mxu0 0.0
    %7571 = vmatpush2.msra.mxu0 0.0
    %7572 = vmatprep.subr.mxu0 0.0
    %7573 = vmatpush2.msra.mxu0 0.0
    %7574 = vmatprep.subr.mxu0 0.0
    %7575 = vmatpush2.msra.mxu0 0.0
    %7576 = vmatprep.subr.mxu0 0.0
    %7577 = vmatpush2.msra.mxu0 0.0
    %7578 = vmatprep.subr.mxu0 0.0
    %7579 = vmatpush2.msra.mxu0 0.0
    %7580 = vmatprep.subr.mxu0 0.0
    %7581 = vmatpush2.msra.mxu0 0.0
    %7582 = vmatprep.subr.mxu0 0.0
    %7583 = vmatpush2.msra.mxu0 0.0
    %7584 = vmatprep.subr.mxu0 0.0
    %7585 = vmatpush2.msra.mxu0 0.0
    %7586 = vmatprep.mubr.f32.mxu0 0.0
    %v7587 = vand.u32 %v7131, 4294901760
    %7588 = vmatmul.mubr.f32.gmra.mxu0 %v7587
    %v7589 = vpop.f32.mrf.mxu0
    %v7590 = vadd.f32 %v7325, %v7589
    %v7591 = vpop.f32.mrf.mxu0
    %v7592 = vadd.f32 %v7327, %v7591
    %7593 = vmatprep.mubr.f32.mxu0 0.0
    %v7594 = vand.u32 %v7132, 4294901760
    %7595 = vmatmul.mubr.f32.gmra.mxu0 %v7594
    %v7596 = vpop.f32.mrf.mxu0
    %v7597 = vadd.f32 %v7336, %v7596
    %v7598 = vpop.f32.mrf.mxu0
    %v7599 = vadd.f32 %v7338, %v7598
    %7600 = vmatprep.mubr.f32.mxu0 0.0
    %v7601 = vand.u32 %v7133, 4294901760
    %7602 = vmatmul.mubr.f32.gmra.mxu0 %v7601
    %v7603 = vpop.f32.mrf.mxu0
    %v7604 = vadd.f32 %v7347, %v7603
    %v7605 = vpop.f32.mrf.mxu0
    %v7606 = vadd.f32 %v7349, %v7605
    %7607 = vmatprep.mubr.f32.mxu0 0.0
    %v7608 = vand.u32 %v7134, 4294901760
    %7609 = vmatmul.mubr.f32.gmra.mxu0 %v7608
    %v7610 = vpop.f32.mrf.mxu0
    %v7611 = vadd.f32 %v7358, %v7610
    %v7612 = vpop.f32.mrf.mxu0
    %v7613 = vadd.f32 %v7360, %v7612
    %7614 = vdwg.mxu0
    %v7615 = vand.u32 %v7196, 4294901760
    %v7616 = vsub.f32 %v7196, %v7615
    %7617 = vmatprep.subr.mxu0 %v7616
    %v7618 = vand.u32 %v7195, 4294901760
    %v7619 = vsub.f32 %v7195, %v7618
    %7620 = vmatpush1.msra.mxu0 %v7619
    %v7621 = vand.u32 %v7192, 4294901760
    %v7622 = vsub.f32 %v7192, %v7621
    %7623 = vmatprep.subr.mxu0 %v7622
    %v7624 = vand.u32 %v7191, 4294901760
    %v7625 = vsub.f32 %v7191, %v7624
    %7626 = vmatpush1.msra.mxu0 %v7625
    %v7627 = vand.u32 %v7188, 4294901760
    %v7628 = vsub.f32 %v7188, %v7627
    %7629 = vmatprep.subr.mxu0 %v7628
    %v7630 = vand.u32 %v7187, 4294901760
    %v7631 = vsub.f32 %v7187, %v7630
    %7632 = vmatpush1.msra.mxu0 %v7631
    %v7633 = vand.u32 %v7184, 4294901760
    %v7634 = vsub.f32 %v7184, %v7633
    %7635 = vmatprep.subr.mxu0 %v7634
    %v7636 = vand.u32 %v7183, 4294901760
    %v7637 = vsub.f32 %v7183, %v7636
    %7638 = vmatpush1.msra.mxu0 %v7637
    %v7639 = vand.u32 %v7180, 4294901760
    %v7640 = vsub.f32 %v7180, %v7639
    %7641 = vmatprep.subr.mxu0 %v7640
    %v7642 = vand.u32 %v7179, 4294901760
    %v7643 = vsub.f32 %v7179, %v7642
    %7644 = vmatpush1.msra.mxu0 %v7643
    %v7645 = vand.u32 %v7176, 4294901760
    %v7646 = vsub.f32 %v7176, %v7645
    %7647 = vmatprep.subr.mxu0 %v7646
    %v7648 = vand.u32 %v7175, 4294901760
    %v7649 = vsub.f32 %v7175, %v7648
    %7650 = vmatpush1.msra.mxu0 %v7649
    %v7651 = vand.u32 %v7172, 4294901760
    %v7652 = vsub.f32 %v7172, %v7651
    %7653 = vmatprep.subr.mxu0 %v7652
    %v7654 = vand.u32 %v7171, 4294901760
    %v7655 = vsub.f32 %v7171, %v7654
    %7656 = vmatpush1.msra.mxu0 %v7655
    %v7657 = vand.u32 %v7168, 4294901760
    %v7658 = vsub.f32 %v7168, %v7657
    %7659 = vmatprep.subr.mxu0 %v7658
    %v7660 = vand.u32 %v7167, 4294901760
    %v7661 = vsub.f32 %v7167, %v7660
    %7662 = vmatpush1.msra.mxu0 %v7661
    %v7663 = vand.u32 %v7164, 4294901760
    %v7664 = vsub.f32 %v7164, %v7663
    %7665 = vmatprep.subr.mxu0 %v7664
    %v7666 = vand.u32 %v7163, 4294901760
    %v7667 = vsub.f32 %v7163, %v7666
    %7668 = vmatpush1.msra.mxu0 %v7667
    %v7669 = vand.u32 %v7160, 4294901760
    %v7670 = vsub.f32 %v7160, %v7669
    %7671 = vmatprep.subr.mxu0 %v7670
    %v7672 = vand.u32 %v7159, 4294901760
    %v7673 = vsub.f32 %v7159, %v7672
    %7674 = vmatpush1.msra.mxu0 %v7673
    %v7675 = vand.u32 %v7156, 4294901760
    %v7676 = vsub.f32 %v7156, %v7675
    %7677 = vmatprep.subr.mxu0 %v7676
    %v7678 = vand.u32 %v7155, 4294901760
    %v7679 = vsub.f32 %v7155, %v7678
    %7680 = vmatpush1.msra.mxu0 %v7679
    %v7681 = vand.u32 %v7152, 4294901760
    %v7682 = vsub.f32 %v7152, %v7681
    %7683 = vmatprep.subr.mxu0 %v7682
    %v7684 = vand.u32 %v7151, 4294901760
    %v7685 = vsub.f32 %v7151, %v7684
    %7686 = vmatpush1.msra.mxu0 %v7685
    %v7687 = vand.u32 %v7148, 4294901760
    %v7688 = vsub.f32 %v7148, %v7687
    %7689 = vmatprep.subr.mxu0 %v7688
    %v7690 = vand.u32 %v7147, 4294901760
    %v7691 = vsub.f32 %v7147, %v7690
    %7692 = vmatpush1.msra.mxu0 %v7691
    %v7693 = vand.u32 %v7144, 4294901760
    %v7694 = vsub.f32 %v7144, %v7693
    %7695 = vmatprep.subr.mxu0 %v7694
    %v7696 = vand.u32 %v7143, 4294901760
    %v7697 = vsub.f32 %v7143, %v7696
    %7698 = vmatpush1.msra.mxu0 %v7697
    %v7699 = vand.u32 %v7140, 4294901760
    %v7700 = vsub.f32 %v7140, %v7699
    %7701 = vmatprep.subr.mxu0 %v7700
    %v7702 = vand.u32 %v7139, 4294901760
    %v7703 = vsub.f32 %v7139, %v7702
    %7704 = vmatpush1.msra.mxu0 %v7703
    %v7705 = vand.u32 %v7136, 4294901760
    %v7706 = vsub.f32 %v7136, %v7705
    %7707 = vmatprep.subr.mxu0 %v7706
    %v7708 = vand.u32 %v7135, 4294901760
    %v7709 = vsub.f32 %v7135, %v7708
    %7710 = vmatpush1.msra.mxu0 %v7709
    %7711 = vmatprep.subr.mxu0 0.0
    %7712 = vmatpush2.msra.mxu0 0.0
    %7713 = vmatprep.subr.mxu0 0.0
    %7714 = vmatpush2.msra.mxu0 0.0
    %7715 = vmatprep.subr.mxu0 0.0
    %7716 = vmatpush2.msra.mxu0 0.0
    %7717 = vmatprep.subr.mxu0 0.0
    %7718 = vmatpush2.msra.mxu0 0.0
    %7719 = vmatprep.subr.mxu0 0.0
    %7720 = vmatpush2.msra.mxu0 0.0
    %7721 = vmatprep.subr.mxu0 0.0
    %7722 = vmatpush2.msra.mxu0 0.0
    %7723 = vmatprep.subr.mxu0 0.0
    %7724 = vmatpush2.msra.mxu0 0.0
    %7725 = vmatprep.subr.mxu0 0.0
    %7726 = vmatpush2.msra.mxu0 0.0
    %7727 = vmatprep.subr.mxu0 0.0
    %7728 = vmatpush2.msra.mxu0 0.0
    %7729 = vmatprep.subr.mxu0 0.0
    %7730 = vmatpush2.msra.mxu0 0.0
    %7731 = vmatprep.subr.mxu0 0.0
    %7732 = vmatpush2.msra.mxu0 0.0
    %7733 = vmatprep.subr.mxu0 0.0
    %7734 = vmatpush2.msra.mxu0 0.0
    %7735 = vmatprep.subr.mxu0 0.0
    %7736 = vmatpush2.msra.mxu0 0.0
    %7737 = vmatprep.subr.mxu0 0.0
    %7738 = vmatpush2.msra.mxu0 0.0
    %7739 = vmatprep.subr.mxu0 0.0
    %7740 = vmatpush2.msra.mxu0 0.0
    %7741 = vmatprep.subr.mxu0 0.0
    %7742 = vmatpush2.msra.mxu0 0.0
    %7743 = vmatprep.mubr.f32.mxu0 0.0
    %v7744 = vand.u32 %v7131, 4294901760
    %v7745 = vsub.f32 %v7131, %v7744
    %7746 = vmatmul.mubr.f32.gmra.mxu0 %v7745
    %v7747 = vpop.f32.mrf.mxu0
    %v7748 = vadd.f32 %v7590, %v7747
    %v7749 = vpop.f32.mrf.mxu0
    %v7750 = vadd.f32 %v7592, %v7749
    %7751 = vmatprep.mubr.f32.mxu0 0.0
    %v7752 = vand.u32 %v7132, 4294901760
    %v7753 = vsub.f32 %v7132, %v7752
    %7754 = vmatmul.mubr.f32.gmra.mxu0 %v7753
    %v7755 = vpop.f32.mrf.mxu0
    %v7756 = vadd.f32 %v7597, %v7755
    %v7757 = vpop.f32.mrf.mxu0
    %v7758 = vadd.f32 %v7599, %v7757
    %7759 = vmatprep.mubr.f32.mxu0 0.0
    %v7760 = vand.u32 %v7133, 4294901760
    %v7761 = vsub.f32 %v7133, %v7760
    %7762 = vmatmul.mubr.f32.gmra.mxu0 %v7761
    %v7763 = vpop.f32.mrf.mxu0
    %v7764 = vadd.f32 %v7604, %v7763
    %v7765 = vpop.f32.mrf.mxu0
    %v7766 = vadd.f32 %v7606, %v7765
    %7767 = vmatprep.mubr.f32.mxu0 0.0
    %v7768 = vand.u32 %v7134, 4294901760
    %v7769 = vsub.f32 %v7134, %v7768
    %7770 = vmatmul.mubr.f32.gmra.mxu0 %v7769
    %v7771 = vpop.f32.mrf.mxu0
    %v7772 = vadd.f32 %v7611, %v7771
    %v7773 = vpop.f32.mrf.mxu0
    %v7774 = vadd.f32 %v7613, %v7773
    %7775 = vdwg.mxu0
    %v7776 = vand.u32 %v7196, 4294901760
    %7777 = vmatprep.subr.mxu0 %v7776
    %v7778 = vand.u32 %v7195, 4294901760
    %7779 = vmatpush1.msra.mxu0 %v7778
    %v7780 = vand.u32 %v7192, 4294901760
    %7781 = vmatprep.subr.mxu0 %v7780
    %v7782 = vand.u32 %v7191, 4294901760
    %7783 = vmatpush1.msra.mxu0 %v7782
    %v7784 = vand.u32 %v7188, 4294901760
    %7785 = vmatprep.subr.mxu0 %v7784
    %v7786 = vand.u32 %v7187, 4294901760
    %7787 = vmatpush1.msra.mxu0 %v7786
    %v7788 = vand.u32 %v7184, 4294901760
    %7789 = vmatprep.subr.mxu0 %v7788
    %v7790 = vand.u32 %v7183, 4294901760
    %7791 = vmatpush1.msra.mxu0 %v7790
    %v7792 = vand.u32 %v7180, 4294901760
    %7793 = vmatprep.subr.mxu0 %v7792
    %v7794 = vand.u32 %v7179, 4294901760
    %7795 = vmatpush1.msra.mxu0 %v7794
    %v7796 = vand.u32 %v7176, 4294901760
    %7797 = vmatprep.subr.mxu0 %v7796
    %v7798 = vand.u32 %v7175, 4294901760
    %7799 = vmatpush1.msra.mxu0 %v7798
    %v7800 = vand.u32 %v7172, 4294901760
    %7801 = vmatprep.subr.mxu0 %v7800
    %v7802 = vand.u32 %v7171, 4294901760
    %7803 = vmatpush1.msra.mxu0 %v7802
    %v7804 = vand.u32 %v7168, 4294901760
    %7805 = vmatprep.subr.mxu0 %v7804
    %v7806 = vand.u32 %v7167, 4294901760
    %7807 = vmatpush1.msra.mxu0 %v7806
    %v7808 = vand.u32 %v7164, 4294901760
    %7809 = vmatprep.subr.mxu0 %v7808
    %v7810 = vand.u32 %v7163, 4294901760
    %7811 = vmatpush1.msra.mxu0 %v7810
    %v7812 = vand.u32 %v7160, 4294901760
    %7813 = vmatprep.subr.mxu0 %v7812
    %v7814 = vand.u32 %v7159, 4294901760
    %7815 = vmatpush1.msra.mxu0 %v7814
    %v7816 = vand.u32 %v7156, 4294901760
    %7817 = vmatprep.subr.mxu0 %v7816
    %v7818 = vand.u32 %v7155, 4294901760
    %7819 = vmatpush1.msra.mxu0 %v7818
    %v7820 = vand.u32 %v7152, 4294901760
    %7821 = vmatprep.subr.mxu0 %v7820
    %v7822 = vand.u32 %v7151, 4294901760
    %7823 = vmatpush1.msra.mxu0 %v7822
    %v7824 = vand.u32 %v7148, 4294901760
    %7825 = vmatprep.subr.mxu0 %v7824
    %v7826 = vand.u32 %v7147, 4294901760
    %7827 = vmatpush1.msra.mxu0 %v7826
    %v7828 = vand.u32 %v7144, 4294901760
    %7829 = vmatprep.subr.mxu0 %v7828
    %v7830 = vand.u32 %v7143, 4294901760
    %7831 = vmatpush1.msra.mxu0 %v7830
    %v7832 = vand.u32 %v7140, 4294901760
    %7833 = vmatprep.subr.mxu0 %v7832
    %v7834 = vand.u32 %v7139, 4294901760
    %7835 = vmatpush1.msra.mxu0 %v7834
    %v7836 = vand.u32 %v7136, 4294901760
    %7837 = vmatprep.subr.mxu0 %v7836
    %v7838 = vand.u32 %v7135, 4294901760
    %7839 = vmatpush1.msra.mxu0 %v7838
    %7840 = vmatprep.subr.mxu0 0.0
    %7841 = vmatpush2.msra.mxu0 0.0
    %7842 = vmatprep.subr.mxu0 0.0
    %7843 = vmatpush2.msra.mxu0 0.0
    %7844 = vmatprep.subr.mxu0 0.0
    %7845 = vmatpush2.msra.mxu0 0.0
    %7846 = vmatprep.subr.mxu0 0.0
    %7847 = vmatpush2.msra.mxu0 0.0
    %7848 = vmatprep.subr.mxu0 0.0
    %7849 = vmatpush2.msra.mxu0 0.0
    %7850 = vmatprep.subr.mxu0 0.0
    %7851 = vmatpush2.msra.mxu0 0.0
    %7852 = vmatprep.subr.mxu0 0.0
    %7853 = vmatpush2.msra.mxu0 0.0
    %7854 = vmatprep.subr.mxu0 0.0
    %7855 = vmatpush2.msra.mxu0 0.0
    %7856 = vmatprep.subr.mxu0 0.0
    %7857 = vmatpush2.msra.mxu0 0.0
    %7858 = vmatprep.subr.mxu0 0.0
    %7859 = vmatpush2.msra.mxu0 0.0
    %7860 = vmatprep.subr.mxu0 0.0
    %7861 = vmatpush2.msra.mxu0 0.0
    %7862 = vmatprep.subr.mxu0 0.0
    %7863 = vmatpush2.msra.mxu0 0.0
    %7864 = vmatprep.subr.mxu0 0.0
    %7865 = vmatpush2.msra.mxu0 0.0
    %7866 = vmatprep.subr.mxu0 0.0
    %7867 = vmatpush2.msra.mxu0 0.0
    %7868 = vmatprep.subr.mxu0 0.0
    %7869 = vmatpush2.msra.mxu0 0.0
    %7870 = vmatprep.subr.mxu0 0.0
    %7871 = vmatpush2.msra.mxu0 0.0
    %7872 = vmatprep.mubr.f32.mxu0 0.0
    %v7873 = vand.u32 %v7131, 4294901760
    %v7874 = vsub.f32 %v7131, %v7873
    %v7875 = vand.u32 %v7874, 4294901760
    %7876 = vmatmul.mubr.f32.gmra.mxu0 %v7875
    %v7877 = vpop.f32.mrf.mxu0
    %v7878 = vadd.f32 %v7748, %v7877
    %v7879 = vpop.f32.mrf.mxu0
    %v7880 = vadd.f32 %v7750, %v7879
    %7881 = vmatprep.mubr.f32.mxu0 0.0
    %v7882 = vand.u32 %v7132, 4294901760
    %v7883 = vsub.f32 %v7132, %v7882
    %v7884 = vand.u32 %v7883, 4294901760
    %7885 = vmatmul.mubr.f32.gmra.mxu0 %v7884
    %v7886 = vpop.f32.mrf.mxu0
    %v7887 = vadd.f32 %v7756, %v7886
    %v7888 = vpop.f32.mrf.mxu0
    %v7889 = vadd.f32 %v7758, %v7888
    %7890 = vmatprep.mubr.f32.mxu0 0.0
    %v7891 = vand.u32 %v7133, 4294901760
    %v7892 = vsub.f32 %v7133, %v7891
    %v7893 = vand.u32 %v7892, 4294901760
    %7894 = vmatmul.mubr.f32.gmra.mxu0 %v7893
    %v7895 = vpop.f32.mrf.mxu0
    %v7896 = vadd.f32 %v7764, %v7895
    %v7897 = vpop.f32.mrf.mxu0
    %v7898 = vadd.f32 %v7766, %v7897
    %7899 = vmatprep.mubr.f32.mxu0 0.0
    %v7900 = vand.u32 %v7134, 4294901760
    %v7901 = vsub.f32 %v7134, %v7900
    %v7902 = vand.u32 %v7901, 4294901760
    %7903 = vmatmul.mubr.f32.gmra.mxu0 %v7902
    %v7904 = vpop.f32.mrf.mxu0
    %v7905 = vadd.f32 %v7772, %v7904
    %v7906 = vpop.f32.mrf.mxu0
    %v7907 = vadd.f32 %v7774, %v7906
    %7908 = vdwg.mxu0
    %v7909 = vand.u32 %v7196, 4294901760
    %v7910 = vsub.f32 %v7196, %v7909
    %v7911 = vand.u32 %v7910, 4294901760
    %7912 = vmatprep.subr.mxu0 %v7911
    %v7913 = vand.u32 %v7195, 4294901760
    %v7914 = vsub.f32 %v7195, %v7913
    %v7915 = vand.u32 %v7914, 4294901760
    %7916 = vmatpush1.msra.mxu0 %v7915
    %v7917 = vand.u32 %v7192, 4294901760
    %v7918 = vsub.f32 %v7192, %v7917
    %v7919 = vand.u32 %v7918, 4294901760
    %7920 = vmatprep.subr.mxu0 %v7919
    %v7921 = vand.u32 %v7191, 4294901760
    %v7922 = vsub.f32 %v7191, %v7921
    %v7923 = vand.u32 %v7922, 4294901760
    %7924 = vmatpush1.msra.mxu0 %v7923
    %v7925 = vand.u32 %v7188, 4294901760
    %v7926 = vsub.f32 %v7188, %v7925
    %v7927 = vand.u32 %v7926, 4294901760
    %7928 = vmatprep.subr.mxu0 %v7927
    %v7929 = vand.u32 %v7187, 4294901760
    %v7930 = vsub.f32 %v7187, %v7929
    %v7931 = vand.u32 %v7930, 4294901760
    %7932 = vmatpush1.msra.mxu0 %v7931
    %v7933 = vand.u32 %v7184, 4294901760
    %v7934 = vsub.f32 %v7184, %v7933
    %v7935 = vand.u32 %v7934, 4294901760
    %7936 = vmatprep.subr.mxu0 %v7935
    %v7937 = vand.u32 %v7183, 4294901760
    %v7938 = vsub.f32 %v7183, %v7937
    %v7939 = vand.u32 %v7938, 4294901760
    %7940 = vmatpush1.msra.mxu0 %v7939
    %v7941 = vand.u32 %v7180, 4294901760
    %v7942 = vsub.f32 %v7180, %v7941
    %v7943 = vand.u32 %v7942, 4294901760
    %7944 = vmatprep.subr.mxu0 %v7943
    %v7945 = vand.u32 %v7179, 4294901760
    %v7946 = vsub.f32 %v7179, %v7945
    %v7947 = vand.u32 %v7946, 4294901760
    %7948 = vmatpush1.msra.mxu0 %v7947
    %v7949 = vand.u32 %v7176, 4294901760
    %v7950 = vsub.f32 %v7176, %v7949
    %v7951 = vand.u32 %v7950, 4294901760
    %7952 = vmatprep.subr.mxu0 %v7951
    %v7953 = vand.u32 %v7175, 4294901760
    %v7954 = vsub.f32 %v7175, %v7953
    %v7955 = vand.u32 %v7954, 4294901760
    %7956 = vmatpush1.msra.mxu0 %v7955
    %v7957 = vand.u32 %v7172, 4294901760
    %v7958 = vsub.f32 %v7172, %v7957
    %v7959 = vand.u32 %v7958, 4294901760
    %7960 = vmatprep.subr.mxu0 %v7959
    %v7961 = vand.u32 %v7171, 4294901760
    %v7962 = vsub.f32 %v7171, %v7961
    %v7963 = vand.u32 %v7962, 4294901760
    %7964 = vmatpush1.msra.mxu0 %v7963
    %v7965 = vand.u32 %v7168, 4294901760
    %v7966 = vsub.f32 %v7168, %v7965
    %v7967 = vand.u32 %v7966, 4294901760
    %7968 = vmatprep.subr.mxu0 %v7967
    %v7969 = vand.u32 %v7167, 4294901760
    %v7970 = vsub.f32 %v7167, %v7969
    %v7971 = vand.u32 %v7970, 4294901760
    %7972 = vmatpush1.msra.mxu0 %v7971
    %v7973 = vand.u32 %v7164, 4294901760
    %v7974 = vsub.f32 %v7164, %v7973
    %v7975 = vand.u32 %v7974, 4294901760
    %7976 = vmatprep.subr.mxu0 %v7975
    %v7977 = vand.u32 %v7163, 4294901760
    %v7978 = vsub.f32 %v7163, %v7977
    %v7979 = vand.u32 %v7978, 4294901760
    %7980 = vmatpush1.msra.mxu0 %v7979
    %v7981 = vand.u32 %v7160, 4294901760
    %v7982 = vsub.f32 %v7160, %v7981
    %v7983 = vand.u32 %v7982, 4294901760
    %7984 = vmatprep.subr.mxu0 %v7983
    %v7985 = vand.u32 %v7159, 4294901760
    %v7986 = vsub.f32 %v7159, %v7985
    %v7987 = vand.u32 %v7986, 4294901760
    %7988 = vmatpush1.msra.mxu0 %v7987
    %v7989 = vand.u32 %v7156, 4294901760
    %v7990 = vsub.f32 %v7156, %v7989
    %v7991 = vand.u32 %v7990, 4294901760
    %7992 = vmatprep.subr.mxu0 %v7991
    %v7993 = vand.u32 %v7155, 4294901760
    %v7994 = vsub.f32 %v7155, %v7993
    %v7995 = vand.u32 %v7994, 4294901760
    %7996 = vmatpush1.msra.mxu0 %v7995
    %v7997 = vand.u32 %v7152, 4294901760
    %v7998 = vsub.f32 %v7152, %v7997
    %v7999 = vand.u32 %v7998, 4294901760
    %8000 = vmatprep.subr.mxu0 %v7999
    %v8001 = vand.u32 %v7151, 4294901760
    %v8002 = vsub.f32 %v7151, %v8001
    %v8003 = vand.u32 %v8002, 4294901760
    %8004 = vmatpush1.msra.mxu0 %v8003
    %v8005 = vand.u32 %v7148, 4294901760
    %v8006 = vsub.f32 %v7148, %v8005
    %v8007 = vand.u32 %v8006, 4294901760
    %8008 = vmatprep.subr.mxu0 %v8007
    %v8009 = vand.u32 %v7147, 4294901760
    %v8010 = vsub.f32 %v7147, %v8009
    %v8011 = vand.u32 %v8010, 4294901760
    %8012 = vmatpush1.msra.mxu0 %v8011
    %v8013 = vand.u32 %v7144, 4294901760
    %v8014 = vsub.f32 %v7144, %v8013
    %v8015 = vand.u32 %v8014, 4294901760
    %8016 = vmatprep.subr.mxu0 %v8015
    %v8017 = vand.u32 %v7143, 4294901760
    %v8018 = vsub.f32 %v7143, %v8017
    %v8019 = vand.u32 %v8018, 4294901760
    %8020 = vmatpush1.msra.mxu0 %v8019
    %v8021 = vand.u32 %v7140, 4294901760
    %v8022 = vsub.f32 %v7140, %v8021
    %v8023 = vand.u32 %v8022, 4294901760
    %8024 = vmatprep.subr.mxu0 %v8023
    %v8025 = vand.u32 %v7139, 4294901760
    %v8026 = vsub.f32 %v7139, %v8025
    %v8027 = vand.u32 %v8026, 4294901760
    %8028 = vmatpush1.msra.mxu0 %v8027
    %v8029 = vand.u32 %v7136, 4294901760
    %v8030 = vsub.f32 %v7136, %v8029
    %v8031 = vand.u32 %v8030, 4294901760
    %8032 = vmatprep.subr.mxu0 %v8031
    %v8033 = vand.u32 %v7135, 4294901760
    %v8034 = vsub.f32 %v7135, %v8033
    %v8035 = vand.u32 %v8034, 4294901760
    %8036 = vmatpush1.msra.mxu0 %v8035
    %8037 = vmatprep.subr.mxu0 0.0
    %8038 = vmatpush2.msra.mxu0 0.0
    %8039 = vmatprep.subr.mxu0 0.0
    %8040 = vmatpush2.msra.mxu0 0.0
    %8041 = vmatprep.subr.mxu0 0.0
    %8042 = vmatpush2.msra.mxu0 0.0
    %8043 = vmatprep.subr.mxu0 0.0
    %8044 = vmatpush2.msra.mxu0 0.0
    %8045 = vmatprep.subr.mxu0 0.0
    %8046 = vmatpush2.msra.mxu0 0.0
    %8047 = vmatprep.subr.mxu0 0.0
    %8048 = vmatpush2.msra.mxu0 0.0
    %8049 = vmatprep.subr.mxu0 0.0
    %8050 = vmatpush2.msra.mxu0 0.0
    %8051 = vmatprep.subr.mxu0 0.0
    %8052 = vmatpush2.msra.mxu0 0.0
    %8053 = vmatprep.subr.mxu0 0.0
    %8054 = vmatpush2.msra.mxu0 0.0
    %8055 = vmatprep.subr.mxu0 0.0
    %8056 = vmatpush2.msra.mxu0 0.0
    %8057 = vmatprep.subr.mxu0 0.0
    %8058 = vmatpush2.msra.mxu0 0.0
    %8059 = vmatprep.subr.mxu0 0.0
    %8060 = vmatpush2.msra.mxu0 0.0
    %8061 = vmatprep.subr.mxu0 0.0
    %8062 = vmatpush2.msra.mxu0 0.0
    %8063 = vmatprep.subr.mxu0 0.0
    %8064 = vmatpush2.msra.mxu0 0.0
    %8065 = vmatprep.subr.mxu0 0.0
    %8066 = vmatpush2.msra.mxu0 0.0
    %8067 = vmatprep.subr.mxu0 0.0
    %8068 = vmatpush2.msra.mxu0 0.0
    %8069 = vmatprep.mubr.f32.mxu0 0.0
    %v8070 = vand.u32 %v7131, 4294901760
    %8071 = vmatmul.mubr.f32.gmra.mxu0 %v8070
    %v8072 = vpop.f32.mrf.mxu0
    %v8073 = vadd.f32 %v7878, %v8072
    %v8074 = vpop.f32.mrf.mxu0
    %v8075 = vadd.f32 %v7880, %v8074
    %8076 = vmatprep.mubr.f32.mxu0 0.0
    %v8077 = vand.u32 %v7132, 4294901760
    %8078 = vmatmul.mubr.f32.gmra.mxu0 %v8077
    %v8079 = vpop.f32.mrf.mxu0
    %v8080 = vadd.f32 %v7887, %v8079
    %v8081 = vpop.f32.mrf.mxu0
    %v8082 = vadd.f32 %v7889, %v8081
    %8083 = vmatprep.mubr.f32.mxu0 0.0
    %v8084 = vand.u32 %v7133, 4294901760
    %8085 = vmatmul.mubr.f32.gmra.mxu0 %v8084
    %v8086 = vpop.f32.mrf.mxu0
    %v8087 = vadd.f32 %v7896, %v8086
    %v8088 = vpop.f32.mrf.mxu0
    %v8089 = vadd.f32 %v7898, %v8088
    %8090 = vmatprep.mubr.f32.mxu0 0.0
    %v8091 = vand.u32 %v7134, 4294901760
    %8092 = vmatmul.mubr.f32.gmra.mxu0 %v8091
    %v8093 = vpop.f32.mrf.mxu0
    %v8094 = vadd.f32 %v7905, %v8093
    %v8095 = vpop.f32.mrf.mxu0
    %v8096 = vadd.f32 %v7907, %v8095
    %8097 = vdwg.mxu0
    %v8098 = vand.u32 %v7196, 4294901760
    %8099 = vmatprep.subr.mxu0 %v8098
    %v8100 = vand.u32 %v7195, 4294901760
    %8101 = vmatpush1.msra.mxu0 %v8100
    %v8102 = vand.u32 %v7192, 4294901760
    %8103 = vmatprep.subr.mxu0 %v8102
    %v8104 = vand.u32 %v7191, 4294901760
    %8105 = vmatpush1.msra.mxu0 %v8104
    %v8106 = vand.u32 %v7188, 4294901760
    %8107 = vmatprep.subr.mxu0 %v8106
    %v8108 = vand.u32 %v7187, 4294901760
    %8109 = vmatpush1.msra.mxu0 %v8108
    %v8110 = vand.u32 %v7184, 4294901760
    %8111 = vmatprep.subr.mxu0 %v8110
    %v8112 = vand.u32 %v7183, 4294901760
    %8113 = vmatpush1.msra.mxu0 %v8112
    %v8114 = vand.u32 %v7180, 4294901760
    %8115 = vmatprep.subr.mxu0 %v8114
    %v8116 = vand.u32 %v7179, 4294901760
    %8117 = vmatpush1.msra.mxu0 %v8116
    %v8118 = vand.u32 %v7176, 4294901760
    %8119 = vmatprep.subr.mxu0 %v8118
    %v8120 = vand.u32 %v7175, 4294901760
    %8121 = vmatpush1.msra.mxu0 %v8120
    %v8122 = vand.u32 %v7172, 4294901760
    %8123 = vmatprep.subr.mxu0 %v8122
    %v8124 = vand.u32 %v7171, 4294901760
    %8125 = vmatpush1.msra.mxu0 %v8124
    %v8126 = vand.u32 %v7168, 4294901760
    %8127 = vmatprep.subr.mxu0 %v8126
    %v8128 = vand.u32 %v7167, 4294901760
    %8129 = vmatpush1.msra.mxu0 %v8128
    %v8130 = vand.u32 %v7164, 4294901760
    %8131 = vmatprep.subr.mxu0 %v8130
    %v8132 = vand.u32 %v7163, 4294901760
    %8133 = vmatpush1.msra.mxu0 %v8132
    %v8134 = vand.u32 %v7160, 4294901760
    %8135 = vmatprep.subr.mxu0 %v8134
    %v8136 = vand.u32 %v7159, 4294901760
    %8137 = vmatpush1.msra.mxu0 %v8136
    %v8138 = vand.u32 %v7156, 4294901760
    %8139 = vmatprep.subr.mxu0 %v8138
    %v8140 = vand.u32 %v7155, 4294901760
    %8141 = vmatpush1.msra.mxu0 %v8140
    %v8142 = vand.u32 %v7152, 4294901760
    %8143 = vmatprep.subr.mxu0 %v8142
    %v8144 = vand.u32 %v7151, 4294901760
    %8145 = vmatpush1.msra.mxu0 %v8144
    %v8146 = vand.u32 %v7148, 4294901760
    %8147 = vmatprep.subr.mxu0 %v8146
    %v8148 = vand.u32 %v7147, 4294901760
    %8149 = vmatpush1.msra.mxu0 %v8148
    %v8150 = vand.u32 %v7144, 4294901760
    %8151 = vmatprep.subr.mxu0 %v8150
    %v8152 = vand.u32 %v7143, 4294901760
    %8153 = vmatpush1.msra.mxu0 %v8152
    %v8154 = vand.u32 %v7140, 4294901760
    %8155 = vmatprep.subr.mxu0 %v8154
    %v8156 = vand.u32 %v7139, 4294901760
    %8157 = vmatpush1.msra.mxu0 %v8156
    %v8158 = vand.u32 %v7136, 4294901760
    %8159 = vmatprep.subr.mxu0 %v8158
    %v8160 = vand.u32 %v7135, 4294901760
    %8161 = vmatpush1.msra.mxu0 %v8160
    %8162 = vmatprep.subr.mxu0 0.0
    %8163 = vmatpush2.msra.mxu0 0.0
    %8164 = vmatprep.subr.mxu0 0.0
    %8165 = vmatpush2.msra.mxu0 0.0
    %8166 = vmatprep.subr.mxu0 0.0
    %8167 = vmatpush2.msra.mxu0 0.0
    %8168 = vmatprep.subr.mxu0 0.0
    %8169 = vmatpush2.msra.mxu0 0.0
    %8170 = vmatprep.subr.mxu0 0.0
    %8171 = vmatpush2.msra.mxu0 0.0
    %8172 = vmatprep.subr.mxu0 0.0
    %8173 = vmatpush2.msra.mxu0 0.0
    %8174 = vmatprep.subr.mxu0 0.0
    %8175 = vmatpush2.msra.mxu0 0.0
    %8176 = vmatprep.subr.mxu0 0.0
    %8177 = vmatpush2.msra.mxu0 0.0
    %8178 = vmatprep.subr.mxu0 0.0
    %8179 = vmatpush2.msra.mxu0 0.0
    %8180 = vmatprep.subr.mxu0 0.0
    %8181 = vmatpush2.msra.mxu0 0.0
    %8182 = vmatprep.subr.mxu0 0.0
    %8183 = vmatpush2.msra.mxu0 0.0
    %8184 = vmatprep.subr.mxu0 0.0
    %8185 = vmatpush2.msra.mxu0 0.0
    %8186 = vmatprep.subr.mxu0 0.0
    %8187 = vmatpush2.msra.mxu0 0.0
    %8188 = vmatprep.subr.mxu0 0.0
    %8189 = vmatpush2.msra.mxu0 0.0
    %8190 = vmatprep.subr.mxu0 0.0
    %8191 = vmatpush2.msra.mxu0 0.0
    %8192 = vmatprep.subr.mxu0 0.0
    %8193 = vmatpush2.msra.mxu0 0.0
    %8194 = vmatprep.mubr.f32.mxu0 0.0
    %v8195 = vand.u32 %v7131, 4294901760
    %8196 = vmatmul.mubr.f32.gmra.mxu0 %v8195
    %v8197 = vpop.f32.mrf.mxu0
    %v8198 = vadd.f32 %v8073, %v8197
    %v8199 = vpop.f32.mrf.mxu0
    %v8200 = vadd.f32 %v8075, %v8199
    %8201 = vmatprep.mubr.f32.mxu0 0.0
    %v8202 = vand.u32 %v7132, 4294901760
    %8203 = vmatmul.mubr.f32.gmra.mxu0 %v8202
    %v8204 = vpop.f32.mrf.mxu0
    %v8205 = vadd.f32 %v8080, %v8204
    %v8206 = vpop.f32.mrf.mxu0
    %v8207 = vadd.f32 %v8082, %v8206
    %8208 = vmatprep.mubr.f32.mxu0 0.0
    %v8209 = vand.u32 %v7133, 4294901760
    %8210 = vmatmul.mubr.f32.gmra.mxu0 %v8209
    %v8211 = vpop.f32.mrf.mxu0
    %v8212 = vadd.f32 %v8087, %v8211
    %v8213 = vpop.f32.mrf.mxu0
    %v8214 = vadd.f32 %v8089, %v8213
    %8215 = vmatprep.mubr.f32.mxu0 0.0
    %v8216 = vand.u32 %v7134, 4294901760
    %8217 = vmatmul.mubr.f32.gmra.mxu0 %v8216
    %v8218 = vpop.f32.mrf.mxu0
    %v8219 = vadd.f32 %v8094, %v8218
    %v8220 = vpop.f32.mrf.mxu0
    %v8221 = vadd.f32 %v8096, %v8220
    %8222 = vdwg.mxu0
    %v8223 = vand.u32 %v7198, 4294901760
    %8224 = vmatprep.subr.mxu0 %v8223
    %v8225 = vand.u32 %v7197, 4294901760
    %8226 = vmatpush1.msra.mxu0 %v8225
    %v8227 = vand.u32 %v7194, 4294901760
    %8228 = vmatprep.subr.mxu0 %v8227
    %v8229 = vand.u32 %v7193, 4294901760
    %8230 = vmatpush1.msra.mxu0 %v8229
    %v8231 = vand.u32 %v7190, 4294901760
    %8232 = vmatprep.subr.mxu0 %v8231
    %v8233 = vand.u32 %v7189, 4294901760
    %8234 = vmatpush1.msra.mxu0 %v8233
    %v8235 = vand.u32 %v7186, 4294901760
    %8236 = vmatprep.subr.mxu0 %v8235
    %v8237 = vand.u32 %v7185, 4294901760
    %8238 = vmatpush1.msra.mxu0 %v8237
    %v8239 = vand.u32 %v7182, 4294901760
    %8240 = vmatprep.subr.mxu0 %v8239
    %v8241 = vand.u32 %v7181, 4294901760
    %8242 = vmatpush1.msra.mxu0 %v8241
    %v8243 = vand.u32 %v7178, 4294901760
    %8244 = vmatprep.subr.mxu0 %v8243
    %v8245 = vand.u32 %v7177, 4294901760
    %8246 = vmatpush1.msra.mxu0 %v8245
    %v8247 = vand.u32 %v7174, 4294901760
    %8248 = vmatprep.subr.mxu0 %v8247
    %v8249 = vand.u32 %v7173, 4294901760
    %8250 = vmatpush1.msra.mxu0 %v8249
    %v8251 = vand.u32 %v7170, 4294901760
    %8252 = vmatprep.subr.mxu0 %v8251
    %v8253 = vand.u32 %v7169, 4294901760
    %8254 = vmatpush1.msra.mxu0 %v8253
    %v8255 = vand.u32 %v7166, 4294901760
    %8256 = vmatprep.subr.mxu0 %v8255
    %v8257 = vand.u32 %v7165, 4294901760
    %8258 = vmatpush1.msra.mxu0 %v8257
    %v8259 = vand.u32 %v7162, 4294901760
    %8260 = vmatprep.subr.mxu0 %v8259
    %v8261 = vand.u32 %v7161, 4294901760
    %8262 = vmatpush1.msra.mxu0 %v8261
    %v8263 = vand.u32 %v7158, 4294901760
    %8264 = vmatprep.subr.mxu0 %v8263
    %v8265 = vand.u32 %v7157, 4294901760
    %8266 = vmatpush1.msra.mxu0 %v8265
    %v8267 = vand.u32 %v7154, 4294901760
    %8268 = vmatprep.subr.mxu0 %v8267
    %v8269 = vand.u32 %v7153, 4294901760
    %8270 = vmatpush1.msra.mxu0 %v8269
    %v8271 = vand.u32 %v7150, 4294901760
    %8272 = vmatprep.subr.mxu0 %v8271
    %v8273 = vand.u32 %v7149, 4294901760
    %8274 = vmatpush1.msra.mxu0 %v8273
    %v8275 = vand.u32 %v7146, 4294901760
    %8276 = vmatprep.subr.mxu0 %v8275
    %v8277 = vand.u32 %v7145, 4294901760
    %8278 = vmatpush1.msra.mxu0 %v8277
    %v8279 = vand.u32 %v7142, 4294901760
    %8280 = vmatprep.subr.mxu0 %v8279
    %v8281 = vand.u32 %v7141, 4294901760
    %8282 = vmatpush1.msra.mxu0 %v8281
    %v8283 = vand.u32 %v7138, 4294901760
    %8284 = vmatprep.subr.mxu0 %v8283
    %v8285 = vand.u32 %v7137, 4294901760
    %8286 = vmatpush1.msra.mxu0 %v8285
    %8287 = vmatprep.subr.mxu0 0.0
    %8288 = vmatpush2.msra.mxu0 0.0
    %8289 = vmatprep.subr.mxu0 0.0
    %8290 = vmatpush2.msra.mxu0 0.0
    %8291 = vmatprep.subr.mxu0 0.0
    %8292 = vmatpush2.msra.mxu0 0.0
    %8293 = vmatprep.subr.mxu0 0.0
    %8294 = vmatpush2.msra.mxu0 0.0
    %8295 = vmatprep.subr.mxu0 0.0
    %8296 = vmatpush2.msra.mxu0 0.0
    %8297 = vmatprep.subr.mxu0 0.0
    %8298 = vmatpush2.msra.mxu0 0.0
    %8299 = vmatprep.subr.mxu0 0.0
    %8300 = vmatpush2.msra.mxu0 0.0
    %8301 = vmatprep.subr.mxu0 0.0
    %8302 = vmatpush2.msra.mxu0 0.0
    %8303 = vmatprep.subr.mxu0 0.0
    %8304 = vmatpush2.msra.mxu0 0.0
    %8305 = vmatprep.subr.mxu0 0.0
    %8306 = vmatpush2.msra.mxu0 0.0
    %8307 = vmatprep.subr.mxu0 0.0
    %8308 = vmatpush2.msra.mxu0 0.0
    %8309 = vmatprep.subr.mxu0 0.0
    %8310 = vmatpush2.msra.mxu0 0.0
    %8311 = vmatprep.subr.mxu0 0.0
    %8312 = vmatpush2.msra.mxu0 0.0
    %8313 = vmatprep.subr.mxu0 0.0
    %8314 = vmatpush2.msra.mxu0 0.0
    %8315 = vmatprep.subr.mxu0 0.0
    %8316 = vmatpush2.msra.mxu0 0.0
    %8317 = vmatprep.subr.mxu0 0.0
    %8318 = vmatpush2.msra.mxu0 0.0
    %8319 = vmatprep.mubr.f32.mxu0 0.0
    %v8320 = vand.u32 %v7131, 4294901760
    %v8321 = vsub.f32 %v7131, %v8320
    %v8322 = vand.u32 %v8321, 4294901760
    %v8323 = vsub.f32 %v8321, %v8322
    %v8324 = vand.u32 %v8323, 4294901760
    %8325 = vmatmul.mubr.f32.gmra.mxu0 %v8324
    %v8326 = vpop.f32.mrf.mxu0
    %v8327 = vadd.f32 %v7212, %v8326
    %v8328 = vpop.f32.mrf.mxu0
    %v8329 = vadd.f32 %v7216, %v8328
    %8330 = vmatprep.mubr.f32.mxu0 0.0
    %v8331 = vand.u32 %v7132, 4294901760
    %v8332 = vsub.f32 %v7132, %v8331
    %v8333 = vand.u32 %v8332, 4294901760
    %v8334 = vsub.f32 %v8332, %v8333
    %v8335 = vand.u32 %v8334, 4294901760
    %8336 = vmatmul.mubr.f32.gmra.mxu0 %v8335
    %v8337 = vpop.f32.mrf.mxu0
    %v8338 = vadd.f32 %v7212, %v8337
    %v8339 = vpop.f32.mrf.mxu0
    %v8340 = vadd.f32 %v7216, %v8339
    %8341 = vmatprep.mubr.f32.mxu0 0.0
    %v8342 = vand.u32 %v7133, 4294901760
    %v8343 = vsub.f32 %v7133, %v8342
    %v8344 = vand.u32 %v8343, 4294901760
    %v8345 = vsub.f32 %v8343, %v8344
    %v8346 = vand.u32 %v8345, 4294901760
    %8347 = vmatmul.mubr.f32.gmra.mxu0 %v8346
    %v8348 = vpop.f32.mrf.mxu0
    %v8349 = vadd.f32 %v7212, %v8348
    %v8350 = vpop.f32.mrf.mxu0
    %v8351 = vadd.f32 %v7216, %v8350
    %8352 = vmatprep.mubr.f32.mxu0 0.0
    %v8353 = vand.u32 %v7134, 4294901760
    %v8354 = vsub.f32 %v7134, %v8353
    %v8355 = vand.u32 %v8354, 4294901760
    %v8356 = vsub.f32 %v8354, %v8355
    %v8357 = vand.u32 %v8356, 4294901760
    %8358 = vmatmul.mubr.f32.gmra.mxu0 %v8357
    %v8359 = vpop.f32.mrf.mxu0
    %v8360 = vadd.f32 %v7212, %v8359
    %v8361 = vpop.f32.mrf.mxu0
    %v8362 = vadd.f32 %v7216, %v8361
    %8363 = vdwg.mxu0
    %v8364 = vand.u32 %v7198, 4294901760
    %v8365 = vsub.f32 %v7198, %v8364
    %v8366 = vand.u32 %v8365, 4294901760
    %v8367 = vsub.f32 %v8365, %v8366
    %v8368 = vand.u32 %v8367, 4294901760
    %8369 = vmatprep.subr.mxu0 %v8368
    %v8370 = vand.u32 %v7197, 4294901760
    %v8371 = vsub.f32 %v7197, %v8370
    %v8372 = vand.u32 %v8371, 4294901760
    %v8373 = vsub.f32 %v8371, %v8372
    %v8374 = vand.u32 %v8373, 4294901760
    %8375 = vmatpush1.msra.mxu0 %v8374
    %v8376 = vand.u32 %v7194, 4294901760
    %v8377 = vsub.f32 %v7194, %v8376
    %v8378 = vand.u32 %v8377, 4294901760
    %v8379 = vsub.f32 %v8377, %v8378
    %v8380 = vand.u32 %v8379, 4294901760
    %8381 = vmatprep.subr.mxu0 %v8380
    %v8382 = vand.u32 %v7193, 4294901760
    %v8383 = vsub.f32 %v7193, %v8382
    %v8384 = vand.u32 %v8383, 4294901760
    %v8385 = vsub.f32 %v8383, %v8384
    %v8386 = vand.u32 %v8385, 4294901760
    %8387 = vmatpush1.msra.mxu0 %v8386
    %v8388 = vand.u32 %v7190, 4294901760
    %v8389 = vsub.f32 %v7190, %v8388
    %v8390 = vand.u32 %v8389, 4294901760
    %v8391 = vsub.f32 %v8389, %v8390
    %v8392 = vand.u32 %v8391, 4294901760
    %8393 = vmatprep.subr.mxu0 %v8392
    %v8394 = vand.u32 %v7189, 4294901760
    %v8395 = vsub.f32 %v7189, %v8394
    %v8396 = vand.u32 %v8395, 4294901760
    %v8397 = vsub.f32 %v8395, %v8396
    %v8398 = vand.u32 %v8397, 4294901760
    %8399 = vmatpush1.msra.mxu0 %v8398
    %v8400 = vand.u32 %v7186, 4294901760
    %v8401 = vsub.f32 %v7186, %v8400
    %v8402 = vand.u32 %v8401, 4294901760
    %v8403 = vsub.f32 %v8401, %v8402
    %v8404 = vand.u32 %v8403, 4294901760
    %8405 = vmatprep.subr.mxu0 %v8404
    %v8406 = vand.u32 %v7185, 4294901760
    %v8407 = vsub.f32 %v7185, %v8406
    %v8408 = vand.u32 %v8407, 4294901760
    %v8409 = vsub.f32 %v8407, %v8408
    %v8410 = vand.u32 %v8409, 4294901760
    %8411 = vmatpush1.msra.mxu0 %v8410
    %v8412 = vand.u32 %v7182, 4294901760
    %v8413 = vsub.f32 %v7182, %v8412
    %v8414 = vand.u32 %v8413, 4294901760
    %v8415 = vsub.f32 %v8413, %v8414
    %v8416 = vand.u32 %v8415, 4294901760
    %8417 = vmatprep.subr.mxu0 %v8416
    %v8418 = vand.u32 %v7181, 4294901760
    %v8419 = vsub.f32 %v7181, %v8418
    %v8420 = vand.u32 %v8419, 4294901760
    %v8421 = vsub.f32 %v8419, %v8420
    %v8422 = vand.u32 %v8421, 4294901760
    %8423 = vmatpush1.msra.mxu0 %v8422
    %v8424 = vand.u32 %v7178, 4294901760
    %v8425 = vsub.f32 %v7178, %v8424
    %v8426 = vand.u32 %v8425, 4294901760
    %v8427 = vsub.f32 %v8425, %v8426
    %v8428 = vand.u32 %v8427, 4294901760
    %8429 = vmatprep.subr.mxu0 %v8428
    %v8430 = vand.u32 %v7177, 4294901760
    %v8431 = vsub.f32 %v7177, %v8430
    %v8432 = vand.u32 %v8431, 4294901760
    %v8433 = vsub.f32 %v8431, %v8432
    %v8434 = vand.u32 %v8433, 4294901760
    %8435 = vmatpush1.msra.mxu0 %v8434
    %v8436 = vand.u32 %v7174, 4294901760
    %v8437 = vsub.f32 %v7174, %v8436
    %v8438 = vand.u32 %v8437, 4294901760
    %v8439 = vsub.f32 %v8437, %v8438
    %v8440 = vand.u32 %v8439, 4294901760
    %8441 = vmatprep.subr.mxu0 %v8440
    %v8442 = vand.u32 %v7173, 4294901760
    %v8443 = vsub.f32 %v7173, %v8442
    %v8444 = vand.u32 %v8443, 4294901760
    %v8445 = vsub.f32 %v8443, %v8444
    %v8446 = vand.u32 %v8445, 4294901760
    %8447 = vmatpush1.msra.mxu0 %v8446
    %v8448 = vand.u32 %v7170, 4294901760
    %v8449 = vsub.f32 %v7170, %v8448
    %v8450 = vand.u32 %v8449, 4294901760
    %v8451 = vsub.f32 %v8449, %v8450
    %v8452 = vand.u32 %v8451, 4294901760
    %8453 = vmatprep.subr.mxu0 %v8452
    %v8454 = vand.u32 %v7169, 4294901760
    %v8455 = vsub.f32 %v7169, %v8454
    %v8456 = vand.u32 %v8455, 4294901760
    %v8457 = vsub.f32 %v8455, %v8456
    %v8458 = vand.u32 %v8457, 4294901760
    %8459 = vmatpush1.msra.mxu0 %v8458
    %v8460 = vand.u32 %v7166, 4294901760
    %v8461 = vsub.f32 %v7166, %v8460
    %v8462 = vand.u32 %v8461, 4294901760
    %v8463 = vsub.f32 %v8461, %v8462
    %v8464 = vand.u32 %v8463, 4294901760
    %8465 = vmatprep.subr.mxu0 %v8464
    %v8466 = vand.u32 %v7165, 4294901760
    %v8467 = vsub.f32 %v7165, %v8466
    %v8468 = vand.u32 %v8467, 4294901760
    %v8469 = vsub.f32 %v8467, %v8468
    %v8470 = vand.u32 %v8469, 4294901760
    %8471 = vmatpush1.msra.mxu0 %v8470
    %v8472 = vand.u32 %v7162, 4294901760
    %v8473 = vsub.f32 %v7162, %v8472
    %v8474 = vand.u32 %v8473, 4294901760
    %v8475 = vsub.f32 %v8473, %v8474
    %v8476 = vand.u32 %v8475, 4294901760
    %8477 = vmatprep.subr.mxu0 %v8476
    %v8478 = vand.u32 %v7161, 4294901760
    %v8479 = vsub.f32 %v7161, %v8478
    %v8480 = vand.u32 %v8479, 4294901760
    %v8481 = vsub.f32 %v8479, %v8480
    %v8482 = vand.u32 %v8481, 4294901760
    %8483 = vmatpush1.msra.mxu0 %v8482
    %v8484 = vand.u32 %v7158, 4294901760
    %v8485 = vsub.f32 %v7158, %v8484
    %v8486 = vand.u32 %v8485, 4294901760
    %v8487 = vsub.f32 %v8485, %v8486
    %v8488 = vand.u32 %v8487, 4294901760
    %8489 = vmatprep.subr.mxu0 %v8488
    %v8490 = vand.u32 %v7157, 4294901760
    %v8491 = vsub.f32 %v7157, %v8490
    %v8492 = vand.u32 %v8491, 4294901760
    %v8493 = vsub.f32 %v8491, %v8492
    %v8494 = vand.u32 %v8493, 4294901760
    %8495 = vmatpush1.msra.mxu0 %v8494
    %v8496 = vand.u32 %v7154, 4294901760
    %v8497 = vsub.f32 %v7154, %v8496
    %v8498 = vand.u32 %v8497, 4294901760
    %v8499 = vsub.f32 %v8497, %v8498
    %v8500 = vand.u32 %v8499, 4294901760
    %8501 = vmatprep.subr.mxu0 %v8500
    %v8502 = vand.u32 %v7153, 4294901760
    %v8503 = vsub.f32 %v7153, %v8502
    %v8504 = vand.u32 %v8503, 4294901760
    %v8505 = vsub.f32 %v8503, %v8504
    %v8506 = vand.u32 %v8505, 4294901760
    %8507 = vmatpush1.msra.mxu0 %v8506
    %v8508 = vand.u32 %v7150, 4294901760
    %v8509 = vsub.f32 %v7150, %v8508
    %v8510 = vand.u32 %v8509, 4294901760
    %v8511 = vsub.f32 %v8509, %v8510
    %v8512 = vand.u32 %v8511, 4294901760
    %8513 = vmatprep.subr.mxu0 %v8512
    %v8514 = vand.u32 %v7149, 4294901760
    %v8515 = vsub.f32 %v7149, %v8514
    %v8516 = vand.u32 %v8515, 4294901760
    %v8517 = vsub.f32 %v8515, %v8516
    %v8518 = vand.u32 %v8517, 4294901760
    %8519 = vmatpush1.msra.mxu0 %v8518
    %v8520 = vand.u32 %v7146, 4294901760
    %v8521 = vsub.f32 %v7146, %v8520
    %v8522 = vand.u32 %v8521, 4294901760
    %v8523 = vsub.f32 %v8521, %v8522
    %v8524 = vand.u32 %v8523, 4294901760
    %8525 = vmatprep.subr.mxu0 %v8524
    %v8526 = vand.u32 %v7145, 4294901760
    %v8527 = vsub.f32 %v7145, %v8526
    %v8528 = vand.u32 %v8527, 4294901760
    %v8529 = vsub.f32 %v8527, %v8528
    %v8530 = vand.u32 %v8529, 4294901760
    %8531 = vmatpush1.msra.mxu0 %v8530
    %v8532 = vand.u32 %v7142, 4294901760
    %v8533 = vsub.f32 %v7142, %v8532
    %v8534 = vand.u32 %v8533, 4294901760
    %v8535 = vsub.f32 %v8533, %v8534
    %v8536 = vand.u32 %v8535, 4294901760
    %8537 = vmatprep.subr.mxu0 %v8536
    %v8538 = vand.u32 %v7141, 4294901760
    %v8539 = vsub.f32 %v7141, %v8538
    %v8540 = vand.u32 %v8539, 4294901760
    %v8541 = vsub.f32 %v8539, %v8540
    %v8542 = vand.u32 %v8541, 4294901760
    %8543 = vmatpush1.msra.mxu0 %v8542
    %v8544 = vand.u32 %v7138, 4294901760
    %v8545 = vsub.f32 %v7138, %v8544
    %v8546 = vand.u32 %v8545, 4294901760
    %v8547 = vsub.f32 %v8545, %v8546
    %v8548 = vand.u32 %v8547, 4294901760
    %8549 = vmatprep.subr.mxu0 %v8548
    %v8550 = vand.u32 %v7137, 4294901760
    %v8551 = vsub.f32 %v7137, %v8550
    %v8552 = vand.u32 %v8551, 4294901760
    %v8553 = vsub.f32 %v8551, %v8552
    %v8554 = vand.u32 %v8553, 4294901760
    %8555 = vmatpush1.msra.mxu0 %v8554
    %8556 = vmatprep.subr.mxu0 0.0
    %8557 = vmatpush2.msra.mxu0 0.0
    %8558 = vmatprep.subr.mxu0 0.0
    %8559 = vmatpush2.msra.mxu0 0.0
    %8560 = vmatprep.subr.mxu0 0.0
    %8561 = vmatpush2.msra.mxu0 0.0
    %8562 = vmatprep.subr.mxu0 0.0
    %8563 = vmatpush2.msra.mxu0 0.0
    %8564 = vmatprep.subr.mxu0 0.0
    %8565 = vmatpush2.msra.mxu0 0.0
    %8566 = vmatprep.subr.mxu0 0.0
    %8567 = vmatpush2.msra.mxu0 0.0
    %8568 = vmatprep.subr.mxu0 0.0
    %8569 = vmatpush2.msra.mxu0 0.0
    %8570 = vmatprep.subr.mxu0 0.0
    %8571 = vmatpush2.msra.mxu0 0.0
    %8572 = vmatprep.subr.mxu0 0.0
    %8573 = vmatpush2.msra.mxu0 0.0
    %8574 = vmatprep.subr.mxu0 0.0
    %8575 = vmatpush2.msra.mxu0 0.0
    %8576 = vmatprep.subr.mxu0 0.0
    %8577 = vmatpush2.msra.mxu0 0.0
    %8578 = vmatprep.subr.mxu0 0.0
    %8579 = vmatpush2.msra.mxu0 0.0
    %8580 = vmatprep.subr.mxu0 0.0
    %8581 = vmatpush2.msra.mxu0 0.0
    %8582 = vmatprep.subr.mxu0 0.0
    %8583 = vmatpush2.msra.mxu0 0.0
    %8584 = vmatprep.subr.mxu0 0.0
    %8585 = vmatpush2.msra.mxu0 0.0
    %8586 = vmatprep.subr.mxu0 0.0
    %8587 = vmatpush2.msra.mxu0 0.0
    %8588 = vmatprep.mubr.f32.mxu0 0.0
    %v8589 = vand.u32 %v7131, 4294901760
    %8590 = vmatmul.mubr.f32.gmra.mxu0 %v8589
    %v8591 = vpop.f32.mrf.mxu0
    %v8592 = vadd.f32 %v8327, %v8591
    %v8593 = vpop.f32.mrf.mxu0
    %v8594 = vadd.f32 %v8329, %v8593
    %8595 = vmatprep.mubr.f32.mxu0 0.0
    %v8596 = vand.u32 %v7132, 4294901760
    %8597 = vmatmul.mubr.f32.gmra.mxu0 %v8596
    %v8598 = vpop.f32.mrf.mxu0
    %v8599 = vadd.f32 %v8338, %v8598
    %v8600 = vpop.f32.mrf.mxu0
    %v8601 = vadd.f32 %v8340, %v8600
    %8602 = vmatprep.mubr.f32.mxu0 0.0
    %v8603 = vand.u32 %v7133, 4294901760
    %8604 = vmatmul.mubr.f32.gmra.mxu0 %v8603
    %v8605 = vpop.f32.mrf.mxu0
    %v8606 = vadd.f32 %v8349, %v8605
    %v8607 = vpop.f32.mrf.mxu0
    %v8608 = vadd.f32 %v8351, %v8607
    %8609 = vmatprep.mubr.f32.mxu0 0.0
    %v8610 = vand.u32 %v7134, 4294901760
    %8611 = vmatmul.mubr.f32.gmra.mxu0 %v8610
    %v8612 = vpop.f32.mrf.mxu0
    %v8613 = vadd.f32 %v8360, %v8612
    %v8614 = vpop.f32.mrf.mxu0
    %v8615 = vadd.f32 %v8362, %v8614
    %8616 = vdwg.mxu0
    %v8617 = vand.u32 %v7198, 4294901760
    %v8618 = vsub.f32 %v7198, %v8617
    %8619 = vmatprep.subr.mxu0 %v8618
    %v8620 = vand.u32 %v7197, 4294901760
    %v8621 = vsub.f32 %v7197, %v8620
    %8622 = vmatpush1.msra.mxu0 %v8621
    %v8623 = vand.u32 %v7194, 4294901760
    %v8624 = vsub.f32 %v7194, %v8623
    %8625 = vmatprep.subr.mxu0 %v8624
    %v8626 = vand.u32 %v7193, 4294901760
    %v8627 = vsub.f32 %v7193, %v8626
    %8628 = vmatpush1.msra.mxu0 %v8627
    %v8629 = vand.u32 %v7190, 4294901760
    %v8630 = vsub.f32 %v7190, %v8629
    %8631 = vmatprep.subr.mxu0 %v8630
    %v8632 = vand.u32 %v7189, 4294901760
    %v8633 = vsub.f32 %v7189, %v8632
    %8634 = vmatpush1.msra.mxu0 %v8633
    %v8635 = vand.u32 %v7186, 4294901760
    %v8636 = vsub.f32 %v7186, %v8635
    %8637 = vmatprep.subr.mxu0 %v8636
    %v8638 = vand.u32 %v7185, 4294901760
    %v8639 = vsub.f32 %v7185, %v8638
    %8640 = vmatpush1.msra.mxu0 %v8639
    %v8641 = vand.u32 %v7182, 4294901760
    %v8642 = vsub.f32 %v7182, %v8641
    %8643 = vmatprep.subr.mxu0 %v8642
    %v8644 = vand.u32 %v7181, 4294901760
    %v8645 = vsub.f32 %v7181, %v8644
    %8646 = vmatpush1.msra.mxu0 %v8645
    %v8647 = vand.u32 %v7178, 4294901760
    %v8648 = vsub.f32 %v7178, %v8647
    %8649 = vmatprep.subr.mxu0 %v8648
    %v8650 = vand.u32 %v7177, 4294901760
    %v8651 = vsub.f32 %v7177, %v8650
    %8652 = vmatpush1.msra.mxu0 %v8651
    %v8653 = vand.u32 %v7174, 4294901760
    %v8654 = vsub.f32 %v7174, %v8653
    %8655 = vmatprep.subr.mxu0 %v8654
    %v8656 = vand.u32 %v7173, 4294901760
    %v8657 = vsub.f32 %v7173, %v8656
    %8658 = vmatpush1.msra.mxu0 %v8657
    %v8659 = vand.u32 %v7170, 4294901760
    %v8660 = vsub.f32 %v7170, %v8659
    %8661 = vmatprep.subr.mxu0 %v8660
    %v8662 = vand.u32 %v7169, 4294901760
    %v8663 = vsub.f32 %v7169, %v8662
    %8664 = vmatpush1.msra.mxu0 %v8663
    %v8665 = vand.u32 %v7166, 4294901760
    %v8666 = vsub.f32 %v7166, %v8665
    %8667 = vmatprep.subr.mxu0 %v8666
    %v8668 = vand.u32 %v7165, 4294901760
    %v8669 = vsub.f32 %v7165, %v8668
    %8670 = vmatpush1.msra.mxu0 %v8669
    %v8671 = vand.u32 %v7162, 4294901760
    %v8672 = vsub.f32 %v7162, %v8671
    %8673 = vmatprep.subr.mxu0 %v8672
    %v8674 = vand.u32 %v7161, 4294901760
    %v8675 = vsub.f32 %v7161, %v8674
    %8676 = vmatpush1.msra.mxu0 %v8675
    %v8677 = vand.u32 %v7158, 4294901760
    %v8678 = vsub.f32 %v7158, %v8677
    %8679 = vmatprep.subr.mxu0 %v8678
    %v8680 = vand.u32 %v7157, 4294901760
    %v8681 = vsub.f32 %v7157, %v8680
    %8682 = vmatpush1.msra.mxu0 %v8681
    %v8683 = vand.u32 %v7154, 4294901760
    %v8684 = vsub.f32 %v7154, %v8683
    %8685 = vmatprep.subr.mxu0 %v8684
    %v8686 = vand.u32 %v7153, 4294901760
    %v8687 = vsub.f32 %v7153, %v8686
    %8688 = vmatpush1.msra.mxu0 %v8687
    %v8689 = vand.u32 %v7150, 4294901760
    %v8690 = vsub.f32 %v7150, %v8689
    %8691 = vmatprep.subr.mxu0 %v8690
    %v8692 = vand.u32 %v7149, 4294901760
    %v8693 = vsub.f32 %v7149, %v8692
    %8694 = vmatpush1.msra.mxu0 %v8693
    %v8695 = vand.u32 %v7146, 4294901760
    %v8696 = vsub.f32 %v7146, %v8695
    %8697 = vmatprep.subr.mxu0 %v8696
    %v8698 = vand.u32 %v7145, 4294901760
    %v8699 = vsub.f32 %v7145, %v8698
    %8700 = vmatpush1.msra.mxu0 %v8699
    %v8701 = vand.u32 %v7142, 4294901760
    %v8702 = vsub.f32 %v7142, %v8701
    %8703 = vmatprep.subr.mxu0 %v8702
    %v8704 = vand.u32 %v7141, 4294901760
    %v8705 = vsub.f32 %v7141, %v8704
    %8706 = vmatpush1.msra.mxu0 %v8705
    %v8707 = vand.u32 %v7138, 4294901760
    %v8708 = vsub.f32 %v7138, %v8707
    %8709 = vmatprep.subr.mxu0 %v8708
    %v8710 = vand.u32 %v7137, 4294901760
    %v8711 = vsub.f32 %v7137, %v8710
    %8712 = vmatpush1.msra.mxu0 %v8711
    %8713 = vmatprep.subr.mxu0 0.0
    %8714 = vmatpush2.msra.mxu0 0.0
    %8715 = vmatprep.subr.mxu0 0.0
    %8716 = vmatpush2.msra.mxu0 0.0
    %8717 = vmatprep.subr.mxu0 0.0
    %8718 = vmatpush2.msra.mxu0 0.0
    %8719 = vmatprep.subr.mxu0 0.0
    %8720 = vmatpush2.msra.mxu0 0.0
    %8721 = vmatprep.subr.mxu0 0.0
    %8722 = vmatpush2.msra.mxu0 0.0
    %8723 = vmatprep.subr.mxu0 0.0
    %8724 = vmatpush2.msra.mxu0 0.0
    %8725 = vmatprep.subr.mxu0 0.0
    %8726 = vmatpush2.msra.mxu0 0.0
    %8727 = vmatprep.subr.mxu0 0.0
    %8728 = vmatpush2.msra.mxu0 0.0
    %8729 = vmatprep.subr.mxu0 0.0
    %8730 = vmatpush2.msra.mxu0 0.0
    %8731 = vmatprep.subr.mxu0 0.0
    %8732 = vmatpush2.msra.mxu0 0.0
    %8733 = vmatprep.subr.mxu0 0.0
    %8734 = vmatpush2.msra.mxu0 0.0
    %8735 = vmatprep.subr.mxu0 0.0
    %8736 = vmatpush2.msra.mxu0 0.0
    %8737 = vmatprep.subr.mxu0 0.0
    %8738 = vmatpush2.msra.mxu0 0.0
    %8739 = vmatprep.subr.mxu0 0.0
    %8740 = vmatpush2.msra.mxu0 0.0
    %8741 = vmatprep.subr.mxu0 0.0
    %8742 = vmatpush2.msra.mxu0 0.0
    %8743 = vmatprep.subr.mxu0 0.0
    %8744 = vmatpush2.msra.mxu0 0.0
    %8745 = vmatprep.mubr.f32.mxu0 0.0
    %v8746 = vand.u32 %v7131, 4294901760
    %v8747 = vsub.f32 %v7131, %v8746
    %8748 = vmatmul.mubr.f32.gmra.mxu0 %v8747
    %v8749 = vpop.f32.mrf.mxu0
    %v8750 = vadd.f32 %v8592, %v8749
    %v8751 = vpop.f32.mrf.mxu0
    %v8752 = vadd.f32 %v8594, %v8751
    %8753 = vmatprep.mubr.f32.mxu0 0.0
    %v8754 = vand.u32 %v7132, 4294901760
    %v8755 = vsub.f32 %v7132, %v8754
    %8756 = vmatmul.mubr.f32.gmra.mxu0 %v8755
    %v8757 = vpop.f32.mrf.mxu0
    %v8758 = vadd.f32 %v8599, %v8757
    %v8759 = vpop.f32.mrf.mxu0
    %v8760 = vadd.f32 %v8601, %v8759
    %8761 = vmatprep.mubr.f32.mxu0 0.0
    %v8762 = vand.u32 %v7133, 4294901760
    %v8763 = vsub.f32 %v7133, %v8762
    %8764 = vmatmul.mubr.f32.gmra.mxu0 %v8763
    %v8765 = vpop.f32.mrf.mxu0
    %v8766 = vadd.f32 %v8606, %v8765
    %v8767 = vpop.f32.mrf.mxu0
    %v8768 = vadd.f32 %v8608, %v8767
    %8769 = vmatprep.mubr.f32.mxu0 0.0
    %v8770 = vand.u32 %v7134, 4294901760
    %v8771 = vsub.f32 %v7134, %v8770
    %8772 = vmatmul.mubr.f32.gmra.mxu0 %v8771
    %v8773 = vpop.f32.mrf.mxu0
    %v8774 = vadd.f32 %v8613, %v8773
    %v8775 = vpop.f32.mrf.mxu0
    %v8776 = vadd.f32 %v8615, %v8775
    %8777 = vdwg.mxu0
    %v8778 = vand.u32 %v7198, 4294901760
    %8779 = vmatprep.subr.mxu0 %v8778
    %v8780 = vand.u32 %v7197, 4294901760
    %8781 = vmatpush1.msra.mxu0 %v8780
    %v8782 = vand.u32 %v7194, 4294901760
    %8783 = vmatprep.subr.mxu0 %v8782
    %v8784 = vand.u32 %v7193, 4294901760
    %8785 = vmatpush1.msra.mxu0 %v8784
    %v8786 = vand.u32 %v7190, 4294901760
    %8787 = vmatprep.subr.mxu0 %v8786
    %v8788 = vand.u32 %v7189, 4294901760
    %8789 = vmatpush1.msra.mxu0 %v8788
    %v8790 = vand.u32 %v7186, 4294901760
    %8791 = vmatprep.subr.mxu0 %v8790
    %v8792 = vand.u32 %v7185, 4294901760
    %8793 = vmatpush1.msra.mxu0 %v8792
    %v8794 = vand.u32 %v7182, 4294901760
    %8795 = vmatprep.subr.mxu0 %v8794
    %v8796 = vand.u32 %v7181, 4294901760
    %8797 = vmatpush1.msra.mxu0 %v8796
    %v8798 = vand.u32 %v7178, 4294901760
    %8799 = vmatprep.subr.mxu0 %v8798
    %v8800 = vand.u32 %v7177, 4294901760
    %8801 = vmatpush1.msra.mxu0 %v8800
    %v8802 = vand.u32 %v7174, 4294901760
    %8803 = vmatprep.subr.mxu0 %v8802
    %v8804 = vand.u32 %v7173, 4294901760
    %8805 = vmatpush1.msra.mxu0 %v8804
    %v8806 = vand.u32 %v7170, 4294901760
    %8807 = vmatprep.subr.mxu0 %v8806
    %v8808 = vand.u32 %v7169, 4294901760
    %8809 = vmatpush1.msra.mxu0 %v8808
    %v8810 = vand.u32 %v7166, 4294901760
    %8811 = vmatprep.subr.mxu0 %v8810
    %v8812 = vand.u32 %v7165, 4294901760
    %8813 = vmatpush1.msra.mxu0 %v8812
    %v8814 = vand.u32 %v7162, 4294901760
    %8815 = vmatprep.subr.mxu0 %v8814
    %v8816 = vand.u32 %v7161, 4294901760
    %8817 = vmatpush1.msra.mxu0 %v8816
    %v8818 = vand.u32 %v7158, 4294901760
    %8819 = vmatprep.subr.mxu0 %v8818
    %v8820 = vand.u32 %v7157, 4294901760
    %8821 = vmatpush1.msra.mxu0 %v8820
    %v8822 = vand.u32 %v7154, 4294901760
    %8823 = vmatprep.subr.mxu0 %v8822
    %v8824 = vand.u32 %v7153, 4294901760
    %8825 = vmatpush1.msra.mxu0 %v8824
    %v8826 = vand.u32 %v7150, 4294901760
    %8827 = vmatprep.subr.mxu0 %v8826
    %v8828 = vand.u32 %v7149, 4294901760
    %8829 = vmatpush1.msra.mxu0 %v8828
    %v8830 = vand.u32 %v7146, 4294901760
    %8831 = vmatprep.subr.mxu0 %v8830
    %v8832 = vand.u32 %v7145, 4294901760
    %8833 = vmatpush1.msra.mxu0 %v8832
    %v8834 = vand.u32 %v7142, 4294901760
    %8835 = vmatprep.subr.mxu0 %v8834
    %v8836 = vand.u32 %v7141, 4294901760
    %8837 = vmatpush1.msra.mxu0 %v8836
    %v8838 = vand.u32 %v7138, 4294901760
    %8839 = vmatprep.subr.mxu0 %v8838
    %v8840 = vand.u32 %v7137, 4294901760
    %8841 = vmatpush1.msra.mxu0 %v8840
    %8842 = vmatprep.subr.mxu0 0.0
    %8843 = vmatpush2.msra.mxu0 0.0
    %8844 = vmatprep.subr.mxu0 0.0
    %8845 = vmatpush2.msra.mxu0 0.0
    %8846 = vmatprep.subr.mxu0 0.0
    %8847 = vmatpush2.msra.mxu0 0.0
    %8848 = vmatprep.subr.mxu0 0.0
    %8849 = vmatpush2.msra.mxu0 0.0
    %8850 = vmatprep.subr.mxu0 0.0
    %8851 = vmatpush2.msra.mxu0 0.0
    %8852 = vmatprep.subr.mxu0 0.0
    %8853 = vmatpush2.msra.mxu0 0.0
    %8854 = vmatprep.subr.mxu0 0.0
    %8855 = vmatpush2.msra.mxu0 0.0
    %8856 = vmatprep.subr.mxu0 0.0
    %8857 = vmatpush2.msra.mxu0 0.0
    %8858 = vmatprep.subr.mxu0 0.0
    %8859 = vmatpush2.msra.mxu0 0.0
    %8860 = vmatprep.subr.mxu0 0.0
    %8861 = vmatpush2.msra.mxu0 0.0
    %8862 = vmatprep.subr.mxu0 0.0
    %8863 = vmatpush2.msra.mxu0 0.0
    %8864 = vmatprep.subr.mxu0 0.0
    %8865 = vmatpush2.msra.mxu0 0.0
    %8866 = vmatprep.subr.mxu0 0.0
    %8867 = vmatpush2.msra.mxu0 0.0
    %8868 = vmatprep.subr.mxu0 0.0
    %8869 = vmatpush2.msra.mxu0 0.0
    %8870 = vmatprep.subr.mxu0 0.0
    %8871 = vmatpush2.msra.mxu0 0.0
    %8872 = vmatprep.subr.mxu0 0.0
    %8873 = vmatpush2.msra.mxu0 0.0
    %8874 = vmatprep.mubr.f32.mxu0 0.0
    %v8875 = vand.u32 %v7131, 4294901760
    %v8876 = vsub.f32 %v7131, %v8875
    %v8877 = vand.u32 %v8876, 4294901760
    %8878 = vmatmul.mubr.f32.gmra.mxu0 %v8877
    %v8879 = vpop.f32.mrf.mxu0
    %v8880 = vadd.f32 %v8750, %v8879
    %v8881 = vpop.f32.mrf.mxu0
    %v8882 = vadd.f32 %v8752, %v8881
    %8883 = vmatprep.mubr.f32.mxu0 0.0
    %v8884 = vand.u32 %v7132, 4294901760
    %v8885 = vsub.f32 %v7132, %v8884
    %v8886 = vand.u32 %v8885, 4294901760
    %8887 = vmatmul.mubr.f32.gmra.mxu0 %v8886
    %v8888 = vpop.f32.mrf.mxu0
    %v8889 = vadd.f32 %v8758, %v8888
    %v8890 = vpop.f32.mrf.mxu0
    %v8891 = vadd.f32 %v8760, %v8890
    %8892 = vmatprep.mubr.f32.mxu0 0.0
    %v8893 = vand.u32 %v7133, 4294901760
    %v8894 = vsub.f32 %v7133, %v8893
    %v8895 = vand.u32 %v8894, 4294901760
    %8896 = vmatmul.mubr.f32.gmra.mxu0 %v8895
    %v8897 = vpop.f32.mrf.mxu0
    %v8898 = vadd.f32 %v8766, %v8897
    %v8899 = vpop.f32.mrf.mxu0
    %v8900 = vadd.f32 %v8768, %v8899
    %8901 = vmatprep.mubr.f32.mxu0 0.0
    %v8902 = vand.u32 %v7134, 4294901760
    %v8903 = vsub.f32 %v7134, %v8902
    %v8904 = vand.u32 %v8903, 4294901760
    %8905 = vmatmul.mubr.f32.gmra.mxu0 %v8904
    %v8906 = vpop.f32.mrf.mxu0
    %v8907 = vadd.f32 %v8774, %v8906
    %v8908 = vpop.f32.mrf.mxu0
    %v8909 = vadd.f32 %v8776, %v8908
    %8910 = vdwg.mxu0
    %v8911 = vand.u32 %v7198, 4294901760
    %v8912 = vsub.f32 %v7198, %v8911
    %v8913 = vand.u32 %v8912, 4294901760
    %8914 = vmatprep.subr.mxu0 %v8913
    %v8915 = vand.u32 %v7197, 4294901760
    %v8916 = vsub.f32 %v7197, %v8915
    %v8917 = vand.u32 %v8916, 4294901760
    %8918 = vmatpush1.msra.mxu0 %v8917
    %v8919 = vand.u32 %v7194, 4294901760
    %v8920 = vsub.f32 %v7194, %v8919
    %v8921 = vand.u32 %v8920, 4294901760
    %8922 = vmatprep.subr.mxu0 %v8921
    %v8923 = vand.u32 %v7193, 4294901760
    %v8924 = vsub.f32 %v7193, %v8923
    %v8925 = vand.u32 %v8924, 4294901760
    %8926 = vmatpush1.msra.mxu0 %v8925
    %v8927 = vand.u32 %v7190, 4294901760
    %v8928 = vsub.f32 %v7190, %v8927
    %v8929 = vand.u32 %v8928, 4294901760
    %8930 = vmatprep.subr.mxu0 %v8929
    %v8931 = vand.u32 %v7189, 4294901760
    %v8932 = vsub.f32 %v7189, %v8931
    %v8933 = vand.u32 %v8932, 4294901760
    %8934 = vmatpush1.msra.mxu0 %v8933
    %v8935 = vand.u32 %v7186, 4294901760
    %v8936 = vsub.f32 %v7186, %v8935
    %v8937 = vand.u32 %v8936, 4294901760
    %8938 = vmatprep.subr.mxu0 %v8937
    %v8939 = vand.u32 %v7185, 4294901760
    %v8940 = vsub.f32 %v7185, %v8939
    %v8941 = vand.u32 %v8940, 4294901760
    %8942 = vmatpush1.msra.mxu0 %v8941
    %v8943 = vand.u32 %v7182, 4294901760
    %v8944 = vsub.f32 %v7182, %v8943
    %v8945 = vand.u32 %v8944, 4294901760
    %8946 = vmatprep.subr.mxu0 %v8945
    %v8947 = vand.u32 %v7181, 4294901760
    %v8948 = vsub.f32 %v7181, %v8947
    %v8949 = vand.u32 %v8948, 4294901760
    %8950 = vmatpush1.msra.mxu0 %v8949
    %v8951 = vand.u32 %v7178, 4294901760
    %v8952 = vsub.f32 %v7178, %v8951
    %v8953 = vand.u32 %v8952, 4294901760
    %8954 = vmatprep.subr.mxu0 %v8953
    %v8955 = vand.u32 %v7177, 4294901760
    %v8956 = vsub.f32 %v7177, %v8955
    %v8957 = vand.u32 %v8956, 4294901760
    %8958 = vmatpush1.msra.mxu0 %v8957
    %v8959 = vand.u32 %v7174, 4294901760
    %v8960 = vsub.f32 %v7174, %v8959
    %v8961 = vand.u32 %v8960, 4294901760
    %8962 = vmatprep.subr.mxu0 %v8961
    %v8963 = vand.u32 %v7173, 4294901760
    %v8964 = vsub.f32 %v7173, %v8963
    %v8965 = vand.u32 %v8964, 4294901760
    %8966 = vmatpush1.msra.mxu0 %v8965
    %v8967 = vand.u32 %v7170, 4294901760
    %v8968 = vsub.f32 %v7170, %v8967
    %v8969 = vand.u32 %v8968, 4294901760
    %8970 = vmatprep.subr.mxu0 %v8969
    %v8971 = vand.u32 %v7169, 4294901760
    %v8972 = vsub.f32 %v7169, %v8971
    %v8973 = vand.u32 %v8972, 4294901760
    %8974 = vmatpush1.msra.mxu0 %v8973
    %v8975 = vand.u32 %v7166, 4294901760
    %v8976 = vsub.f32 %v7166, %v8975
    %v8977 = vand.u32 %v8976, 4294901760
    %8978 = vmatprep.subr.mxu0 %v8977
    %v8979 = vand.u32 %v7165, 4294901760
    %v8980 = vsub.f32 %v7165, %v8979
    %v8981 = vand.u32 %v8980, 4294901760
    %8982 = vmatpush1.msra.mxu0 %v8981
    %v8983 = vand.u32 %v7162, 4294901760
    %v8984 = vsub.f32 %v7162, %v8983
    %v8985 = vand.u32 %v8984, 4294901760
    %8986 = vmatprep.subr.mxu0 %v8985
    %v8987 = vand.u32 %v7161, 4294901760
    %v8988 = vsub.f32 %v7161, %v8987
    %v8989 = vand.u32 %v8988, 4294901760
    %8990 = vmatpush1.msra.mxu0 %v8989
    %v8991 = vand.u32 %v7158, 4294901760
    %v8992 = vsub.f32 %v7158, %v8991
    %v8993 = vand.u32 %v8992, 4294901760
    %8994 = vmatprep.subr.mxu0 %v8993
    %v8995 = vand.u32 %v7157, 4294901760
    %v8996 = vsub.f32 %v7157, %v8995
    %v8997 = vand.u32 %v8996, 4294901760
    %8998 = vmatpush1.msra.mxu0 %v8997
    %v8999 = vand.u32 %v7154, 4294901760
    %v9000 = vsub.f32 %v7154, %v8999
    %v9001 = vand.u32 %v9000, 4294901760
    %9002 = vmatprep.subr.mxu0 %v9001
    %v9003 = vand.u32 %v7153, 4294901760
    %v9004 = vsub.f32 %v7153, %v9003
    %v9005 = vand.u32 %v9004, 4294901760
    %9006 = vmatpush1.msra.mxu0 %v9005
    %v9007 = vand.u32 %v7150, 4294901760
    %v9008 = vsub.f32 %v7150, %v9007
    %v9009 = vand.u32 %v9008, 4294901760
    %9010 = vmatprep.subr.mxu0 %v9009
    %v9011 = vand.u32 %v7149, 4294901760
    %v9012 = vsub.f32 %v7149, %v9011
    %v9013 = vand.u32 %v9012, 4294901760
    %9014 = vmatpush1.msra.mxu0 %v9013
    %v9015 = vand.u32 %v7146, 4294901760
    %v9016 = vsub.f32 %v7146, %v9015
    %v9017 = vand.u32 %v9016, 4294901760
    %9018 = vmatprep.subr.mxu0 %v9017
    %v9019 = vand.u32 %v7145, 4294901760
    %v9020 = vsub.f32 %v7145, %v9019
    %v9021 = vand.u32 %v9020, 4294901760
    %9022 = vmatpush1.msra.mxu0 %v9021
    %v9023 = vand.u32 %v7142, 4294901760
    %v9024 = vsub.f32 %v7142, %v9023
    %v9025 = vand.u32 %v9024, 4294901760
    %9026 = vmatprep.subr.mxu0 %v9025
    %v9027 = vand.u32 %v7141, 4294901760
    %v9028 = vsub.f32 %v7141, %v9027
    %v9029 = vand.u32 %v9028, 4294901760
    %9030 = vmatpush1.msra.mxu0 %v9029
    %v9031 = vand.u32 %v7138, 4294901760
    %v9032 = vsub.f32 %v7138, %v9031
    %v9033 = vand.u32 %v9032, 4294901760
    %9034 = vmatprep.subr.mxu0 %v9033
    %v9035 = vand.u32 %v7137, 4294901760
    %v9036 = vsub.f32 %v7137, %v9035
    %v9037 = vand.u32 %v9036, 4294901760
    %9038 = vmatpush1.msra.mxu0 %v9037
    %9039 = vmatprep.subr.mxu0 0.0
    %9040 = vmatpush2.msra.mxu0 0.0
    %9041 = vmatprep.subr.mxu0 0.0
    %9042 = vmatpush2.msra.mxu0 0.0
    %9043 = vmatprep.subr.mxu0 0.0
    %9044 = vmatpush2.msra.mxu0 0.0
    %9045 = vmatprep.subr.mxu0 0.0
    %9046 = vmatpush2.msra.mxu0 0.0
    %9047 = vmatprep.subr.mxu0 0.0
    %9048 = vmatpush2.msra.mxu0 0.0
    %9049 = vmatprep.subr.mxu0 0.0
    %9050 = vmatpush2.msra.mxu0 0.0
    %9051 = vmatprep.subr.mxu0 0.0
    %9052 = vmatpush2.msra.mxu0 0.0
    %9053 = vmatprep.subr.mxu0 0.0
    %9054 = vmatpush2.msra.mxu0 0.0
    %9055 = vmatprep.subr.mxu0 0.0
    %9056 = vmatpush2.msra.mxu0 0.0
    %9057 = vmatprep.subr.mxu0 0.0
    %9058 = vmatpush2.msra.mxu0 0.0
    %9059 = vmatprep.subr.mxu0 0.0
    %9060 = vmatpush2.msra.mxu0 0.0
    %9061 = vmatprep.subr.mxu0 0.0
    %9062 = vmatpush2.msra.mxu0 0.0
    %9063 = vmatprep.subr.mxu0 0.0
    %9064 = vmatpush2.msra.mxu0 0.0
    %9065 = vmatprep.subr.mxu0 0.0
    %9066 = vmatpush2.msra.mxu0 0.0
    %9067 = vmatprep.subr.mxu0 0.0
    %9068 = vmatpush2.msra.mxu0 0.0
    %9069 = vmatprep.subr.mxu0 0.0
    %9070 = vmatpush2.msra.mxu0 0.0
    %9071 = vmatprep.mubr.f32.mxu0 0.0
    %v9072 = vand.u32 %v7131, 4294901760
    %9073 = vmatmul.mubr.f32.gmra.mxu0 %v9072
    %v9074 = vpop.f32.mrf.mxu0
    %v9075 = vadd.f32 %v8880, %v9074
    %v9076 = vpop.f32.mrf.mxu0
    %v9077 = vadd.f32 %v8882, %v9076
    %9078 = vmatprep.mubr.f32.mxu0 0.0
    %v9079 = vand.u32 %v7132, 4294901760
    %9080 = vmatmul.mubr.f32.gmra.mxu0 %v9079
    %v9081 = vpop.f32.mrf.mxu0
    %v9082 = vadd.f32 %v8889, %v9081
    %v9083 = vpop.f32.mrf.mxu0
    %v9084 = vadd.f32 %v8891, %v9083
    %9085 = vmatprep.mubr.f32.mxu0 0.0
    %v9086 = vand.u32 %v7133, 4294901760
    %9087 = vmatmul.mubr.f32.gmra.mxu0 %v9086
    %v9088 = vpop.f32.mrf.mxu0
    %v9089 = vadd.f32 %v8898, %v9088
    %v9090 = vpop.f32.mrf.mxu0
    %v9091 = vadd.f32 %v8900, %v9090
    %9092 = vmatprep.mubr.f32.mxu0 0.0
    %v9093 = vand.u32 %v7134, 4294901760
    %9094 = vmatmul.mubr.f32.gmra.mxu0 %v9093
    %v9095 = vpop.f32.mrf.mxu0
    %v9096 = vadd.f32 %v8907, %v9095
    %v9097 = vpop.f32.mrf.mxu0
    %v9098 = vadd.f32 %v8909, %v9097
    %9099 = vdwg.mxu0
    %v9100 = vand.u32 %v7198, 4294901760
    %9101 = vmatprep.subr.mxu0 %v9100
    %v9102 = vand.u32 %v7197, 4294901760
    %9103 = vmatpush1.msra.mxu0 %v9102
    %v9104 = vand.u32 %v7194, 4294901760
    %9105 = vmatprep.subr.mxu0 %v9104
    %v9106 = vand.u32 %v7193, 4294901760
    %9107 = vmatpush1.msra.mxu0 %v9106
    %v9108 = vand.u32 %v7190, 4294901760
    %9109 = vmatprep.subr.mxu0 %v9108
    %v9110 = vand.u32 %v7189, 4294901760
    %9111 = vmatpush1.msra.mxu0 %v9110
    %v9112 = vand.u32 %v7186, 4294901760
    %9113 = vmatprep.subr.mxu0 %v9112
    %v9114 = vand.u32 %v7185, 4294901760
    %9115 = vmatpush1.msra.mxu0 %v9114
    %v9116 = vand.u32 %v7182, 4294901760
    %9117 = vmatprep.subr.mxu0 %v9116
    %v9118 = vand.u32 %v7181, 4294901760
    %9119 = vmatpush1.msra.mxu0 %v9118
    %v9120 = vand.u32 %v7178, 4294901760
    %9121 = vmatprep.subr.mxu0 %v9120
    %v9122 = vand.u32 %v7177, 4294901760
    %9123 = vmatpush1.msra.mxu0 %v9122
    %v9124 = vand.u32 %v7174, 4294901760
    %9125 = vmatprep.subr.mxu0 %v9124
    %v9126 = vand.u32 %v7173, 4294901760
    %9127 = vmatpush1.msra.mxu0 %v9126
    %v9128 = vand.u32 %v7170, 4294901760
    %9129 = vmatprep.subr.mxu0 %v9128
    %v9130 = vand.u32 %v7169, 4294901760
    %9131 = vmatpush1.msra.mxu0 %v9130
    %v9132 = vand.u32 %v7166, 4294901760
    %9133 = vmatprep.subr.mxu0 %v9132
    %v9134 = vand.u32 %v7165, 4294901760
    %9135 = vmatpush1.msra.mxu0 %v9134
    %v9136 = vand.u32 %v7162, 4294901760
    %9137 = vmatprep.subr.mxu0 %v9136
    %v9138 = vand.u32 %v7161, 4294901760
    %9139 = vmatpush1.msra.mxu0 %v9138
    %v9140 = vand.u32 %v7158, 4294901760
    %9141 = vmatprep.subr.mxu0 %v9140
    %v9142 = vand.u32 %v7157, 4294901760
    %9143 = vmatpush1.msra.mxu0 %v9142
    %v9144 = vand.u32 %v7154, 4294901760
    %9145 = vmatprep.subr.mxu0 %v9144
    %v9146 = vand.u32 %v7153, 4294901760
    %9147 = vmatpush1.msra.mxu0 %v9146
    %v9148 = vand.u32 %v7150, 4294901760
    %9149 = vmatprep.subr.mxu0 %v9148
    %v9150 = vand.u32 %v7149, 4294901760
    %9151 = vmatpush1.msra.mxu0 %v9150
    %v9152 = vand.u32 %v7146, 4294901760
    %9153 = vmatprep.subr.mxu0 %v9152
    %v9154 = vand.u32 %v7145, 4294901760
    %9155 = vmatpush1.msra.mxu0 %v9154
    %v9156 = vand.u32 %v7142, 4294901760
    %9157 = vmatprep.subr.mxu0 %v9156
    %v9158 = vand.u32 %v7141, 4294901760
    %9159 = vmatpush1.msra.mxu0 %v9158
    %v9160 = vand.u32 %v7138, 4294901760
    %9161 = vmatprep.subr.mxu0 %v9160
    %v9162 = vand.u32 %v7137, 4294901760
    %9163 = vmatpush1.msra.mxu0 %v9162
    %9164 = vmatprep.subr.mxu0 0.0
    %9165 = vmatpush2.msra.mxu0 0.0
    %9166 = vmatprep.subr.mxu0 0.0
    %9167 = vmatpush2.msra.mxu0 0.0
    %9168 = vmatprep.subr.mxu0 0.0
    %9169 = vmatpush2.msra.mxu0 0.0
    %9170 = vmatprep.subr.mxu0 0.0
    %9171 = vmatpush2.msra.mxu0 0.0
    %9172 = vmatprep.subr.mxu0 0.0
    %9173 = vmatpush2.msra.mxu0 0.0
    %9174 = vmatprep.subr.mxu0 0.0
    %9175 = vmatpush2.msra.mxu0 0.0
    %9176 = vmatprep.subr.mxu0 0.0
    %9177 = vmatpush2.msra.mxu0 0.0
    %9178 = vmatprep.subr.mxu0 0.0
    %9179 = vmatpush2.msra.mxu0 0.0
    %9180 = vmatprep.subr.mxu0 0.0
    %9181 = vmatpush2.msra.mxu0 0.0
    %9182 = vmatprep.subr.mxu0 0.0
    %9183 = vmatpush2.msra.mxu0 0.0
    %9184 = vmatprep.subr.mxu0 0.0
    %9185 = vmatpush2.msra.mxu0 0.0
    %9186 = vmatprep.subr.mxu0 0.0
    %9187 = vmatpush2.msra.mxu0 0.0
    %9188 = vmatprep.subr.mxu0 0.0
    %9189 = vmatpush2.msra.mxu0 0.0
    %9190 = vmatprep.subr.mxu0 0.0
    %9191 = vmatpush2.msra.mxu0 0.0
    %9192 = vmatprep.subr.mxu0 0.0
    %9193 = vmatpush2.msra.mxu0 0.0
    %9194 = vmatprep.subr.mxu0 0.0
    %9195 = vmatpush2.msra.mxu0 0.0
    %9196 = vmatprep.mubr.f32.mxu0 0.0
    %v9197 = vand.u32 %v7131, 4294901760
    %9198 = vmatmul.mubr.f32.gmra.mxu0 %v9197
    %v9199 = vpop.f32.mrf.mxu0
    %v9200 = vadd.f32 %v9075, %v9199
    %v9201 = vpop.f32.mrf.mxu0
    %v9202 = vadd.f32 %v9077, %v9201
    %9203 = vmatprep.mubr.f32.mxu0 0.0
    %v9204 = vand.u32 %v7132, 4294901760
    %9205 = vmatmul.mubr.f32.gmra.mxu0 %v9204
    %v9206 = vpop.f32.mrf.mxu0
    %v9207 = vadd.f32 %v9082, %v9206
    %v9208 = vpop.f32.mrf.mxu0
    %v9209 = vadd.f32 %v9084, %v9208
    %9210 = vmatprep.mubr.f32.mxu0 0.0
    %v9211 = vand.u32 %v7133, 4294901760
    %9212 = vmatmul.mubr.f32.gmra.mxu0 %v9211
    %v9213 = vpop.f32.mrf.mxu0
    %v9214 = vadd.f32 %v9089, %v9213
    %v9215 = vpop.f32.mrf.mxu0
    %v9216 = vadd.f32 %v9091, %v9215
    %9217 = vmatprep.mubr.f32.mxu0 0.0
    %v9218 = vand.u32 %v7134, 4294901760
    %9219 = vmatmul.mubr.f32.gmra.mxu0 %v9218
    %v9220 = vpop.f32.mrf.mxu0
    %v9221 = vadd.f32 %v9096, %v9220
    %v9222 = vpop.f32.mrf.mxu0
    %v9223 = vadd.f32 %v9098, %v9222
    %9224 = vdwg.mxu0
    %9225 = vst [vmem:[#allocation2] sm:$0xff] %v8198
    %9226 = vst [vmem:[#allocation2 + $0x8] sm:$0xff] %v8200
    %9227 = vst [vmem:[#allocation2 + $0x10] sm:$0xff] %v9200
    %9228 = vst [vmem:[#allocation2 + $0x18] sm:$0xff] %v9202
    %9229 = vst [vmem:[#allocation2 + $0x20] sm:$0xff] %v8205
    %9230 = vst [vmem:[#allocation2 + $0x28] sm:$0xff] %v8207
    %9231 = vst [vmem:[#allocation2 + $0x30] sm:$0xff] %v9207
    %9232 = vst [vmem:[#allocation2 + $0x38] sm:$0xff] %v9209
    %9233 = vst [vmem:[#allocation2 + $0x40] sm:$0xff] %v8212
    %9234 = vst [vmem:[#allocation2 + $0x48] sm:$0xff] %v8214
    %9235 = vst [vmem:[#allocation2 + $0x50] sm:$0xff] %v9214
    %9236 = vst [vmem:[#allocation2 + $0x58] sm:$0xff] %v9216
    %9237 = vst [vmem:[#allocation2 + $0x60] sm:$0xff] %v8219
    %9238 = vst [vmem:[#allocation2 + $0x68] sm:$0xff] %v8221
    %9239 = vst [vmem:[#allocation2 + $0x70] sm:$0xff] %v9221
    %9240 = vst [vmem:[#allocation2 + $0x78] sm:$0xff] %v9223
    %v9241 = vld [vmem:[%s8] sm:$0xff]
    %v9242 = vld [vmem:[%s8 + $0x8] sm:$0xff]
    %v9243 = vld [vmem:[%s8 + $0x10] sm:$0xff]
    %v9244 = vld [vmem:[%s8 + $0x18] sm:$0xff]
    %v9245 = vld [vmem:[%s8 + $0x20] sm:$0xff]
    %v9246 = vld [vmem:[%s8 + $0x28] sm:$0xff]
    %v9247 = vld [vmem:[%s8 + $0x30] sm:$0xff]
    %v9248 = vld [vmem:[%s8 + $0x38] sm:$0xff]
    %v9249 = vld [vmem:[%s8 + $0x40] sm:$0xff]
    %v9250 = vld [vmem:[%s8 + $0x48] sm:$0xff]
    %v9251 = vld [vmem:[%s8 + $0x50] sm:$0xff]
    %v9252 = vld [vmem:[%s8 + $0x58] sm:$0xff]
    %v9253 = vld [vmem:[%s8 + $0x60] sm:$0xff]
    %v9254 = vld [vmem:[%s8 + $0x68] sm:$0xff]
    %v9255 = vld [vmem:[%s8 + $0x70] sm:$0xff]
    %v9256 = vld [vmem:[%s8 + $0x78] sm:$0xff]
    %v9257 = vld [vmem:[%s8 + $0x80] sm:$0xff]
    %v9258 = vld [vmem:[%s8 + $0x88] sm:$0xff]
    %v9259 = vld [vmem:[%s8 + $0x90] sm:$0xff]
    %v9260 = vld [vmem:[%s8 + $0x98] sm:$0xff]
    %v9261 = vld [vmem:[%s8 + $0xa0] sm:$0xff]
    %v9262 = vld [vmem:[%s8 + $0xa8] sm:$0xff]
    %v9263 = vld [vmem:[%s8 + $0xb0] sm:$0xff]
    %v9264 = vld [vmem:[%s8 + $0xb8] sm:$0xff]
    %v9265 = vld [vmem:[%s8 + $0xc0] sm:$0xff]
    %v9266 = vld [vmem:[%s8 + $0xc8] sm:$0xff]
    %v9267 = vld [vmem:[%s8 + $0xd0] sm:$0xff]
    %v9268 = vld [vmem:[%s8 + $0xd8] sm:$0xff]
    %v9269 = vld [vmem:[%s8 + $0xe0] sm:$0xff]
    %v9270 = vld [vmem:[%s8 + $0xe8] sm:$0xff]
    %v9271 = vld [vmem:[%s8 + $0xf0] sm:$0xff]
    %v9272 = vld [vmem:[%s8 + $0xf8] sm:$0xff]
    %v9273 = vld [vmem:[%s8 + $0x100] sm:$0xff]
    %v9274 = vld [vmem:[%s8 + $0x108] sm:$0xff]
    %v9275 = vld [vmem:[%s8 + $0x110] sm:$0xff]
    %v9276 = vld [vmem:[%s8 + $0x118] sm:$0xff]
    %v9277 = vld [vmem:[%s8 + $0x120] sm:$0xff]
    %v9278 = vld [vmem:[%s8 + $0x128] sm:$0xff]
    %v9279 = vld [vmem:[%s8 + $0x130] sm:$0xff]
    %v9280 = vld [vmem:[%s8 + $0x138] sm:$0xff]
    %v9281 = vld [vmem:[%s8 + $0x140] sm:$0xff]
    %v9282 = vld [vmem:[%s8 + $0x148] sm:$0xff]
    %v9283 = vld [vmem:[%s8 + $0x150] sm:$0xff]
    %v9284 = vld [vmem:[%s8 + $0x158] sm:$0xff]
    %v9285 = vld [vmem:[%s8 + $0x160] sm:$0xff]
    %v9286 = vld [vmem:[%s8 + $0x168] sm:$0xff]
    %v9287 = vld [vmem:[%s8 + $0x170] sm:$0xff]
    %v9288 = vld [vmem:[%s8 + $0x178] sm:$0xff]
    %v9289 = vld [vmem:[%s8 + $0x180] sm:$0xff]
    %v9290 = vld [vmem:[%s8 + $0x188] sm:$0xff]
    %v9291 = vld [vmem:[%s8 + $0x190] sm:$0xff]
    %v9292 = vld [vmem:[%s8 + $0x198] sm:$0xff]
    %v9293 = vld [vmem:[%s8 + $0x1a0] sm:$0xff]
    %v9294 = vld [vmem:[%s8 + $0x1a8] sm:$0xff]
    %v9295 = vld [vmem:[%s8 + $0x1b0] sm:$0xff]
    %v9296 = vld [vmem:[%s8 + $0x1b8] sm:$0xff]
    %v9297 = vld [vmem:[%s8 + $0x1c0] sm:$0xff]
    %v9298 = vld [vmem:[%s8 + $0x1c8] sm:$0xff]
    %v9299 = vld [vmem:[%s8 + $0x1d0] sm:$0xff]
    %v9300 = vld [vmem:[%s8 + $0x1d8] sm:$0xff]
    %v9301 = vld [vmem:[%s8 + $0x1e0] sm:$0xff]
    %v9302 = vld [vmem:[%s8 + $0x1e8] sm:$0xff]
    %v9303 = vld [vmem:[%s8 + $0x1f0] sm:$0xff]
    %v9304 = vld [vmem:[%s8 + $0x1f8] sm:$0xff]
    loop: start=0, step=1, limit=16
    $region50: #{cnn_lstm_forward.1} parent=1 // loop_pre_header
      _
    $region51: #{cnn_lstm_forward.1} parent=1 // loop_header
      %s9306 = sphi 0, %s9310
      %p9307 = scmp.ge.s32.totalorder %s9306, 16
      %v9311 = vphi 0.0, %v11133
      %v9312 = vphi 0.0, %v11134
      %v9313 = vphi 0.0, %v11125
      %v9314 = vphi 0.0, %v11126
    $region52: #{cnn_lstm_forward.1} parent=1 // loop_header_branch
      %9309 = sbr.rel (%p9307) target = $region56
    $region53: #{cnn_lstm_forward.1} parent=1 // loop_body
      %s9315 = sshra.s32 %s9306, 3
      %s9316 = sand.u32 %s9306, 7
      %s9317 = sshra.s32 %s9306, 3
      %s9318 = sand.u32 %s9306, 7
      %s9319 = smul.u32 %s9315, 4
      %s9320 = smul.u32 %s9319, 8
      %s9321 = sadd.s32 %s9320, %s9318
      %s9322 = scalar_lea.vmem [#allocation2], %s9321
      %v9323 = vld [vmem:[%s9322] ss:$8 sm:$0xf]
      %s9324 = sadd.s32 64, %s9321
      %s9325 = scalar_lea.vmem [#allocation2], %s9324
      %v9326 = vld [vmem:[%s9325] ss:$8 sm:$0xf]
      %v9329 = vcombine.low %v9311, %v9312
      %v9331 = vunpack.c.l.s4 1966171168
      %v9332 = vunpack.c.0.s8 %v9331
      %v9333 = vlaneseq
      %v9334 = vshrl.u32 %v9333, 7
      %v9335 = vsub.s32 %v9332, %v9334
      %v9336 = vrot.slane %v9329, %v9335
      %v9338 = vunpack.c.l.s4 1966171168
      %v9339 = vunpack.c.0.s8 %v9338
      %v9340 = vlaneseq
      %v9341 = vshrl.u32 %v9340, 7
      %v9342 = vsub.s32 %v9339, %v9341
      %v9343 = vrot.slane %v9336, %v9342
      %v9345 = vand.u32 %v9302, 4294901760
      %9346 = vmatprep.subr.mxu0 %v9345
      %v9347 = vand.u32 %v9301, 4294901760
      %9348 = vmatpush1.msra.mxu0 %v9347
      %v9349 = vand.u32 %v9298, 4294901760
      %9350 = vmatprep.subr.mxu0 %v9349
      %v9351 = vand.u32 %v9297, 4294901760
      %9352 = vmatpush1.msra.mxu0 %v9351
      %v9353 = vand.u32 %v9294, 4294901760
      %9354 = vmatprep.subr.mxu0 %v9353
      %v9355 = vand.u32 %v9293, 4294901760
      %9356 = vmatpush1.msra.mxu0 %v9355
      %v9357 = vand.u32 %v9290, 4294901760
      %9358 = vmatprep.subr.mxu0 %v9357
      %v9359 = vand.u32 %v9289, 4294901760
      %9360 = vmatpush1.msra.mxu0 %v9359
      %v9361 = vand.u32 %v9286, 4294901760
      %9362 = vmatprep.subr.mxu0 %v9361
      %v9363 = vand.u32 %v9285, 4294901760
      %9364 = vmatpush1.msra.mxu0 %v9363
      %v9365 = vand.u32 %v9282, 4294901760
      %9366 = vmatprep.subr.mxu0 %v9365
      %v9367 = vand.u32 %v9281, 4294901760
      %9368 = vmatpush1.msra.mxu0 %v9367
      %v9369 = vand.u32 %v9278, 4294901760
      %9370 = vmatprep.subr.mxu0 %v9369
      %v9371 = vand.u32 %v9277, 4294901760
      %9372 = vmatpush1.msra.mxu0 %v9371
      %v9373 = vand.u32 %v9274, 4294901760
      %9374 = vmatprep.subr.mxu0 %v9373
      %v9375 = vand.u32 %v9273, 4294901760
      %9376 = vmatpush1.msra.mxu0 %v9375
      %v9377 = vand.u32 %v9270, 4294901760
      %9378 = vmatprep.subr.mxu0 %v9377
      %v9379 = vand.u32 %v9269, 4294901760
      %9380 = vmatpush1.msra.mxu0 %v9379
      %v9381 = vand.u32 %v9266, 4294901760
      %9382 = vmatprep.subr.mxu0 %v9381
      %v9383 = vand.u32 %v9265, 4294901760
      %9384 = vmatpush1.msra.mxu0 %v9383
      %v9385 = vand.u32 %v9262, 4294901760
      %9386 = vmatprep.subr.mxu0 %v9385
      %v9387 = vand.u32 %v9261, 4294901760
      %9388 = vmatpush1.msra.mxu0 %v9387
      %v9389 = vand.u32 %v9258, 4294901760
      %9390 = vmatprep.subr.mxu0 %v9389
      %v9391 = vand.u32 %v9257, 4294901760
      %9392 = vmatpush1.msra.mxu0 %v9391
      %v9393 = vand.u32 %v9254, 4294901760
      %9394 = vmatprep.subr.mxu0 %v9393
      %v9395 = vand.u32 %v9253, 4294901760
      %9396 = vmatpush1.msra.mxu0 %v9395
      %v9397 = vand.u32 %v9250, 4294901760
      %9398 = vmatprep.subr.mxu0 %v9397
      %v9399 = vand.u32 %v9249, 4294901760
      %9400 = vmatpush1.msra.mxu0 %v9399
      %v9401 = vand.u32 %v9246, 4294901760
      %9402 = vmatprep.subr.mxu0 %v9401
      %v9403 = vand.u32 %v9245, 4294901760
      %9404 = vmatpush1.msra.mxu0 %v9403
      %v9405 = vand.u32 %v9242, 4294901760
      %9406 = vmatprep.subr.mxu0 %v9405
      %v9407 = vand.u32 %v9241, 4294901760
      %9408 = vmatpush1.msra.mxu0 %v9407
      %9409 = vmatprep.subr.mxu0 0.0
      %9410 = vmatpush2.msra.mxu0 0.0
      %9411 = vmatprep.subr.mxu0 0.0
      %9412 = vmatpush2.msra.mxu0 0.0
      %9413 = vmatprep.subr.mxu0 0.0
      %9414 = vmatpush2.msra.mxu0 0.0
      %9415 = vmatprep.subr.mxu0 0.0
      %9416 = vmatpush2.msra.mxu0 0.0
      %9417 = vmatprep.subr.mxu0 0.0
      %9418 = vmatpush2.msra.mxu0 0.0
      %9419 = vmatprep.subr.mxu0 0.0
      %9420 = vmatpush2.msra.mxu0 0.0
      %9421 = vmatprep.subr.mxu0 0.0
      %9422 = vmatpush2.msra.mxu0 0.0
      %9423 = vmatprep.subr.mxu0 0.0
      %9424 = vmatpush2.msra.mxu0 0.0
      %9425 = vmatprep.subr.mxu0 0.0
      %9426 = vmatpush2.msra.mxu0 0.0
      %9427 = vmatprep.subr.mxu0 0.0
      %9428 = vmatpush2.msra.mxu0 0.0
      %9429 = vmatprep.subr.mxu0 0.0
      %9430 = vmatpush2.msra.mxu0 0.0
      %9431 = vmatprep.subr.mxu0 0.0
      %9432 = vmatpush2.msra.mxu0 0.0
      %9433 = vmatprep.subr.mxu0 0.0
      %9434 = vmatpush2.msra.mxu0 0.0
      %9435 = vmatprep.subr.mxu0 0.0
      %9436 = vmatpush2.msra.mxu0 0.0
      %9437 = vmatprep.subr.mxu0 0.0
      %9438 = vmatpush2.msra.mxu0 0.0
      %9439 = vmatprep.subr.mxu0 0.0
      %9440 = vmatpush2.msra.mxu0 0.0
      %9441 = vmatprep.mubr.f32.mxu0 0.0
      %v9442 = vand.u32 %v9343, 4294901760
      %v9443 = vsub.f32 %v9343, %v9442
      %v9444 = vand.u32 %v9443, 4294901760
      %v9445 = vsub.f32 %v9443, %v9444
      %v9446 = vand.u32 %v9445, 4294901760
      %9447 = vmatmul.mubr.f32.gmra.mxu0 %v9446
      %v9448 = vpop.f32.mrf.mxu0
      %v9449 = vadd.f32 0.0, %v9448
      %v9450 = vpop.f32.mrf.mxu0
      %v9451 = vadd.f32 0.0, %v9450
      %9452 = vdwg.mxu0
      %v9453 = vand.u32 %v9302, 4294901760
      %v9454 = vsub.f32 %v9302, %v9453
      %v9455 = vand.u32 %v9454, 4294901760
      %v9456 = vsub.f32 %v9454, %v9455
      %v9457 = vand.u32 %v9456, 4294901760
      %9458 = vmatprep.subr.mxu0 %v9457
      %v9459 = vand.u32 %v9301, 4294901760
      %v9460 = vsub.f32 %v9301, %v9459
      %v9461 = vand.u32 %v9460, 4294901760
      %v9462 = vsub.f32 %v9460, %v9461
      %v9463 = vand.u32 %v9462, 4294901760
      %9464 = vmatpush1.msra.mxu0 %v9463
      %v9465 = vand.u32 %v9298, 4294901760
      %v9466 = vsub.f32 %v9298, %v9465
      %v9467 = vand.u32 %v9466, 4294901760
      %v9468 = vsub.f32 %v9466, %v9467
      %v9469 = vand.u32 %v9468, 4294901760
      %9470 = vmatprep.subr.mxu0 %v9469
      %v9471 = vand.u32 %v9297, 4294901760
      %v9472 = vsub.f32 %v9297, %v9471
      %v9473 = vand.u32 %v9472, 4294901760
      %v9474 = vsub.f32 %v9472, %v9473
      %v9475 = vand.u32 %v9474, 4294901760
      %9476 = vmatpush1.msra.mxu0 %v9475
      %v9477 = vand.u32 %v9294, 4294901760
      %v9478 = vsub.f32 %v9294, %v9477
      %v9479 = vand.u32 %v9478, 4294901760
      %v9480 = vsub.f32 %v9478, %v9479
      %v9481 = vand.u32 %v9480, 4294901760
      %9482 = vmatprep.subr.mxu0 %v9481
      %v9483 = vand.u32 %v9293, 4294901760
      %v9484 = vsub.f32 %v9293, %v9483
      %v9485 = vand.u32 %v9484, 4294901760
      %v9486 = vsub.f32 %v9484, %v9485
      %v9487 = vand.u32 %v9486, 4294901760
      %9488 = vmatpush1.msra.mxu0 %v9487
      %v9489 = vand.u32 %v9290, 4294901760
      %v9490 = vsub.f32 %v9290, %v9489
      %v9491 = vand.u32 %v9490, 4294901760
      %v9492 = vsub.f32 %v9490, %v9491
      %v9493 = vand.u32 %v9492, 4294901760
      %9494 = vmatprep.subr.mxu0 %v9493
      %v9495 = vand.u32 %v9289, 4294901760
      %v9496 = vsub.f32 %v9289, %v9495
      %v9497 = vand.u32 %v9496, 4294901760
      %v9498 = vsub.f32 %v9496, %v9497
      %v9499 = vand.u32 %v9498, 4294901760
      %9500 = vmatpush1.msra.mxu0 %v9499
      %v9501 = vand.u32 %v9286, 4294901760
      %v9502 = vsub.f32 %v9286, %v9501
      %v9503 = vand.u32 %v9502, 4294901760
      %v9504 = vsub.f32 %v9502, %v9503
      %v9505 = vand.u32 %v9504, 4294901760
      %9506 = vmatprep.subr.mxu0 %v9505
      %v9507 = vand.u32 %v9285, 4294901760
      %v9508 = vsub.f32 %v9285, %v9507
      %v9509 = vand.u32 %v9508, 4294901760
      %v9510 = vsub.f32 %v9508, %v9509
      %v9511 = vand.u32 %v9510, 4294901760
      %9512 = vmatpush1.msra.mxu0 %v9511
      %v9513 = vand.u32 %v9282, 4294901760
      %v9514 = vsub.f32 %v9282, %v9513
      %v9515 = vand.u32 %v9514, 4294901760
      %v9516 = vsub.f32 %v9514, %v9515
      %v9517 = vand.u32 %v9516, 4294901760
      %9518 = vmatprep.subr.mxu0 %v9517
      %v9519 = vand.u32 %v9281, 4294901760
      %v9520 = vsub.f32 %v9281, %v9519
      %v9521 = vand.u32 %v9520, 4294901760
      %v9522 = vsub.f32 %v9520, %v9521
      %v9523 = vand.u32 %v9522, 4294901760
      %9524 = vmatpush1.msra.mxu0 %v9523
      %v9525 = vand.u32 %v9278, 4294901760
      %v9526 = vsub.f32 %v9278, %v9525
      %v9527 = vand.u32 %v9526, 4294901760
      %v9528 = vsub.f32 %v9526, %v9527
      %v9529 = vand.u32 %v9528, 4294901760
      %9530 = vmatprep.subr.mxu0 %v9529
      %v9531 = vand.u32 %v9277, 4294901760
      %v9532 = vsub.f32 %v9277, %v9531
      %v9533 = vand.u32 %v9532, 4294901760
      %v9534 = vsub.f32 %v9532, %v9533
      %v9535 = vand.u32 %v9534, 4294901760
      %9536 = vmatpush1.msra.mxu0 %v9535
      %v9537 = vand.u32 %v9274, 4294901760
      %v9538 = vsub.f32 %v9274, %v9537
      %v9539 = vand.u32 %v9538, 4294901760
      %v9540 = vsub.f32 %v9538, %v9539
      %v9541 = vand.u32 %v9540, 4294901760
      %9542 = vmatprep.subr.mxu0 %v9541
      %v9543 = vand.u32 %v9273, 4294901760
      %v9544 = vsub.f32 %v9273, %v9543
      %v9545 = vand.u32 %v9544, 4294901760
      %v9546 = vsub.f32 %v9544, %v9545
      %v9547 = vand.u32 %v9546, 4294901760
      %9548 = vmatpush1.msra.mxu0 %v9547
      %v9549 = vand.u32 %v9270, 4294901760
      %v9550 = vsub.f32 %v9270, %v9549
      %v9551 = vand.u32 %v9550, 4294901760
      %v9552 = vsub.f32 %v9550, %v9551
      %v9553 = vand.u32 %v9552, 4294901760
      %9554 = vmatprep.subr.mxu0 %v9553
      %v9555 = vand.u32 %v9269, 4294901760
      %v9556 = vsub.f32 %v9269, %v9555
      %v9557 = vand.u32 %v9556, 4294901760
      %v9558 = vsub.f32 %v9556, %v9557
      %v9559 = vand.u32 %v9558, 4294901760
      %9560 = vmatpush1.msra.mxu0 %v9559
      %v9561 = vand.u32 %v9266, 4294901760
      %v9562 = vsub.f32 %v9266, %v9561
      %v9563 = vand.u32 %v9562, 4294901760
      %v9564 = vsub.f32 %v9562, %v9563
      %v9565 = vand.u32 %v9564, 4294901760
      %9566 = vmatprep.subr.mxu0 %v9565
      %v9567 = vand.u32 %v9265, 4294901760
      %v9568 = vsub.f32 %v9265, %v9567
      %v9569 = vand.u32 %v9568, 4294901760
      %v9570 = vsub.f32 %v9568, %v9569
      %v9571 = vand.u32 %v9570, 4294901760
      %9572 = vmatpush1.msra.mxu0 %v9571
      %v9573 = vand.u32 %v9262, 4294901760
      %v9574 = vsub.f32 %v9262, %v9573
      %v9575 = vand.u32 %v9574, 4294901760
      %v9576 = vsub.f32 %v9574, %v9575
      %v9577 = vand.u32 %v9576, 4294901760
      %9578 = vmatprep.subr.mxu0 %v9577
      %v9579 = vand.u32 %v9261, 4294901760
      %v9580 = vsub.f32 %v9261, %v9579
      %v9581 = vand.u32 %v9580, 4294901760
      %v9582 = vsub.f32 %v9580, %v9581
      %v9583 = vand.u32 %v9582, 4294901760
      %9584 = vmatpush1.msra.mxu0 %v9583
      %v9585 = vand.u32 %v9258, 4294901760
      %v9586 = vsub.f32 %v9258, %v9585
      %v9587 = vand.u32 %v9586, 4294901760
      %v9588 = vsub.f32 %v9586, %v9587
      %v9589 = vand.u32 %v9588, 4294901760
      %9590 = vmatprep.subr.mxu0 %v9589
      %v9591 = vand.u32 %v9257, 4294901760
      %v9592 = vsub.f32 %v9257, %v9591
      %v9593 = vand.u32 %v9592, 4294901760
      %v9594 = vsub.f32 %v9592, %v9593
      %v9595 = vand.u32 %v9594, 4294901760
      %9596 = vmatpush1.msra.mxu0 %v9595
      %v9597 = vand.u32 %v9254, 4294901760
      %v9598 = vsub.f32 %v9254, %v9597
      %v9599 = vand.u32 %v9598, 4294901760
      %v9600 = vsub.f32 %v9598, %v9599
      %v9601 = vand.u32 %v9600, 4294901760
      %9602 = vmatprep.subr.mxu0 %v9601
      %v9603 = vand.u32 %v9253, 4294901760
      %v9604 = vsub.f32 %v9253, %v9603
      %v9605 = vand.u32 %v9604, 4294901760
      %v9606 = vsub.f32 %v9604, %v9605
      %v9607 = vand.u32 %v9606, 4294901760
      %9608 = vmatpush1.msra.mxu0 %v9607
      %v9609 = vand.u32 %v9250, 4294901760
      %v9610 = vsub.f32 %v9250, %v9609
      %v9611 = vand.u32 %v9610, 4294901760
      %v9612 = vsub.f32 %v9610, %v9611
      %v9613 = vand.u32 %v9612, 4294901760
      %9614 = vmatprep.subr.mxu0 %v9613
      %v9615 = vand.u32 %v9249, 4294901760
      %v9616 = vsub.f32 %v9249, %v9615
      %v9617 = vand.u32 %v9616, 4294901760
      %v9618 = vsub.f32 %v9616, %v9617
      %v9619 = vand.u32 %v9618, 4294901760
      %9620 = vmatpush1.msra.mxu0 %v9619
      %v9621 = vand.u32 %v9246, 4294901760
      %v9622 = vsub.f32 %v9246, %v9621
      %v9623 = vand.u32 %v9622, 4294901760
      %v9624 = vsub.f32 %v9622, %v9623
      %v9625 = vand.u32 %v9624, 4294901760
      %9626 = vmatprep.subr.mxu0 %v9625
      %v9627 = vand.u32 %v9245, 4294901760
      %v9628 = vsub.f32 %v9245, %v9627
      %v9629 = vand.u32 %v9628, 4294901760
      %v9630 = vsub.f32 %v9628, %v9629
      %v9631 = vand.u32 %v9630, 4294901760
      %9632 = vmatpush1.msra.mxu0 %v9631
      %v9633 = vand.u32 %v9242, 4294901760
      %v9634 = vsub.f32 %v9242, %v9633
      %v9635 = vand.u32 %v9634, 4294901760
      %v9636 = vsub.f32 %v9634, %v9635
      %v9637 = vand.u32 %v9636, 4294901760
      %9638 = vmatprep.subr.mxu0 %v9637
      %v9639 = vand.u32 %v9241, 4294901760
      %v9640 = vsub.f32 %v9241, %v9639
      %v9641 = vand.u32 %v9640, 4294901760
      %v9642 = vsub.f32 %v9640, %v9641
      %v9643 = vand.u32 %v9642, 4294901760
      %9644 = vmatpush1.msra.mxu0 %v9643
      %9645 = vmatprep.subr.mxu0 0.0
      %9646 = vmatpush2.msra.mxu0 0.0
      %9647 = vmatprep.subr.mxu0 0.0
      %9648 = vmatpush2.msra.mxu0 0.0
      %9649 = vmatprep.subr.mxu0 0.0
      %9650 = vmatpush2.msra.mxu0 0.0
      %9651 = vmatprep.subr.mxu0 0.0
      %9652 = vmatpush2.msra.mxu0 0.0
      %9653 = vmatprep.subr.mxu0 0.0
      %9654 = vmatpush2.msra.mxu0 0.0
      %9655 = vmatprep.subr.mxu0 0.0
      %9656 = vmatpush2.msra.mxu0 0.0
      %9657 = vmatprep.subr.mxu0 0.0
      %9658 = vmatpush2.msra.mxu0 0.0
      %9659 = vmatprep.subr.mxu0 0.0
      %9660 = vmatpush2.msra.mxu0 0.0
      %9661 = vmatprep.subr.mxu0 0.0
      %9662 = vmatpush2.msra.mxu0 0.0
      %9663 = vmatprep.subr.mxu0 0.0
      %9664 = vmatpush2.msra.mxu0 0.0
      %9665 = vmatprep.subr.mxu0 0.0
      %9666 = vmatpush2.msra.mxu0 0.0
      %9667 = vmatprep.subr.mxu0 0.0
      %9668 = vmatpush2.msra.mxu0 0.0
      %9669 = vmatprep.subr.mxu0 0.0
      %9670 = vmatpush2.msra.mxu0 0.0
      %9671 = vmatprep.subr.mxu0 0.0
      %9672 = vmatpush2.msra.mxu0 0.0
      %9673 = vmatprep.subr.mxu0 0.0
      %9674 = vmatpush2.msra.mxu0 0.0
      %9675 = vmatprep.subr.mxu0 0.0
      %9676 = vmatpush2.msra.mxu0 0.0
      %9677 = vmatprep.mubr.f32.mxu0 0.0
      %v9678 = vand.u32 %v9343, 4294901760
      %9679 = vmatmul.mubr.f32.gmra.mxu0 %v9678
      %v9680 = vpop.f32.mrf.mxu0
      %v9681 = vadd.f32 %v9449, %v9680
      %v9682 = vpop.f32.mrf.mxu0
      %v9683 = vadd.f32 %v9451, %v9682
      %9684 = vdwg.mxu0
      %v9685 = vand.u32 %v9302, 4294901760
      %v9686 = vsub.f32 %v9302, %v9685
      %9687 = vmatprep.subr.mxu0 %v9686
      %v9688 = vand.u32 %v9301, 4294901760
      %v9689 = vsub.f32 %v9301, %v9688
      %9690 = vmatpush1.msra.mxu0 %v9689
      %v9691 = vand.u32 %v9298, 4294901760
      %v9692 = vsub.f32 %v9298, %v9691
      %9693 = vmatprep.subr.mxu0 %v9692
      %v9694 = vand.u32 %v9297, 4294901760
      %v9695 = vsub.f32 %v9297, %v9694
      %9696 = vmatpush1.msra.mxu0 %v9695
      %v9697 = vand.u32 %v9294, 4294901760
      %v9698 = vsub.f32 %v9294, %v9697
      %9699 = vmatprep.subr.mxu0 %v9698
      %v9700 = vand.u32 %v9293, 4294901760
      %v9701 = vsub.f32 %v9293, %v9700
      %9702 = vmatpush1.msra.mxu0 %v9701
      %v9703 = vand.u32 %v9290, 4294901760
      %v9704 = vsub.f32 %v9290, %v9703
      %9705 = vmatprep.subr.mxu0 %v9704
      %v9706 = vand.u32 %v9289, 4294901760
      %v9707 = vsub.f32 %v9289, %v9706
      %9708 = vmatpush1.msra.mxu0 %v9707
      %v9709 = vand.u32 %v9286, 4294901760
      %v9710 = vsub.f32 %v9286, %v9709
      %9711 = vmatprep.subr.mxu0 %v9710
      %v9712 = vand.u32 %v9285, 4294901760
      %v9713 = vsub.f32 %v9285, %v9712
      %9714 = vmatpush1.msra.mxu0 %v9713
      %v9715 = vand.u32 %v9282, 4294901760
      %v9716 = vsub.f32 %v9282, %v9715
      %9717 = vmatprep.subr.mxu0 %v9716
      %v9718 = vand.u32 %v9281, 4294901760
      %v9719 = vsub.f32 %v9281, %v9718
      %9720 = vmatpush1.msra.mxu0 %v9719
      %v9721 = vand.u32 %v9278, 4294901760
      %v9722 = vsub.f32 %v9278, %v9721
      %9723 = vmatprep.subr.mxu0 %v9722
      %v9724 = vand.u32 %v9277, 4294901760
      %v9725 = vsub.f32 %v9277, %v9724
      %9726 = vmatpush1.msra.mxu0 %v9725
      %v9727 = vand.u32 %v9274, 4294901760
      %v9728 = vsub.f32 %v9274, %v9727
      %9729 = vmatprep.subr.mxu0 %v9728
      %v9730 = vand.u32 %v9273, 4294901760
      %v9731 = vsub.f32 %v9273, %v9730
      %9732 = vmatpush1.msra.mxu0 %v9731
      %v9733 = vand.u32 %v9270, 4294901760
      %v9734 = vsub.f32 %v9270, %v9733
      %9735 = vmatprep.subr.mxu0 %v9734
      %v9736 = vand.u32 %v9269, 4294901760
      %v9737 = vsub.f32 %v9269, %v9736
      %9738 = vmatpush1.msra.mxu0 %v9737
      %v9739 = vand.u32 %v9266, 4294901760
      %v9740 = vsub.f32 %v9266, %v9739
      %9741 = vmatprep.subr.mxu0 %v9740
      %v9742 = vand.u32 %v9265, 4294901760
      %v9743 = vsub.f32 %v9265, %v9742
      %9744 = vmatpush1.msra.mxu0 %v9743
      %v9745 = vand.u32 %v9262, 4294901760
      %v9746 = vsub.f32 %v9262, %v9745
      %9747 = vmatprep.subr.mxu0 %v9746
      %v9748 = vand.u32 %v9261, 4294901760
      %v9749 = vsub.f32 %v9261, %v9748
      %9750 = vmatpush1.msra.mxu0 %v9749
      %v9751 = vand.u32 %v9258, 4294901760
      %v9752 = vsub.f32 %v9258, %v9751
      %9753 = vmatprep.subr.mxu0 %v9752
      %v9754 = vand.u32 %v9257, 4294901760
      %v9755 = vsub.f32 %v9257, %v9754
      %9756 = vmatpush1.msra.mxu0 %v9755
      %v9757 = vand.u32 %v9254, 4294901760
      %v9758 = vsub.f32 %v9254, %v9757
      %9759 = vmatprep.subr.mxu0 %v9758
      %v9760 = vand.u32 %v9253, 4294901760
      %v9761 = vsub.f32 %v9253, %v9760
      %9762 = vmatpush1.msra.mxu0 %v9761
      %v9763 = vand.u32 %v9250, 4294901760
      %v9764 = vsub.f32 %v9250, %v9763
      %9765 = vmatprep.subr.mxu0 %v9764
      %v9766 = vand.u32 %v9249, 4294901760
      %v9767 = vsub.f32 %v9249, %v9766
      %9768 = vmatpush1.msra.mxu0 %v9767
      %v9769 = vand.u32 %v9246, 4294901760
      %v9770 = vsub.f32 %v9246, %v9769
      %9771 = vmatprep.subr.mxu0 %v9770
      %v9772 = vand.u32 %v9245, 4294901760
      %v9773 = vsub.f32 %v9245, %v9772
      %9774 = vmatpush1.msra.mxu0 %v9773
      %v9775 = vand.u32 %v9242, 4294901760
      %v9776 = vsub.f32 %v9242, %v9775
      %9777 = vmatprep.subr.mxu0 %v9776
      %v9778 = vand.u32 %v9241, 4294901760
      %v9779 = vsub.f32 %v9241, %v9778
      %9780 = vmatpush1.msra.mxu0 %v9779
      %9781 = vmatprep.subr.mxu0 0.0
      %9782 = vmatpush2.msra.mxu0 0.0
      %9783 = vmatprep.subr.mxu0 0.0
      %9784 = vmatpush2.msra.mxu0 0.0
      %9785 = vmatprep.subr.mxu0 0.0
      %9786 = vmatpush2.msra.mxu0 0.0
      %9787 = vmatprep.subr.mxu0 0.0
      %9788 = vmatpush2.msra.mxu0 0.0
      %9789 = vmatprep.subr.mxu0 0.0
      %9790 = vmatpush2.msra.mxu0 0.0
      %9791 = vmatprep.subr.mxu0 0.0
      %9792 = vmatpush2.msra.mxu0 0.0
      %9793 = vmatprep.subr.mxu0 0.0
      %9794 = vmatpush2.msra.mxu0 0.0
      %9795 = vmatprep.subr.mxu0 0.0
      %9796 = vmatpush2.msra.mxu0 0.0
      %9797 = vmatprep.subr.mxu0 0.0
      %9798 = vmatpush2.msra.mxu0 0.0
      %9799 = vmatprep.subr.mxu0 0.0
      %9800 = vmatpush2.msra.mxu0 0.0
      %9801 = vmatprep.subr.mxu0 0.0
      %9802 = vmatpush2.msra.mxu0 0.0
      %9803 = vmatprep.subr.mxu0 0.0
      %9804 = vmatpush2.msra.mxu0 0.0
      %9805 = vmatprep.subr.mxu0 0.0
      %9806 = vmatpush2.msra.mxu0 0.0
      %9807 = vmatprep.subr.mxu0 0.0
      %9808 = vmatpush2.msra.mxu0 0.0
      %9809 = vmatprep.subr.mxu0 0.0
      %9810 = vmatpush2.msra.mxu0 0.0
      %9811 = vmatprep.subr.mxu0 0.0
      %9812 = vmatpush2.msra.mxu0 0.0
      %9813 = vmatprep.mubr.f32.mxu0 0.0
      %v9814 = vand.u32 %v9343, 4294901760
      %v9815 = vsub.f32 %v9343, %v9814
      %9816 = vmatmul.mubr.f32.gmra.mxu0 %v9815
      %v9817 = vpop.f32.mrf.mxu0
      %v9818 = vadd.f32 %v9681, %v9817
      %v9819 = vpop.f32.mrf.mxu0
      %v9820 = vadd.f32 %v9683, %v9819
      %9821 = vdwg.mxu0
      %v9822 = vand.u32 %v9302, 4294901760
      %9823 = vmatprep.subr.mxu0 %v9822
      %v9824 = vand.u32 %v9301, 4294901760
      %9825 = vmatpush1.msra.mxu0 %v9824
      %v9826 = vand.u32 %v9298, 4294901760
      %9827 = vmatprep.subr.mxu0 %v9826
      %v9828 = vand.u32 %v9297, 4294901760
      %9829 = vmatpush1.msra.mxu0 %v9828
      %v9830 = vand.u32 %v9294, 4294901760
      %9831 = vmatprep.subr.mxu0 %v9830
      %v9832 = vand.u32 %v9293, 4294901760
      %9833 = vmatpush1.msra.mxu0 %v9832
      %v9834 = vand.u32 %v9290, 4294901760
      %9835 = vmatprep.subr.mxu0 %v9834
      %v9836 = vand.u32 %v9289, 4294901760
      %9837 = vmatpush1.msra.mxu0 %v9836
      %v9838 = vand.u32 %v9286, 4294901760
      %9839 = vmatprep.subr.mxu0 %v9838
      %v9840 = vand.u32 %v9285, 4294901760
      %9841 = vmatpush1.msra.mxu0 %v9840
      %v9842 = vand.u32 %v9282, 4294901760
      %9843 = vmatprep.subr.mxu0 %v9842
      %v9844 = vand.u32 %v9281, 4294901760
      %9845 = vmatpush1.msra.mxu0 %v9844
      %v9846 = vand.u32 %v9278, 4294901760
      %9847 = vmatprep.subr.mxu0 %v9846
      %v9848 = vand.u32 %v9277, 4294901760
      %9849 = vmatpush1.msra.mxu0 %v9848
      %v9850 = vand.u32 %v9274, 4294901760
      %9851 = vmatprep.subr.mxu0 %v9850
      %v9852 = vand.u32 %v9273, 4294901760
      %9853 = vmatpush1.msra.mxu0 %v9852
      %v9854 = vand.u32 %v9270, 4294901760
      %9855 = vmatprep.subr.mxu0 %v9854
      %v9856 = vand.u32 %v9269, 4294901760
      %9857 = vmatpush1.msra.mxu0 %v9856
      %v9858 = vand.u32 %v9266, 4294901760
      %9859 = vmatprep.subr.mxu0 %v9858
      %v9860 = vand.u32 %v9265, 4294901760
      %9861 = vmatpush1.msra.mxu0 %v9860
      %v9862 = vand.u32 %v9262, 4294901760
      %9863 = vmatprep.subr.mxu0 %v9862
      %v9864 = vand.u32 %v9261, 4294901760
      %9865 = vmatpush1.msra.mxu0 %v9864
      %v9866 = vand.u32 %v9258, 4294901760
      %9867 = vmatprep.subr.mxu0 %v9866
      %v9868 = vand.u32 %v9257, 4294901760
      %9869 = vmatpush1.msra.mxu0 %v9868
      %v9870 = vand.u32 %v9254, 4294901760
      %9871 = vmatprep.subr.mxu0 %v9870
      %v9872 = vand.u32 %v9253, 4294901760
      %9873 = vmatpush1.msra.mxu0 %v9872
      %v9874 = vand.u32 %v9250, 4294901760
      %9875 = vmatprep.subr.mxu0 %v9874
      %v9876 = vand.u32 %v9249, 4294901760
      %9877 = vmatpush1.msra.mxu0 %v9876
      %v9878 = vand.u32 %v9246, 4294901760
      %9879 = vmatprep.subr.mxu0 %v9878
      %v9880 = vand.u32 %v9245, 4294901760
      %9881 = vmatpush1.msra.mxu0 %v9880
      %v9882 = vand.u32 %v9242, 4294901760
      %9883 = vmatprep.subr.mxu0 %v9882
      %v9884 = vand.u32 %v9241, 4294901760
      %9885 = vmatpush1.msra.mxu0 %v9884
      %9886 = vmatprep.subr.mxu0 0.0
      %9887 = vmatpush2.msra.mxu0 0.0
      %9888 = vmatprep.subr.mxu0 0.0
      %9889 = vmatpush2.msra.mxu0 0.0
      %9890 = vmatprep.subr.mxu0 0.0
      %9891 = vmatpush2.msra.mxu0 0.0
      %9892 = vmatprep.subr.mxu0 0.0
      %9893 = vmatpush2.msra.mxu0 0.0
      %9894 = vmatprep.subr.mxu0 0.0
      %9895 = vmatpush2.msra.mxu0 0.0
      %9896 = vmatprep.subr.mxu0 0.0
      %9897 = vmatpush2.msra.mxu0 0.0
      %9898 = vmatprep.subr.mxu0 0.0
      %9899 = vmatpush2.msra.mxu0 0.0
      %9900 = vmatprep.subr.mxu0 0.0
      %9901 = vmatpush2.msra.mxu0 0.0
      %9902 = vmatprep.subr.mxu0 0.0
      %9903 = vmatpush2.msra.mxu0 0.0
      %9904 = vmatprep.subr.mxu0 0.0
      %9905 = vmatpush2.msra.mxu0 0.0
      %9906 = vmatprep.subr.mxu0 0.0
      %9907 = vmatpush2.msra.mxu0 0.0
      %9908 = vmatprep.subr.mxu0 0.0
      %9909 = vmatpush2.msra.mxu0 0.0
      %9910 = vmatprep.subr.mxu0 0.0
      %9911 = vmatpush2.msra.mxu0 0.0
      %9912 = vmatprep.subr.mxu0 0.0
      %9913 = vmatpush2.msra.mxu0 0.0
      %9914 = vmatprep.subr.mxu0 0.0
      %9915 = vmatpush2.msra.mxu0 0.0
      %9916 = vmatprep.subr.mxu0 0.0
      %9917 = vmatpush2.msra.mxu0 0.0
      %9918 = vmatprep.mubr.f32.mxu0 0.0
      %v9919 = vand.u32 %v9343, 4294901760
      %v9920 = vsub.f32 %v9343, %v9919
      %v9921 = vand.u32 %v9920, 4294901760
      %9922 = vmatmul.mubr.f32.gmra.mxu0 %v9921
      %v9923 = vpop.f32.mrf.mxu0
      %v9924 = vadd.f32 %v9818, %v9923
      %v9925 = vpop.f32.mrf.mxu0
      %v9926 = vadd.f32 %v9820, %v9925
      %9927 = vdwg.mxu0
      %v9928 = vand.u32 %v9302, 4294901760
      %v9929 = vsub.f32 %v9302, %v9928
      %v9930 = vand.u32 %v9929, 4294901760
      %9931 = vmatprep.subr.mxu0 %v9930
      %v9932 = vand.u32 %v9301, 4294901760
      %v9933 = vsub.f32 %v9301, %v9932
      %v9934 = vand.u32 %v9933, 4294901760
      %9935 = vmatpush1.msra.mxu0 %v9934
      %v9936 = vand.u32 %v9298, 4294901760
      %v9937 = vsub.f32 %v9298, %v9936
      %v9938 = vand.u32 %v9937, 4294901760
      %9939 = vmatprep.subr.mxu0 %v9938
      %v9940 = vand.u32 %v9297, 4294901760
      %v9941 = vsub.f32 %v9297, %v9940
      %v9942 = vand.u32 %v9941, 4294901760
      %9943 = vmatpush1.msra.mxu0 %v9942
      %v9944 = vand.u32 %v9294, 4294901760
      %v9945 = vsub.f32 %v9294, %v9944
      %v9946 = vand.u32 %v9945, 4294901760
      %9947 = vmatprep.subr.mxu0 %v9946
      %v9948 = vand.u32 %v9293, 4294901760
      %v9949 = vsub.f32 %v9293, %v9948
      %v9950 = vand.u32 %v9949, 4294901760
      %9951 = vmatpush1.msra.mxu0 %v9950
      %v9952 = vand.u32 %v9290, 4294901760
      %v9953 = vsub.f32 %v9290, %v9952
      %v9954 = vand.u32 %v9953, 4294901760
      %9955 = vmatprep.subr.mxu0 %v9954
      %v9956 = vand.u32 %v9289, 4294901760
      %v9957 = vsub.f32 %v9289, %v9956
      %v9958 = vand.u32 %v9957, 4294901760
      %9959 = vmatpush1.msra.mxu0 %v9958
      %v9960 = vand.u32 %v9286, 4294901760
      %v9961 = vsub.f32 %v9286, %v9960
      %v9962 = vand.u32 %v9961, 4294901760
      %9963 = vmatprep.subr.mxu0 %v9962
      %v9964 = vand.u32 %v9285, 4294901760
      %v9965 = vsub.f32 %v9285, %v9964
      %v9966 = vand.u32 %v9965, 4294901760
      %9967 = vmatpush1.msra.mxu0 %v9966
      %v9968 = vand.u32 %v9282, 4294901760
      %v9969 = vsub.f32 %v9282, %v9968
      %v9970 = vand.u32 %v9969, 4294901760
      %9971 = vmatprep.subr.mxu0 %v9970
      %v9972 = vand.u32 %v9281, 4294901760
      %v9973 = vsub.f32 %v9281, %v9972
      %v9974 = vand.u32 %v9973, 4294901760
      %9975 = vmatpush1.msra.mxu0 %v9974
      %v9976 = vand.u32 %v9278, 4294901760
      %v9977 = vsub.f32 %v9278, %v9976
      %v9978 = vand.u32 %v9977, 4294901760
      %9979 = vmatprep.subr.mxu0 %v9978
      %v9980 = vand.u32 %v9277, 4294901760
      %v9981 = vsub.f32 %v9277, %v9980
      %v9982 = vand.u32 %v9981, 4294901760
      %9983 = vmatpush1.msra.mxu0 %v9982
      %v9984 = vand.u32 %v9274, 4294901760
      %v9985 = vsub.f32 %v9274, %v9984
      %v9986 = vand.u32 %v9985, 4294901760
      %9987 = vmatprep.subr.mxu0 %v9986
      %v9988 = vand.u32 %v9273, 4294901760
      %v9989 = vsub.f32 %v9273, %v9988
      %v9990 = vand.u32 %v9989, 4294901760
      %9991 = vmatpush1.msra.mxu0 %v9990
      %v9992 = vand.u32 %v9270, 4294901760
      %v9993 = vsub.f32 %v9270, %v9992
      %v9994 = vand.u32 %v9993, 4294901760
      %9995 = vmatprep.subr.mxu0 %v9994
      %v9996 = vand.u32 %v9269, 4294901760
      %v9997 = vsub.f32 %v9269, %v9996
      %v9998 = vand.u32 %v9997, 4294901760
      %9999 = vmatpush1.msra.mxu0 %v9998
      %v10000 = vand.u32 %v9266, 4294901760
      %v10001 = vsub.f32 %v9266, %v10000
      %v10002 = vand.u32 %v10001, 4294901760
      %10003 = vmatprep.subr.mxu0 %v10002
      %v10004 = vand.u32 %v9265, 4294901760
      %v10005 = vsub.f32 %v9265, %v10004
      %v10006 = vand.u32 %v10005, 4294901760
      %10007 = vmatpush1.msra.mxu0 %v10006
      %v10008 = vand.u32 %v9262, 4294901760
      %v10009 = vsub.f32 %v9262, %v10008
      %v10010 = vand.u32 %v10009, 4294901760
      %10011 = vmatprep.subr.mxu0 %v10010
      %v10012 = vand.u32 %v9261, 4294901760
      %v10013 = vsub.f32 %v9261, %v10012
      %v10014 = vand.u32 %v10013, 4294901760
      %10015 = vmatpush1.msra.mxu0 %v10014
      %v10016 = vand.u32 %v9258, 4294901760
      %v10017 = vsub.f32 %v9258, %v10016
      %v10018 = vand.u32 %v10017, 4294901760
      %10019 = vmatprep.subr.mxu0 %v10018
      %v10020 = vand.u32 %v9257, 4294901760
      %v10021 = vsub.f32 %v9257, %v10020
      %v10022 = vand.u32 %v10021, 4294901760
      %10023 = vmatpush1.msra.mxu0 %v10022
      %v10024 = vand.u32 %v9254, 4294901760
      %v10025 = vsub.f32 %v9254, %v10024
      %v10026 = vand.u32 %v10025, 4294901760
      %10027 = vmatprep.subr.mxu0 %v10026
      %v10028 = vand.u32 %v9253, 4294901760
      %v10029 = vsub.f32 %v9253, %v10028
      %v10030 = vand.u32 %v10029, 4294901760
      %10031 = vmatpush1.msra.mxu0 %v10030
      %v10032 = vand.u32 %v9250, 4294901760
      %v10033 = vsub.f32 %v9250, %v10032
      %v10034 = vand.u32 %v10033, 4294901760
      %10035 = vmatprep.subr.mxu0 %v10034
      %v10036 = vand.u32 %v9249, 4294901760
      %v10037 = vsub.f32 %v9249, %v10036
      %v10038 = vand.u32 %v10037, 4294901760
      %10039 = vmatpush1.msra.mxu0 %v10038
      %v10040 = vand.u32 %v9246, 4294901760
      %v10041 = vsub.f32 %v9246, %v10040
      %v10042 = vand.u32 %v10041, 4294901760
      %10043 = vmatprep.subr.mxu0 %v10042
      %v10044 = vand.u32 %v9245, 4294901760
      %v10045 = vsub.f32 %v9245, %v10044
      %v10046 = vand.u32 %v10045, 4294901760
      %10047 = vmatpush1.msra.mxu0 %v10046
      %v10048 = vand.u32 %v9242, 4294901760
      %v10049 = vsub.f32 %v9242, %v10048
      %v10050 = vand.u32 %v10049, 4294901760
      %10051 = vmatprep.subr.mxu0 %v10050
      %v10052 = vand.u32 %v9241, 4294901760
      %v10053 = vsub.f32 %v9241, %v10052
      %v10054 = vand.u32 %v10053, 4294901760
      %10055 = vmatpush1.msra.mxu0 %v10054
      %10056 = vmatprep.subr.mxu0 0.0
      %10057 = vmatpush2.msra.mxu0 0.0
      %10058 = vmatprep.subr.mxu0 0.0
      %10059 = vmatpush2.msra.mxu0 0.0
      %10060 = vmatprep.subr.mxu0 0.0
      %10061 = vmatpush2.msra.mxu0 0.0
      %10062 = vmatprep.subr.mxu0 0.0
      %10063 = vmatpush2.msra.mxu0 0.0
      %10064 = vmatprep.subr.mxu0 0.0
      %10065 = vmatpush2.msra.mxu0 0.0
      %10066 = vmatprep.subr.mxu0 0.0
      %10067 = vmatpush2.msra.mxu0 0.0
      %10068 = vmatprep.subr.mxu0 0.0
      %10069 = vmatpush2.msra.mxu0 0.0
      %10070 = vmatprep.subr.mxu0 0.0
      %10071 = vmatpush2.msra.mxu0 0.0
      %10072 = vmatprep.subr.mxu0 0.0
      %10073 = vmatpush2.msra.mxu0 0.0
      %10074 = vmatprep.subr.mxu0 0.0
      %10075 = vmatpush2.msra.mxu0 0.0
      %10076 = vmatprep.subr.mxu0 0.0
      %10077 = vmatpush2.msra.mxu0 0.0
      %10078 = vmatprep.subr.mxu0 0.0
      %10079 = vmatpush2.msra.mxu0 0.0
      %10080 = vmatprep.subr.mxu0 0.0
      %10081 = vmatpush2.msra.mxu0 0.0
      %10082 = vmatprep.subr.mxu0 0.0
      %10083 = vmatpush2.msra.mxu0 0.0
      %10084 = vmatprep.subr.mxu0 0.0
      %10085 = vmatpush2.msra.mxu0 0.0
      %10086 = vmatprep.subr.mxu0 0.0
      %10087 = vmatpush2.msra.mxu0 0.0
      %10088 = vmatprep.mubr.f32.mxu0 0.0
      %v10089 = vand.u32 %v9343, 4294901760
      %10090 = vmatmul.mubr.f32.gmra.mxu0 %v10089
      %v10091 = vpop.f32.mrf.mxu0
      %v10092 = vadd.f32 %v9924, %v10091
      %v10093 = vpop.f32.mrf.mxu0
      %v10094 = vadd.f32 %v9926, %v10093
      %10095 = vdwg.mxu0
      %v10096 = vand.u32 %v9302, 4294901760
      %10097 = vmatprep.subr.mxu0 %v10096
      %v10098 = vand.u32 %v9301, 4294901760
      %10099 = vmatpush1.msra.mxu0 %v10098
      %v10100 = vand.u32 %v9298, 4294901760
      %10101 = vmatprep.subr.mxu0 %v10100
      %v10102 = vand.u32 %v9297, 4294901760
      %10103 = vmatpush1.msra.mxu0 %v10102
      %v10104 = vand.u32 %v9294, 4294901760
      %10105 = vmatprep.subr.mxu0 %v10104
      %v10106 = vand.u32 %v9293, 4294901760
      %10107 = vmatpush1.msra.mxu0 %v10106
      %v10108 = vand.u32 %v9290, 4294901760
      %10109 = vmatprep.subr.mxu0 %v10108
      %v10110 = vand.u32 %v9289, 4294901760
      %10111 = vmatpush1.msra.mxu0 %v10110
      %v10112 = vand.u32 %v9286, 4294901760
      %10113 = vmatprep.subr.mxu0 %v10112
      %v10114 = vand.u32 %v9285, 4294901760
      %10115 = vmatpush1.msra.mxu0 %v10114
      %v10116 = vand.u32 %v9282, 4294901760
      %10117 = vmatprep.subr.mxu0 %v10116
      %v10118 = vand.u32 %v9281, 4294901760
      %10119 = vmatpush1.msra.mxu0 %v10118
      %v10120 = vand.u32 %v9278, 4294901760
      %10121 = vmatprep.subr.mxu0 %v10120
      %v10122 = vand.u32 %v9277, 4294901760
      %10123 = vmatpush1.msra.mxu0 %v10122
      %v10124 = vand.u32 %v9274, 4294901760
      %10125 = vmatprep.subr.mxu0 %v10124
      %v10126 = vand.u32 %v9273, 4294901760
      %10127 = vmatpush1.msra.mxu0 %v10126
      %v10128 = vand.u32 %v9270, 4294901760
      %10129 = vmatprep.subr.mxu0 %v10128
      %v10130 = vand.u32 %v9269, 4294901760
      %10131 = vmatpush1.msra.mxu0 %v10130
      %v10132 = vand.u32 %v9266, 4294901760
      %10133 = vmatprep.subr.mxu0 %v10132
      %v10134 = vand.u32 %v9265, 4294901760
      %10135 = vmatpush1.msra.mxu0 %v10134
      %v10136 = vand.u32 %v9262, 4294901760
      %10137 = vmatprep.subr.mxu0 %v10136
      %v10138 = vand.u32 %v9261, 4294901760
      %10139 = vmatpush1.msra.mxu0 %v10138
      %v10140 = vand.u32 %v9258, 4294901760
      %10141 = vmatprep.subr.mxu0 %v10140
      %v10142 = vand.u32 %v9257, 4294901760
      %10143 = vmatpush1.msra.mxu0 %v10142
      %v10144 = vand.u32 %v9254, 4294901760
      %10145 = vmatprep.subr.mxu0 %v10144
      %v10146 = vand.u32 %v9253, 4294901760
      %10147 = vmatpush1.msra.mxu0 %v10146
      %v10148 = vand.u32 %v9250, 4294901760
      %10149 = vmatprep.subr.mxu0 %v10148
      %v10150 = vand.u32 %v9249, 4294901760
      %10151 = vmatpush1.msra.mxu0 %v10150
      %v10152 = vand.u32 %v9246, 4294901760
      %10153 = vmatprep.subr.mxu0 %v10152
      %v10154 = vand.u32 %v9245, 4294901760
      %10155 = vmatpush1.msra.mxu0 %v10154
      %v10156 = vand.u32 %v9242, 4294901760
      %10157 = vmatprep.subr.mxu0 %v10156
      %v10158 = vand.u32 %v9241, 4294901760
      %10159 = vmatpush1.msra.mxu0 %v10158
      %10160 = vmatprep.subr.mxu0 0.0
      %10161 = vmatpush2.msra.mxu0 0.0
      %10162 = vmatprep.subr.mxu0 0.0
      %10163 = vmatpush2.msra.mxu0 0.0
      %10164 = vmatprep.subr.mxu0 0.0
      %10165 = vmatpush2.msra.mxu0 0.0
      %10166 = vmatprep.subr.mxu0 0.0
      %10167 = vmatpush2.msra.mxu0 0.0
      %10168 = vmatprep.subr.mxu0 0.0
      %10169 = vmatpush2.msra.mxu0 0.0
      %10170 = vmatprep.subr.mxu0 0.0
      %10171 = vmatpush2.msra.mxu0 0.0
      %10172 = vmatprep.subr.mxu0 0.0
      %10173 = vmatpush2.msra.mxu0 0.0
      %10174 = vmatprep.subr.mxu0 0.0
      %10175 = vmatpush2.msra.mxu0 0.0
      %10176 = vmatprep.subr.mxu0 0.0
      %10177 = vmatpush2.msra.mxu0 0.0
      %10178 = vmatprep.subr.mxu0 0.0
      %10179 = vmatpush2.msra.mxu0 0.0
      %10180 = vmatprep.subr.mxu0 0.0
      %10181 = vmatpush2.msra.mxu0 0.0
      %10182 = vmatprep.subr.mxu0 0.0
      %10183 = vmatpush2.msra.mxu0 0.0
      %10184 = vmatprep.subr.mxu0 0.0
      %10185 = vmatpush2.msra.mxu0 0.0
      %10186 = vmatprep.subr.mxu0 0.0
      %10187 = vmatpush2.msra.mxu0 0.0
      %10188 = vmatprep.subr.mxu0 0.0
      %10189 = vmatpush2.msra.mxu0 0.0
      %10190 = vmatprep.subr.mxu0 0.0
      %10191 = vmatpush2.msra.mxu0 0.0
      %10192 = vmatprep.mubr.f32.mxu0 0.0
      %v10193 = vand.u32 %v9343, 4294901760
      %10194 = vmatmul.mubr.f32.gmra.mxu0 %v10193
      %v10195 = vpop.f32.mrf.mxu0
      %v10196 = vadd.f32 %v10092, %v10195
      %v10197 = vpop.f32.mrf.mxu0
      %v10198 = vadd.f32 %v10094, %v10197
      %10199 = vdwg.mxu0
      %v10200 = vand.u32 %v9304, 4294901760
      %10201 = vmatprep.subr.mxu0 %v10200
      %v10202 = vand.u32 %v9303, 4294901760
      %10203 = vmatpush1.msra.mxu0 %v10202
      %v10204 = vand.u32 %v9300, 4294901760
      %10205 = vmatprep.subr.mxu0 %v10204
      %v10206 = vand.u32 %v9299, 4294901760
      %10207 = vmatpush1.msra.mxu0 %v10206
      %v10208 = vand.u32 %v9296, 4294901760
      %10209 = vmatprep.subr.mxu0 %v10208
      %v10210 = vand.u32 %v9295, 4294901760
      %10211 = vmatpush1.msra.mxu0 %v10210
      %v10212 = vand.u32 %v9292, 4294901760
      %10213 = vmatprep.subr.mxu0 %v10212
      %v10214 = vand.u32 %v9291, 4294901760
      %10215 = vmatpush1.msra.mxu0 %v10214
      %v10216 = vand.u32 %v9288, 4294901760
      %10217 = vmatprep.subr.mxu0 %v10216
      %v10218 = vand.u32 %v9287, 4294901760
      %10219 = vmatpush1.msra.mxu0 %v10218
      %v10220 = vand.u32 %v9284, 4294901760
      %10221 = vmatprep.subr.mxu0 %v10220
      %v10222 = vand.u32 %v9283, 4294901760
      %10223 = vmatpush1.msra.mxu0 %v10222
      %v10224 = vand.u32 %v9280, 4294901760
      %10225 = vmatprep.subr.mxu0 %v10224
      %v10226 = vand.u32 %v9279, 4294901760
      %10227 = vmatpush1.msra.mxu0 %v10226
      %v10228 = vand.u32 %v9276, 4294901760
      %10229 = vmatprep.subr.mxu0 %v10228
      %v10230 = vand.u32 %v9275, 4294901760
      %10231 = vmatpush1.msra.mxu0 %v10230
      %v10232 = vand.u32 %v9272, 4294901760
      %10233 = vmatprep.subr.mxu0 %v10232
      %v10234 = vand.u32 %v9271, 4294901760
      %10235 = vmatpush1.msra.mxu0 %v10234
      %v10236 = vand.u32 %v9268, 4294901760
      %10237 = vmatprep.subr.mxu0 %v10236
      %v10238 = vand.u32 %v9267, 4294901760
      %10239 = vmatpush1.msra.mxu0 %v10238
      %v10240 = vand.u32 %v9264, 4294901760
      %10241 = vmatprep.subr.mxu0 %v10240
      %v10242 = vand.u32 %v9263, 4294901760
      %10243 = vmatpush1.msra.mxu0 %v10242
      %v10244 = vand.u32 %v9260, 4294901760
      %10245 = vmatprep.subr.mxu0 %v10244
      %v10246 = vand.u32 %v9259, 4294901760
      %10247 = vmatpush1.msra.mxu0 %v10246
      %v10248 = vand.u32 %v9256, 4294901760
      %10249 = vmatprep.subr.mxu0 %v10248
      %v10250 = vand.u32 %v9255, 4294901760
      %10251 = vmatpush1.msra.mxu0 %v10250
      %v10252 = vand.u32 %v9252, 4294901760
      %10253 = vmatprep.subr.mxu0 %v10252
      %v10254 = vand.u32 %v9251, 4294901760
      %10255 = vmatpush1.msra.mxu0 %v10254
      %v10256 = vand.u32 %v9248, 4294901760
      %10257 = vmatprep.subr.mxu0 %v10256
      %v10258 = vand.u32 %v9247, 4294901760
      %10259 = vmatpush1.msra.mxu0 %v10258
      %v10260 = vand.u32 %v9244, 4294901760
      %10261 = vmatprep.subr.mxu0 %v10260
      %v10262 = vand.u32 %v9243, 4294901760
      %10263 = vmatpush1.msra.mxu0 %v10262
      %10264 = vmatprep.subr.mxu0 0.0
      %10265 = vmatpush2.msra.mxu0 0.0
      %10266 = vmatprep.subr.mxu0 0.0
      %10267 = vmatpush2.msra.mxu0 0.0
      %10268 = vmatprep.subr.mxu0 0.0
      %10269 = vmatpush2.msra.mxu0 0.0
      %10270 = vmatprep.subr.mxu0 0.0
      %10271 = vmatpush2.msra.mxu0 0.0
      %10272 = vmatprep.subr.mxu0 0.0
      %10273 = vmatpush2.msra.mxu0 0.0
      %10274 = vmatprep.subr.mxu0 0.0
      %10275 = vmatpush2.msra.mxu0 0.0
      %10276 = vmatprep.subr.mxu0 0.0
      %10277 = vmatpush2.msra.mxu0 0.0
      %10278 = vmatprep.subr.mxu0 0.0
      %10279 = vmatpush2.msra.mxu0 0.0
      %10280 = vmatprep.subr.mxu0 0.0
      %10281 = vmatpush2.msra.mxu0 0.0
      %10282 = vmatprep.subr.mxu0 0.0
      %10283 = vmatpush2.msra.mxu0 0.0
      %10284 = vmatprep.subr.mxu0 0.0
      %10285 = vmatpush2.msra.mxu0 0.0
      %10286 = vmatprep.subr.mxu0 0.0
      %10287 = vmatpush2.msra.mxu0 0.0
      %10288 = vmatprep.subr.mxu0 0.0
      %10289 = vmatpush2.msra.mxu0 0.0
      %10290 = vmatprep.subr.mxu0 0.0
      %10291 = vmatpush2.msra.mxu0 0.0
      %10292 = vmatprep.subr.mxu0 0.0
      %10293 = vmatpush2.msra.mxu0 0.0
      %10294 = vmatprep.subr.mxu0 0.0
      %10295 = vmatpush2.msra.mxu0 0.0
      %10296 = vmatprep.mubr.f32.mxu0 0.0
      %v10297 = vand.u32 %v9343, 4294901760
      %v10298 = vsub.f32 %v9343, %v10297
      %v10299 = vand.u32 %v10298, 4294901760
      %v10300 = vsub.f32 %v10298, %v10299
      %v10301 = vand.u32 %v10300, 4294901760
      %10302 = vmatmul.mubr.f32.gmra.mxu0 %v10301
      %v10303 = vpop.f32.mrf.mxu0
      %v10304 = vadd.f32 0.0, %v10303
      %v10305 = vpop.f32.mrf.mxu0
      %v10306 = vadd.f32 0.0, %v10305
      %10307 = vdwg.mxu0
      %v10308 = vand.u32 %v9304, 4294901760
      %v10309 = vsub.f32 %v9304, %v10308
      %v10310 = vand.u32 %v10309, 4294901760
      %v10311 = vsub.f32 %v10309, %v10310
      %v10312 = vand.u32 %v10311, 4294901760
      %10313 = vmatprep.subr.mxu0 %v10312
      %v10314 = vand.u32 %v9303, 4294901760
      %v10315 = vsub.f32 %v9303, %v10314
      %v10316 = vand.u32 %v10315, 4294901760
      %v10317 = vsub.f32 %v10315, %v10316
      %v10318 = vand.u32 %v10317, 4294901760
      %10319 = vmatpush1.msra.mxu0 %v10318
      %v10320 = vand.u32 %v9300, 4294901760
      %v10321 = vsub.f32 %v9300, %v10320
      %v10322 = vand.u32 %v10321, 4294901760
      %v10323 = vsub.f32 %v10321, %v10322
      %v10324 = vand.u32 %v10323, 4294901760
      %10325 = vmatprep.subr.mxu0 %v10324
      %v10326 = vand.u32 %v9299, 4294901760
      %v10327 = vsub.f32 %v9299, %v10326
      %v10328 = vand.u32 %v10327, 4294901760
      %v10329 = vsub.f32 %v10327, %v10328
      %v10330 = vand.u32 %v10329, 4294901760
      %10331 = vmatpush1.msra.mxu0 %v10330
      %v10332 = vand.u32 %v9296, 4294901760
      %v10333 = vsub.f32 %v9296, %v10332
      %v10334 = vand.u32 %v10333, 4294901760
      %v10335 = vsub.f32 %v10333, %v10334
      %v10336 = vand.u32 %v10335, 4294901760
      %10337 = vmatprep.subr.mxu0 %v10336
      %v10338 = vand.u32 %v9295, 4294901760
      %v10339 = vsub.f32 %v9295, %v10338
      %v10340 = vand.u32 %v10339, 4294901760
      %v10341 = vsub.f32 %v10339, %v10340
      %v10342 = vand.u32 %v10341, 4294901760
      %10343 = vmatpush1.msra.mxu0 %v10342
      %v10344 = vand.u32 %v9292, 4294901760
      %v10345 = vsub.f32 %v9292, %v10344
      %v10346 = vand.u32 %v10345, 4294901760
      %v10347 = vsub.f32 %v10345, %v10346
      %v10348 = vand.u32 %v10347, 4294901760
      %10349 = vmatprep.subr.mxu0 %v10348
      %v10350 = vand.u32 %v9291, 4294901760
      %v10351 = vsub.f32 %v9291, %v10350
      %v10352 = vand.u32 %v10351, 4294901760
      %v10353 = vsub.f32 %v10351, %v10352
      %v10354 = vand.u32 %v10353, 4294901760
      %10355 = vmatpush1.msra.mxu0 %v10354
      %v10356 = vand.u32 %v9288, 4294901760
      %v10357 = vsub.f32 %v9288, %v10356
      %v10358 = vand.u32 %v10357, 4294901760
      %v10359 = vsub.f32 %v10357, %v10358
      %v10360 = vand.u32 %v10359, 4294901760
      %10361 = vmatprep.subr.mxu0 %v10360
      %v10362 = vand.u32 %v9287, 4294901760
      %v10363 = vsub.f32 %v9287, %v10362
      %v10364 = vand.u32 %v10363, 4294901760
      %v10365 = vsub.f32 %v10363, %v10364
      %v10366 = vand.u32 %v10365, 4294901760
      %10367 = vmatpush1.msra.mxu0 %v10366
      %v10368 = vand.u32 %v9284, 4294901760
      %v10369 = vsub.f32 %v9284, %v10368
      %v10370 = vand.u32 %v10369, 4294901760
      %v10371 = vsub.f32 %v10369, %v10370
      %v10372 = vand.u32 %v10371, 4294901760
      %10373 = vmatprep.subr.mxu0 %v10372
      %v10374 = vand.u32 %v9283, 4294901760
      %v10375 = vsub.f32 %v9283, %v10374
      %v10376 = vand.u32 %v10375, 4294901760
      %v10377 = vsub.f32 %v10375, %v10376
      %v10378 = vand.u32 %v10377, 4294901760
      %10379 = vmatpush1.msra.mxu0 %v10378
      %v10380 = vand.u32 %v9280, 4294901760
      %v10381 = vsub.f32 %v9280, %v10380
      %v10382 = vand.u32 %v10381, 4294901760
      %v10383 = vsub.f32 %v10381, %v10382
      %v10384 = vand.u32 %v10383, 4294901760
      %10385 = vmatprep.subr.mxu0 %v10384
      %v10386 = vand.u32 %v9279, 4294901760
      %v10387 = vsub.f32 %v9279, %v10386
      %v10388 = vand.u32 %v10387, 4294901760
      %v10389 = vsub.f32 %v10387, %v10388
      %v10390 = vand.u32 %v10389, 4294901760
      %10391 = vmatpush1.msra.mxu0 %v10390
      %v10392 = vand.u32 %v9276, 4294901760
      %v10393 = vsub.f32 %v9276, %v10392
      %v10394 = vand.u32 %v10393, 4294901760
      %v10395 = vsub.f32 %v10393, %v10394
      %v10396 = vand.u32 %v10395, 4294901760
      %10397 = vmatprep.subr.mxu0 %v10396
      %v10398 = vand.u32 %v9275, 4294901760
      %v10399 = vsub.f32 %v9275, %v10398
      %v10400 = vand.u32 %v10399, 4294901760
      %v10401 = vsub.f32 %v10399, %v10400
      %v10402 = vand.u32 %v10401, 4294901760
      %10403 = vmatpush1.msra.mxu0 %v10402
      %v10404 = vand.u32 %v9272, 4294901760
      %v10405 = vsub.f32 %v9272, %v10404
      %v10406 = vand.u32 %v10405, 4294901760
      %v10407 = vsub.f32 %v10405, %v10406
      %v10408 = vand.u32 %v10407, 4294901760
      %10409 = vmatprep.subr.mxu0 %v10408
      %v10410 = vand.u32 %v9271, 4294901760
      %v10411 = vsub.f32 %v9271, %v10410
      %v10412 = vand.u32 %v10411, 4294901760
      %v10413 = vsub.f32 %v10411, %v10412
      %v10414 = vand.u32 %v10413, 4294901760
      %10415 = vmatpush1.msra.mxu0 %v10414
      %v10416 = vand.u32 %v9268, 4294901760
      %v10417 = vsub.f32 %v9268, %v10416
      %v10418 = vand.u32 %v10417, 4294901760
      %v10419 = vsub.f32 %v10417, %v10418
      %v10420 = vand.u32 %v10419, 4294901760
      %10421 = vmatprep.subr.mxu0 %v10420
      %v10422 = vand.u32 %v9267, 4294901760
      %v10423 = vsub.f32 %v9267, %v10422
      %v10424 = vand.u32 %v10423, 4294901760
      %v10425 = vsub.f32 %v10423, %v10424
      %v10426 = vand.u32 %v10425, 4294901760
      %10427 = vmatpush1.msra.mxu0 %v10426
      %v10428 = vand.u32 %v9264, 4294901760
      %v10429 = vsub.f32 %v9264, %v10428
      %v10430 = vand.u32 %v10429, 4294901760
      %v10431 = vsub.f32 %v10429, %v10430
      %v10432 = vand.u32 %v10431, 4294901760
      %10433 = vmatprep.subr.mxu0 %v10432
      %v10434 = vand.u32 %v9263, 4294901760
      %v10435 = vsub.f32 %v9263, %v10434
      %v10436 = vand.u32 %v10435, 4294901760
      %v10437 = vsub.f32 %v10435, %v10436
      %v10438 = vand.u32 %v10437, 4294901760
      %10439 = vmatpush1.msra.mxu0 %v10438
      %v10440 = vand.u32 %v9260, 4294901760
      %v10441 = vsub.f32 %v9260, %v10440
      %v10442 = vand.u32 %v10441, 4294901760
      %v10443 = vsub.f32 %v10441, %v10442
      %v10444 = vand.u32 %v10443, 4294901760
      %10445 = vmatprep.subr.mxu0 %v10444
      %v10446 = vand.u32 %v9259, 4294901760
      %v10447 = vsub.f32 %v9259, %v10446
      %v10448 = vand.u32 %v10447, 4294901760
      %v10449 = vsub.f32 %v10447, %v10448
      %v10450 = vand.u32 %v10449, 4294901760
      %10451 = vmatpush1.msra.mxu0 %v10450
      %v10452 = vand.u32 %v9256, 4294901760
      %v10453 = vsub.f32 %v9256, %v10452
      %v10454 = vand.u32 %v10453, 4294901760
      %v10455 = vsub.f32 %v10453, %v10454
      %v10456 = vand.u32 %v10455, 4294901760
      %10457 = vmatprep.subr.mxu0 %v10456
      %v10458 = vand.u32 %v9255, 4294901760
      %v10459 = vsub.f32 %v9255, %v10458
      %v10460 = vand.u32 %v10459, 4294901760
      %v10461 = vsub.f32 %v10459, %v10460
      %v10462 = vand.u32 %v10461, 4294901760
      %10463 = vmatpush1.msra.mxu0 %v10462
      %v10464 = vand.u32 %v9252, 4294901760
      %v10465 = vsub.f32 %v9252, %v10464
      %v10466 = vand.u32 %v10465, 4294901760
      %v10467 = vsub.f32 %v10465, %v10466
      %v10468 = vand.u32 %v10467, 4294901760
      %10469 = vmatprep.subr.mxu0 %v10468
      %v10470 = vand.u32 %v9251, 4294901760
      %v10471 = vsub.f32 %v9251, %v10470
      %v10472 = vand.u32 %v10471, 4294901760
      %v10473 = vsub.f32 %v10471, %v10472
      %v10474 = vand.u32 %v10473, 4294901760
      %10475 = vmatpush1.msra.mxu0 %v10474
      %v10476 = vand.u32 %v9248, 4294901760
      %v10477 = vsub.f32 %v9248, %v10476
      %v10478 = vand.u32 %v10477, 4294901760
      %v10479 = vsub.f32 %v10477, %v10478
      %v10480 = vand.u32 %v10479, 4294901760
      %10481 = vmatprep.subr.mxu0 %v10480
      %v10482 = vand.u32 %v9247, 4294901760
      %v10483 = vsub.f32 %v9247, %v10482
      %v10484 = vand.u32 %v10483, 4294901760
      %v10485 = vsub.f32 %v10483, %v10484
      %v10486 = vand.u32 %v10485, 4294901760
      %10487 = vmatpush1.msra.mxu0 %v10486
      %v10488 = vand.u32 %v9244, 4294901760
      %v10489 = vsub.f32 %v9244, %v10488
      %v10490 = vand.u32 %v10489, 4294901760
      %v10491 = vsub.f32 %v10489, %v10490
      %v10492 = vand.u32 %v10491, 4294901760
      %10493 = vmatprep.subr.mxu0 %v10492
      %v10494 = vand.u32 %v9243, 4294901760
      %v10495 = vsub.f32 %v9243, %v10494
      %v10496 = vand.u32 %v10495, 4294901760
      %v10497 = vsub.f32 %v10495, %v10496
      %v10498 = vand.u32 %v10497, 4294901760
      %10499 = vmatpush1.msra.mxu0 %v10498
      %10500 = vmatprep.subr.mxu0 0.0
      %10501 = vmatpush2.msra.mxu0 0.0
      %10502 = vmatprep.subr.mxu0 0.0
      %10503 = vmatpush2.msra.mxu0 0.0
      %10504 = vmatprep.subr.mxu0 0.0
      %10505 = vmatpush2.msra.mxu0 0.0
      %10506 = vmatprep.subr.mxu0 0.0
      %10507 = vmatpush2.msra.mxu0 0.0
      %10508 = vmatprep.subr.mxu0 0.0
      %10509 = vmatpush2.msra.mxu0 0.0
      %10510 = vmatprep.subr.mxu0 0.0
      %10511 = vmatpush2.msra.mxu0 0.0
      %10512 = vmatprep.subr.mxu0 0.0
      %10513 = vmatpush2.msra.mxu0 0.0
      %10514 = vmatprep.subr.mxu0 0.0
      %10515 = vmatpush2.msra.mxu0 0.0
      %10516 = vmatprep.subr.mxu0 0.0
      %10517 = vmatpush2.msra.mxu0 0.0
      %10518 = vmatprep.subr.mxu0 0.0
      %10519 = vmatpush2.msra.mxu0 0.0
      %10520 = vmatprep.subr.mxu0 0.0
      %10521 = vmatpush2.msra.mxu0 0.0
      %10522 = vmatprep.subr.mxu0 0.0
      %10523 = vmatpush2.msra.mxu0 0.0
      %10524 = vmatprep.subr.mxu0 0.0
      %10525 = vmatpush2.msra.mxu0 0.0
      %10526 = vmatprep.subr.mxu0 0.0
      %10527 = vmatpush2.msra.mxu0 0.0
      %10528 = vmatprep.subr.mxu0 0.0
      %10529 = vmatpush2.msra.mxu0 0.0
      %10530 = vmatprep.subr.mxu0 0.0
      %10531 = vmatpush2.msra.mxu0 0.0
      %10532 = vmatprep.mubr.f32.mxu0 0.0
      %v10533 = vand.u32 %v9343, 4294901760
      %10534 = vmatmul.mubr.f32.gmra.mxu0 %v10533
      %v10535 = vpop.f32.mrf.mxu0
      %v10536 = vadd.f32 %v10304, %v10535
      %v10537 = vpop.f32.mrf.mxu0
      %v10538 = vadd.f32 %v10306, %v10537
      %10539 = vdwg.mxu0
      %v10540 = vand.u32 %v9304, 4294901760
      %v10541 = vsub.f32 %v9304, %v10540
      %10542 = vmatprep.subr.mxu0 %v10541
      %v10543 = vand.u32 %v9303, 4294901760
      %v10544 = vsub.f32 %v9303, %v10543
      %10545 = vmatpush1.msra.mxu0 %v10544
      %v10546 = vand.u32 %v9300, 4294901760
      %v10547 = vsub.f32 %v9300, %v10546
      %10548 = vmatprep.subr.mxu0 %v10547
      %v10549 = vand.u32 %v9299, 4294901760
      %v10550 = vsub.f32 %v9299, %v10549
      %10551 = vmatpush1.msra.mxu0 %v10550
      %v10552 = vand.u32 %v9296, 4294901760
      %v10553 = vsub.f32 %v9296, %v10552
      %10554 = vmatprep.subr.mxu0 %v10553
      %v10555 = vand.u32 %v9295, 4294901760
      %v10556 = vsub.f32 %v9295, %v10555
      %10557 = vmatpush1.msra.mxu0 %v10556
      %v10558 = vand.u32 %v9292, 4294901760
      %v10559 = vsub.f32 %v9292, %v10558
      %10560 = vmatprep.subr.mxu0 %v10559
      %v10561 = vand.u32 %v9291, 4294901760
      %v10562 = vsub.f32 %v9291, %v10561
      %10563 = vmatpush1.msra.mxu0 %v10562
      %v10564 = vand.u32 %v9288, 4294901760
      %v10565 = vsub.f32 %v9288, %v10564
      %10566 = vmatprep.subr.mxu0 %v10565
      %v10567 = vand.u32 %v9287, 4294901760
      %v10568 = vsub.f32 %v9287, %v10567
      %10569 = vmatpush1.msra.mxu0 %v10568
      %v10570 = vand.u32 %v9284, 4294901760
      %v10571 = vsub.f32 %v9284, %v10570
      %10572 = vmatprep.subr.mxu0 %v10571
      %v10573 = vand.u32 %v9283, 4294901760
      %v10574 = vsub.f32 %v9283, %v10573
      %10575 = vmatpush1.msra.mxu0 %v10574
      %v10576 = vand.u32 %v9280, 4294901760
      %v10577 = vsub.f32 %v9280, %v10576
      %10578 = vmatprep.subr.mxu0 %v10577
      %v10579 = vand.u32 %v9279, 4294901760
      %v10580 = vsub.f32 %v9279, %v10579
      %10581 = vmatpush1.msra.mxu0 %v10580
      %v10582 = vand.u32 %v9276, 4294901760
      %v10583 = vsub.f32 %v9276, %v10582
      %10584 = vmatprep.subr.mxu0 %v10583
      %v10585 = vand.u32 %v9275, 4294901760
      %v10586 = vsub.f32 %v9275, %v10585
      %10587 = vmatpush1.msra.mxu0 %v10586
      %v10588 = vand.u32 %v9272, 4294901760
      %v10589 = vsub.f32 %v9272, %v10588
      %10590 = vmatprep.subr.mxu0 %v10589
      %v10591 = vand.u32 %v9271, 4294901760
      %v10592 = vsub.f32 %v9271, %v10591
      %10593 = vmatpush1.msra.mxu0 %v10592
      %v10594 = vand.u32 %v9268, 4294901760
      %v10595 = vsub.f32 %v9268, %v10594
      %10596 = vmatprep.subr.mxu0 %v10595
      %v10597 = vand.u32 %v9267, 4294901760
      %v10598 = vsub.f32 %v9267, %v10597
      %10599 = vmatpush1.msra.mxu0 %v10598
      %v10600 = vand.u32 %v9264, 4294901760
      %v10601 = vsub.f32 %v9264, %v10600
      %10602 = vmatprep.subr.mxu0 %v10601
      %v10603 = vand.u32 %v9263, 4294901760
      %v10604 = vsub.f32 %v9263, %v10603
      %10605 = vmatpush1.msra.mxu0 %v10604
      %v10606 = vand.u32 %v9260, 4294901760
      %v10607 = vsub.f32 %v9260, %v10606
      %10608 = vmatprep.subr.mxu0 %v10607
      %v10609 = vand.u32 %v9259, 4294901760
      %v10610 = vsub.f32 %v9259, %v10609
      %10611 = vmatpush1.msra.mxu0 %v10610
      %v10612 = vand.u32 %v9256, 4294901760
      %v10613 = vsub.f32 %v9256, %v10612
      %10614 = vmatprep.subr.mxu0 %v10613
      %v10615 = vand.u32 %v9255, 4294901760
      %v10616 = vsub.f32 %v9255, %v10615
      %10617 = vmatpush1.msra.mxu0 %v10616
      %v10618 = vand.u32 %v9252, 4294901760
      %v10619 = vsub.f32 %v9252, %v10618
      %10620 = vmatprep.subr.mxu0 %v10619
      %v10621 = vand.u32 %v9251, 4294901760
      %v10622 = vsub.f32 %v9251, %v10621
      %10623 = vmatpush1.msra.mxu0 %v10622
      %v10624 = vand.u32 %v9248, 4294901760
      %v10625 = vsub.f32 %v9248, %v10624
      %10626 = vmatprep.subr.mxu0 %v10625
      %v10627 = vand.u32 %v9247, 4294901760
      %v10628 = vsub.f32 %v9247, %v10627
      %10629 = vmatpush1.msra.mxu0 %v10628
      %v10630 = vand.u32 %v9244, 4294901760
      %v10631 = vsub.f32 %v9244, %v10630
      %10632 = vmatprep.subr.mxu0 %v10631
      %v10633 = vand.u32 %v9243, 4294901760
      %v10634 = vsub.f32 %v9243, %v10633
      %10635 = vmatpush1.msra.mxu0 %v10634
      %10636 = vmatprep.subr.mxu0 0.0
      %10637 = vmatpush2.msra.mxu0 0.0
      %10638 = vmatprep.subr.mxu0 0.0
      %10639 = vmatpush2.msra.mxu0 0.0
      %10640 = vmatprep.subr.mxu0 0.0
      %10641 = vmatpush2.msra.mxu0 0.0
      %10642 = vmatprep.subr.mxu0 0.0
      %10643 = vmatpush2.msra.mxu0 0.0
      %10644 = vmatprep.subr.mxu0 0.0
      %10645 = vmatpush2.msra.mxu0 0.0
      %10646 = vmatprep.subr.mxu0 0.0
      %10647 = vmatpush2.msra.mxu0 0.0
      %10648 = vmatprep.subr.mxu0 0.0
      %10649 = vmatpush2.msra.mxu0 0.0
      %10650 = vmatprep.subr.mxu0 0.0
      %10651 = vmatpush2.msra.mxu0 0.0
      %10652 = vmatprep.subr.mxu0 0.0
      %10653 = vmatpush2.msra.mxu0 0.0
      %10654 = vmatprep.subr.mxu0 0.0
      %10655 = vmatpush2.msra.mxu0 0.0
      %10656 = vmatprep.subr.mxu0 0.0
      %10657 = vmatpush2.msra.mxu0 0.0
      %10658 = vmatprep.subr.mxu0 0.0
      %10659 = vmatpush2.msra.mxu0 0.0
      %10660 = vmatprep.subr.mxu0 0.0
      %10661 = vmatpush2.msra.mxu0 0.0
      %10662 = vmatprep.subr.mxu0 0.0
      %10663 = vmatpush2.msra.mxu0 0.0
      %10664 = vmatprep.subr.mxu0 0.0
      %10665 = vmatpush2.msra.mxu0 0.0
      %10666 = vmatprep.subr.mxu0 0.0
      %10667 = vmatpush2.msra.mxu0 0.0
      %10668 = vmatprep.mubr.f32.mxu0 0.0
      %v10669 = vand.u32 %v9343, 4294901760
      %v10670 = vsub.f32 %v9343, %v10669
      %10671 = vmatmul.mubr.f32.gmra.mxu0 %v10670
      %v10672 = vpop.f32.mrf.mxu0
      %v10673 = vadd.f32 %v10536, %v10672
      %v10674 = vpop.f32.mrf.mxu0
      %v10675 = vadd.f32 %v10538, %v10674
      %10676 = vdwg.mxu0
      %v10677 = vand.u32 %v9304, 4294901760
      %10678 = vmatprep.subr.mxu0 %v10677
      %v10679 = vand.u32 %v9303, 4294901760
      %10680 = vmatpush1.msra.mxu0 %v10679
      %v10681 = vand.u32 %v9300, 4294901760
      %10682 = vmatprep.subr.mxu0 %v10681
      %v10683 = vand.u32 %v9299, 4294901760
      %10684 = vmatpush1.msra.mxu0 %v10683
      %v10685 = vand.u32 %v9296, 4294901760
      %10686 = vmatprep.subr.mxu0 %v10685
      %v10687 = vand.u32 %v9295, 4294901760
      %10688 = vmatpush1.msra.mxu0 %v10687
      %v10689 = vand.u32 %v9292, 4294901760
      %10690 = vmatprep.subr.mxu0 %v10689
      %v10691 = vand.u32 %v9291, 4294901760
      %10692 = vmatpush1.msra.mxu0 %v10691
      %v10693 = vand.u32 %v9288, 4294901760
      %10694 = vmatprep.subr.mxu0 %v10693
      %v10695 = vand.u32 %v9287, 4294901760
      %10696 = vmatpush1.msra.mxu0 %v10695
      %v10697 = vand.u32 %v9284, 4294901760
      %10698 = vmatprep.subr.mxu0 %v10697
      %v10699 = vand.u32 %v9283, 4294901760
      %10700 = vmatpush1.msra.mxu0 %v10699
      %v10701 = vand.u32 %v9280, 4294901760
      %10702 = vmatprep.subr.mxu0 %v10701
      %v10703 = vand.u32 %v9279, 4294901760
      %10704 = vmatpush1.msra.mxu0 %v10703
      %v10705 = vand.u32 %v9276, 4294901760
      %10706 = vmatprep.subr.mxu0 %v10705
      %v10707 = vand.u32 %v9275, 4294901760
      %10708 = vmatpush1.msra.mxu0 %v10707
      %v10709 = vand.u32 %v9272, 4294901760
      %10710 = vmatprep.subr.mxu0 %v10709
      %v10711 = vand.u32 %v9271, 4294901760
      %10712 = vmatpush1.msra.mxu0 %v10711
      %v10713 = vand.u32 %v9268, 4294901760
      %10714 = vmatprep.subr.mxu0 %v10713
      %v10715 = vand.u32 %v9267, 4294901760
      %10716 = vmatpush1.msra.mxu0 %v10715
      %v10717 = vand.u32 %v9264, 4294901760
      %10718 = vmatprep.subr.mxu0 %v10717
      %v10719 = vand.u32 %v9263, 4294901760
      %10720 = vmatpush1.msra.mxu0 %v10719
      %v10721 = vand.u32 %v9260, 4294901760
      %10722 = vmatprep.subr.mxu0 %v10721
      %v10723 = vand.u32 %v9259, 4294901760
      %10724 = vmatpush1.msra.mxu0 %v10723
      %v10725 = vand.u32 %v9256, 4294901760
      %10726 = vmatprep.subr.mxu0 %v10725
      %v10727 = vand.u32 %v9255, 4294901760
      %10728 = vmatpush1.msra.mxu0 %v10727
      %v10729 = vand.u32 %v9252, 4294901760
      %10730 = vmatprep.subr.mxu0 %v10729
      %v10731 = vand.u32 %v9251, 4294901760
      %10732 = vmatpush1.msra.mxu0 %v10731
      %v10733 = vand.u32 %v9248, 4294901760
      %10734 = vmatprep.subr.mxu0 %v10733
      %v10735 = vand.u32 %v9247, 4294901760
      %10736 = vmatpush1.msra.mxu0 %v10735
      %v10737 = vand.u32 %v9244, 4294901760
      %10738 = vmatprep.subr.mxu0 %v10737
      %v10739 = vand.u32 %v9243, 4294901760
      %10740 = vmatpush1.msra.mxu0 %v10739
      %10741 = vmatprep.subr.mxu0 0.0
      %10742 = vmatpush2.msra.mxu0 0.0
      %10743 = vmatprep.subr.mxu0 0.0
      %10744 = vmatpush2.msra.mxu0 0.0
      %10745 = vmatprep.subr.mxu0 0.0
      %10746 = vmatpush2.msra.mxu0 0.0
      %10747 = vmatprep.subr.mxu0 0.0
      %10748 = vmatpush2.msra.mxu0 0.0
      %10749 = vmatprep.subr.mxu0 0.0
      %10750 = vmatpush2.msra.mxu0 0.0
      %10751 = vmatprep.subr.mxu0 0.0
      %10752 = vmatpush2.msra.mxu0 0.0
      %10753 = vmatprep.subr.mxu0 0.0
      %10754 = vmatpush2.msra.mxu0 0.0
      %10755 = vmatprep.subr.mxu0 0.0
      %10756 = vmatpush2.msra.mxu0 0.0
      %10757 = vmatprep.subr.mxu0 0.0
      %10758 = vmatpush2.msra.mxu0 0.0
      %10759 = vmatprep.subr.mxu0 0.0
      %10760 = vmatpush2.msra.mxu0 0.0
      %10761 = vmatprep.subr.mxu0 0.0
      %10762 = vmatpush2.msra.mxu0 0.0
      %10763 = vmatprep.subr.mxu0 0.0
      %10764 = vmatpush2.msra.mxu0 0.0
      %10765 = vmatprep.subr.mxu0 0.0
      %10766 = vmatpush2.msra.mxu0 0.0
      %10767 = vmatprep.subr.mxu0 0.0
      %10768 = vmatpush2.msra.mxu0 0.0
      %10769 = vmatprep.subr.mxu0 0.0
      %10770 = vmatpush2.msra.mxu0 0.0
      %10771 = vmatprep.subr.mxu0 0.0
      %10772 = vmatpush2.msra.mxu0 0.0
      %10773 = vmatprep.mubr.f32.mxu0 0.0
      %v10774 = vand.u32 %v9343, 4294901760
      %v10775 = vsub.f32 %v9343, %v10774
      %v10776 = vand.u32 %v10775, 4294901760
      %10777 = vmatmul.mubr.f32.gmra.mxu0 %v10776
      %v10778 = vpop.f32.mrf.mxu0
      %v10779 = vadd.f32 %v10673, %v10778
      %v10780 = vpop.f32.mrf.mxu0
      %v10781 = vadd.f32 %v10675, %v10780
      %10782 = vdwg.mxu0
      %v10783 = vand.u32 %v9304, 4294901760
      %v10784 = vsub.f32 %v9304, %v10783
      %v10785 = vand.u32 %v10784, 4294901760
      %10786 = vmatprep.subr.mxu0 %v10785
      %v10787 = vand.u32 %v9303, 4294901760
      %v10788 = vsub.f32 %v9303, %v10787
      %v10789 = vand.u32 %v10788, 4294901760
      %10790 = vmatpush1.msra.mxu0 %v10789
      %v10791 = vand.u32 %v9300, 4294901760
      %v10792 = vsub.f32 %v9300, %v10791
      %v10793 = vand.u32 %v10792, 4294901760
      %10794 = vmatprep.subr.mxu0 %v10793
      %v10795 = vand.u32 %v9299, 4294901760
      %v10796 = vsub.f32 %v9299, %v10795
      %v10797 = vand.u32 %v10796, 4294901760
      %10798 = vmatpush1.msra.mxu0 %v10797
      %v10799 = vand.u32 %v9296, 4294901760
      %v10800 = vsub.f32 %v9296, %v10799
      %v10801 = vand.u32 %v10800, 4294901760
      %10802 = vmatprep.subr.mxu0 %v10801
      %v10803 = vand.u32 %v9295, 4294901760
      %v10804 = vsub.f32 %v9295, %v10803
      %v10805 = vand.u32 %v10804, 4294901760
      %10806 = vmatpush1.msra.mxu0 %v10805
      %v10807 = vand.u32 %v9292, 4294901760
      %v10808 = vsub.f32 %v9292, %v10807
      %v10809 = vand.u32 %v10808, 4294901760
      %10810 = vmatprep.subr.mxu0 %v10809
      %v10811 = vand.u32 %v9291, 4294901760
      %v10812 = vsub.f32 %v9291, %v10811
      %v10813 = vand.u32 %v10812, 4294901760
      %10814 = vmatpush1.msra.mxu0 %v10813
      %v10815 = vand.u32 %v9288, 4294901760
      %v10816 = vsub.f32 %v9288, %v10815
      %v10817 = vand.u32 %v10816, 4294901760
      %10818 = vmatprep.subr.mxu0 %v10817
      %v10819 = vand.u32 %v9287, 4294901760
      %v10820 = vsub.f32 %v9287, %v10819
      %v10821 = vand.u32 %v10820, 4294901760
      %10822 = vmatpush1.msra.mxu0 %v10821
      %v10823 = vand.u32 %v9284, 4294901760
      %v10824 = vsub.f32 %v9284, %v10823
      %v10825 = vand.u32 %v10824, 4294901760
      %10826 = vmatprep.subr.mxu0 %v10825
      %v10827 = vand.u32 %v9283, 4294901760
      %v10828 = vsub.f32 %v9283, %v10827
      %v10829 = vand.u32 %v10828, 4294901760
      %10830 = vmatpush1.msra.mxu0 %v10829
      %v10831 = vand.u32 %v9280, 4294901760
      %v10832 = vsub.f32 %v9280, %v10831
      %v10833 = vand.u32 %v10832, 4294901760
      %10834 = vmatprep.subr.mxu0 %v10833
      %v10835 = vand.u32 %v9279, 4294901760
      %v10836 = vsub.f32 %v9279, %v10835
      %v10837 = vand.u32 %v10836, 4294901760
      %10838 = vmatpush1.msra.mxu0 %v10837
      %v10839 = vand.u32 %v9276, 4294901760
      %v10840 = vsub.f32 %v9276, %v10839
      %v10841 = vand.u32 %v10840, 4294901760
      %10842 = vmatprep.subr.mxu0 %v10841
      %v10843 = vand.u32 %v9275, 4294901760
      %v10844 = vsub.f32 %v9275, %v10843
      %v10845 = vand.u32 %v10844, 4294901760
      %10846 = vmatpush1.msra.mxu0 %v10845
      %v10847 = vand.u32 %v9272, 4294901760
      %v10848 = vsub.f32 %v9272, %v10847
      %v10849 = vand.u32 %v10848, 4294901760
      %10850 = vmatprep.subr.mxu0 %v10849
      %v10851 = vand.u32 %v9271, 4294901760
      %v10852 = vsub.f32 %v9271, %v10851
      %v10853 = vand.u32 %v10852, 4294901760
      %10854 = vmatpush1.msra.mxu0 %v10853
      %v10855 = vand.u32 %v9268, 4294901760
      %v10856 = vsub.f32 %v9268, %v10855
      %v10857 = vand.u32 %v10856, 4294901760
      %10858 = vmatprep.subr.mxu0 %v10857
      %v10859 = vand.u32 %v9267, 4294901760
      %v10860 = vsub.f32 %v9267, %v10859
      %v10861 = vand.u32 %v10860, 4294901760
      %10862 = vmatpush1.msra.mxu0 %v10861
      %v10863 = vand.u32 %v9264, 4294901760
      %v10864 = vsub.f32 %v9264, %v10863
      %v10865 = vand.u32 %v10864, 4294901760
      %10866 = vmatprep.subr.mxu0 %v10865
      %v10867 = vand.u32 %v9263, 4294901760
      %v10868 = vsub.f32 %v9263, %v10867
      %v10869 = vand.u32 %v10868, 4294901760
      %10870 = vmatpush1.msra.mxu0 %v10869
      %v10871 = vand.u32 %v9260, 4294901760
      %v10872 = vsub.f32 %v9260, %v10871
      %v10873 = vand.u32 %v10872, 4294901760
      %10874 = vmatprep.subr.mxu0 %v10873
      %v10875 = vand.u32 %v9259, 4294901760
      %v10876 = vsub.f32 %v9259, %v10875
      %v10877 = vand.u32 %v10876, 4294901760
      %10878 = vmatpush1.msra.mxu0 %v10877
      %v10879 = vand.u32 %v9256, 4294901760
      %v10880 = vsub.f32 %v9256, %v10879
      %v10881 = vand.u32 %v10880, 4294901760
      %10882 = vmatprep.subr.mxu0 %v10881
      %v10883 = vand.u32 %v9255, 4294901760
      %v10884 = vsub.f32 %v9255, %v10883
      %v10885 = vand.u32 %v10884, 4294901760
      %10886 = vmatpush1.msra.mxu0 %v10885
      %v10887 = vand.u32 %v9252, 4294901760
      %v10888 = vsub.f32 %v9252, %v10887
      %v10889 = vand.u32 %v10888, 4294901760
      %10890 = vmatprep.subr.mxu0 %v10889
      %v10891 = vand.u32 %v9251, 4294901760
      %v10892 = vsub.f32 %v9251, %v10891
      %v10893 = vand.u32 %v10892, 4294901760
      %10894 = vmatpush1.msra.mxu0 %v10893
      %v10895 = vand.u32 %v9248, 4294901760
      %v10896 = vsub.f32 %v9248, %v10895
      %v10897 = vand.u32 %v10896, 4294901760
      %10898 = vmatprep.subr.mxu0 %v10897
      %v10899 = vand.u32 %v9247, 4294901760
      %v10900 = vsub.f32 %v9247, %v10899
      %v10901 = vand.u32 %v10900, 4294901760
      %10902 = vmatpush1.msra.mxu0 %v10901
      %v10903 = vand.u32 %v9244, 4294901760
      %v10904 = vsub.f32 %v9244, %v10903
      %v10905 = vand.u32 %v10904, 4294901760
      %10906 = vmatprep.subr.mxu0 %v10905
      %v10907 = vand.u32 %v9243, 4294901760
      %v10908 = vsub.f32 %v9243, %v10907
      %v10909 = vand.u32 %v10908, 4294901760
      %10910 = vmatpush1.msra.mxu0 %v10909
      %10911 = vmatprep.subr.mxu0 0.0
      %10912 = vmatpush2.msra.mxu0 0.0
      %10913 = vmatprep.subr.mxu0 0.0
      %10914 = vmatpush2.msra.mxu0 0.0
      %10915 = vmatprep.subr.mxu0 0.0
      %10916 = vmatpush2.msra.mxu0 0.0
      %10917 = vmatprep.subr.mxu0 0.0
      %10918 = vmatpush2.msra.mxu0 0.0
      %10919 = vmatprep.subr.mxu0 0.0
      %10920 = vmatpush2.msra.mxu0 0.0
      %10921 = vmatprep.subr.mxu0 0.0
      %10922 = vmatpush2.msra.mxu0 0.0
      %10923 = vmatprep.subr.mxu0 0.0
      %10924 = vmatpush2.msra.mxu0 0.0
      %10925 = vmatprep.subr.mxu0 0.0
      %10926 = vmatpush2.msra.mxu0 0.0
      %10927 = vmatprep.subr.mxu0 0.0
      %10928 = vmatpush2.msra.mxu0 0.0
      %10929 = vmatprep.subr.mxu0 0.0
      %10930 = vmatpush2.msra.mxu0 0.0
      %10931 = vmatprep.subr.mxu0 0.0
      %10932 = vmatpush2.msra.mxu0 0.0
      %10933 = vmatprep.subr.mxu0 0.0
      %10934 = vmatpush2.msra.mxu0 0.0
      %10935 = vmatprep.subr.mxu0 0.0
      %10936 = vmatpush2.msra.mxu0 0.0
      %10937 = vmatprep.subr.mxu0 0.0
      %10938 = vmatpush2.msra.mxu0 0.0
      %10939 = vmatprep.subr.mxu0 0.0
      %10940 = vmatpush2.msra.mxu0 0.0
      %10941 = vmatprep.subr.mxu0 0.0
      %10942 = vmatpush2.msra.mxu0 0.0
      %10943 = vmatprep.mubr.f32.mxu0 0.0
      %v10944 = vand.u32 %v9343, 4294901760
      %10945 = vmatmul.mubr.f32.gmra.mxu0 %v10944
      %v10946 = vpop.f32.mrf.mxu0
      %v10947 = vadd.f32 %v10779, %v10946
      %v10948 = vpop.f32.mrf.mxu0
      %v10949 = vadd.f32 %v10781, %v10948
      %10950 = vdwg.mxu0
      %v10951 = vand.u32 %v9304, 4294901760
      %10952 = vmatprep.subr.mxu0 %v10951
      %v10953 = vand.u32 %v9303, 4294901760
      %10954 = vmatpush1.msra.mxu0 %v10953
      %v10955 = vand.u32 %v9300, 4294901760
      %10956 = vmatprep.subr.mxu0 %v10955
      %v10957 = vand.u32 %v9299, 4294901760
      %10958 = vmatpush1.msra.mxu0 %v10957
      %v10959 = vand.u32 %v9296, 4294901760
      %10960 = vmatprep.subr.mxu0 %v10959
      %v10961 = vand.u32 %v9295, 4294901760
      %10962 = vmatpush1.msra.mxu0 %v10961
      %v10963 = vand.u32 %v9292, 4294901760
      %10964 = vmatprep.subr.mxu0 %v10963
      %v10965 = vand.u32 %v9291, 4294901760
      %10966 = vmatpush1.msra.mxu0 %v10965
      %v10967 = vand.u32 %v9288, 4294901760
      %10968 = vmatprep.subr.mxu0 %v10967
      %v10969 = vand.u32 %v9287, 4294901760
      %10970 = vmatpush1.msra.mxu0 %v10969
      %v10971 = vand.u32 %v9284, 4294901760
      %10972 = vmatprep.subr.mxu0 %v10971
      %v10973 = vand.u32 %v9283, 4294901760
      %10974 = vmatpush1.msra.mxu0 %v10973
      %v10975 = vand.u32 %v9280, 4294901760
      %10976 = vmatprep.subr.mxu0 %v10975
      %v10977 = vand.u32 %v9279, 4294901760
      %10978 = vmatpush1.msra.mxu0 %v10977
      %v10979 = vand.u32 %v9276, 4294901760
      %10980 = vmatprep.subr.mxu0 %v10979
      %v10981 = vand.u32 %v9275, 4294901760
      %10982 = vmatpush1.msra.mxu0 %v10981
      %v10983 = vand.u32 %v9272, 4294901760
      %10984 = vmatprep.subr.mxu0 %v10983
      %v10985 = vand.u32 %v9271, 4294901760
      %10986 = vmatpush1.msra.mxu0 %v10985
      %v10987 = vand.u32 %v9268, 4294901760
      %10988 = vmatprep.subr.mxu0 %v10987
      %v10989 = vand.u32 %v9267, 4294901760
      %10990 = vmatpush1.msra.mxu0 %v10989
      %v10991 = vand.u32 %v9264, 4294901760
      %10992 = vmatprep.subr.mxu0 %v10991
      %v10993 = vand.u32 %v9263, 4294901760
      %10994 = vmatpush1.msra.mxu0 %v10993
      %v10995 = vand.u32 %v9260, 4294901760
      %10996 = vmatprep.subr.mxu0 %v10995
      %v10997 = vand.u32 %v9259, 4294901760
      %10998 = vmatpush1.msra.mxu0 %v10997
      %v10999 = vand.u32 %v9256, 4294901760
      %11000 = vmatprep.subr.mxu0 %v10999
      %v11001 = vand.u32 %v9255, 4294901760
      %11002 = vmatpush1.msra.mxu0 %v11001
      %v11003 = vand.u32 %v9252, 4294901760
      %11004 = vmatprep.subr.mxu0 %v11003
      %v11005 = vand.u32 %v9251, 4294901760
      %11006 = vmatpush1.msra.mxu0 %v11005
      %v11007 = vand.u32 %v9248, 4294901760
      %11008 = vmatprep.subr.mxu0 %v11007
      %v11009 = vand.u32 %v9247, 4294901760
      %11010 = vmatpush1.msra.mxu0 %v11009
      %v11011 = vand.u32 %v9244, 4294901760
      %11012 = vmatprep.subr.mxu0 %v11011
      %v11013 = vand.u32 %v9243, 4294901760
      %11014 = vmatpush1.msra.mxu0 %v11013
      %11015 = vmatprep.subr.mxu0 0.0
      %11016 = vmatpush2.msra.mxu0 0.0
      %11017 = vmatprep.subr.mxu0 0.0
      %11018 = vmatpush2.msra.mxu0 0.0
      %11019 = vmatprep.subr.mxu0 0.0
      %11020 = vmatpush2.msra.mxu0 0.0
      %11021 = vmatprep.subr.mxu0 0.0
      %11022 = vmatpush2.msra.mxu0 0.0
      %11023 = vmatprep.subr.mxu0 0.0
      %11024 = vmatpush2.msra.mxu0 0.0
      %11025 = vmatprep.subr.mxu0 0.0
      %11026 = vmatpush2.msra.mxu0 0.0
      %11027 = vmatprep.subr.mxu0 0.0
      %11028 = vmatpush2.msra.mxu0 0.0
      %11029 = vmatprep.subr.mxu0 0.0
      %11030 = vmatpush2.msra.mxu0 0.0
      %11031 = vmatprep.subr.mxu0 0.0
      %11032 = vmatpush2.msra.mxu0 0.0
      %11033 = vmatprep.subr.mxu0 0.0
      %11034 = vmatpush2.msra.mxu0 0.0
      %11035 = vmatprep.subr.mxu0 0.0
      %11036 = vmatpush2.msra.mxu0 0.0
      %11037 = vmatprep.subr.mxu0 0.0
      %11038 = vmatpush2.msra.mxu0 0.0
      %11039 = vmatprep.subr.mxu0 0.0
      %11040 = vmatpush2.msra.mxu0 0.0
      %11041 = vmatprep.subr.mxu0 0.0
      %11042 = vmatpush2.msra.mxu0 0.0
      %11043 = vmatprep.subr.mxu0 0.0
      %11044 = vmatpush2.msra.mxu0 0.0
      %11045 = vmatprep.subr.mxu0 0.0
      %11046 = vmatpush2.msra.mxu0 0.0
      %11047 = vmatprep.mubr.f32.mxu0 0.0
      %v11048 = vand.u32 %v9343, 4294901760
      %11049 = vmatmul.mubr.f32.gmra.mxu0 %v11048
      %v11050 = vpop.f32.mrf.mxu0
      %v11051 = vadd.f32 %v10947, %v11050
      %v11052 = vpop.f32.mrf.mxu0
      %v11053 = vadd.f32 %v10949, %v11052
      %11054 = vdwg.mxu0
      %v11059 = vcombine.low %v10196, %v10198
      %v11060 = vcombine.low %v11051, %v11053
      %v11062 = vunpack.c.l.s4 1966171168
      %v11063 = vunpack.c.0.s8 %v11062
      %v11064 = vlaneseq
      %v11065 = vshrl.u32 %v11064, 7
      %v11066 = vsub.s32 %v11063, %v11065
      %v11067 = vrot.slane %v11059, %v11066
      %v11069 = vunpack.c.l.s4 1966171168
      %v11070 = vunpack.c.0.s8 %v11069
      %v11071 = vlaneseq
      %v11072 = vshrl.u32 %v11071, 7
      %v11073 = vsub.s32 %v11070, %v11072
      %v11074 = vrot.slane %v11060, %v11073
      %v11075 = vcombine.low %v11067, %v11074
      %v11076 = vcombine.high %v11067, %v11074
      %v11078 = vunpack.c.l.s4 1966171168
      %v11079 = vunpack.c.0.s8 %v11078
      %v11080 = vlaneseq
      %v11081 = vshrl.u32 %v11080, 7
      %v11082 = vsub.s32 %v11079, %v11081
      %v11083 = vrot.slane %v11075, %v11082
      %v11085 = vunpack.c.l.s4 1966171168
      %v11086 = vunpack.c.0.s8 %v11085
      %v11087 = vlaneseq
      %v11088 = vshrl.u32 %v11087, 7
      %v11089 = vsub.s32 %v11086, %v11088
      %v11090 = vrot.slane %v11076, %v11089
      %v11093 = vadd.f32 %v9323, %v11083
      %v11094 = vadd.f32 %v9326, %v11090
      %v11095 = vxor.u32 %v11093, 2147483648
      %v11096 = vxor.u32 %v11094, 2147483648
      %v11097 = vmul.f32 %v11095, 1.442695
      %v11098 = vpow.pop %v11097
      %v11099 = vmul.f32 %v11096, 1.442695
      %v11100 = vpow.pop %v11099
      %v11101 = vadd.f32 %v11098, 1.0
      %v11102 = vadd.f32 %v11100, 1.0
      %v11103 = vrcp.pop %v11101
      %v11104 = vmul.f32 1.0, %v11103
      %v11105 = vrcp.pop %v11102
      %v11106 = vmul.f32 1.0, %v11105
      %v11109 = vrot.slane %v11093, 3
      %v11110 = vrot.slane %v11094, 3
      %v11113 = vtanh.pop %v11109
      %v11114 = vtanh.pop %v11110
      %v11117 = vrot.slane %v11104, 1
      %v11118 = vrot.slane %v11106, 1
      %v11121 = vmul.f32 %v11117, %v9313
      %v11122 = vmul.f32 %v11118, %v9314
      %v11123 = vmul.f32 %v11104, %v11113
      %v11124 = vmul.f32 %v11106, %v11114
      %v11125 = vadd.f32 %v11121, %v11123
      %v11126 = vadd.f32 %v11122, %v11124
      %v11127 = vtanh.pop %v11125
      %v11128 = vtanh.pop %v11126
      %v11129 = vrot.slane %v11104, 2
      %v11130 = vrot.slane %v11106, 2
      %v11133 = vmul.f32 %v11129, %v11127
      %v11134 = vmul.f32 %v11130, %v11128
      %s11135 = scalar_lea.vmem [#allocation3], %s9306
      %11136 = vst [vmem:[%s11135] sm:$0x1] %v11133
      %11137 = vst [vmem:[%s11135 + $0x10] sm:$0x1] %v11134
    $region54: #{cnn_lstm_forward.1} parent=1 // loop_footer
      %s9310 = sadd.s32 1, %s9306
    $region55: #{cnn_lstm_forward.1} parent=1 // loop_footer_branch
      %9305 = sbr.rel target = $region51
    $region56: #{cnn_lstm_forward.1} parent=1 // loop_exit
      _
    %v11138 = vld [vmem:[#allocation3] sm:$0xff]
    %v11139 = vld [vmem:[#allocation3 + $0x8] sm:$0xff]
    %v11140 = vld [vmem:[#allocation3 + $0x10] sm:$0xff]
    %v11141 = vld [vmem:[#allocation3 + $0x18] sm:$0xff]
    %v11142 = vld [vmem:[%s10] sm:$0x1]
    %v11144 = vlaneseq
    %v11145 = vshrl.u32 %v11144, 7
    %v11146 = vsub.s32 0, %v11145
    %v11147 = vrot.slane %v11142, %v11146
    %v11149 = vmul.f32 %v11138, %v11147
    %v11150 = vmul.f32 %v11139, %v11147
    %v11151 = vmul.f32 %v11140, %v11147
    %v11152 = vmul.f32 %v11141, %v11147
    %11153 = vadd.xlane.f32.xlu0 %v11149
    %v11154 = vpop.xlane.xlu0 %11153
    %11155 = vadd.xlane.f32.xlu0 %v11150
    %v11156 = vpop.xlane.xlu0 %11155
    %11157 = vadd.xlane.f32.xlu0 %v11151
    %v11158 = vpop.xlane.xlu0 %11157
    %11159 = vadd.xlane.f32.xlu0 %v11152
    %v11160 = vpop.xlane.xlu0 %11159
    %v11161 = vld [vmem:[#allocation4] sm:$0x1]
    %v11163 = vlaneseq
    %v11164 = vshrl.u32 %v11163, 7
    %v11165 = vsub.s32 0, %v11164
    %v11166 = vrot.slane %v11161, %v11165
    %11167 = vset.pattern.permute.xlu0 0
    %11168 = vperm.xlu0 %11167, %v11166
    %v11169 = vpop.permute.xlu0 %11168
    %v11171 = vadd.f32 %v11154, %v11169
    %v11172 = vadd.f32 %v11156, %v11169
    %v11173 = vadd.f32 %v11158, %v11169
    %v11174 = vadd.f32 %v11160, %v11169
    %v11175 = vxor.u32 %v11171, 2147483648
    %v11176 = vxor.u32 %v11172, 2147483648
    %v11177 = vxor.u32 %v11173, 2147483648
    %v11178 = vxor.u32 %v11174, 2147483648
    %v11179 = vmul.f32 %v11175, 1.442695
    %v11180 = vpow.pop %v11179
    %v11181 = vmul.f32 %v11176, 1.442695
    %v11182 = vpow.pop %v11181
    %v11183 = vmul.f32 %v11177, 1.442695
    %v11184 = vpow.pop %v11183
    %v11185 = vmul.f32 %v11178, 1.442695
    %v11186 = vpow.pop %v11185
    %v11187 = vadd.f32 %v11180, 1.0
    %v11188 = vadd.f32 %v11182, 1.0
    %v11189 = vadd.f32 %v11184, 1.0
    %v11190 = vadd.f32 %v11186, 1.0
    %v11191 = vrcp.pop %v11187
    %v11192 = vmul.f32 1.0, %v11191
    %v11193 = vrcp.pop %v11188
    %v11194 = vmul.f32 1.0, %v11193
    %v11195 = vrcp.pop %v11189
    %v11196 = vmul.f32 1.0, %v11195
    %v11197 = vrcp.pop %v11190
    %v11198 = vmul.f32 1.0, %v11197
    %v11203 = vlaneseq
    %v11204 = vand.u32 %v11203, 127
    %v11205 = vlaneseq
    %v11206 = vshrl.u32 %v11205, 7
    %v11207 = vsub.s32 %v11204, %v11206
    %v11208 = vrot.slane %v11192, %v11207
    %v11209 = vadd.s32 %v11204, 4294967288
    %v11210 = vlaneseq
    %v11211 = vshrl.u32 %v11210, 7
    %v11212 = vsub.s32 %v11209, %v11211
    %v11213 = vrot.slane %v11194, %v11212
    %vm11214 = vcmask 130112
    %v11215 = vsel %vm11214, %v11213, %v11208
    %v11216 = vlaneseq
    %v11217 = vshrl.u32 %v11216, 7
    %v11218 = vsub.s32 %v11204, %v11217
    %v11219 = vrot.slane %v11196, %v11218
    %v11220 = vlaneseq
    %v11221 = vshrl.u32 %v11220, 7
    %v11222 = vsub.s32 %v11209, %v11221
    %v11223 = vrot.slane %v11198, %v11222
    %v11224 = vsel %vm11214, %v11223, %v11219
    %vm11225 = vcmask 1041409
    %v11226 = vsel %vm11225, %v11224, %v11215
    %vm11228 = vcmask 123904
    %11229 = vst.msk [vmem:[#allocation5] sm:$0x3] %vm11228, %v11226
    // Predicated region
    $region57: #{cnn_lstm_forward.1} parent=1 // pred_check
      _
    $region58: #{cnn_lstm_forward.1} parent=1 // pred_check_branch
      %11231 = sbr.rel (0) target = $region60
    $region59: #{cnn_lstm_forward.1} parent=1 // pred_region
      %s11233 = ssub.s32 32, 32
      %11234 = vsyncadd [#allocation6], %s11233
      %s11236 = sshll.u32 [#allocation5], 4
      %s11237 = int_to_ptr.vmem [resolvable:$true] %s11236
      %11239 = dma.vmem_to_hbm [thread:$0]  %s11237, 32, %s12, [#allocation6]
    $region60: #{cnn_lstm_forward.1} parent=1 // pred_fallthru
      _
    // Predicated region
    $region61: #{cnn_lstm_forward.1} parent=1 // pred_check
      _
    $region62: #{cnn_lstm_forward.1} parent=1 // pred_check_branch
      %11241 = sbr.rel (0) target = $region64
    $region63: #{cnn_lstm_forward.1} parent=1 // pred_region
      %11242 = dma.done [#allocation6], 32
    $region64: #{cnn_lstm_forward.1} parent=1 // pred_fallthru
      _
    %11243 = vsyncpa [#allocation6], 1

</llo_original>
